<compile_context>
chip_gen: v5e
topology: v5e:2x2
jax: 0.10.0
libtpu: 0.0.40
codegen_flags: <defaults>
</compile_context>

<pallas_src>
import math

import jax
import jax.numpy as jnp
import numpy as np
from jax.experimental import pallas as pl
from jax.experimental.pallas import tpu as pltpu

BN_EPS = 1e-5


# ----------------------------------------------------------------------------
# Fused dense-block kernel (one grid step == one batch element).
#   refs = [x, (s1,b1,w1,b2,w2) * num_layers, out, zpad_scratch]
#   x    : (1, H, W, C0)        f32
#   s1,b1: (1, Cin_i)           f32   (BN1 folded scale/shift)
#   w1   : (Cin_i, Cmid)        bf16  (1x1 conv, BN2 scale pre-folded)
#   b2   : (1, Cmid)            f32   (BN2 shift)
#   w2   : (9*Cmid, G)          bf16  (3x3 conv, im2col layout (dy,dx,cin))
#   out  : (1, H, W, C_final)   f32   (also serves as the resident concat buf)
#   zpad : (1, H+2, Wp, Cmid)   f32   VMEM scratch, zero halo for padding=1
# ----------------------------------------------------------------------------
def _make_dense_block_kernel(num_layers, c0, g, cmid, h, w):
    def kernel(*refs):
        x_ref = refs[0]
        wrefs = refs[1:1 + 5 * num_layers]
        out_ref = refs[1 + 5 * num_layers]
        zpad_ref = refs[2 + 5 * num_layers]

        # Seed the VMEM-resident feature buffer with the input block.
        out_ref[:, :, :, 0:c0] = x_ref[...]

        # Zero the padded scratch once; every layer only overwrites the
        # interior, so the halo (and alignment padding) stays zero.
        zpad_ref[...] = jnp.zeros(zpad_ref.shape, zpad_ref.dtype)

        for i in range(num_layers):
            s1, b1, w1, b2, w2 = wrefs[5 * i:5 * i + 5]
            cin = c0 + i * g

            # BN1 (inference affine) + ReLU on the concatenated features.
            feat = out_ref[:, :, :, 0:cin].reshape(h * w, cin)
            y = jnp.maximum(feat * s1[...] + b1[...], 0.0)

            # 1x1 conv as a channel matmul (BN2 scale folded into w1),
            # bf16 operands, f32 accumulation; then BN2 shift + ReLU.
            bott = jnp.dot(y.astype(jnp.bfloat16), w1[...],
                           preferred_element_type=jnp.float32)
            z = jnp.maximum(bott + b2[...], 0.0)

            # Write bottleneck activations into the interior of the padded
            # scratch, then do the 3x3 conv as ONE im2col matmul (K = 9*Cmid).
            zpad_ref[:, 1:h + 1, 1:w + 1, :] = z.reshape(1, h, w, cmid)
            taps = [zpad_ref[:, dy:dy + h, dx:dx + w, :]
                    for dy in range(3) for dx in range(3)]
            patch = jnp.concatenate(taps, axis=-1).reshape(h * w, 9 * cmid)
            new = jnp.dot(patch.astype(jnp.bfloat16), w2[...],
                          preferred_element_type=jnp.float32)

            # Append the new features to the resident concat buffer.
            out_ref[:, :, :, cin:cin + g] = (
                new.reshape(1, h, w, g).astype(out_ref.dtype))

    return kernel


# ----------------------------------------------------------------------------
# Deterministic parameter init matching _DenseLayer._init_weight():
#   Conv2d -> kaiming_normal_ (fan_in, gain=sqrt(2)), bias=False
#   BatchNorm2d -> weight=1, bias=0 (running_mean=0, running_var=1)
# BN2's scale is folded into w1's columns; weights are stored in bf16.
# ----------------------------------------------------------------------------
def _kaiming_normal(key, shape_oihw):
    o, i, kh, kw = shape_oihw
    fan_in = i * kh * kw
    std = math.sqrt(2.0 / fan_in)
    return std * jax.random.normal(key, shape_oihw, dtype=jnp.float32)


def _fold_bn(c):
    gamma = jnp.ones((c,), jnp.float32)
    beta = jnp.zeros((c,), jnp.float32)
    mean = jnp.zeros((c,), jnp.float32)
    var = jnp.ones((c,), jnp.float32)
    scale = gamma / jnp.sqrt(var + BN_EPS)
    shift = beta - mean * scale
    return scale, shift


def init_dense_block_params(key, num_layers, num_input_features, bn_size,
                            growth_rate):
    cmid = bn_size * growth_rate
    params = []
    for i in range(num_layers):
        cin = num_input_features + i * growth_rate
        key, k1, k2 = jax.random.split(key, 3)
        w1_oihw = _kaiming_normal(k1, (cmid, cin, 1, 1))
        w2_oihw = _kaiming_normal(k2, (growth_rate, cmid, 3, 3))

        s1, b1 = _fold_bn(cin)
        s2, b2 = _fold_bn(cmid)

        w1 = jnp.transpose(w1_oihw[:, :, 0, 0], (1, 0))               # (cin, cmid)
        w1_folded = (w1 * s2[None, :]).astype(jnp.bfloat16)           # fold BN2 scale
        w2_hwio = jnp.transpose(w2_oihw, (2, 3, 1, 0)).astype(jnp.bfloat16)  # (3,3,cmid,G)
        w2_flat = w2_hwio.reshape(9 * cmid, growth_rate)              # (dy,dx,cin) rows

        params.append(dict(
            s1=s1.reshape(1, cin),
            b1=b1.reshape(1, cin),
            w1=w1_folded,
            b2=b2.reshape(1, cmid),
            w2=w2_flat,
            w2_hwio=w2_hwio,   # reference only
        ))
    return params


# ----------------------------------------------------------------------------
# _DenseBlock.forward (use_context=False), NCHW in / NCHW out.
# ----------------------------------------------------------------------------
def dense_block_forward(x_nchw, params):
    num_layers = len(params)
    n, c0, h, w = x_nchw.shape
    cmid = params[0]["w1"].shape[1]
    g = params[0]["w2"].shape[1]
    c_final = c0 + num_layers * g

    x = jnp.transpose(x_nchw, (0, 2, 3, 1))        # NCHW -> NHWC
    wp = ((w + 2 + 7) // 8) * 8                    # sublane-aligned padded width

    in_specs = [pl.BlockSpec((1, h, w, c0), lambda b: (b, 0, 0, 0))]
    weight_args = []
    for p in params:
        for name in ("s1", "b1", "w1", "b2", "w2"):
            arr = p[name]
            in_specs.append(
                pl.BlockSpec(arr.shape, lambda b, nd=arr.ndim: (0,) * nd))
            weight_args.append(arr)

    out = pl.pallas_call(
        _make_dense_block_kernel(num_layers, c0, g, cmid, h, w),
        out_shape=jax.ShapeDtypeStruct((n, h, w, c_final), x.dtype),
        grid_spec=pltpu.PrefetchScalarGridSpec(
            num_scalar_prefetch=0,
            grid=(n,),
            in_specs=in_specs,
            out_specs=pl.BlockSpec((1, h, w, c_final), lambda b: (b, 0, 0, 0)),
            scratch_shapes=[pltpu.VMEM((1, h + 2, wp, cmid), jnp.float32)],
        ),
        compiler_params=pltpu.CompilerParams(
            dimension_semantics=("parallel",)),
    )(x, *weight_args)

    return jnp.transpose(out, (0, 3, 1, 2))        # NHWC -> NCHW


# ----------------------------------------------------------------------------
# Pure-JAX reference (lax.conv), used only for self-validation.
# bf16_matmul=True applies the same operand quantization as the kernel.
# ----------------------------------------------------------------------------
def _reference_forward(x_nchw, params, bf16_matmul=True):
    x = jnp.transpose(x_nchw, (0, 2, 3, 1))
    feats = [x]
    for p in params:
        cat = jnp.concatenate(feats, axis=-1)
        cin = cat.shape[-1]
        y = jnp.maximum(cat * p["s1"].reshape(1, 1, 1, cin)
                        + p["b1"].reshape(1, 1, 1, cin), 0.0)
        w1 = p["w1"][None, None, :, :]     # (1,1,cin,cmid) bf16
        w2 = p["w2_hwio"]                  # (3,3,cmid,G)   bf16
        if bf16_matmul:
            y_op = y.astype(jnp.bfloat16)
        else:
            y_op = y
            w1 = w1.astype(jnp.float32)
            w2 = w2.astype(jnp.float32)
        b = jax.lax.conv_general_dilated(
            y_op, w1, (1, 1), "VALID",
            dimension_numbers=("NHWC", "HWIO", "NHWC"),
            preferred_element_type=jnp.float32)
        z = jnp.maximum(b + p["b2"].reshape(1, 1, 1, -1), 0.0)
        z_op = z.astype(jnp.bfloat16) if bf16_matmul else z
        new = jax.lax.conv_general_dilated(
            z_op, w2, (1, 1), "SAME",
            dimension_numbers=("NHWC", "HWIO", "NHWC"),
            preferred_element_type=jnp.float32)
        feats.append(new.astype(x.dtype))
    out = jnp.concatenate(feats, axis=-1)
    return jnp.transpose(out, (0, 3, 1, 2))


if __name__ == "__main__":
    num_layers = 3
    num_input_features = 8
    bn_size = 2
    growth_rate = 8

    key = jax.random.PRNGKey(0)
    kx, kp = jax.random.split(key)
    x = jax.random.normal(kx, (2, num_input_features, 16, 16), dtype=jnp.float32)
    params = init_dense_block_params(kp, num_layers, num_input_features,
                                     bn_size, growth_rate)

    fwd = jax.jit(dense_block_forward)
    out = jax.block_until_ready(fwd(x, params))
    assert out.shape == (2, num_input_features + num_layers * growth_rate, 16, 16)

    # Tight check against a reference with identical bf16 operand quantization.
    ref_bf16 = jax.block_until_ready(_reference_forward(x, params, True))
    np.testing.assert_allclose(np.asarray(out), np.asarray(ref_bf16),
                               atol=1e-3, rtol=1e-3)

    # Loose sanity check against the full-f32 reference (bf16 operand error).
    ref_f32 = jax.block_until_ready(_reference_forward(x, params, False))
    np.testing.assert_allclose(np.asarray(out), np.asarray(ref_f32),
                               atol=5e-2, rtol=5e-2)

    print("KERNEL_OK")
</pallas_src>

<mosaic_0001>
module attributes {stable_mosaic.version = 11 : i64} {
  func.func @kernel(%arg0: i32, %arg1: memref<1x16x16x8xf32, #tpu.memory_space<vmem>>, %arg2: memref<1x8xf32, #tpu.memory_space<vmem>>, %arg3: memref<1x8xf32, #tpu.memory_space<vmem>>, %arg4: memref<8x16xbf16, #tpu.memory_space<vmem>>, %arg5: memref<1x16xf32, #tpu.memory_space<vmem>>, %arg6: memref<144x8xbf16, #tpu.memory_space<vmem>>, %arg7: memref<1x16xf32, #tpu.memory_space<vmem>>, %arg8: memref<1x16xf32, #tpu.memory_space<vmem>>, %arg9: memref<16x16xbf16, #tpu.memory_space<vmem>>, %arg10: memref<1x16xf32, #tpu.memory_space<vmem>>, %arg11: memref<144x8xbf16, #tpu.memory_space<vmem>>, %arg12: memref<1x24xf32, #tpu.memory_space<vmem>>, %arg13: memref<1x24xf32, #tpu.memory_space<vmem>>, %arg14: memref<24x16xbf16, #tpu.memory_space<vmem>>, %arg15: memref<1x16xf32, #tpu.memory_space<vmem>>, %arg16: memref<144x8xbf16, #tpu.memory_space<vmem>>, %arg17: memref<1x16x16x32xf32, #tpu.memory_space<vmem>>, %arg18: memref<1x18x24x16xf32, #tpu.memory_space<vmem>>) attributes {dimension_semantics = [#tpu.dimension_semantics<parallel>], iteration_bounds = array<i64: 2>, scalar_prefetch = 0 : i64, scratch_operands = 1 : i64, tpu.core_type = #tpu.core_type<tc>, window_params = [{transform_indices = @transform_0, window_bounds = array<i64: 1, 16, 16, 8>}, {pipeline_mode = #tpu.pipeline_mode<synchronous>, transform_indices = @transform_1, window_bounds = array<i64: 1, 8>}, {pipeline_mode = #tpu.pipeline_mode<synchronous>, transform_indices = @transform_2, window_bounds = array<i64: 1, 8>}, {pipeline_mode = #tpu.pipeline_mode<synchronous>, transform_indices = @transform_3, window_bounds = array<i64: 8, 16>}, {pipeline_mode = #tpu.pipeline_mode<synchronous>, transform_indices = @transform_4, window_bounds = array<i64: 1, 16>}, {pipeline_mode = #tpu.pipeline_mode<synchronous>, transform_indices = @transform_5, window_bounds = array<i64: 144, 8>}, {pipeline_mode = #tpu.pipeline_mode<synchronous>, transform_indices = @transform_6, window_bounds = array<i64: 1, 16>}, {pipeline_mode = #tpu.pipeline_mode<synchronous>, transform_indices = @transform_7, window_bounds = array<i64: 1, 16>}, {pipeline_mode = #tpu.pipeline_mode<synchronous>, transform_indices = @transform_8, window_bounds = array<i64: 16, 16>}, {pipeline_mode = #tpu.pipeline_mode<synchronous>, transform_indices = @transform_9, window_bounds = array<i64: 1, 16>}, {pipeline_mode = #tpu.pipeline_mode<synchronous>, transform_indices = @transform_10, window_bounds = array<i64: 144, 8>}, {pipeline_mode = #tpu.pipeline_mode<synchronous>, transform_indices = @transform_11, window_bounds = array<i64: 1, 24>}, {pipeline_mode = #tpu.pipeline_mode<synchronous>, transform_indices = @transform_12, window_bounds = array<i64: 1, 24>}, {pipeline_mode = #tpu.pipeline_mode<synchronous>, transform_indices = @transform_13, window_bounds = array<i64: 24, 16>}, {pipeline_mode = #tpu.pipeline_mode<synchronous>, transform_indices = @transform_14, window_bounds = array<i64: 1, 16>}, {pipeline_mode = #tpu.pipeline_mode<synchronous>, transform_indices = @transform_15, window_bounds = array<i64: 144, 8>}, {transform_indices = @transform_16, window_bounds = array<i64: 1, 16, 16, 32>}]} {
    %c0 = arith.constant 0 : index
    %c0_0 = arith.constant 0 : index
    %c0_1 = arith.constant 0 : index
    %c0_2 = arith.constant 0 : index
    %0 = vector.load %arg1[%c0, %c0_0, %c0_1, %c0_2] : memref<1x16x16x8xf32, #tpu.memory_space<vmem>>, vector<1x16x16x8xf32>
    %c0_3 = arith.constant 0 : index
    %c0_4 = arith.constant 0 : index
    %c0_5 = arith.constant 0 : index
    %c0_6 = arith.constant 0 : index
    %1 = vector.load %arg17[%c0_3, %c0_4, %c0_5, %c0_6] : memref<1x16x16x32xf32, #tpu.memory_space<vmem>>, vector<1x16x16x8xf32>
    tpu.vector_store %arg17[%c0_3, %c0_4, %c0_5, %c0_6], %0 {strides = array<i32>} : memref<1x16x16x32xf32, #tpu.memory_space<vmem>>, vector<1x16x16x8xf32>,
    %cst = arith.constant 0.000000e+00 : f32
    %2 = vector.broadcast %cst : f32 to vector<1x18x24x16xf32>
    %c0_7 = arith.constant 0 : index
    %c0_8 = arith.constant 0 : index
    %c0_9 = arith.constant 0 : index
    %c0_10 = arith.constant 0 : index
    %3 = vector.load %arg18[%c0_7, %c0_8, %c0_9, %c0_10] : memref<1x18x24x16xf32, #tpu.memory_space<vmem>>, vector<1x18x24x16xf32>
    tpu.vector_store %arg18[%c0_7, %c0_8, %c0_9, %c0_10], %2 {strides = array<i32>} : memref<1x18x24x16xf32, #tpu.memory_space<vmem>>, vector<1x18x24x16xf32>,
    %c0_11 = arith.constant 0 : index
    %c0_12 = arith.constant 0 : index
    %c0_13 = arith.constant 0 : index
    %c0_14 = arith.constant 0 : index
    %4 = vector.load %arg17[%c0_11, %c0_12, %c0_13, %c0_14] : memref<1x16x16x32xf32, #tpu.memory_space<vmem>>, vector<1x16x16x8xf32>
    %5 = vector.shape_cast %4 : vector<1x16x16x8xf32> to vector<256x8xf32>
    %c0_15 = arith.constant 0 : index
    %c0_16 = arith.constant 0 : index
    %6 = vector.load %arg2[%c0_15, %c0_16] : memref<1x8xf32, #tpu.memory_space<vmem>>, vector<1x8xf32>
    %7 = vector.broadcast %6 : vector<1x8xf32> to vector<256x8xf32>
    %8 = arith.mulf %5, %7 : vector<256x8xf32>
    %c0_17 = arith.constant 0 : index
    %c0_18 = arith.constant 0 : index
    %9 = vector.load %arg3[%c0_17, %c0_18] : memref<1x8xf32, #tpu.memory_space<vmem>>, vector<1x8xf32>
    %10 = vector.broadcast %9 : vector<1x8xf32> to vector<256x8xf32>
    %11 = arith.addf %8, %10 : vector<256x8xf32>
    %cst_19 = arith.constant 0.000000e+00 : f32
    %12 = vector.broadcast %cst_19 : f32 to vector<256x8xf32>
    %13 = arith.maximumf %11, %12 : vector<256x8xf32>
    %14 = arith.truncf %13 : vector<256x8xf32> to vector<256x8xbf16>
    %c0_20 = arith.constant 0 : index
    %c0_21 = arith.constant 0 : index
    %15 = vector.load %arg4[%c0_20, %c0_21] : memref<8x16xbf16, #tpu.memory_space<vmem>>, vector<8x16xbf16>
    %cst_22 = arith.constant dense<0.000000e+00> : vector<256x16xf32>
    %16 = tpu.matmul %14, %15, %cst_22 {dimension_numbers = #tpu.dot_dimension_numbers<[1], [0], [0], [1], [0, 0, 1, 1], [], []>} : vector<256x8xbf16>, vector<8x16xbf16>, vector<256x16xf32> -> vector<256x16xf32>
    %c0_23 = arith.constant 0 : index
    %c0_24 = arith.constant 0 : index
    %17 = vector.load %arg5[%c0_23, %c0_24] : memref<1x16xf32, #tpu.memory_space<vmem>>, vector<1x16xf32>
    %18 = vector.broadcast %17 : vector<1x16xf32> to vector<256x16xf32>
    %19 = arith.addf %16, %18 : vector<256x16xf32>
    %cst_25 = arith.constant 0.000000e+00 : f32
    %20 = vector.broadcast %cst_25 : f32 to vector<256x16xf32>
    %21 = arith.maximumf %19, %20 : vector<256x16xf32>
    %22 = vector.shape_cast %21 : vector<256x16xf32> to vector<1x16x16x16xf32>
    %c0_26 = arith.constant 0 : index
    %c1 = arith.constant 1 : index
    %c1_27 = arith.constant 1 : index
    %c0_28 = arith.constant 0 : index
    %23 = vector.load %arg18[%c0_26, %c1, %c1_27, %c0_28] : memref<1x18x24x16xf32, #tpu.memory_space<vmem>>, vector<1x16x16x16xf32>
    tpu.vector_store %arg18[%c0_26, %c1, %c1_27, %c0_28], %22 {strides = array<i32>} : memref<1x18x24x16xf32, #tpu.memory_space<vmem>>, vector<1x16x16x16xf32>,
    %c0_29 = arith.constant 0 : index
    %c0_30 = arith.constant 0 : index
    %c0_31 = arith.constant 0 : index
    %c0_32 = arith.constant 0 : index
    %24 = vector.load %arg18[%c0_29, %c0_30, %c0_31, %c0_32] : memref<1x18x24x16xf32, #tpu.memory_space<vmem>>, vector<1x16x16x16xf32>
    %c0_33 = arith.constant 0 : index
    %c0_34 = arith.constant 0 : index
    %c1_35 = arith.constant 1 : index
    %c0_36 = arith.constant 0 : index
    %25 = vector.load %arg18[%c0_33, %c0_34, %c1_35, %c0_36] : memref<1x18x24x16xf32, #tpu.memory_space<vmem>>, vector<1x16x16x16xf32>
    %c0_37 = arith.constant 0 : index
    %c0_38 = arith.constant 0 : index
    %c2 = arith.constant 2 : index
    %c0_39 = arith.constant 0 : index
    %26 = vector.load %arg18[%c0_37, %c0_38, %c2, %c0_39] : memref<1x18x24x16xf32, #tpu.memory_space<vmem>>, vector<1x16x16x16xf32>
    %c0_40 = arith.constant 0 : index
    %c1_41 = arith.constant 1 : index
    %c0_42 = arith.constant 0 : index
    %c0_43 = arith.constant 0 : index
    %27 = vector.load %arg18[%c0_40, %c1_41, %c0_42, %c0_43] : memref<1x18x24x16xf32, #tpu.memory_space<vmem>>, vector<1x16x16x16xf32>
    %c0_44 = arith.constant 0 : index
    %c1_45 = arith.constant 1 : index
    %c1_46 = arith.constant 1 : index
    %c0_47 = arith.constant 0 : index
    %28 = vector.load %arg18[%c0_44, %c1_45, %c1_46, %c0_47] : memref<1x18x24x16xf32, #tpu.memory_space<vmem>>, vector<1x16x16x16xf32>
    %c0_48 = arith.constant 0 : index
    %c1_49 = arith.constant 1 : index
    %c2_50 = arith.constant 2 : index
    %c0_51 = arith.constant 0 : index
    %29 = vector.load %arg18[%c0_48, %c1_49, %c2_50, %c0_51] : memref<1x18x24x16xf32, #tpu.memory_space<vmem>>, vector<1x16x16x16xf32>
    %c0_52 = arith.constant 0 : index
    %c2_53 = arith.constant 2 : index
    %c0_54 = arith.constant 0 : index
    %c0_55 = arith.constant 0 : index
    %30 = vector.load %arg18[%c0_52, %c2_53, %c0_54, %c0_55] : memref<1x18x24x16xf32, #tpu.memory_space<vmem>>, vector<1x16x16x16xf32>
    %c0_56 = arith.constant 0 : index
    %c2_57 = arith.constant 2 : index
    %c1_58 = arith.constant 1 : index
    %c0_59 = arith.constant 0 : index
    %31 = vector.load %arg18[%c0_56, %c2_57, %c1_58, %c0_59] : memref<1x18x24x16xf32, #tpu.memory_space<vmem>>, vector<1x16x16x16xf32>
    %c0_60 = arith.constant 0 : index
    %c2_61 = arith.constant 2 : index
    %c2_62 = arith.constant 2 : index
    %c0_63 = arith.constant 0 : index
    %32 = vector.load %arg18[%c0_60, %c2_61, %c2_62, %c0_63] : memref<1x18x24x16xf32, #tpu.memory_space<vmem>>, vector<1x16x16x16xf32>
    %33 = tpu.concatenate %24, %25, %26, %27, %28, %29, %30, %31, %32 in 3 : vector<1x16x16x16xf32>, vector<1x16x16x16xf32>, vector<1x16x16x16xf32>, vector<1x16x16x16xf32>, vector<1x16x16x16xf32>, vector<1x16x16x16xf32>, vector<1x16x16x16xf32>, vector<1x16x16x16xf32>, vector<1x16x16x16xf32> -> vector<1x16x16x144xf32>
    %34 = vector.shape_cast %33 : vector<1x16x16x144xf32> to vector<256x144xf32>
    %35 = arith.truncf %34 : vector<256x144xf32> to vector<256x144xbf16>
    %c0_64 = arith.constant 0 : index
    %c0_65 = arith.constant 0 : index
    %36 = vector.load %arg6[%c0_64, %c0_65] : memref<144x8xbf16, #tpu.memory_space<vmem>>, vector<144x8xbf16>
    %cst_66 = arith.constant dense<0.000000e+00> : vector<256x8xf32>
    %37 = tpu.matmul %35, %36, %cst_66 {dimension_numbers = #tpu.dot_dimension_numbers<[1], [0], [0], [1], [0, 0, 1, 1], [], []>} : vector<256x144xbf16>, vector<144x8xbf16>, vector<256x8xf32> -> vector<256x8xf32>
    %38 = vector.shape_cast %37 : vector<256x8xf32> to vector<1x16x16x8xf32>
    %c0_67 = arith.constant 0 : index
    %c0_68 = arith.constant 0 : index
    %c0_69 = arith.constant 0 : index
    %c8 = arith.constant 8 : index
    %39 = vector.load %arg17[%c0_67, %c0_68, %c0_69, %c8] : memref<1x16x16x32xf32, #tpu.memory_space<vmem>>, vector<1x16x16x8xf32>
    tpu.vector_store %arg17[%c0_67, %c0_68, %c0_69, %c8], %38 {strides = array<i32>} : memref<1x16x16x32xf32, #tpu.memory_space<vmem>>, vector<1x16x16x8xf32>,
    %c0_70 = arith.constant 0 : index
    %c0_71 = arith.constant 0 : index
    %c0_72 = arith.constant 0 : index
    %c0_73 = arith.constant 0 : index
    %40 = vector.load %arg17[%c0_70, %c0_71, %c0_72, %c0_73] : memref<1x16x16x32xf32, #tpu.memory_space<vmem>>, vector<1x16x16x16xf32>
    %41 = vector.shape_cast %40 : vector<1x16x16x16xf32> to vector<256x16xf32>
    %c0_74 = arith.constant 0 : index
    %c0_75 = arith.constant 0 : index
    %42 = vector.load %arg7[%c0_74, %c0_75] : memref<1x16xf32, #tpu.memory_space<vmem>>, vector<1x16xf32>
    %43 = vector.broadcast %42 : vector<1x16xf32> to vector<256x16xf32>
    %44 = arith.mulf %41, %43 : vector<256x16xf32>
    %c0_76 = arith.constant 0 : index
    %c0_77 = arith.constant 0 : index
    %45 = vector.load %arg8[%c0_76, %c0_77] : memref<1x16xf32, #tpu.memory_space<vmem>>, vector<1x16xf32>
    %46 = vector.broadcast %45 : vector<1x16xf32> to vector<256x16xf32>
    %47 = arith.addf %44, %46 : vector<256x16xf32>
    %cst_78 = arith.constant 0.000000e+00 : f32
    %48 = vector.broadcast %cst_78 : f32 to vector<256x16xf32>
    %49 = arith.maximumf %47, %48 : vector<256x16xf32>
    %50 = arith.truncf %49 : vector<256x16xf32> to vector<256x16xbf16>
    %c0_79 = arith.constant 0 : index
    %c0_80 = arith.constant 0 : index
    %51 = vector.load %arg9[%c0_79, %c0_80] : memref<16x16xbf16, #tpu.memory_space<vmem>>, vector<16x16xbf16>
    %cst_81 = arith.constant dense<0.000000e+00> : vector<256x16xf32>
    %52 = tpu.matmul %50, %51, %cst_81 {dimension_numbers = #tpu.dot_dimension_numbers<[1], [0], [0], [1], [0, 0, 1, 1], [], []>} : vector<256x16xbf16>, vector<16x16xbf16>, vector<256x16xf32> -> vector<256x16xf32>
    %c0_82 = arith.constant 0 : index
    %c0_83 = arith.constant 0 : index
    %53 = vector.load %arg10[%c0_82, %c0_83] : memref<1x16xf32, #tpu.memory_space<vmem>>, vector<1x16xf32>
    %54 = vector.broadcast %53 : vector<1x16xf32> to vector<256x16xf32>
    %55 = arith.addf %52, %54 : vector<256x16xf32>
    %cst_84 = arith.constant 0.000000e+00 : f32
    %56 = vector.broadcast %cst_84 : f32 to vector<256x16xf32>
    %57 = arith.maximumf %55, %56 : vector<256x16xf32>
    %58 = vector.shape_cast %57 : vector<256x16xf32> to vector<1x16x16x16xf32>
    %c0_85 = arith.constant 0 : index
    %c1_86 = arith.constant 1 : index
    %c1_87 = arith.constant 1 : index
    %c0_88 = arith.constant 0 : index
    %59 = vector.load %arg18[%c0_85, %c1_86, %c1_87, %c0_88] : memref<1x18x24x16xf32, #tpu.memory_space<vmem>>, vector<1x16x16x16xf32>
    tpu.vector_store %arg18[%c0_85, %c1_86, %c1_87, %c0_88], %58 {strides = array<i32>} : memref<1x18x24x16xf32, #tpu.memory_space<vmem>>, vector<1x16x16x16xf32>,
    %c0_89 = arith.constant 0 : index
    %c0_90 = arith.constant 0 : index
    %c0_91 = arith.constant 0 : index
    %c0_92 = arith.constant 0 : index
    %60 = vector.load %arg18[%c0_89, %c0_90, %c0_91, %c0_92] : memref<1x18x24x16xf32, #tpu.memory_space<vmem>>, vector<1x16x16x16xf32>
    %c0_93 = arith.constant 0 : index
    %c0_94 = arith.constant 0 : index
    %c1_95 = arith.constant 1 : index
    %c0_96 = arith.constant 0 : index
    %61 = vector.load %arg18[%c0_93, %c0_94, %c1_95, %c0_96] : memref<1x18x24x16xf32, #tpu.memory_space<vmem>>, vector<1x16x16x16xf32>
    %c0_97 = arith.constant 0 : index
    %c0_98 = arith.constant 0 : index
    %c2_99 = arith.constant 2 : index
    %c0_100 = arith.constant 0 : index
    %62 = vector.load %arg18[%c0_97, %c0_98, %c2_99, %c0_100] : memref<1x18x24x16xf32, #tpu.memory_space<vmem>>, vector<1x16x16x16xf32>
    %c0_101 = arith.constant 0 : index
    %c1_102 = arith.constant 1 : index
    %c0_103 = arith.constant 0 : index
    %c0_104 = arith.constant 0 : index
    %63 = vector.load %arg18[%c0_101, %c1_102, %c0_103, %c0_104] : memref<1x18x24x16xf32, #tpu.memory_space<vmem>>, vector<1x16x16x16xf32>
    %c0_105 = arith.constant 0 : index
    %c1_106 = arith.constant 1 : index
    %c1_107 = arith.constant 1 : index
    %c0_108 = arith.constant 0 : index
    %64 = vector.load %arg18[%c0_105, %c1_106, %c1_107, %c0_108] : memref<1x18x24x16xf32, #tpu.memory_space<vmem>>, vector<1x16x16x16xf32>
    %c0_109 = arith.constant 0 : index
    %c1_110 = arith.constant 1 : index
    %c2_111 = arith.constant 2 : index
    %c0_112 = arith.constant 0 : index
    %65 = vector.load %arg18[%c0_109, %c1_110, %c2_111, %c0_112] : memref<1x18x24x16xf32, #tpu.memory_space<vmem>>, vector<1x16x16x16xf32>
    %c0_113 = arith.constant 0 : index
    %c2_114 = arith.constant 2 : index
    %c0_115 = arith.constant 0 : index
    %c0_116 = arith.constant 0 : index
    %66 = vector.load %arg18[%c0_113, %c2_114, %c0_115, %c0_116] : memref<1x18x24x16xf32, #tpu.memory_space<vmem>>, vector<1x16x16x16xf32>
    %c0_117 = arith.constant 0 : index
    %c2_118 = arith.constant 2 : index
    %c1_119 = arith.constant 1 : index
    %c0_120 = arith.constant 0 : index
    %67 = vector.load %arg18[%c0_117, %c2_118, %c1_119, %c0_120] : memref<1x18x24x16xf32, #tpu.memory_space<vmem>>, vector<1x16x16x16xf32>
    %c0_121 = arith.constant 0 : index
    %c2_122 = arith.constant 2 : index
    %c2_123 = arith.constant 2 : index
    %c0_124 = arith.constant 0 : index
    %68 = vector.load %arg18[%c0_121, %c2_122, %c2_123, %c0_124] : memref<1x18x24x16xf32, #tpu.memory_space<vmem>>, vector<1x16x16x16xf32>
    %69 = tpu.concatenate %60, %61, %62, %63, %64, %65, %66, %67, %68 in 3 : vector<1x16x16x16xf32>, vector<1x16x16x16xf32>, vector<1x16x16x16xf32>, vector<1x16x16x16xf32>, vector<1x16x16x16xf32>, vector<1x16x16x16xf32>, vector<1x16x16x16xf32>, vector<1x16x16x16xf32>, vector<1x16x16x16xf32> -> vector<1x16x16x144xf32>
    %70 = vector.shape_cast %69 : vector<1x16x16x144xf32> to vector<256x144xf32>
    %71 = arith.truncf %70 : vector<256x144xf32> to vector<256x144xbf16>
    %c0_125 = arith.constant 0 : index
    %c0_126 = arith.constant 0 : index
    %72 = vector.load %arg11[%c0_125, %c0_126] : memref<144x8xbf16, #tpu.memory_space<vmem>>, vector<144x8xbf16>
    %cst_127 = arith.constant dense<0.000000e+00> : vector<256x8xf32>
    %73 = tpu.matmul %71, %72, %cst_127 {dimension_numbers = #tpu.dot_dimension_numbers<[1], [0], [0], [1], [0, 0, 1, 1], [], []>} : vector<256x144xbf16>, vector<144x8xbf16>, vector<256x8xf32> -> vector<256x8xf32>
    %74 = vector.shape_cast %73 : vector<256x8xf32> to vector<1x16x16x8xf32>
    %c0_128 = arith.constant 0 : index
    %c0_129 = arith.constant 0 : index
    %c0_130 = arith.constant 0 : index
    %c16 = arith.constant 16 : index
    %75 = vector.load %arg17[%c0_128, %c0_129, %c0_130, %c16] : memref<1x16x16x32xf32, #tpu.memory_space<vmem>>, vector<1x16x16x8xf32>
    tpu.vector_store %arg17[%c0_128, %c0_129, %c0_130, %c16], %74 {strides = array<i32>} : memref<1x16x16x32xf32, #tpu.memory_space<vmem>>, vector<1x16x16x8xf32>,
    %c0_131 = arith.constant 0 : index
    %c0_132 = arith.constant 0 : index
    %c0_133 = arith.constant 0 : index
    %c0_134 = arith.constant 0 : index
    %76 = vector.load %arg17[%c0_131, %c0_132, %c0_133, %c0_134] : memref<1x16x16x32xf32, #tpu.memory_space<vmem>>, vector<1x16x16x24xf32>
    %77 = vector.shape_cast %76 : vector<1x16x16x24xf32> to vector<256x24xf32>
    %c0_135 = arith.constant 0 : index
    %c0_136 = arith.constant 0 : index
    %78 = vector.load %arg12[%c0_135, %c0_136] : memref<1x24xf32, #tpu.memory_space<vmem>>, vector<1x24xf32>
    %79 = vector.broadcast %78 : vector<1x24xf32> to vector<256x24xf32>
    %80 = arith.mulf %77, %79 : vector<256x24xf32>
    %c0_137 = arith.constant 0 : index
    %c0_138 = arith.constant 0 : index
    %81 = vector.load %arg13[%c0_137, %c0_138] : memref<1x24xf32, #tpu.memory_space<vmem>>, vector<1x24xf32>
    %82 = vector.broadcast %81 : vector<1x24xf32> to vector<256x24xf32>
    %83 = arith.addf %80, %82 : vector<256x24xf32>
    %cst_139 = arith.constant 0.000000e+00 : f32
    %84 = vector.broadcast %cst_139 : f32 to vector<256x24xf32>
    %85 = arith.maximumf %83, %84 : vector<256x24xf32>
    %86 = arith.truncf %85 : vector<256x24xf32> to vector<256x24xbf16>
    %c0_140 = arith.constant 0 : index
    %c0_141 = arith.constant 0 : index
    %87 = vector.load %arg14[%c0_140, %c0_141] : memref<24x16xbf16, #tpu.memory_space<vmem>>, vector<24x16xbf16>
    %cst_142 = arith.constant dense<0.000000e+00> : vector<256x16xf32>
    %88 = tpu.matmul %86, %87, %cst_142 {dimension_numbers = #tpu.dot_dimension_numbers<[1], [0], [0], [1], [0, 0, 1, 1], [], []>} : vector<256x24xbf16>, vector<24x16xbf16>, vector<256x16xf32> -> vector<256x16xf32>
    %c0_143 = arith.constant 0 : index
    %c0_144 = arith.constant 0 : index
    %89 = vector.load %arg15[%c0_143, %c0_144] : memref<1x16xf32, #tpu.memory_space<vmem>>, vector<1x16xf32>
    %90 = vector.broadcast %89 : vector<1x16xf32> to vector<256x16xf32>
    %91 = arith.addf %88, %90 : vector<256x16xf32>
    %cst_145 = arith.constant 0.000000e+00 : f32
    %92 = vector.broadcast %cst_145 : f32 to vector<256x16xf32>
    %93 = arith.maximumf %91, %92 : vector<256x16xf32>
    %94 = vector.shape_cast %93 : vector<256x16xf32> to vector<1x16x16x16xf32>
    %c0_146 = arith.constant 0 : index
    %c1_147 = arith.constant 1 : index
    %c1_148 = arith.constant 1 : index
    %c0_149 = arith.constant 0 : index
    %95 = vector.load %arg18[%c0_146, %c1_147, %c1_148, %c0_149] : memref<1x18x24x16xf32, #tpu.memory_space<vmem>>, vector<1x16x16x16xf32>
    tpu.vector_store %arg18[%c0_146, %c1_147, %c1_148, %c0_149], %94 {strides = array<i32>} : memref<1x18x24x16xf32, #tpu.memory_space<vmem>>, vector<1x16x16x16xf32>,
    %c0_150 = arith.constant 0 : index
    %c0_151 = arith.constant 0 : index
    %c0_152 = arith.constant 0 : index
    %c0_153 = arith.constant 0 : index
    %96 = vector.load %arg18[%c0_150, %c0_151, %c0_152, %c0_153] : memref<1x18x24x16xf32, #tpu.memory_space<vmem>>, vector<1x16x16x16xf32>
    %c0_154 = arith.constant 0 : index
    %c0_155 = arith.constant 0 : index
    %c1_156 = arith.constant 1 : index
    %c0_157 = arith.constant 0 : index
    %97 = vector.load %arg18[%c0_154, %c0_155, %c1_156, %c0_157] : memref<1x18x24x16xf32, #tpu.memory_space<vmem>>, vector<1x16x16x16xf32>
    %c0_158 = arith.constant 0 : index
    %c0_159 = arith.constant 0 : index
    %c2_160 = arith.constant 2 : index
    %c0_161 = arith.constant 0 : index
    %98 = vector.load %arg18[%c0_158, %c0_159, %c2_160, %c0_161] : memref<1x18x24x16xf32, #tpu.memory_space<vmem>>, vector<1x16x16x16xf32>
    %c0_162 = arith.constant 0 : index
    %c1_163 = arith.constant 1 : index
    %c0_164 = arith.constant 0 : index
    %c0_165 = arith.constant 0 : index
    %99 = vector.load %arg18[%c0_162, %c1_163, %c0_164, %c0_165] : memref<1x18x24x16xf32, #tpu.memory_space<vmem>>, vector<1x16x16x16xf32>
    %c0_166 = arith.constant 0 : index
    %c1_167 = arith.constant 1 : index
    %c1_168 = arith.constant 1 : index
    %c0_169 = arith.constant 0 : index
    %100 = vector.load %arg18[%c0_166, %c1_167, %c1_168, %c0_169] : memref<1x18x24x16xf32, #tpu.memory_space<vmem>>, vector<1x16x16x16xf32>
    %c0_170 = arith.constant 0 : index
    %c1_171 = arith.constant 1 : index
    %c2_172 = arith.constant 2 : index
    %c0_173 = arith.constant 0 : index
    %101 = vector.load %arg18[%c0_170, %c1_171, %c2_172, %c0_173] : memref<1x18x24x16xf32, #tpu.memory_space<vmem>>, vector<1x16x16x16xf32>
    %c0_174 = arith.constant 0 : index
    %c2_175 = arith.constant 2 : index
    %c0_176 = arith.constant 0 : index
    %c0_177 = arith.constant 0 : index
    %102 = vector.load %arg18[%c0_174, %c2_175, %c0_176, %c0_177] : memref<1x18x24x16xf32, #tpu.memory_space<vmem>>, vector<1x16x16x16xf32>
    %c0_178 = arith.constant 0 : index
    %c2_179 = arith.constant 2 : index
    %c1_180 = arith.constant 1 : index
    %c0_181 = arith.constant 0 : index
    %103 = vector.load %arg18[%c0_178, %c2_179, %c1_180, %c0_181] : memref<1x18x24x16xf32, #tpu.memory_space<vmem>>, vector<1x16x16x16xf32>
    %c0_182 = arith.constant 0 : index
    %c2_183 = arith.constant 2 : index
    %c2_184 = arith.constant 2 : index
    %c0_185 = arith.constant 0 : index
    %104 = vector.load %arg18[%c0_182, %c2_183, %c2_184, %c0_185] : memref<1x18x24x16xf32, #tpu.memory_space<vmem>>, vector<1x16x16x16xf32>
    %105 = tpu.concatenate %96, %97, %98, %99, %100, %101, %102, %103, %104 in 3 : vector<1x16x16x16xf32>, vector<1x16x16x16xf32>, vector<1x16x16x16xf32>, vector<1x16x16x16xf32>, vector<1x16x16x16xf32>, vector<1x16x16x16xf32>, vector<1x16x16x16xf32>, vector<1x16x16x16xf32>, vector<1x16x16x16xf32> -> vector<1x16x16x144xf32>
    %106 = vector.shape_cast %105 : vector<1x16x16x144xf32> to vector<256x144xf32>
    %107 = arith.truncf %106 : vector<256x144xf32> to vector<256x144xbf16>
    %c0_186 = arith.constant 0 : index
    %c0_187 = arith.constant 0 : index
    %108 = vector.load %arg16[%c0_186, %c0_187] : memref<144x8xbf16, #tpu.memory_space<vmem>>, vector<144x8xbf16>
    %cst_188 = arith.constant dense<0.000000e+00> : vector<256x8xf32>
    %109 = tpu.matmul %107, %108, %cst_188 {dimension_numbers = #tpu.dot_dimension_numbers<[1], [0], [0], [1], [0, 0, 1, 1], [], []>} : vector<256x144xbf16>, vector<144x8xbf16>, vector<256x8xf32> -> vector<256x8xf32>
    %110 = vector.shape_cast %109 : vector<256x8xf32> to vector<1x16x16x8xf32>
    %c0_189 = arith.constant 0 : index
    %c0_190 = arith.constant 0 : index
    %c0_191 = arith.constant 0 : index
    %c24 = arith.constant 24 : index
    %111 = vector.load %arg17[%c0_189, %c0_190, %c0_191, %c24] : memref<1x16x16x32xf32, #tpu.memory_space<vmem>>, vector<1x16x16x8xf32>
    tpu.vector_store %arg17[%c0_189, %c0_190, %c0_191, %c24], %110 {strides = array<i32>} : memref<1x16x16x32xf32, #tpu.memory_space<vmem>>, vector<1x16x16x8xf32>,
    return
  }
  func.func @transform_0(%arg0: i32) -> (i32, i32, i32, i32) {
    %c0_i32 = arith.constant 0 : i32
    %c0_i32_0 = arith.constant 0 : i32
    %c0_i32_1 = arith.constant 0 : i32
    %c0_i32_2 = arith.constant 0 : i32
    return %arg0, %c0_i32, %c0_i32_0, %c0_i32_1 : i32, i32, i32, i32
  }
  func.func @transform_1(%arg0: i32) -> (i32, i32) {
    %c0_i32 = arith.constant 0 : i32
    %c0_i32_0 = arith.constant 0 : i32
    %c0_i32_1 = arith.constant 0 : i32
    return %c0_i32, %c0_i32_0 : i32, i32
  }
  func.func @transform_2(%arg0: i32) -> (i32, i32) {
    %c0_i32 = arith.constant 0 : i32
    %c0_i32_0 = arith.constant 0 : i32
    %c0_i32_1 = arith.constant 0 : i32
    return %c0_i32, %c0_i32_0 : i32, i32
  }
  func.func @transform_3(%arg0: i32) -> (i32, i32) {
    %c0_i32 = arith.constant 0 : i32
    %c0_i32_0 = arith.constant 0 : i32
    %c0_i32_1 = arith.constant 0 : i32
    return %c0_i32, %c0_i32_0 : i32, i32
  }
  func.func @transform_4(%arg0: i32) -> (i32, i32) {
    %c0_i32 = arith.constant 0 : i32
    %c0_i32_0 = arith.constant 0 : i32
    %c0_i32_1 = arith.constant 0 : i32
    return %c0_i32, %c0_i32_0 : i32, i32
  }
  func.func @transform_5(%arg0: i32) -> (i32, i32) {
    %c0_i32 = arith.constant 0 : i32
    %c0_i32_0 = arith.constant 0 : i32
    %c0_i32_1 = arith.constant 0 : i32
    return %c0_i32, %c0_i32_0 : i32, i32
  }
  func.func @transform_6(%arg0: i32) -> (i32, i32) {
    %c0_i32 = arith.constant 0 : i32
    %c0_i32_0 = arith.constant 0 : i32
    %c0_i32_1 = arith.constant 0 : i32
    return %c0_i32, %c0_i32_0 : i32, i32
  }
  func.func @transform_7(%arg0: i32) -> (i32, i32) {
    %c0_i32 = arith.constant 0 : i32
    %c0_i32_0 = arith.constant 0 : i32
    %c0_i32_1 = arith.constant 0 : i32
    return %c0_i32, %c0_i32_0 : i32, i32
  }
  func.func @transform_8(%arg0: i32) -> (i32, i32) {
    %c0_i32 = arith.constant 0 : i32
    %c0_i32_0 = arith.constant 0 : i32
    %c0_i32_1 = arith.constant 0 : i32
    return %c0_i32, %c0_i32_0 : i32, i32
  }
  func.func @transform_9(%arg0: i32) -> (i32, i32) {
    %c0_i32 = arith.constant 0 : i32
    %c0_i32_0 = arith.constant 0 : i32
    %c0_i32_1 = arith.constant 0 : i32
    return %c0_i32, %c0_i32_0 : i32, i32
  }
  func.func @transform_10(%arg0: i32) -> (i32, i32) {
    %c0_i32 = arith.constant 0 : i32
    %c0_i32_0 = arith.constant 0 : i32
    %c0_i32_1 = arith.constant 0 : i32
    return %c0_i32, %c0_i32_0 : i32, i32
  }
  func.func @transform_11(%arg0: i32) -> (i32, i32) {
    %c0_i32 = arith.constant 0 : i32
    %c0_i32_0 = arith.constant 0 : i32
    %c0_i32_1 = arith.constant 0 : i32
    return %c0_i32, %c0_i32_0 : i32, i32
  }
  func.func @transform_12(%arg0: i32) -> (i32, i32) {
    %c0_i32 = arith.constant 0 : i32
    %c0_i32_0 = arith.constant 0 : i32
    %c0_i32_1 = arith.constant 0 : i32
    return %c0_i32, %c0_i32_0 : i32, i32
  }
  func.func @transform_13(%arg0: i32) -> (i32, i32) {
    %c0_i32 = arith.constant 0 : i32
    %c0_i32_0 = arith.constant 0 : i32
    %c0_i32_1 = arith.constant 0 : i32
    return %c0_i32, %c0_i32_0 : i32, i32
  }
  func.func @transform_14(%arg0: i32) -> (i32, i32) {
    %c0_i32 = arith.constant 0 : i32
    %c0_i32_0 = arith.constant 0 : i32
    %c0_i32_1 = arith.constant 0 : i32
    return %c0_i32, %c0_i32_0 : i32, i32
  }
  func.func @transform_15(%arg0: i32) -> (i32, i32) {
    %c0_i32 = arith.constant 0 : i32
    %c0_i32_0 = arith.constant 0 : i32
    %c0_i32_1 = arith.constant 0 : i32
    return %c0_i32, %c0_i32_0 : i32, i32
  }
  func.func @transform_16(%arg0: i32) -> (i32, i32, i32, i32) {
    %c0_i32 = arith.constant 0 : i32
    %c0_i32_0 = arith.constant 0 : i32
    %c0_i32_1 = arith.constant 0 : i32
    %c0_i32_2 = arith.constant 0 : i32
    return %arg0, %c0_i32, %c0_i32_0, %c0_i32_1 : i32, i32, i32, i32
  }
}

</mosaic_0001>

<llo_original>
// kernel: dense_block_forward.1
$region0: #{dense_block_forward.1}
  #allocation0 [shape = 'u32[]', space=smem, size = 0x4, offset = 0x4, fixed_abs, tag = 'smem constant byte address 0x4 - core index']
  #allocation1 [shape = 'u32[72,128]{1,0:T(1,128)}', space=vmem, size = 0x9000, scoped, tag = 'internal scratch']
  #allocation2 [shape = 'f32[1,18,24,16]{3,2,1,0:T(8,128)}', space=vmem, size = 0x36000, scoped, tag = 'scratch operand']
  %s0 = inlined_call_operand.vmem [shape: f32[2,16,16,8], index: 0, kind: input, shape index: {}]
  %s1 = inlined_call_operand.vmem [shape: f32[1,8], index: 1, kind: input, shape index: {}]
  %s2 = inlined_call_operand.vmem [shape: f32[1,8], index: 2, kind: input, shape index: {}]
  %s3 = inlined_call_operand.vmem [shape: bf16[8,16], index: 3, kind: input, shape index: {}]
  %s4 = inlined_call_operand.vmem [shape: f32[1,16], index: 4, kind: input, shape index: {}]
  %s5 = inlined_call_operand.vmem [shape: bf16[144,8], index: 5, kind: input, shape index: {}]
  %s6 = inlined_call_operand.vmem [shape: f32[1,16], index: 6, kind: input, shape index: {}]
  %s7 = inlined_call_operand.vmem [shape: f32[1,16], index: 7, kind: input, shape index: {}]
  %s8 = inlined_call_operand.vmem [shape: bf16[16,16], index: 8, kind: input, shape index: {}]
  %s9 = inlined_call_operand.vmem [shape: f32[1,16], index: 9, kind: input, shape index: {}]
  %s10 = inlined_call_operand.vmem [shape: bf16[144,8], index: 10, kind: input, shape index: {}]
  %s11 = inlined_call_operand.vmem [shape: f32[1,24], index: 11, kind: input, shape index: {}]
  %s12 = inlined_call_operand.vmem [shape: f32[1,24], index: 12, kind: input, shape index: {}]
  %s13 = inlined_call_operand.vmem [shape: bf16[24,16], index: 13, kind: input, shape index: {}]
  %s14 = inlined_call_operand.vmem [shape: f32[1,16], index: 14, kind: input, shape index: {}]
  %s15 = inlined_call_operand.vmem [shape: bf16[144,8], index: 15, kind: input, shape index: {}]
  %s16 = inlined_call_operand.hbm [shape: f32[2,16,16,32], index: 16, kind: output, shape index: {}]
  %s17 = sld [smem:[#allocation0]]
  $region97: #{dense_block_forward.1} parent=0
    _
  %s19 = ssub.s32 1, %s17
  %s20 = scalar_select 0, %s19, %s17
  $region1: #{dense_block_forward.1} parent=0
    #allocation3 [shape = 'u8[262144]{0}', space=vmem, size = 0x40000, scoped, tag = 'output window, operand 0']
    #allocation4 [shape = 's32[2]{0}', space=sflag, size = 0x8, scoped, tag = 'scoped memory for dense_block_forward.1']
    %21 = vsyncpa [#allocation4], 0
    %s22 = scalar_lea.sflag [#allocation4], 1
    %23 = vsyncpa %s22, 0
    loop: start=0, step=1, limit=4
    $region2: #{dense_block_forward.1} parent=1 // loop_pre_header
      _
    $region3: #{dense_block_forward.1} parent=1 // loop_header
      %s25 = sphi 0, %s29
      %p26 = scmp.ge.s32.totalorder %s25, 4
      %s35 = sphi 0, %s37
      %s38 = sphi 0, %s35
      %s39 = sphi 0, %s38
      %s55 = sphi 0, %s39
      %s59 = sphi 0, %s59
      %s61 = sphi 0, %s59
      %s62 = sphi 0, %s61
      %s76 = sphi 0, %s62
      %s80 = sphi 0, %s80
      %s82 = sphi 0, %s80
      %s83 = sphi 0, %s82
      %s97 = sphi 0, %s83
      %s101 = sphi 0, %s101
      %s103 = sphi 0, %s101
      %s104 = sphi 0, %s103
      %s118 = sphi 0, %s104
      %s122 = sphi 0, %s122
      %s124 = sphi 0, %s122
      %s125 = sphi 0, %s124
      %s139 = sphi 0, %s125
      %s143 = sphi 0, %s143
      %s145 = sphi 0, %s143
      %s146 = sphi 0, %s145
      %s160 = sphi 0, %s146
      %s164 = sphi 0, %s164
      %s166 = sphi 0, %s164
      %s167 = sphi 0, %s166
      %s181 = sphi 0, %s167
      %s185 = sphi 0, %s185
      %s187 = sphi 0, %s185
      %s188 = sphi 0, %s187
      %s202 = sphi 0, %s188
      %s206 = sphi 0, %s206
      %s208 = sphi 0, %s206
      %s209 = sphi 0, %s208
      %s223 = sphi 0, %s209
      %s227 = sphi 0, %s227
      %s229 = sphi 0, %s227
      %s230 = sphi 0, %s229
      %s244 = sphi 0, %s230
      %s248 = sphi 0, %s248
      %s250 = sphi 0, %s248
      %s251 = sphi 0, %s250
      %s265 = sphi 0, %s251
      %s269 = sphi 0, %s269
      %s271 = sphi 0, %s269
      %s272 = sphi 0, %s271
      %s286 = sphi 0, %s272
      %s290 = sphi 0, %s290
      %s292 = sphi 0, %s290
      %s293 = sphi 0, %s292
      %s307 = sphi 0, %s293
      %s311 = sphi 0, %s311
      %s313 = sphi 0, %s311
      %s314 = sphi 0, %s313
      %s328 = sphi 0, %s314
      %s332 = sphi 0, %s332
      %s334 = sphi 0, %s332
      %s335 = sphi 0, %s334
      %s349 = sphi 0, %s335
      %s353 = sphi 0, %s353
      %s355 = sphi 0, %s353
      %s356 = sphi 0, %s355
      %s370 = sphi 0, %s356
      %s376 = sphi 0, %s378
      %s379 = sphi 0, %s376
      %s380 = sphi 0, %s379
      %s396 = sphi 0, %s380
    $region4: #{dense_block_forward.1} parent=1 // loop_header_branch
      %28 = sbr.rel (%p26) target = $region8
    $region5: #{dense_block_forward.1} parent=1 // loop_body
      %s30 = ssub.s32 %s25, 1
      %s31 = ssub.s32 %s25, 2
      %s32 = sadd.s32 %s25, 1
      %s33 = ssub.s32 %s25, %s32
      %p34 = scmp.eq.s32.totalorder %s33, 0
      %s36 = sadd.s32 %s35, 1
      %s37 = scalar_select %p34, %s35, %s36
      %p40 = pneg %p34
      %p41 = scmp.eq.s32.totalorder %s25, 1
      %p42 = por %p40, %p41
      %p43 = scmp.ne.s32.totalorder %s35, %s38
      %p44 = scmp.eq.s32.totalorder %s25, 0
      %p45 = por %p43, %p44
      %p46 = scmp.ne.s32.totalorder %s35, %s38
      %p47 = scmp.eq.s32.totalorder %s30, 1
      %p48 = por %p46, %p47
      %p49 = scmp.ne.s32.totalorder %s38, %s39
      %p50 = scmp.eq.s32.totalorder %s30, 0
      %p51 = por %p49, %p50
      %p52 = scmp.ne.s32.totalorder %s38, %s39
      %p53 = scmp.eq.s32.totalorder %s31, 1
      %p54 = por %p52, %p53
      %p56 = scmp.ne.s32.totalorder %s39, %s55
      %p57 = scmp.eq.s32.totalorder %s31, 0
      %p58 = por %p56, %p57
      %s60 = sadd.s32 %s59, 1
      %p63 = scmp.eq.s32.totalorder %s25, 1
      %p64 = scmp.ne.s32.totalorder %s59, %s61
      %p65 = scmp.eq.s32.totalorder %s25, 0
      %p66 = por %p64, %p65
      %p67 = scmp.ne.s32.totalorder %s59, %s61
      %p68 = scmp.eq.s32.totalorder %s30, 1
      %p69 = por %p67, %p68
      %p70 = scmp.ne.s32.totalorder %s61, %s62
      %p71 = scmp.eq.s32.totalorder %s30, 0
      %p72 = por %p70, %p71
      %p73 = scmp.ne.s32.totalorder %s61, %s62
      %p74 = scmp.eq.s32.totalorder %s31, 1
      %p75 = por %p73, %p74
      %p77 = scmp.ne.s32.totalorder %s62, %s76
      %p78 = scmp.eq.s32.totalorder %s31, 0
      %p79 = por %p77, %p78
      %s81 = sadd.s32 %s80, 1
      %p84 = scmp.eq.s32.totalorder %s25, 1
      %p85 = scmp.ne.s32.totalorder %s80, %s82
      %p86 = scmp.eq.s32.totalorder %s25, 0
      %p87 = por %p85, %p86
      %p88 = scmp.ne.s32.totalorder %s80, %s82
      %p89 = scmp.eq.s32.totalorder %s30, 1
      %p90 = por %p88, %p89
      %p91 = scmp.ne.s32.totalorder %s82, %s83
      %p92 = scmp.eq.s32.totalorder %s30, 0
      %p93 = por %p91, %p92
      %p94 = scmp.ne.s32.totalorder %s82, %s83
      %p95 = scmp.eq.s32.totalorder %s31, 1
      %p96 = por %p94, %p95
      %p98 = scmp.ne.s32.totalorder %s83, %s97
      %p99 = scmp.eq.s32.totalorder %s31, 0
      %p100 = por %p98, %p99
      %s102 = sadd.s32 %s101, 1
      %p105 = scmp.eq.s32.totalorder %s25, 1
      %p106 = scmp.ne.s32.totalorder %s101, %s103
      %p107 = scmp.eq.s32.totalorder %s25, 0
      %p108 = por %p106, %p107
      %p109 = scmp.ne.s32.totalorder %s101, %s103
      %p110 = scmp.eq.s32.totalorder %s30, 1
      %p111 = por %p109, %p110
      %p112 = scmp.ne.s32.totalorder %s103, %s104
      %p113 = scmp.eq.s32.totalorder %s30, 0
      %p114 = por %p112, %p113
      %p115 = scmp.ne.s32.totalorder %s103, %s104
      %p116 = scmp.eq.s32.totalorder %s31, 1
      %p117 = por %p115, %p116
      %p119 = scmp.ne.s32.totalorder %s104, %s118
      %p120 = scmp.eq.s32.totalorder %s31, 0
      %p121 = por %p119, %p120
      %s123 = sadd.s32 %s122, 1
      %p126 = scmp.eq.s32.totalorder %s25, 1
      %p127 = scmp.ne.s32.totalorder %s122, %s124
      %p128 = scmp.eq.s32.totalorder %s25, 0
      %p129 = por %p127, %p128
      %p130 = scmp.ne.s32.totalorder %s122, %s124
      %p131 = scmp.eq.s32.totalorder %s30, 1
      %p132 = por %p130, %p131
      %p133 = scmp.ne.s32.totalorder %s124, %s125
      %p134 = scmp.eq.s32.totalorder %s30, 0
      %p135 = por %p133, %p134
      %p136 = scmp.ne.s32.totalorder %s124, %s125
      %p137 = scmp.eq.s32.totalorder %s31, 1
      %p138 = por %p136, %p137
      %p140 = scmp.ne.s32.totalorder %s125, %s139
      %p141 = scmp.eq.s32.totalorder %s31, 0
      %p142 = por %p140, %p141
      %s144 = sadd.s32 %s143, 1
      %p147 = scmp.eq.s32.totalorder %s25, 1
      %p148 = scmp.ne.s32.totalorder %s143, %s145
      %p149 = scmp.eq.s32.totalorder %s25, 0
      %p150 = por %p148, %p149
      %p151 = scmp.ne.s32.totalorder %s143, %s145
      %p152 = scmp.eq.s32.totalorder %s30, 1
      %p153 = por %p151, %p152
      %p154 = scmp.ne.s32.totalorder %s145, %s146
      %p155 = scmp.eq.s32.totalorder %s30, 0
      %p156 = por %p154, %p155
      %p157 = scmp.ne.s32.totalorder %s145, %s146
      %p158 = scmp.eq.s32.totalorder %s31, 1
      %p159 = por %p157, %p158
      %p161 = scmp.ne.s32.totalorder %s146, %s160
      %p162 = scmp.eq.s32.totalorder %s31, 0
      %p163 = por %p161, %p162
      %s165 = sadd.s32 %s164, 1
      %p168 = scmp.eq.s32.totalorder %s25, 1
      %p169 = scmp.ne.s32.totalorder %s164, %s166
      %p170 = scmp.eq.s32.totalorder %s25, 0
      %p171 = por %p169, %p170
      %p172 = scmp.ne.s32.totalorder %s164, %s166
      %p173 = scmp.eq.s32.totalorder %s30, 1
      %p174 = por %p172, %p173
      %p175 = scmp.ne.s32.totalorder %s166, %s167
      %p176 = scmp.eq.s32.totalorder %s30, 0
      %p177 = por %p175, %p176
      %p178 = scmp.ne.s32.totalorder %s166, %s167
      %p179 = scmp.eq.s32.totalorder %s31, 1
      %p180 = por %p178, %p179
      %p182 = scmp.ne.s32.totalorder %s167, %s181
      %p183 = scmp.eq.s32.totalorder %s31, 0
      %p184 = por %p182, %p183
      %s186 = sadd.s32 %s185, 1
      %p189 = scmp.eq.s32.totalorder %s25, 1
      %p190 = scmp.ne.s32.totalorder %s185, %s187
      %p191 = scmp.eq.s32.totalorder %s25, 0
      %p192 = por %p190, %p191
      %p193 = scmp.ne.s32.totalorder %s185, %s187
      %p194 = scmp.eq.s32.totalorder %s30, 1
      %p195 = por %p193, %p194
      %p196 = scmp.ne.s32.totalorder %s187, %s188
      %p197 = scmp.eq.s32.totalorder %s30, 0
      %p198 = por %p196, %p197
      %p199 = scmp.ne.s32.totalorder %s187, %s188
      %p200 = scmp.eq.s32.totalorder %s31, 1
      %p201 = por %p199, %p200
      %p203 = scmp.ne.s32.totalorder %s188, %s202
      %p204 = scmp.eq.s32.totalorder %s31, 0
      %p205 = por %p203, %p204
      %s207 = sadd.s32 %s206, 1
      %p210 = scmp.eq.s32.totalorder %s25, 1
      %p211 = scmp.ne.s32.totalorder %s206, %s208
      %p212 = scmp.eq.s32.totalorder %s25, 0
      %p213 = por %p211, %p212
      %p214 = scmp.ne.s32.totalorder %s206, %s208
      %p215 = scmp.eq.s32.totalorder %s30, 1
      %p216 = por %p214, %p215
      %p217 = scmp.ne.s32.totalorder %s208, %s209
      %p218 = scmp.eq.s32.totalorder %s30, 0
      %p219 = por %p217, %p218
      %p220 = scmp.ne.s32.totalorder %s208, %s209
      %p221 = scmp.eq.s32.totalorder %s31, 1
      %p222 = por %p220, %p221
      %p224 = scmp.ne.s32.totalorder %s209, %s223
      %p225 = scmp.eq.s32.totalorder %s31, 0
      %p226 = por %p224, %p225
      %s228 = sadd.s32 %s227, 1
      %p231 = scmp.eq.s32.totalorder %s25, 1
      %p232 = scmp.ne.s32.totalorder %s227, %s229
      %p233 = scmp.eq.s32.totalorder %s25, 0
      %p234 = por %p232, %p233
      %p235 = scmp.ne.s32.totalorder %s227, %s229
      %p236 = scmp.eq.s32.totalorder %s30, 1
      %p237 = por %p235, %p236
      %p238 = scmp.ne.s32.totalorder %s229, %s230
      %p239 = scmp.eq.s32.totalorder %s30, 0
      %p240 = por %p238, %p239
      %p241 = scmp.ne.s32.totalorder %s229, %s230
      %p242 = scmp.eq.s32.totalorder %s31, 1
      %p243 = por %p241, %p242
      %p245 = scmp.ne.s32.totalorder %s230, %s244
      %p246 = scmp.eq.s32.totalorder %s31, 0
      %p247 = por %p245, %p246
      %s249 = sadd.s32 %s248, 1
      %p252 = scmp.eq.s32.totalorder %s25, 1
      %p253 = scmp.ne.s32.totalorder %s248, %s250
      %p254 = scmp.eq.s32.totalorder %s25, 0
      %p255 = por %p253, %p254
      %p256 = scmp.ne.s32.totalorder %s248, %s250
      %p257 = scmp.eq.s32.totalorder %s30, 1
      %p258 = por %p256, %p257
      %p259 = scmp.ne.s32.totalorder %s250, %s251
      %p260 = scmp.eq.s32.totalorder %s30, 0
      %p261 = por %p259, %p260
      %p262 = scmp.ne.s32.totalorder %s250, %s251
      %p263 = scmp.eq.s32.totalorder %s31, 1
      %p264 = por %p262, %p263
      %p266 = scmp.ne.s32.totalorder %s251, %s265
      %p267 = scmp.eq.s32.totalorder %s31, 0
      %p268 = por %p266, %p267
      %s270 = sadd.s32 %s269, 1
      %p273 = scmp.eq.s32.totalorder %s25, 1
      %p274 = scmp.ne.s32.totalorder %s269, %s271
      %p275 = scmp.eq.s32.totalorder %s25, 0
      %p276 = por %p274, %p275
      %p277 = scmp.ne.s32.totalorder %s269, %s271
      %p278 = scmp.eq.s32.totalorder %s30, 1
      %p279 = por %p277, %p278
      %p280 = scmp.ne.s32.totalorder %s271, %s272
      %p281 = scmp.eq.s32.totalorder %s30, 0
      %p282 = por %p280, %p281
      %p283 = scmp.ne.s32.totalorder %s271, %s272
      %p284 = scmp.eq.s32.totalorder %s31, 1
      %p285 = por %p283, %p284
      %p287 = scmp.ne.s32.totalorder %s272, %s286
      %p288 = scmp.eq.s32.totalorder %s31, 0
      %p289 = por %p287, %p288
      %s291 = sadd.s32 %s290, 1
      %p294 = scmp.eq.s32.totalorder %s25, 1
      %p295 = scmp.ne.s32.totalorder %s290, %s292
      %p296 = scmp.eq.s32.totalorder %s25, 0
      %p297 = por %p295, %p296
      %p298 = scmp.ne.s32.totalorder %s290, %s292
      %p299 = scmp.eq.s32.totalorder %s30, 1
      %p300 = por %p298, %p299
      %p301 = scmp.ne.s32.totalorder %s292, %s293
      %p302 = scmp.eq.s32.totalorder %s30, 0
      %p303 = por %p301, %p302
      %p304 = scmp.ne.s32.totalorder %s292, %s293
      %p305 = scmp.eq.s32.totalorder %s31, 1
      %p306 = por %p304, %p305
      %p308 = scmp.ne.s32.totalorder %s293, %s307
      %p309 = scmp.eq.s32.totalorder %s31, 0
      %p310 = por %p308, %p309
      %s312 = sadd.s32 %s311, 1
      %p315 = scmp.eq.s32.totalorder %s25, 1
      %p316 = scmp.ne.s32.totalorder %s311, %s313
      %p317 = scmp.eq.s32.totalorder %s25, 0
      %p318 = por %p316, %p317
      %p319 = scmp.ne.s32.totalorder %s311, %s313
      %p320 = scmp.eq.s32.totalorder %s30, 1
      %p321 = por %p319, %p320
      %p322 = scmp.ne.s32.totalorder %s313, %s314
      %p323 = scmp.eq.s32.totalorder %s30, 0
      %p324 = por %p322, %p323
      %p325 = scmp.ne.s32.totalorder %s313, %s314
      %p326 = scmp.eq.s32.totalorder %s31, 1
      %p327 = por %p325, %p326
      %p329 = scmp.ne.s32.totalorder %s314, %s328
      %p330 = scmp.eq.s32.totalorder %s31, 0
      %p331 = por %p329, %p330
      %s333 = sadd.s32 %s332, 1
      %p336 = scmp.eq.s32.totalorder %s25, 1
      %p337 = scmp.ne.s32.totalorder %s332, %s334
      %p338 = scmp.eq.s32.totalorder %s25, 0
      %p339 = por %p337, %p338
      %p340 = scmp.ne.s32.totalorder %s332, %s334
      %p341 = scmp.eq.s32.totalorder %s30, 1
      %p342 = por %p340, %p341
      %p343 = scmp.ne.s32.totalorder %s334, %s335
      %p344 = scmp.eq.s32.totalorder %s30, 0
      %p345 = por %p343, %p344
      %p346 = scmp.ne.s32.totalorder %s334, %s335
      %p347 = scmp.eq.s32.totalorder %s31, 1
      %p348 = por %p346, %p347
      %p350 = scmp.ne.s32.totalorder %s335, %s349
      %p351 = scmp.eq.s32.totalorder %s31, 0
      %p352 = por %p350, %p351
      %s354 = sadd.s32 %s353, 1
      %p357 = scmp.eq.s32.totalorder %s25, 1
      %p358 = scmp.ne.s32.totalorder %s353, %s355
      %p359 = scmp.eq.s32.totalorder %s25, 0
      %p360 = por %p358, %p359
      %p361 = scmp.ne.s32.totalorder %s353, %s355
      %p362 = scmp.eq.s32.totalorder %s30, 1
      %p363 = por %p361, %p362
      %p364 = scmp.ne.s32.totalorder %s355, %s356
      %p365 = scmp.eq.s32.totalorder %s30, 0
      %p366 = por %p364, %p365
      %p367 = scmp.ne.s32.totalorder %s355, %s356
      %p368 = scmp.eq.s32.totalorder %s31, 1
      %p369 = por %p367, %p368
      %p371 = scmp.ne.s32.totalorder %s356, %s370
      %p372 = scmp.eq.s32.totalorder %s31, 0
      %p373 = por %p371, %p372
      %s374 = ssub.s32 %s25, %s32
      %p375 = scmp.eq.s32.totalorder %s374, 0
      %s377 = sadd.s32 %s376, 1
      %s378 = scalar_select %p375, %s376, %s377
      %p381 = pneg %p375
      %p382 = scmp.eq.s32.totalorder %s25, 1
      %p383 = por %p381, %p382
      %p384 = scmp.ne.s32.totalorder %s376, %s379
      %p385 = scmp.eq.s32.totalorder %s25, 0
      %p386 = por %p384, %p385
      %p387 = scmp.ne.s32.totalorder %s376, %s379
      %p388 = scmp.eq.s32.totalorder %s30, 1
      %p389 = por %p387, %p388
      %p390 = scmp.ne.s32.totalorder %s379, %s380
      %p391 = scmp.eq.s32.totalorder %s30, 0
      %p392 = por %p390, %p391
      %p393 = scmp.ne.s32.totalorder %s379, %s380
      %p394 = scmp.eq.s32.totalorder %s31, 1
      %p395 = por %p393, %p394
      %p397 = scmp.ne.s32.totalorder %s380, %s396
      %p398 = scmp.eq.s32.totalorder %s31, 0
      %p399 = por %p397, %p398
      %p400 = scmp.le.s32.totalorder 1, %s25
      %p401 = scmp.lt.s32.totalorder %s25, 3
      %p402 = pnand %p400, %p401
      %p403 = pneg %p402
      // Predicated region
      $region9: #{dense_block_forward.1} parent=5 // pred_check
        _
      $region10: #{dense_block_forward.1} parent=5 // pred_check_branch
        %405 = sbr.rel (%p402) target = $region12
      $region11: #{dense_block_forward.1} parent=5 // pred_region
        %s406 = ssub.s32 %s25, 1
        // Predicated region
        $region13: #{dense_block_forward.1} parent=11 // pred_check
          %p407 = pneg %p72
        $region14: #{dense_block_forward.1} parent=11 // pred_check_branch
          %409 = sbr.rel (%p407) target = $region16
        $region15: #{dense_block_forward.1} parent=11 // pred_region
          _
        $region16: #{dense_block_forward.1} parent=11 // pred_fallthru
          _
        // Predicated region
        $region17: #{dense_block_forward.1} parent=11 // pred_check
          %p410 = pneg %p93
        $region18: #{dense_block_forward.1} parent=11 // pred_check_branch
          %412 = sbr.rel (%p410) target = $region20
        $region19: #{dense_block_forward.1} parent=11 // pred_region
          _
        $region20: #{dense_block_forward.1} parent=11 // pred_fallthru
          _
        // Predicated region
        $region21: #{dense_block_forward.1} parent=11 // pred_check
          %p413 = pneg %p114
        $region22: #{dense_block_forward.1} parent=11 // pred_check_branch
          %415 = sbr.rel (%p413) target = $region24
        $region23: #{dense_block_forward.1} parent=11 // pred_region
          _
        $region24: #{dense_block_forward.1} parent=11 // pred_fallthru
          _
        // Predicated region
        $region25: #{dense_block_forward.1} parent=11 // pred_check
          %p416 = pneg %p135
        $region26: #{dense_block_forward.1} parent=11 // pred_check_branch
          %418 = sbr.rel (%p416) target = $region28
        $region27: #{dense_block_forward.1} parent=11 // pred_region
          _
        $region28: #{dense_block_forward.1} parent=11 // pred_fallthru
          _
        // Predicated region
        $region29: #{dense_block_forward.1} parent=11 // pred_check
          %p419 = pneg %p156
        $region30: #{dense_block_forward.1} parent=11 // pred_check_branch
          %421 = sbr.rel (%p419) target = $region32
        $region31: #{dense_block_forward.1} parent=11 // pred_region
          _
        $region32: #{dense_block_forward.1} parent=11 // pred_fallthru
          _
        // Predicated region
        $region33: #{dense_block_forward.1} parent=11 // pred_check
          %p422 = pneg %p177
        $region34: #{dense_block_forward.1} parent=11 // pred_check_branch
          %424 = sbr.rel (%p422) target = $region36
        $region35: #{dense_block_forward.1} parent=11 // pred_region
          _
        $region36: #{dense_block_forward.1} parent=11 // pred_fallthru
          _
        // Predicated region
        $region37: #{dense_block_forward.1} parent=11 // pred_check
          %p425 = pneg %p198
        $region38: #{dense_block_forward.1} parent=11 // pred_check_branch
          %427 = sbr.rel (%p425) target = $region40
        $region39: #{dense_block_forward.1} parent=11 // pred_region
          _
        $region40: #{dense_block_forward.1} parent=11 // pred_fallthru
          _
        // Predicated region
        $region41: #{dense_block_forward.1} parent=11 // pred_check
          %p428 = pneg %p219
        $region42: #{dense_block_forward.1} parent=11 // pred_check_branch
          %430 = sbr.rel (%p428) target = $region44
        $region43: #{dense_block_forward.1} parent=11 // pred_region
          _
        $region44: #{dense_block_forward.1} parent=11 // pred_fallthru
          _
        // Predicated region
        $region45: #{dense_block_forward.1} parent=11 // pred_check
          %p431 = pneg %p240
        $region46: #{dense_block_forward.1} parent=11 // pred_check_branch
          %433 = sbr.rel (%p431) target = $region48
        $region47: #{dense_block_forward.1} parent=11 // pred_region
          _
        $region48: #{dense_block_forward.1} parent=11 // pred_fallthru
          _
        // Predicated region
        $region49: #{dense_block_forward.1} parent=11 // pred_check
          %p434 = pneg %p261
        $region50: #{dense_block_forward.1} parent=11 // pred_check_branch
          %436 = sbr.rel (%p434) target = $region52
        $region51: #{dense_block_forward.1} parent=11 // pred_region
          _
        $region52: #{dense_block_forward.1} parent=11 // pred_fallthru
          _
        // Predicated region
        $region53: #{dense_block_forward.1} parent=11 // pred_check
          %p437 = pneg %p282
        $region54: #{dense_block_forward.1} parent=11 // pred_check_branch
          %439 = sbr.rel (%p437) target = $region56
        $region55: #{dense_block_forward.1} parent=11 // pred_region
          _
        $region56: #{dense_block_forward.1} parent=11 // pred_fallthru
          _
        // Predicated region
        $region57: #{dense_block_forward.1} parent=11 // pred_check
          %p440 = pneg %p303
        $region58: #{dense_block_forward.1} parent=11 // pred_check_branch
          %442 = sbr.rel (%p440) target = $region60
        $region59: #{dense_block_forward.1} parent=11 // pred_region
          _
        $region60: #{dense_block_forward.1} parent=11 // pred_fallthru
          _
        // Predicated region
        $region61: #{dense_block_forward.1} parent=11 // pred_check
          %p443 = pneg %p324
        $region62: #{dense_block_forward.1} parent=11 // pred_check_branch
          %445 = sbr.rel (%p443) target = $region64
        $region63: #{dense_block_forward.1} parent=11 // pred_region
          _
        $region64: #{dense_block_forward.1} parent=11 // pred_fallthru
          _
        // Predicated region
        $region65: #{dense_block_forward.1} parent=11 // pred_check
          %p446 = pneg %p345
        $region66: #{dense_block_forward.1} parent=11 // pred_check_branch
          %448 = sbr.rel (%p446) target = $region68
        $region67: #{dense_block_forward.1} parent=11 // pred_region
          _
        $region68: #{dense_block_forward.1} parent=11 // pred_fallthru
          _
        // Predicated region
        $region69: #{dense_block_forward.1} parent=11 // pred_check
          %p449 = pneg %p366
        $region70: #{dense_block_forward.1} parent=11 // pred_check_branch
          %451 = sbr.rel (%p449) target = $region72
        $region71: #{dense_block_forward.1} parent=11 // pred_region
          _
        $region72: #{dense_block_forward.1} parent=11 // pred_fallthru
          _
      $region12: #{dense_block_forward.1} parent=5 // pred_fallthru
        _
      %p452 = scmp.lt.s32.totalorder %s25, 2
      // Predicated region
      $region73: #{dense_block_forward.1} parent=5 // pred_check
        %p453 = pneg %p452
      $region74: #{dense_block_forward.1} parent=5 // pred_check_branch
        %455 = sbr.rel (%p453) target = $region76
      $region75: #{dense_block_forward.1} parent=5 // pred_region
        // Predicated region
        $region77: #{dense_block_forward.1} parent=75 // pred_check
          %p456 = pneg %p45
        $region78: #{dense_block_forward.1} parent=75 // pred_check_branch
          %458 = sbr.rel (%p456) target = $region80
        $region79: #{dense_block_forward.1} parent=75 // pred_region
          %p459 = scmp.lt.s32.totalorder %s25, 1
          %s460 = scalar_select %p459, %s25, 1
          %s461 = smul.addr %s460, 32
          %s462 = smul.addr %s461, 8
          %s463 = scalar_lea.vmem %s0, %s462
        $region80: #{dense_block_forward.1} parent=75 // pred_fallthru
          _
      $region76: #{dense_block_forward.1} parent=5 // pred_fallthru
        _
      %p464 = scmp.le.s32.totalorder 1, %s25
      %p465 = scmp.lt.s32.totalorder %s25, 3
      %p466 = pnand %p464, %p465
      %p467 = pneg %p466
      // Predicated region
      $region81: #{dense_block_forward.1} parent=5 // pred_check
        _
      $region82: #{dense_block_forward.1} parent=5 // pred_check_branch
        %469 = sbr.rel (%p466) target = $region84
      $region83: #{dense_block_forward.1} parent=5 // pred_region
        %s470 = ssub.s32 %s25, 1
        %p471 = scmp.lt.s32.totalorder %s30, 1
        %s472 = scalar_select %p471, %s30, 1
        %s473 = smul.addr %s472, 32
        %s474 = smul.addr %s473, 8
        %s475 = scalar_lea.vmem %s0, %s474
        %p476 = pneg %p51
        %p477 = pneg %p48
        %p478 = pneg %p72
        %p479 = pneg %p69
        %p480 = pneg %p93
        %p481 = pneg %p90
        %p482 = pneg %p114
        %p483 = pneg %p111
        %p484 = pneg %p135
        %p485 = pneg %p132
        %p486 = pneg %p156
        %p487 = pneg %p153
        %p488 = pneg %p177
        %p489 = pneg %p174
        %p490 = pneg %p198
        %p491 = pneg %p195
        %p492 = pneg %p219
        %p493 = pneg %p216
        %p494 = pneg %p240
        %p495 = pneg %p237
        %p496 = pneg %p261
        %p497 = pneg %p258
        %p498 = pneg %p282
        %p499 = pneg %p279
        %p500 = pneg %p303
        %p501 = pneg %p300
        %p502 = pneg %p324
        %p503 = pneg %p321
        %p504 = pneg %p345
        %p505 = pneg %p342
        %p506 = pneg %p366
        %p507 = pneg %p363
        %p508 = pneg %p392
        %p509 = pneg %p389
        %s510 = sand.u32 %s379, 1
        %s511 = scalar_lea.sflag [#allocation4], %s510
        %s512 = sand.u32 %s379, 1
        %s513 = smul.addr %s512, 256
        %s514 = scalar_lea.vmem [#allocation3], %s513
        %p515 = scmp.lt.s32.totalorder %s30, 1
        %s516 = scalar_select %p515, %s30, 1
        %s517 = smul.addr %s516, 32
        %s518 = smul.addr %s517, 8
        %s519 = scalar_lea.vmem %s0, %s518
        %v521 = vld [vmem:[%s519] sm:$0xff]
        %v522 = vld [vmem:[%s519 + $0x8] sm:$0xff]
        %v523 = vld [vmem:[%s519 + $0x10] sm:$0xff]
        %v524 = vld [vmem:[%s519 + $0x18] sm:$0xff]
        %v525 = vld [vmem:[%s519 + $0x20] sm:$0xff]
        %v526 = vld [vmem:[%s519 + $0x28] sm:$0xff]
        %v527 = vld [vmem:[%s519 + $0x30] sm:$0xff]
        %v528 = vld [vmem:[%s519 + $0x38] sm:$0xff]
        %v529 = vld [vmem:[%s519 + $0x40] sm:$0xff]
        %v530 = vld [vmem:[%s519 + $0x48] sm:$0xff]
        %v531 = vld [vmem:[%s519 + $0x50] sm:$0xff]
        %v532 = vld [vmem:[%s519 + $0x58] sm:$0xff]
        %v533 = vld [vmem:[%s519 + $0x60] sm:$0xff]
        %v534 = vld [vmem:[%s519 + $0x68] sm:$0xff]
        %v535 = vld [vmem:[%s519 + $0x70] sm:$0xff]
        %v536 = vld [vmem:[%s519 + $0x78] sm:$0xff]
        %v537 = vld [vmem:[%s519 + $0x80] sm:$0xff]
        %v538 = vld [vmem:[%s519 + $0x88] sm:$0xff]
        %v539 = vld [vmem:[%s519 + $0x90] sm:$0xff]
        %v540 = vld [vmem:[%s519 + $0x98] sm:$0xff]
        %v541 = vld [vmem:[%s519 + $0xa0] sm:$0xff]
        %v542 = vld [vmem:[%s519 + $0xa8] sm:$0xff]
        %v543 = vld [vmem:[%s519 + $0xb0] sm:$0xff]
        %v544 = vld [vmem:[%s519 + $0xb8] sm:$0xff]
        %v545 = vld [vmem:[%s519 + $0xc0] sm:$0xff]
        %v546 = vld [vmem:[%s519 + $0xc8] sm:$0xff]
        %v547 = vld [vmem:[%s519 + $0xd0] sm:$0xff]
        %v548 = vld [vmem:[%s519 + $0xd8] sm:$0xff]
        %v549 = vld [vmem:[%s519 + $0xe0] sm:$0xff]
        %v550 = vld [vmem:[%s519 + $0xe8] sm:$0xff]
        %v551 = vld [vmem:[%s519 + $0xf0] sm:$0xff]
        %v552 = vld [vmem:[%s519 + $0xf8] sm:$0xff]
        %vm553 = vcmask 64512
        %554 = vst.msk [vmem:[%s514] sm:$0xff] %vm553, %v521
        %555 = vst.msk [vmem:[%s514 + $0x8] sm:$0xff] %vm553, %v522
        %556 = vst.msk [vmem:[%s514 + $0x10] sm:$0xff] %vm553, %v523
        %557 = vst.msk [vmem:[%s514 + $0x18] sm:$0xff] %vm553, %v524
        %558 = vst.msk [vmem:[%s514 + $0x20] sm:$0xff] %vm553, %v525
        %559 = vst.msk [vmem:[%s514 + $0x28] sm:$0xff] %vm553, %v526
        %560 = vst.msk [vmem:[%s514 + $0x30] sm:$0xff] %vm553, %v527
        %561 = vst.msk [vmem:[%s514 + $0x38] sm:$0xff] %vm553, %v528
        %562 = vst.msk [vmem:[%s514 + $0x40] sm:$0xff] %vm553, %v529
        %563 = vst.msk [vmem:[%s514 + $0x48] sm:$0xff] %vm553, %v530
        %564 = vst.msk [vmem:[%s514 + $0x50] sm:$0xff] %vm553, %v531
        %565 = vst.msk [vmem:[%s514 + $0x58] sm:$0xff] %vm553, %v532
        %566 = vst.msk [vmem:[%s514 + $0x60] sm:$0xff] %vm553, %v533
        %567 = vst.msk [vmem:[%s514 + $0x68] sm:$0xff] %vm553, %v534
        %568 = vst.msk [vmem:[%s514 + $0x70] sm:$0xff] %vm553, %v535
        %569 = vst.msk [vmem:[%s514 + $0x78] sm:$0xff] %vm553, %v536
        %570 = vst.msk [vmem:[%s514 + $0x80] sm:$0xff] %vm553, %v537
        %571 = vst.msk [vmem:[%s514 + $0x88] sm:$0xff] %vm553, %v538
        %572 = vst.msk [vmem:[%s514 + $0x90] sm:$0xff] %vm553, %v539
        %573 = vst.msk [vmem:[%s514 + $0x98] sm:$0xff] %vm553, %v540
        %574 = vst.msk [vmem:[%s514 + $0xa0] sm:$0xff] %vm553, %v541
        %575 = vst.msk [vmem:[%s514 + $0xa8] sm:$0xff] %vm553, %v542
        %576 = vst.msk [vmem:[%s514 + $0xb0] sm:$0xff] %vm553, %v543
        %577 = vst.msk [vmem:[%s514 + $0xb8] sm:$0xff] %vm553, %v544
        %578 = vst.msk [vmem:[%s514 + $0xc0] sm:$0xff] %vm553, %v545
        %579 = vst.msk [vmem:[%s514 + $0xc8] sm:$0xff] %vm553, %v546
        %580 = vst.msk [vmem:[%s514 + $0xd0] sm:$0xff] %vm553, %v547
        %581 = vst.msk [vmem:[%s514 + $0xd8] sm:$0xff] %vm553, %v548
        %582 = vst.msk [vmem:[%s514 + $0xe0] sm:$0xff] %vm553, %v549
        %583 = vst.msk [vmem:[%s514 + $0xe8] sm:$0xff] %vm553, %v550
        %584 = vst.msk [vmem:[%s514 + $0xf0] sm:$0xff] %vm553, %v551
        %585 = vst.msk [vmem:[%s514 + $0xf8] sm:$0xff] %vm553, %v552
        %vm586 = vcmask 130048
        %587 = vst.msk [vmem:[#allocation2] sm:$0xff] %vm586, 0.0
        %588 = vst.msk [vmem:[#allocation2 + $0x8] sm:$0xff] %vm586, 0.0
        %589 = vst.msk [vmem:[#allocation2 + $0x10] sm:$0xff] %vm586, 0.0
        %590 = vst.msk [vmem:[#allocation2 + $0x18] sm:$0xff] %vm586, 0.0
        %591 = vst.msk [vmem:[#allocation2 + $0x20] sm:$0xff] %vm586, 0.0
        %592 = vst.msk [vmem:[#allocation2 + $0x28] sm:$0xff] %vm586, 0.0
        %593 = vst.msk [vmem:[#allocation2 + $0x30] sm:$0xff] %vm586, 0.0
        %594 = vst.msk [vmem:[#allocation2 + $0x38] sm:$0xff] %vm586, 0.0
        %595 = vst.msk [vmem:[#allocation2 + $0x40] sm:$0xff] %vm586, 0.0
        %596 = vst.msk [vmem:[#allocation2 + $0x48] sm:$0xff] %vm586, 0.0
        %597 = vst.msk [vmem:[#allocation2 + $0x50] sm:$0xff] %vm586, 0.0
        %598 = vst.msk [vmem:[#allocation2 + $0x58] sm:$0xff] %vm586, 0.0
        %599 = vst.msk [vmem:[#allocation2 + $0x60] sm:$0xff] %vm586, 0.0
        %600 = vst.msk [vmem:[#allocation2 + $0x68] sm:$0xff] %vm586, 0.0
        %601 = vst.msk [vmem:[#allocation2 + $0x70] sm:$0xff] %vm586, 0.0
        %602 = vst.msk [vmem:[#allocation2 + $0x78] sm:$0xff] %vm586, 0.0
        %603 = vst.msk [vmem:[#allocation2 + $0x80] sm:$0xff] %vm586, 0.0
        %604 = vst.msk [vmem:[#allocation2 + $0x88] sm:$0xff] %vm586, 0.0
        %605 = vst.msk [vmem:[#allocation2 + $0x90] sm:$0xff] %vm586, 0.0
        %606 = vst.msk [vmem:[#allocation2 + $0x98] sm:$0xff] %vm586, 0.0
        %607 = vst.msk [vmem:[#allocation2 + $0xa0] sm:$0xff] %vm586, 0.0
        %608 = vst.msk [vmem:[#allocation2 + $0xa8] sm:$0xff] %vm586, 0.0
        %609 = vst.msk [vmem:[#allocation2 + $0xb0] sm:$0xff] %vm586, 0.0
        %610 = vst.msk [vmem:[#allocation2 + $0xb8] sm:$0xff] %vm586, 0.0
        %611 = vst.msk [vmem:[#allocation2 + $0xc0] sm:$0xff] %vm586, 0.0
        %612 = vst.msk [vmem:[#allocation2 + $0xc8] sm:$0xff] %vm586, 0.0
        %613 = vst.msk [vmem:[#allocation2 + $0xd0] sm:$0xff] %vm586, 0.0
        %614 = vst.msk [vmem:[#allocation2 + $0xd8] sm:$0xff] %vm586, 0.0
        %615 = vst.msk [vmem:[#allocation2 + $0xe0] sm:$0xff] %vm586, 0.0
        %616 = vst.msk [vmem:[#allocation2 + $0xe8] sm:$0xff] %vm586, 0.0
        %617 = vst.msk [vmem:[#allocation2 + $0xf0] sm:$0xff] %vm586, 0.0
        %618 = vst.msk [vmem:[#allocation2 + $0xf8] sm:$0xff] %vm586, 0.0
        %619 = vst.msk [vmem:[#allocation2 + $0x100] sm:$0xff] %vm586, 0.0
        %620 = vst.msk [vmem:[#allocation2 + $0x108] sm:$0xff] %vm586, 0.0
        %621 = vst.msk [vmem:[#allocation2 + $0x110] sm:$0xff] %vm586, 0.0
        %622 = vst.msk [vmem:[#allocation2 + $0x118] sm:$0xff] %vm586, 0.0
        %623 = vst.msk [vmem:[#allocation2 + $0x120] sm:$0xff] %vm586, 0.0
        %624 = vst.msk [vmem:[#allocation2 + $0x128] sm:$0xff] %vm586, 0.0
        %625 = vst.msk [vmem:[#allocation2 + $0x130] sm:$0xff] %vm586, 0.0
        %626 = vst.msk [vmem:[#allocation2 + $0x138] sm:$0xff] %vm586, 0.0
        %627 = vst.msk [vmem:[#allocation2 + $0x140] sm:$0xff] %vm586, 0.0
        %628 = vst.msk [vmem:[#allocation2 + $0x148] sm:$0xff] %vm586, 0.0
        %629 = vst.msk [vmem:[#allocation2 + $0x150] sm:$0xff] %vm586, 0.0
        %630 = vst.msk [vmem:[#allocation2 + $0x158] sm:$0xff] %vm586, 0.0
        %631 = vst.msk [vmem:[#allocation2 + $0x160] sm:$0xff] %vm586, 0.0
        %632 = vst.msk [vmem:[#allocation2 + $0x168] sm:$0xff] %vm586, 0.0
        %633 = vst.msk [vmem:[#allocation2 + $0x170] sm:$0xff] %vm586, 0.0
        %634 = vst.msk [vmem:[#allocation2 + $0x178] sm:$0xff] %vm586, 0.0
        %635 = vst.msk [vmem:[#allocation2 + $0x180] sm:$0xff] %vm586, 0.0
        %636 = vst.msk [vmem:[#allocation2 + $0x188] sm:$0xff] %vm586, 0.0
        %637 = vst.msk [vmem:[#allocation2 + $0x190] sm:$0xff] %vm586, 0.0
        %638 = vst.msk [vmem:[#allocation2 + $0x198] sm:$0xff] %vm586, 0.0
        %639 = vst.msk [vmem:[#allocation2 + $0x1a0] sm:$0xff] %vm586, 0.0
        %640 = vst.msk [vmem:[#allocation2 + $0x1a8] sm:$0xff] %vm586, 0.0
        %v641 = vld [vmem:[%s514] sm:$0xff]
        %v642 = vld [vmem:[%s514 + $0x8] sm:$0xff]
        %v643 = vld [vmem:[%s514 + $0x10] sm:$0xff]
        %v644 = vld [vmem:[%s514 + $0x18] sm:$0xff]
        %v645 = vld [vmem:[%s514 + $0x20] sm:$0xff]
        %v646 = vld [vmem:[%s514 + $0x28] sm:$0xff]
        %v647 = vld [vmem:[%s514 + $0x30] sm:$0xff]
        %v648 = vld [vmem:[%s514 + $0x38] sm:$0xff]
        %v649 = vld [vmem:[%s514 + $0x40] sm:$0xff]
        %v650 = vld [vmem:[%s514 + $0x48] sm:$0xff]
        %v651 = vld [vmem:[%s514 + $0x50] sm:$0xff]
        %v652 = vld [vmem:[%s514 + $0x58] sm:$0xff]
        %v653 = vld [vmem:[%s514 + $0x60] sm:$0xff]
        %v654 = vld [vmem:[%s514 + $0x68] sm:$0xff]
        %v655 = vld [vmem:[%s514 + $0x70] sm:$0xff]
        %v656 = vld [vmem:[%s514 + $0x78] sm:$0xff]
        %v657 = vld [vmem:[%s514 + $0x80] sm:$0xff]
        %v658 = vld [vmem:[%s514 + $0x88] sm:$0xff]
        %v659 = vld [vmem:[%s514 + $0x90] sm:$0xff]
        %v660 = vld [vmem:[%s514 + $0x98] sm:$0xff]
        %v661 = vld [vmem:[%s514 + $0xa0] sm:$0xff]
        %v662 = vld [vmem:[%s514 + $0xa8] sm:$0xff]
        %v663 = vld [vmem:[%s514 + $0xb0] sm:$0xff]
        %v664 = vld [vmem:[%s514 + $0xb8] sm:$0xff]
        %v665 = vld [vmem:[%s514 + $0xc0] sm:$0xff]
        %v666 = vld [vmem:[%s514 + $0xc8] sm:$0xff]
        %v667 = vld [vmem:[%s514 + $0xd0] sm:$0xff]
        %v668 = vld [vmem:[%s514 + $0xd8] sm:$0xff]
        %v669 = vld [vmem:[%s514 + $0xe0] sm:$0xff]
        %v670 = vld [vmem:[%s514 + $0xe8] sm:$0xff]
        %v671 = vld [vmem:[%s514 + $0xf0] sm:$0xff]
        %v672 = vld [vmem:[%s514 + $0xf8] sm:$0xff]
        %v673 = vld [vmem:[%s1] sm:$0x1]
        %v675 = vperm.slane %v673, 0
        %v677 = vmul.f32 %v641, %v675
        %v678 = vmul.f32 %v642, %v675
        %v679 = vmul.f32 %v643, %v675
        %v680 = vmul.f32 %v644, %v675
        %v681 = vmul.f32 %v645, %v675
        %v682 = vmul.f32 %v646, %v675
        %v683 = vmul.f32 %v647, %v675
        %v684 = vmul.f32 %v648, %v675
        %v685 = vmul.f32 %v649, %v675
        %v686 = vmul.f32 %v650, %v675
        %v687 = vmul.f32 %v651, %v675
        %v688 = vmul.f32 %v652, %v675
        %v689 = vmul.f32 %v653, %v675
        %v690 = vmul.f32 %v654, %v675
        %v691 = vmul.f32 %v655, %v675
        %v692 = vmul.f32 %v656, %v675
        %v693 = vmul.f32 %v657, %v675
        %v694 = vmul.f32 %v658, %v675
        %v695 = vmul.f32 %v659, %v675
        %v696 = vmul.f32 %v660, %v675
        %v697 = vmul.f32 %v661, %v675
        %v698 = vmul.f32 %v662, %v675
        %v699 = vmul.f32 %v663, %v675
        %v700 = vmul.f32 %v664, %v675
        %v701 = vmul.f32 %v665, %v675
        %v702 = vmul.f32 %v666, %v675
        %v703 = vmul.f32 %v667, %v675
        %v704 = vmul.f32 %v668, %v675
        %v705 = vmul.f32 %v669, %v675
        %v706 = vmul.f32 %v670, %v675
        %v707 = vmul.f32 %v671, %v675
        %v708 = vmul.f32 %v672, %v675
        %v709 = vld [vmem:[%s2] sm:$0x1]
        %v711 = vperm.slane %v709, 0
        %v713 = vadd.f32 %v677, %v711
        %v714 = vadd.f32 %v678, %v711
        %v715 = vadd.f32 %v679, %v711
        %v716 = vadd.f32 %v680, %v711
        %v717 = vadd.f32 %v681, %v711
        %v718 = vadd.f32 %v682, %v711
        %v719 = vadd.f32 %v683, %v711
        %v720 = vadd.f32 %v684, %v711
        %v721 = vadd.f32 %v685, %v711
        %v722 = vadd.f32 %v686, %v711
        %v723 = vadd.f32 %v687, %v711
        %v724 = vadd.f32 %v688, %v711
        %v725 = vadd.f32 %v689, %v711
        %v726 = vadd.f32 %v690, %v711
        %v727 = vadd.f32 %v691, %v711
        %v728 = vadd.f32 %v692, %v711
        %v729 = vadd.f32 %v693, %v711
        %v730 = vadd.f32 %v694, %v711
        %v731 = vadd.f32 %v695, %v711
        %v732 = vadd.f32 %v696, %v711
        %v733 = vadd.f32 %v697, %v711
        %v734 = vadd.f32 %v698, %v711
        %v735 = vadd.f32 %v699, %v711
        %v736 = vadd.f32 %v700, %v711
        %v737 = vadd.f32 %v701, %v711
        %v738 = vadd.f32 %v702, %v711
        %v739 = vadd.f32 %v703, %v711
        %v740 = vadd.f32 %v704, %v711
        %v741 = vadd.f32 %v705, %v711
        %v742 = vadd.f32 %v706, %v711
        %v743 = vadd.f32 %v707, %v711
        %v744 = vadd.f32 %v708, %v711
        %v745 = vmax.f32 %v713, 0.0
        %v746 = vmax.f32 %v714, 0.0
        %v747 = vmax.f32 %v715, 0.0
        %v748 = vmax.f32 %v716, 0.0
        %v749 = vmax.f32 %v717, 0.0
        %v750 = vmax.f32 %v718, 0.0
        %v751 = vmax.f32 %v719, 0.0
        %v752 = vmax.f32 %v720, 0.0
        %v753 = vmax.f32 %v721, 0.0
        %v754 = vmax.f32 %v722, 0.0
        %v755 = vmax.f32 %v723, 0.0
        %v756 = vmax.f32 %v724, 0.0
        %v757 = vmax.f32 %v725, 0.0
        %v758 = vmax.f32 %v726, 0.0
        %v759 = vmax.f32 %v727, 0.0
        %v760 = vmax.f32 %v728, 0.0
        %v761 = vmax.f32 %v729, 0.0
        %v762 = vmax.f32 %v730, 0.0
        %v763 = vmax.f32 %v731, 0.0
        %v764 = vmax.f32 %v732, 0.0
        %v765 = vmax.f32 %v733, 0.0
        %v766 = vmax.f32 %v734, 0.0
        %v767 = vmax.f32 %v735, 0.0
        %v768 = vmax.f32 %v736, 0.0
        %v769 = vmax.f32 %v737, 0.0
        %v770 = vmax.f32 %v738, 0.0
        %v771 = vmax.f32 %v739, 0.0
        %v772 = vmax.f32 %v740, 0.0
        %v773 = vmax.f32 %v741, 0.0
        %v774 = vmax.f32 %v742, 0.0
        %v775 = vmax.f32 %v743, 0.0
        %v776 = vmax.f32 %v744, 0.0
        %v777 = vpack.c.bf16 %v746, %v745
        %v778 = vpack.c.bf16 %v748, %v747
        %v779 = vpack.c.bf16 %v750, %v749
        %v780 = vpack.c.bf16 %v752, %v751
        %v781 = vpack.c.bf16 %v754, %v753
        %v782 = vpack.c.bf16 %v756, %v755
        %v783 = vpack.c.bf16 %v758, %v757
        %v784 = vpack.c.bf16 %v760, %v759
        %v785 = vpack.c.bf16 %v762, %v761
        %v786 = vpack.c.bf16 %v764, %v763
        %v787 = vpack.c.bf16 %v766, %v765
        %v788 = vpack.c.bf16 %v768, %v767
        %v789 = vpack.c.bf16 %v770, %v769
        %v790 = vpack.c.bf16 %v772, %v771
        %v791 = vpack.c.bf16 %v774, %v773
        %v792 = vpack.c.bf16 %v776, %v775
        %v793 = vld [vmem:[%s3] sm:$0xf]
        %v794 = vld [vmem:[%s4] sm:$0x1]
        %v796 = vperm.slane %v794, 0
        %v799 = vsel %vm553, %v777, 0
        %v802 = vsel %vm553, %v778, 0
        %v805 = vsel %vm553, %v779, 0
        %v808 = vsel %vm553, %v780, 0
        %v811 = vsel %vm553, %v781, 0
        %v814 = vsel %vm553, %v782, 0
        %v817 = vsel %vm553, %v783, 0
        %v820 = vsel %vm553, %v784, 0
        %v823 = vsel %vm553, %v785, 0
        %v826 = vsel %vm553, %v786, 0
        %v829 = vsel %vm553, %v787, 0
        %v832 = vsel %vm553, %v788, 0
        %v835 = vsel %vm553, %v789, 0
        %v838 = vsel %vm553, %v790, 0
        %v841 = vsel %vm553, %v791, 0
        %v844 = vsel %vm553, %v792, 0
        %vm846 = vcmask 1043456
        %v848 = vsel %vm846, %v793, 0
        %850 = vmatpush.bf16.msra.mxu0 0
        %851 = vmatpush.bf16.msra.mxu0 0
        %852 = vmatpush.bf16.msra.mxu0 0
        %853 = vmatpush.bf16.msra.mxu0 0
        %854 = vmatpush.bf16.msra.mxu0 0
        %855 = vmatpush.bf16.msra.mxu0 0
        %856 = vmatpush.bf16.msra.mxu0 0
        %857 = vmatpush.bf16.msra.mxu0 %v848
        %858 = vmatmul.bf16.gmra.mxu0 %v799
        %v859 = vpop.f32.mrf.mxu0
        %v860 = vadd.f32 %v796, %v859
        %v861 = vpop.f32.mrf.mxu0
        %v862 = vadd.f32 %v796, %v861
        %863 = vmatmul.bf16.gmra.mxu0 %v802
        %v864 = vpop.f32.mrf.mxu0
        %v865 = vadd.f32 %v796, %v864
        %v866 = vpop.f32.mrf.mxu0
        %v867 = vadd.f32 %v796, %v866
        %868 = vmatmul.bf16.gmra.mxu0 %v805
        %v869 = vpop.f32.mrf.mxu0
        %v870 = vadd.f32 %v796, %v869
        %v871 = vpop.f32.mrf.mxu0
        %v872 = vadd.f32 %v796, %v871
        %873 = vmatmul.bf16.gmra.mxu0 %v808
        %v874 = vpop.f32.mrf.mxu0
        %v875 = vadd.f32 %v796, %v874
        %v876 = vpop.f32.mrf.mxu0
        %v877 = vadd.f32 %v796, %v876
        %878 = vmatmul.bf16.gmra.mxu0 %v811
        %v879 = vpop.f32.mrf.mxu0
        %v880 = vadd.f32 %v796, %v879
        %v881 = vpop.f32.mrf.mxu0
        %v882 = vadd.f32 %v796, %v881
        %883 = vmatmul.bf16.gmra.mxu0 %v814
        %v884 = vpop.f32.mrf.mxu0
        %v885 = vadd.f32 %v796, %v884
        %v886 = vpop.f32.mrf.mxu0
        %v887 = vadd.f32 %v796, %v886
        %888 = vmatmul.bf16.gmra.mxu0 %v817
        %v889 = vpop.f32.mrf.mxu0
        %v890 = vadd.f32 %v796, %v889
        %v891 = vpop.f32.mrf.mxu0
        %v892 = vadd.f32 %v796, %v891
        %893 = vmatmul.bf16.gmra.mxu0 %v820
        %v894 = vpop.f32.mrf.mxu0
        %v895 = vadd.f32 %v796, %v894
        %v896 = vpop.f32.mrf.mxu0
        %v897 = vadd.f32 %v796, %v896
        %898 = vmatmul.bf16.gmra.mxu0 %v823
        %v899 = vpop.f32.mrf.mxu0
        %v900 = vadd.f32 %v796, %v899
        %v901 = vpop.f32.mrf.mxu0
        %v902 = vadd.f32 %v796, %v901
        %903 = vmatmul.bf16.gmra.mxu0 %v826
        %v904 = vpop.f32.mrf.mxu0
        %v905 = vadd.f32 %v796, %v904
        %v906 = vpop.f32.mrf.mxu0
        %v907 = vadd.f32 %v796, %v906
        %908 = vmatmul.bf16.gmra.mxu0 %v829
        %v909 = vpop.f32.mrf.mxu0
        %v910 = vadd.f32 %v796, %v909
        %v911 = vpop.f32.mrf.mxu0
        %v912 = vadd.f32 %v796, %v911
        %913 = vmatmul.bf16.gmra.mxu0 %v832
        %v914 = vpop.f32.mrf.mxu0
        %v915 = vadd.f32 %v796, %v914
        %v916 = vpop.f32.mrf.mxu0
        %v917 = vadd.f32 %v796, %v916
        %918 = vmatmul.bf16.gmra.mxu0 %v835
        %v919 = vpop.f32.mrf.mxu0
        %v920 = vadd.f32 %v796, %v919
        %v921 = vpop.f32.mrf.mxu0
        %v922 = vadd.f32 %v796, %v921
        %923 = vmatmul.bf16.gmra.mxu0 %v838
        %v924 = vpop.f32.mrf.mxu0
        %v925 = vadd.f32 %v796, %v924
        %v926 = vpop.f32.mrf.mxu0
        %v927 = vadd.f32 %v796, %v926
        %928 = vmatmul.bf16.gmra.mxu0 %v841
        %v929 = vpop.f32.mrf.mxu0
        %v930 = vadd.f32 %v796, %v929
        %v931 = vpop.f32.mrf.mxu0
        %v932 = vadd.f32 %v796, %v931
        %933 = vmatmul.bf16.gmra.mxu0 %v844
        %v934 = vpop.f32.mrf.mxu0
        %v935 = vadd.f32 %v796, %v934
        %v936 = vpop.f32.mrf.mxu0
        %v937 = vadd.f32 %v796, %v936
        %938 = vdwg.mxu0
        %v939 = vmax.f32 %v860, 0.0
        %v940 = vmax.f32 %v862, 0.0
        %v941 = vmax.f32 %v865, 0.0
        %v942 = vmax.f32 %v867, 0.0
        %v943 = vmax.f32 %v870, 0.0
        %v944 = vmax.f32 %v872, 0.0
        %v945 = vmax.f32 %v875, 0.0
        %v946 = vmax.f32 %v877, 0.0
        %v947 = vmax.f32 %v880, 0.0
        %v948 = vmax.f32 %v882, 0.0
        %v949 = vmax.f32 %v885, 0.0
        %v950 = vmax.f32 %v887, 0.0
        %v951 = vmax.f32 %v890, 0.0
        %v952 = vmax.f32 %v892, 0.0
        %v953 = vmax.f32 %v895, 0.0
        %v954 = vmax.f32 %v897, 0.0
        %v955 = vmax.f32 %v900, 0.0
        %v956 = vmax.f32 %v902, 0.0
        %v957 = vmax.f32 %v905, 0.0
        %v958 = vmax.f32 %v907, 0.0
        %v959 = vmax.f32 %v910, 0.0
        %v960 = vmax.f32 %v912, 0.0
        %v961 = vmax.f32 %v915, 0.0
        %v962 = vmax.f32 %v917, 0.0
        %v963 = vmax.f32 %v920, 0.0
        %v964 = vmax.f32 %v922, 0.0
        %v965 = vmax.f32 %v925, 0.0
        %v966 = vmax.f32 %v927, 0.0
        %v967 = vmax.f32 %v930, 0.0
        %v968 = vmax.f32 %v932, 0.0
        %v969 = vmax.f32 %v935, 0.0
        %v970 = vmax.f32 %v937, 0.0
        %s971 = scalar_lea.vmem [#allocation2], 24
        %972 = vst.msk [vmem:[%s971 + $0x1] sm:$0xff] %vm586, %v939
        %973 = vst.msk [vmem:[%s971 + $0x9] sm:$0xff] %vm586, %v940
        %974 = vst.msk [vmem:[%s971 + $0x19] sm:$0xff] %vm586, %v941
        %975 = vst.msk [vmem:[%s971 + $0x21] sm:$0xff] %vm586, %v942
        %976 = vst.msk [vmem:[%s971 + $0x31] sm:$0xff] %vm586, %v943
        %977 = vst.msk [vmem:[%s971 + $0x39] sm:$0xff] %vm586, %v944
        %978 = vst.msk [vmem:[%s971 + $0x49] sm:$0xff] %vm586, %v945
        %979 = vst.msk [vmem:[%s971 + $0x51] sm:$0xff] %vm586, %v946
        %980 = vst.msk [vmem:[%s971 + $0x61] sm:$0xff] %vm586, %v947
        %981 = vst.msk [vmem:[%s971 + $0x69] sm:$0xff] %vm586, %v948
        %982 = vst.msk [vmem:[%s971 + $0x79] sm:$0xff] %vm586, %v949
        %983 = vst.msk [vmem:[%s971 + $0x81] sm:$0xff] %vm586, %v950
        %984 = vst.msk [vmem:[%s971 + $0x91] sm:$0xff] %vm586, %v951
        %985 = vst.msk [vmem:[%s971 + $0x99] sm:$0xff] %vm586, %v952
        %986 = vst.msk [vmem:[%s971 + $0xa9] sm:$0xff] %vm586, %v953
        %987 = vst.msk [vmem:[%s971 + $0xb1] sm:$0xff] %vm586, %v954
        %988 = vst.msk [vmem:[%s971 + $0xc1] sm:$0xff] %vm586, %v955
        %989 = vst.msk [vmem:[%s971 + $0xc9] sm:$0xff] %vm586, %v956
        %990 = vst.msk [vmem:[%s971 + $0xd9] sm:$0xff] %vm586, %v957
        %991 = vst.msk [vmem:[%s971 + $0xe1] sm:$0xff] %vm586, %v958
        %992 = vst.msk [vmem:[%s971 + $0xf1] sm:$0xff] %vm586, %v959
        %993 = vst.msk [vmem:[%s971 + $0xf9] sm:$0xff] %vm586, %v960
        %994 = vst.msk [vmem:[%s971 + $0x109] sm:$0xff] %vm586, %v961
        %995 = vst.msk [vmem:[%s971 + $0x111] sm:$0xff] %vm586, %v962
        %996 = vst.msk [vmem:[%s971 + $0x121] sm:$0xff] %vm586, %v963
        %997 = vst.msk [vmem:[%s971 + $0x129] sm:$0xff] %vm586, %v964
        %998 = vst.msk [vmem:[%s971 + $0x139] sm:$0xff] %vm586, %v965
        %999 = vst.msk [vmem:[%s971 + $0x141] sm:$0xff] %vm586, %v966
        %1000 = vst.msk [vmem:[%s971 + $0x151] sm:$0xff] %vm586, %v967
        %1001 = vst.msk [vmem:[%s971 + $0x159] sm:$0xff] %vm586, %v968
        %1002 = vst.msk [vmem:[%s971 + $0x169] sm:$0xff] %vm586, %v969
        %1003 = vst.msk [vmem:[%s971 + $0x171] sm:$0xff] %vm586, %v970
        %v1004 = vld [vmem:[#allocation2] sm:$0xff]
        %v1005 = vld [vmem:[#allocation2 + $0x8] sm:$0xff]
        %v1006 = vld [vmem:[#allocation2 + $0x18] sm:$0xff]
        %v1007 = vld [vmem:[#allocation2 + $0x20] sm:$0xff]
        %v1008 = vld [vmem:[#allocation2 + $0x30] sm:$0xff]
        %v1009 = vld [vmem:[#allocation2 + $0x38] sm:$0xff]
        %v1010 = vld [vmem:[#allocation2 + $0x48] sm:$0xff]
        %v1011 = vld [vmem:[#allocation2 + $0x50] sm:$0xff]
        %v1012 = vld [vmem:[#allocation2 + $0x60] sm:$0xff]
        %v1013 = vld [vmem:[#allocation2 + $0x68] sm:$0xff]
        %v1014 = vld [vmem:[#allocation2 + $0x78] sm:$0xff]
        %v1015 = vld [vmem:[#allocation2 + $0x80] sm:$0xff]
        %v1016 = vld [vmem:[#allocation2 + $0x90] sm:$0xff]
        %v1017 = vld [vmem:[#allocation2 + $0x98] sm:$0xff]
        %v1018 = vld [vmem:[#allocation2 + $0xa8] sm:$0xff]
        %v1019 = vld [vmem:[#allocation2 + $0xb0] sm:$0xff]
        %v1020 = vld [vmem:[#allocation2 + $0xc0] sm:$0xff]
        %v1021 = vld [vmem:[#allocation2 + $0xc8] sm:$0xff]
        %v1022 = vld [vmem:[#allocation2 + $0xd8] sm:$0xff]
        %v1023 = vld [vmem:[#allocation2 + $0xe0] sm:$0xff]
        %v1024 = vld [vmem:[#allocation2 + $0xf0] sm:$0xff]
        %v1025 = vld [vmem:[#allocation2 + $0xf8] sm:$0xff]
        %v1026 = vld [vmem:[#allocation2 + $0x108] sm:$0xff]
        %v1027 = vld [vmem:[#allocation2 + $0x110] sm:$0xff]
        %v1028 = vld [vmem:[#allocation2 + $0x120] sm:$0xff]
        %v1029 = vld [vmem:[#allocation2 + $0x128] sm:$0xff]
        %v1030 = vld [vmem:[#allocation2 + $0x138] sm:$0xff]
        %v1031 = vld [vmem:[#allocation2 + $0x140] sm:$0xff]
        %v1032 = vld [vmem:[#allocation2 + $0x150] sm:$0xff]
        %v1033 = vld [vmem:[#allocation2 + $0x158] sm:$0xff]
        %v1034 = vld [vmem:[#allocation2 + $0x168] sm:$0xff]
        %v1035 = vld [vmem:[#allocation2 + $0x170] sm:$0xff]
        %v1036 = vld [vmem:[#allocation2 + $0x1] sm:$0xff]
        %v1037 = vld [vmem:[#allocation2 + $0x9] sm:$0xff]
        %v1038 = vld [vmem:[#allocation2 + $0x19] sm:$0xff]
        %v1039 = vld [vmem:[#allocation2 + $0x21] sm:$0xff]
        %v1040 = vld [vmem:[#allocation2 + $0x31] sm:$0xff]
        %v1041 = vld [vmem:[#allocation2 + $0x39] sm:$0xff]
        %v1042 = vld [vmem:[#allocation2 + $0x49] sm:$0xff]
        %v1043 = vld [vmem:[#allocation2 + $0x51] sm:$0xff]
        %v1044 = vld [vmem:[#allocation2 + $0x61] sm:$0xff]
        %v1045 = vld [vmem:[#allocation2 + $0x69] sm:$0xff]
        %v1046 = vld [vmem:[#allocation2 + $0x79] sm:$0xff]
        %v1047 = vld [vmem:[#allocation2 + $0x81] sm:$0xff]
        %v1048 = vld [vmem:[#allocation2 + $0x91] sm:$0xff]
        %v1049 = vld [vmem:[#allocation2 + $0x99] sm:$0xff]
        %v1050 = vld [vmem:[#allocation2 + $0xa9] sm:$0xff]
        %v1051 = vld [vmem:[#allocation2 + $0xb1] sm:$0xff]
        %v1052 = vld [vmem:[#allocation2 + $0xc1] sm:$0xff]
        %v1053 = vld [vmem:[#allocation2 + $0xc9] sm:$0xff]
        %v1054 = vld [vmem:[#allocation2 + $0xd9] sm:$0xff]
        %v1055 = vld [vmem:[#allocation2 + $0xe1] sm:$0xff]
        %v1056 = vld [vmem:[#allocation2 + $0xf1] sm:$0xff]
        %v1057 = vld [vmem:[#allocation2 + $0xf9] sm:$0xff]
        %v1058 = vld [vmem:[#allocation2 + $0x109] sm:$0xff]
        %v1059 = vld [vmem:[#allocation2 + $0x111] sm:$0xff]
        %v1060 = vld [vmem:[#allocation2 + $0x121] sm:$0xff]
        %v1061 = vld [vmem:[#allocation2 + $0x129] sm:$0xff]
        %v1062 = vld [vmem:[#allocation2 + $0x139] sm:$0xff]
        %v1063 = vld [vmem:[#allocation2 + $0x141] sm:$0xff]
        %v1064 = vld [vmem:[#allocation2 + $0x151] sm:$0xff]
        %v1065 = vld [vmem:[#allocation2 + $0x159] sm:$0xff]
        %v1066 = vld [vmem:[#allocation2 + $0x169] sm:$0xff]
        %v1067 = vld [vmem:[#allocation2 + $0x171] sm:$0xff]
        %v1068 = vld [vmem:[#allocation2 + $0x2] sm:$0xff]
        %v1069 = vld [vmem:[#allocation2 + $0xa] sm:$0xff]
        %v1070 = vld [vmem:[#allocation2 + $0x1a] sm:$0xff]
        %v1071 = vld [vmem:[#allocation2 + $0x22] sm:$0xff]
        %v1072 = vld [vmem:[#allocation2 + $0x32] sm:$0xff]
        %v1073 = vld [vmem:[#allocation2 + $0x3a] sm:$0xff]
        %v1074 = vld [vmem:[#allocation2 + $0x4a] sm:$0xff]
        %v1075 = vld [vmem:[#allocation2 + $0x52] sm:$0xff]
        %v1076 = vld [vmem:[#allocation2 + $0x62] sm:$0xff]
        %v1077 = vld [vmem:[#allocation2 + $0x6a] sm:$0xff]
        %v1078 = vld [vmem:[#allocation2 + $0x7a] sm:$0xff]
        %v1079 = vld [vmem:[#allocation2 + $0x82] sm:$0xff]
        %v1080 = vld [vmem:[#allocation2 + $0x92] sm:$0xff]
        %v1081 = vld [vmem:[#allocation2 + $0x9a] sm:$0xff]
        %v1082 = vld [vmem:[#allocation2 + $0xaa] sm:$0xff]
        %v1083 = vld [vmem:[#allocation2 + $0xb2] sm:$0xff]
        %v1084 = vld [vmem:[#allocation2 + $0xc2] sm:$0xff]
        %v1085 = vld [vmem:[#allocation2 + $0xca] sm:$0xff]
        %v1086 = vld [vmem:[#allocation2 + $0xda] sm:$0xff]
        %v1087 = vld [vmem:[#allocation2 + $0xe2] sm:$0xff]
        %v1088 = vld [vmem:[#allocation2 + $0xf2] sm:$0xff]
        %v1089 = vld [vmem:[#allocation2 + $0xfa] sm:$0xff]
        %v1090 = vld [vmem:[#allocation2 + $0x10a] sm:$0xff]
        %v1091 = vld [vmem:[#allocation2 + $0x112] sm:$0xff]
        %v1092 = vld [vmem:[#allocation2 + $0x122] sm:$0xff]
        %v1093 = vld [vmem:[#allocation2 + $0x12a] sm:$0xff]
        %v1094 = vld [vmem:[#allocation2 + $0x13a] sm:$0xff]
        %v1095 = vld [vmem:[#allocation2 + $0x142] sm:$0xff]
        %v1096 = vld [vmem:[#allocation2 + $0x152] sm:$0xff]
        %v1097 = vld [vmem:[#allocation2 + $0x15a] sm:$0xff]
        %v1098 = vld [vmem:[#allocation2 + $0x16a] sm:$0xff]
        %v1099 = vld [vmem:[#allocation2 + $0x172] sm:$0xff]
        %v1100 = vld [vmem:[%s971] sm:$0xff]
        %v1101 = vld [vmem:[%s971 + $0x8] sm:$0xff]
        %v1102 = vld [vmem:[%s971 + $0x18] sm:$0xff]
        %v1103 = vld [vmem:[%s971 + $0x20] sm:$0xff]
        %v1104 = vld [vmem:[%s971 + $0x30] sm:$0xff]
        %v1105 = vld [vmem:[%s971 + $0x38] sm:$0xff]
        %v1106 = vld [vmem:[%s971 + $0x48] sm:$0xff]
        %v1107 = vld [vmem:[%s971 + $0x50] sm:$0xff]
        %v1108 = vld [vmem:[%s971 + $0x60] sm:$0xff]
        %v1109 = vld [vmem:[%s971 + $0x68] sm:$0xff]
        %v1110 = vld [vmem:[%s971 + $0x78] sm:$0xff]
        %v1111 = vld [vmem:[%s971 + $0x80] sm:$0xff]
        %v1112 = vld [vmem:[%s971 + $0x90] sm:$0xff]
        %v1113 = vld [vmem:[%s971 + $0x98] sm:$0xff]
        %v1114 = vld [vmem:[%s971 + $0xa8] sm:$0xff]
        %v1115 = vld [vmem:[%s971 + $0xb0] sm:$0xff]
        %v1116 = vld [vmem:[%s971 + $0xc0] sm:$0xff]
        %v1117 = vld [vmem:[%s971 + $0xc8] sm:$0xff]
        %v1118 = vld [vmem:[%s971 + $0xd8] sm:$0xff]
        %v1119 = vld [vmem:[%s971 + $0xe0] sm:$0xff]
        %v1120 = vld [vmem:[%s971 + $0xf0] sm:$0xff]
        %v1121 = vld [vmem:[%s971 + $0xf8] sm:$0xff]
        %v1122 = vld [vmem:[%s971 + $0x108] sm:$0xff]
        %v1123 = vld [vmem:[%s971 + $0x110] sm:$0xff]
        %v1124 = vld [vmem:[%s971 + $0x120] sm:$0xff]
        %v1125 = vld [vmem:[%s971 + $0x128] sm:$0xff]
        %v1126 = vld [vmem:[%s971 + $0x138] sm:$0xff]
        %v1127 = vld [vmem:[%s971 + $0x140] sm:$0xff]
        %v1128 = vld [vmem:[%s971 + $0x150] sm:$0xff]
        %v1129 = vld [vmem:[%s971 + $0x158] sm:$0xff]
        %v1130 = vld [vmem:[%s971 + $0x168] sm:$0xff]
        %v1131 = vld [vmem:[%s971 + $0x170] sm:$0xff]
        %v1132 = vld [vmem:[%s971 + $0x1] sm:$0xff]
        %v1133 = vld [vmem:[%s971 + $0x9] sm:$0xff]
        %v1134 = vld [vmem:[%s971 + $0x19] sm:$0xff]
        %v1135 = vld [vmem:[%s971 + $0x21] sm:$0xff]
        %v1136 = vld [vmem:[%s971 + $0x31] sm:$0xff]
        %v1137 = vld [vmem:[%s971 + $0x39] sm:$0xff]
        %v1138 = vld [vmem:[%s971 + $0x49] sm:$0xff]
        %v1139 = vld [vmem:[%s971 + $0x51] sm:$0xff]
        %v1140 = vld [vmem:[%s971 + $0x61] sm:$0xff]
        %v1141 = vld [vmem:[%s971 + $0x69] sm:$0xff]
        %v1142 = vld [vmem:[%s971 + $0x79] sm:$0xff]
        %v1143 = vld [vmem:[%s971 + $0x81] sm:$0xff]
        %v1144 = vld [vmem:[%s971 + $0x91] sm:$0xff]
        %v1145 = vld [vmem:[%s971 + $0x99] sm:$0xff]
        %v1146 = vld [vmem:[%s971 + $0xa9] sm:$0xff]
        %v1147 = vld [vmem:[%s971 + $0xb1] sm:$0xff]
        %v1148 = vld [vmem:[%s971 + $0xc1] sm:$0xff]
        %v1149 = vld [vmem:[%s971 + $0xc9] sm:$0xff]
        %v1150 = vld [vmem:[%s971 + $0xd9] sm:$0xff]
        %v1151 = vld [vmem:[%s971 + $0xe1] sm:$0xff]
        %v1152 = vld [vmem:[%s971 + $0xf1] sm:$0xff]
        %v1153 = vld [vmem:[%s971 + $0xf9] sm:$0xff]
        %v1154 = vld [vmem:[%s971 + $0x109] sm:$0xff]
        %v1155 = vld [vmem:[%s971 + $0x111] sm:$0xff]
        %v1156 = vld [vmem:[%s971 + $0x121] sm:$0xff]
        %v1157 = vld [vmem:[%s971 + $0x129] sm:$0xff]
        %v1158 = vld [vmem:[%s971 + $0x139] sm:$0xff]
        %v1159 = vld [vmem:[%s971 + $0x141] sm:$0xff]
        %v1160 = vld [vmem:[%s971 + $0x151] sm:$0xff]
        %v1161 = vld [vmem:[%s971 + $0x159] sm:$0xff]
        %v1162 = vld [vmem:[%s971 + $0x169] sm:$0xff]
        %v1163 = vld [vmem:[%s971 + $0x171] sm:$0xff]
        %v1164 = vld [vmem:[%s971 + $0x2] sm:$0xff]
        %v1165 = vld [vmem:[%s971 + $0xa] sm:$0xff]
        %v1166 = vld [vmem:[%s971 + $0x1a] sm:$0xff]
        %v1167 = vld [vmem:[%s971 + $0x22] sm:$0xff]
        %v1168 = vld [vmem:[%s971 + $0x32] sm:$0xff]
        %v1169 = vld [vmem:[%s971 + $0x3a] sm:$0xff]
        %v1170 = vld [vmem:[%s971 + $0x4a] sm:$0xff]
        %v1171 = vld [vmem:[%s971 + $0x52] sm:$0xff]
        %v1172 = vld [vmem:[%s971 + $0x62] sm:$0xff]
        %v1173 = vld [vmem:[%s971 + $0x6a] sm:$0xff]
        %v1174 = vld [vmem:[%s971 + $0x7a] sm:$0xff]
        %v1175 = vld [vmem:[%s971 + $0x82] sm:$0xff]
        %v1176 = vld [vmem:[%s971 + $0x92] sm:$0xff]
        %v1177 = vld [vmem:[%s971 + $0x9a] sm:$0xff]
        %v1178 = vld [vmem:[%s971 + $0xaa] sm:$0xff]
        %v1179 = vld [vmem:[%s971 + $0xb2] sm:$0xff]
        %v1180 = vld [vmem:[%s971 + $0xc2] sm:$0xff]
        %v1181 = vld [vmem:[%s971 + $0xca] sm:$0xff]
        %v1182 = vld [vmem:[%s971 + $0xda] sm:$0xff]
        %v1183 = vld [vmem:[%s971 + $0xe2] sm:$0xff]
        %v1184 = vld [vmem:[%s971 + $0xf2] sm:$0xff]
        %v1185 = vld [vmem:[%s971 + $0xfa] sm:$0xff]
        %v1186 = vld [vmem:[%s971 + $0x10a] sm:$0xff]
        %v1187 = vld [vmem:[%s971 + $0x112] sm:$0xff]
        %v1188 = vld [vmem:[%s971 + $0x122] sm:$0xff]
        %v1189 = vld [vmem:[%s971 + $0x12a] sm:$0xff]
        %v1190 = vld [vmem:[%s971 + $0x13a] sm:$0xff]
        %v1191 = vld [vmem:[%s971 + $0x142] sm:$0xff]
        %v1192 = vld [vmem:[%s971 + $0x152] sm:$0xff]
        %v1193 = vld [vmem:[%s971 + $0x15a] sm:$0xff]
        %v1194 = vld [vmem:[%s971 + $0x16a] sm:$0xff]
        %v1195 = vld [vmem:[%s971 + $0x172] sm:$0xff]
        %s1196 = scalar_lea.vmem [#allocation2], 48
        %v1197 = vld [vmem:[%s1196] sm:$0xff]
        %v1198 = vld [vmem:[%s1196 + $0x8] sm:$0xff]
        %v1199 = vld [vmem:[%s1196 + $0x18] sm:$0xff]
        %v1200 = vld [vmem:[%s1196 + $0x20] sm:$0xff]
        %v1201 = vld [vmem:[%s1196 + $0x30] sm:$0xff]
        %v1202 = vld [vmem:[%s1196 + $0x38] sm:$0xff]
        %v1203 = vld [vmem:[%s1196 + $0x48] sm:$0xff]
        %v1204 = vld [vmem:[%s1196 + $0x50] sm:$0xff]
        %v1205 = vld [vmem:[%s1196 + $0x60] sm:$0xff]
        %v1206 = vld [vmem:[%s1196 + $0x68] sm:$0xff]
        %v1207 = vld [vmem:[%s1196 + $0x78] sm:$0xff]
        %v1208 = vld [vmem:[%s1196 + $0x80] sm:$0xff]
        %v1209 = vld [vmem:[%s1196 + $0x90] sm:$0xff]
        %v1210 = vld [vmem:[%s1196 + $0x98] sm:$0xff]
        %v1211 = vld [vmem:[%s1196 + $0xa8] sm:$0xff]
        %v1212 = vld [vmem:[%s1196 + $0xb0] sm:$0xff]
        %v1213 = vld [vmem:[%s1196 + $0xc0] sm:$0xff]
        %v1214 = vld [vmem:[%s1196 + $0xc8] sm:$0xff]
        %v1215 = vld [vmem:[%s1196 + $0xd8] sm:$0xff]
        %v1216 = vld [vmem:[%s1196 + $0xe0] sm:$0xff]
        %v1217 = vld [vmem:[%s1196 + $0xf0] sm:$0xff]
        %v1218 = vld [vmem:[%s1196 + $0xf8] sm:$0xff]
        %v1219 = vld [vmem:[%s1196 + $0x108] sm:$0xff]
        %v1220 = vld [vmem:[%s1196 + $0x110] sm:$0xff]
        %v1221 = vld [vmem:[%s1196 + $0x120] sm:$0xff]
        %v1222 = vld [vmem:[%s1196 + $0x128] sm:$0xff]
        %v1223 = vld [vmem:[%s1196 + $0x138] sm:$0xff]
        %v1224 = vld [vmem:[%s1196 + $0x140] sm:$0xff]
        %v1225 = vld [vmem:[%s1196 + $0x150] sm:$0xff]
        %v1226 = vld [vmem:[%s1196 + $0x158] sm:$0xff]
        %v1227 = vld [vmem:[%s1196 + $0x168] sm:$0xff]
        %v1228 = vld [vmem:[%s1196 + $0x170] sm:$0xff]
        %v1229 = vld [vmem:[%s1196 + $0x1] sm:$0xff]
        %v1230 = vld [vmem:[%s1196 + $0x9] sm:$0xff]
        %v1231 = vld [vmem:[%s1196 + $0x19] sm:$0xff]
        %v1232 = vld [vmem:[%s1196 + $0x21] sm:$0xff]
        %v1233 = vld [vmem:[%s1196 + $0x31] sm:$0xff]
        %v1234 = vld [vmem:[%s1196 + $0x39] sm:$0xff]
        %v1235 = vld [vmem:[%s1196 + $0x49] sm:$0xff]
        %v1236 = vld [vmem:[%s1196 + $0x51] sm:$0xff]
        %v1237 = vld [vmem:[%s1196 + $0x61] sm:$0xff]
        %v1238 = vld [vmem:[%s1196 + $0x69] sm:$0xff]
        %v1239 = vld [vmem:[%s1196 + $0x79] sm:$0xff]
        %v1240 = vld [vmem:[%s1196 + $0x81] sm:$0xff]
        %v1241 = vld [vmem:[%s1196 + $0x91] sm:$0xff]
        %v1242 = vld [vmem:[%s1196 + $0x99] sm:$0xff]
        %v1243 = vld [vmem:[%s1196 + $0xa9] sm:$0xff]
        %v1244 = vld [vmem:[%s1196 + $0xb1] sm:$0xff]
        %v1245 = vld [vmem:[%s1196 + $0xc1] sm:$0xff]
        %v1246 = vld [vmem:[%s1196 + $0xc9] sm:$0xff]
        %v1247 = vld [vmem:[%s1196 + $0xd9] sm:$0xff]
        %v1248 = vld [vmem:[%s1196 + $0xe1] sm:$0xff]
        %v1249 = vld [vmem:[%s1196 + $0xf1] sm:$0xff]
        %v1250 = vld [vmem:[%s1196 + $0xf9] sm:$0xff]
        %v1251 = vld [vmem:[%s1196 + $0x109] sm:$0xff]
        %v1252 = vld [vmem:[%s1196 + $0x111] sm:$0xff]
        %v1253 = vld [vmem:[%s1196 + $0x121] sm:$0xff]
        %v1254 = vld [vmem:[%s1196 + $0x129] sm:$0xff]
        %v1255 = vld [vmem:[%s1196 + $0x139] sm:$0xff]
        %v1256 = vld [vmem:[%s1196 + $0x141] sm:$0xff]
        %v1257 = vld [vmem:[%s1196 + $0x151] sm:$0xff]
        %v1258 = vld [vmem:[%s1196 + $0x159] sm:$0xff]
        %v1259 = vld [vmem:[%s1196 + $0x169] sm:$0xff]
        %v1260 = vld [vmem:[%s1196 + $0x171] sm:$0xff]
        %v1261 = vld [vmem:[%s1196 + $0x2] sm:$0xff]
        %v1262 = vld [vmem:[%s1196 + $0xa] sm:$0xff]
        %v1263 = vld [vmem:[%s1196 + $0x1a] sm:$0xff]
        %v1264 = vld [vmem:[%s1196 + $0x22] sm:$0xff]
        %v1265 = vld [vmem:[%s1196 + $0x32] sm:$0xff]
        %v1266 = vld [vmem:[%s1196 + $0x3a] sm:$0xff]
        %v1267 = vld [vmem:[%s1196 + $0x4a] sm:$0xff]
        %v1268 = vld [vmem:[%s1196 + $0x52] sm:$0xff]
        %v1269 = vld [vmem:[%s1196 + $0x62] sm:$0xff]
        %v1270 = vld [vmem:[%s1196 + $0x6a] sm:$0xff]
        %v1271 = vld [vmem:[%s1196 + $0x7a] sm:$0xff]
        %v1272 = vld [vmem:[%s1196 + $0x82] sm:$0xff]
        %v1273 = vld [vmem:[%s1196 + $0x92] sm:$0xff]
        %v1274 = vld [vmem:[%s1196 + $0x9a] sm:$0xff]
        %v1275 = vld [vmem:[%s1196 + $0xaa] sm:$0xff]
        %v1276 = vld [vmem:[%s1196 + $0xb2] sm:$0xff]
        %v1277 = vld [vmem:[%s1196 + $0xc2] sm:$0xff]
        %v1278 = vld [vmem:[%s1196 + $0xca] sm:$0xff]
        %v1279 = vld [vmem:[%s1196 + $0xda] sm:$0xff]
        %v1280 = vld [vmem:[%s1196 + $0xe2] sm:$0xff]
        %v1281 = vld [vmem:[%s1196 + $0xf2] sm:$0xff]
        %v1282 = vld [vmem:[%s1196 + $0xfa] sm:$0xff]
        %v1283 = vld [vmem:[%s1196 + $0x10a] sm:$0xff]
        %v1284 = vld [vmem:[%s1196 + $0x112] sm:$0xff]
        %v1285 = vld [vmem:[%s1196 + $0x122] sm:$0xff]
        %v1286 = vld [vmem:[%s1196 + $0x12a] sm:$0xff]
        %v1287 = vld [vmem:[%s1196 + $0x13a] sm:$0xff]
        %v1288 = vld [vmem:[%s1196 + $0x142] sm:$0xff]
        %v1289 = vld [vmem:[%s1196 + $0x152] sm:$0xff]
        %v1290 = vld [vmem:[%s1196 + $0x15a] sm:$0xff]
        %v1291 = vld [vmem:[%s1196 + $0x16a] sm:$0xff]
        %v1292 = vld [vmem:[%s1196 + $0x172] sm:$0xff]
        %1325 = vrot.lane.b32.xlu0 %v1036, 16
        %v1326 = vpop.permute.xlu0 %1325
        %1327 = vrot.lane.b32.xlu0 %v1037, 16
        %v1328 = vpop.permute.xlu0 %1327
        %1329 = vrot.lane.b32.xlu0 %v1038, 16
        %v1330 = vpop.permute.xlu0 %1329
        %1331 = vrot.lane.b32.xlu0 %v1039, 16
        %v1332 = vpop.permute.xlu0 %1331
        %1333 = vrot.lane.b32.xlu0 %v1040, 16
        %v1334 = vpop.permute.xlu0 %1333
        %1335 = vrot.lane.b32.xlu0 %v1041, 16
        %v1336 = vpop.permute.xlu0 %1335
        %1337 = vrot.lane.b32.xlu0 %v1042, 16
        %v1338 = vpop.permute.xlu0 %1337
        %1339 = vrot.lane.b32.xlu0 %v1043, 16
        %v1340 = vpop.permute.xlu0 %1339
        %1341 = vrot.lane.b32.xlu0 %v1044, 16
        %v1342 = vpop.permute.xlu0 %1341
        %1343 = vrot.lane.b32.xlu0 %v1045, 16
        %v1344 = vpop.permute.xlu0 %1343
        %1345 = vrot.lane.b32.xlu0 %v1046, 16
        %v1346 = vpop.permute.xlu0 %1345
        %1347 = vrot.lane.b32.xlu0 %v1047, 16
        %v1348 = vpop.permute.xlu0 %1347
        %1349 = vrot.lane.b32.xlu0 %v1048, 16
        %v1350 = vpop.permute.xlu0 %1349
        %1351 = vrot.lane.b32.xlu0 %v1049, 16
        %v1352 = vpop.permute.xlu0 %1351
        %1353 = vrot.lane.b32.xlu0 %v1050, 16
        %v1354 = vpop.permute.xlu0 %1353
        %1355 = vrot.lane.b32.xlu0 %v1051, 16
        %v1356 = vpop.permute.xlu0 %1355
        %1357 = vrot.lane.b32.xlu0 %v1052, 16
        %v1358 = vpop.permute.xlu0 %1357
        %1359 = vrot.lane.b32.xlu0 %v1053, 16
        %v1360 = vpop.permute.xlu0 %1359
        %1361 = vrot.lane.b32.xlu0 %v1054, 16
        %v1362 = vpop.permute.xlu0 %1361
        %1363 = vrot.lane.b32.xlu0 %v1055, 16
        %v1364 = vpop.permute.xlu0 %1363
        %1365 = vrot.lane.b32.xlu0 %v1056, 16
        %v1366 = vpop.permute.xlu0 %1365
        %1367 = vrot.lane.b32.xlu0 %v1057, 16
        %v1368 = vpop.permute.xlu0 %1367
        %1369 = vrot.lane.b32.xlu0 %v1058, 16
        %v1370 = vpop.permute.xlu0 %1369
        %1371 = vrot.lane.b32.xlu0 %v1059, 16
        %v1372 = vpop.permute.xlu0 %1371
        %1373 = vrot.lane.b32.xlu0 %v1060, 16
        %v1374 = vpop.permute.xlu0 %1373
        %1375 = vrot.lane.b32.xlu0 %v1061, 16
        %v1376 = vpop.permute.xlu0 %1375
        %1377 = vrot.lane.b32.xlu0 %v1062, 16
        %v1378 = vpop.permute.xlu0 %1377
        %1379 = vrot.lane.b32.xlu0 %v1063, 16
        %v1380 = vpop.permute.xlu0 %1379
        %1381 = vrot.lane.b32.xlu0 %v1064, 16
        %v1382 = vpop.permute.xlu0 %1381
        %1383 = vrot.lane.b32.xlu0 %v1065, 16
        %v1384 = vpop.permute.xlu0 %1383
        %1385 = vrot.lane.b32.xlu0 %v1066, 16
        %v1386 = vpop.permute.xlu0 %1385
        %1387 = vrot.lane.b32.xlu0 %v1067, 16
        %v1388 = vpop.permute.xlu0 %1387
        %1453 = vrot.lane.b32.xlu0 %v1068, 32
        %v1454 = vpop.permute.xlu0 %1453
        %1455 = vrot.lane.b32.xlu0 %v1069, 32
        %v1456 = vpop.permute.xlu0 %1455
        %1457 = vrot.lane.b32.xlu0 %v1070, 32
        %v1458 = vpop.permute.xlu0 %1457
        %1459 = vrot.lane.b32.xlu0 %v1071, 32
        %v1460 = vpop.permute.xlu0 %1459
        %1461 = vrot.lane.b32.xlu0 %v1072, 32
        %v1462 = vpop.permute.xlu0 %1461
        %1463 = vrot.lane.b32.xlu0 %v1073, 32
        %v1464 = vpop.permute.xlu0 %1463
        %1465 = vrot.lane.b32.xlu0 %v1074, 32
        %v1466 = vpop.permute.xlu0 %1465
        %1467 = vrot.lane.b32.xlu0 %v1075, 32
        %v1468 = vpop.permute.xlu0 %1467
        %1469 = vrot.lane.b32.xlu0 %v1076, 32
        %v1470 = vpop.permute.xlu0 %1469
        %1471 = vrot.lane.b32.xlu0 %v1077, 32
        %v1472 = vpop.permute.xlu0 %1471
        %1473 = vrot.lane.b32.xlu0 %v1078, 32
        %v1474 = vpop.permute.xlu0 %1473
        %1475 = vrot.lane.b32.xlu0 %v1079, 32
        %v1476 = vpop.permute.xlu0 %1475
        %1477 = vrot.lane.b32.xlu0 %v1080, 32
        %v1478 = vpop.permute.xlu0 %1477
        %1479 = vrot.lane.b32.xlu0 %v1081, 32
        %v1480 = vpop.permute.xlu0 %1479
        %1481 = vrot.lane.b32.xlu0 %v1082, 32
        %v1482 = vpop.permute.xlu0 %1481
        %1483 = vrot.lane.b32.xlu0 %v1083, 32
        %v1484 = vpop.permute.xlu0 %1483
        %1485 = vrot.lane.b32.xlu0 %v1084, 32
        %v1486 = vpop.permute.xlu0 %1485
        %1487 = vrot.lane.b32.xlu0 %v1085, 32
        %v1488 = vpop.permute.xlu0 %1487
        %1489 = vrot.lane.b32.xlu0 %v1086, 32
        %v1490 = vpop.permute.xlu0 %1489
        %1491 = vrot.lane.b32.xlu0 %v1087, 32
        %v1492 = vpop.permute.xlu0 %1491
        %1493 = vrot.lane.b32.xlu0 %v1088, 32
        %v1494 = vpop.permute.xlu0 %1493
        %1495 = vrot.lane.b32.xlu0 %v1089, 32
        %v1496 = vpop.permute.xlu0 %1495
        %1497 = vrot.lane.b32.xlu0 %v1090, 32
        %v1498 = vpop.permute.xlu0 %1497
        %1499 = vrot.lane.b32.xlu0 %v1091, 32
        %v1500 = vpop.permute.xlu0 %1499
        %1501 = vrot.lane.b32.xlu0 %v1092, 32
        %v1502 = vpop.permute.xlu0 %1501
        %1503 = vrot.lane.b32.xlu0 %v1093, 32
        %v1504 = vpop.permute.xlu0 %1503
        %1505 = vrot.lane.b32.xlu0 %v1094, 32
        %v1506 = vpop.permute.xlu0 %1505
        %1507 = vrot.lane.b32.xlu0 %v1095, 32
        %v1508 = vpop.permute.xlu0 %1507
        %1509 = vrot.lane.b32.xlu0 %v1096, 32
        %v1510 = vpop.permute.xlu0 %1509
        %1511 = vrot.lane.b32.xlu0 %v1097, 32
        %v1512 = vpop.permute.xlu0 %1511
        %1513 = vrot.lane.b32.xlu0 %v1098, 32
        %v1514 = vpop.permute.xlu0 %1513
        %1515 = vrot.lane.b32.xlu0 %v1099, 32
        %v1516 = vpop.permute.xlu0 %1515
        %1581 = vrot.lane.b32.xlu0 %v1100, 48
        %v1582 = vpop.permute.xlu0 %1581
        %1583 = vrot.lane.b32.xlu0 %v1101, 48
        %v1584 = vpop.permute.xlu0 %1583
        %1585 = vrot.lane.b32.xlu0 %v1102, 48
        %v1586 = vpop.permute.xlu0 %1585
        %1587 = vrot.lane.b32.xlu0 %v1103, 48
        %v1588 = vpop.permute.xlu0 %1587
        %1589 = vrot.lane.b32.xlu0 %v1104, 48
        %v1590 = vpop.permute.xlu0 %1589
        %1591 = vrot.lane.b32.xlu0 %v1105, 48
        %v1592 = vpop.permute.xlu0 %1591
        %1593 = vrot.lane.b32.xlu0 %v1106, 48
        %v1594 = vpop.permute.xlu0 %1593
        %1595 = vrot.lane.b32.xlu0 %v1107, 48
        %v1596 = vpop.permute.xlu0 %1595
        %1597 = vrot.lane.b32.xlu0 %v1108, 48
        %v1598 = vpop.permute.xlu0 %1597
        %1599 = vrot.lane.b32.xlu0 %v1109, 48
        %v1600 = vpop.permute.xlu0 %1599
        %1601 = vrot.lane.b32.xlu0 %v1110, 48
        %v1602 = vpop.permute.xlu0 %1601
        %1603 = vrot.lane.b32.xlu0 %v1111, 48
        %v1604 = vpop.permute.xlu0 %1603
        %1605 = vrot.lane.b32.xlu0 %v1112, 48
        %v1606 = vpop.permute.xlu0 %1605
        %1607 = vrot.lane.b32.xlu0 %v1113, 48
        %v1608 = vpop.permute.xlu0 %1607
        %1609 = vrot.lane.b32.xlu0 %v1114, 48
        %v1610 = vpop.permute.xlu0 %1609
        %1611 = vrot.lane.b32.xlu0 %v1115, 48
        %v1612 = vpop.permute.xlu0 %1611
        %1613 = vrot.lane.b32.xlu0 %v1116, 48
        %v1614 = vpop.permute.xlu0 %1613
        %1615 = vrot.lane.b32.xlu0 %v1117, 48
        %v1616 = vpop.permute.xlu0 %1615
        %1617 = vrot.lane.b32.xlu0 %v1118, 48
        %v1618 = vpop.permute.xlu0 %1617
        %1619 = vrot.lane.b32.xlu0 %v1119, 48
        %v1620 = vpop.permute.xlu0 %1619
        %1621 = vrot.lane.b32.xlu0 %v1120, 48
        %v1622 = vpop.permute.xlu0 %1621
        %1623 = vrot.lane.b32.xlu0 %v1121, 48
        %v1624 = vpop.permute.xlu0 %1623
        %1625 = vrot.lane.b32.xlu0 %v1122, 48
        %v1626 = vpop.permute.xlu0 %1625
        %1627 = vrot.lane.b32.xlu0 %v1123, 48
        %v1628 = vpop.permute.xlu0 %1627
        %1629 = vrot.lane.b32.xlu0 %v1124, 48
        %v1630 = vpop.permute.xlu0 %1629
        %1631 = vrot.lane.b32.xlu0 %v1125, 48
        %v1632 = vpop.permute.xlu0 %1631
        %1633 = vrot.lane.b32.xlu0 %v1126, 48
        %v1634 = vpop.permute.xlu0 %1633
        %1635 = vrot.lane.b32.xlu0 %v1127, 48
        %v1636 = vpop.permute.xlu0 %1635
        %1637 = vrot.lane.b32.xlu0 %v1128, 48
        %v1638 = vpop.permute.xlu0 %1637
        %1639 = vrot.lane.b32.xlu0 %v1129, 48
        %v1640 = vpop.permute.xlu0 %1639
        %1641 = vrot.lane.b32.xlu0 %v1130, 48
        %v1642 = vpop.permute.xlu0 %1641
        %1643 = vrot.lane.b32.xlu0 %v1131, 48
        %v1644 = vpop.permute.xlu0 %1643
        %1709 = vrot.lane.b32.xlu0 %v1132, 64
        %v1710 = vpop.permute.xlu0 %1709
        %1711 = vrot.lane.b32.xlu0 %v1133, 64
        %v1712 = vpop.permute.xlu0 %1711
        %1713 = vrot.lane.b32.xlu0 %v1134, 64
        %v1714 = vpop.permute.xlu0 %1713
        %1715 = vrot.lane.b32.xlu0 %v1135, 64
        %v1716 = vpop.permute.xlu0 %1715
        %1717 = vrot.lane.b32.xlu0 %v1136, 64
        %v1718 = vpop.permute.xlu0 %1717
        %1719 = vrot.lane.b32.xlu0 %v1137, 64
        %v1720 = vpop.permute.xlu0 %1719
        %1721 = vrot.lane.b32.xlu0 %v1138, 64
        %v1722 = vpop.permute.xlu0 %1721
        %1723 = vrot.lane.b32.xlu0 %v1139, 64
        %v1724 = vpop.permute.xlu0 %1723
        %1725 = vrot.lane.b32.xlu0 %v1140, 64
        %v1726 = vpop.permute.xlu0 %1725
        %1727 = vrot.lane.b32.xlu0 %v1141, 64
        %v1728 = vpop.permute.xlu0 %1727
        %1729 = vrot.lane.b32.xlu0 %v1142, 64
        %v1730 = vpop.permute.xlu0 %1729
        %1731 = vrot.lane.b32.xlu0 %v1143, 64
        %v1732 = vpop.permute.xlu0 %1731
        %1733 = vrot.lane.b32.xlu0 %v1144, 64
        %v1734 = vpop.permute.xlu0 %1733
        %1735 = vrot.lane.b32.xlu0 %v1145, 64
        %v1736 = vpop.permute.xlu0 %1735
        %1737 = vrot.lane.b32.xlu0 %v1146, 64
        %v1738 = vpop.permute.xlu0 %1737
        %1739 = vrot.lane.b32.xlu0 %v1147, 64
        %v1740 = vpop.permute.xlu0 %1739
        %1741 = vrot.lane.b32.xlu0 %v1148, 64
        %v1742 = vpop.permute.xlu0 %1741
        %1743 = vrot.lane.b32.xlu0 %v1149, 64
        %v1744 = vpop.permute.xlu0 %1743
        %1745 = vrot.lane.b32.xlu0 %v1150, 64
        %v1746 = vpop.permute.xlu0 %1745
        %1747 = vrot.lane.b32.xlu0 %v1151, 64
        %v1748 = vpop.permute.xlu0 %1747
        %1749 = vrot.lane.b32.xlu0 %v1152, 64
        %v1750 = vpop.permute.xlu0 %1749
        %1751 = vrot.lane.b32.xlu0 %v1153, 64
        %v1752 = vpop.permute.xlu0 %1751
        %1753 = vrot.lane.b32.xlu0 %v1154, 64
        %v1754 = vpop.permute.xlu0 %1753
        %1755 = vrot.lane.b32.xlu0 %v1155, 64
        %v1756 = vpop.permute.xlu0 %1755
        %1757 = vrot.lane.b32.xlu0 %v1156, 64
        %v1758 = vpop.permute.xlu0 %1757
        %1759 = vrot.lane.b32.xlu0 %v1157, 64
        %v1760 = vpop.permute.xlu0 %1759
        %1761 = vrot.lane.b32.xlu0 %v1158, 64
        %v1762 = vpop.permute.xlu0 %1761
        %1763 = vrot.lane.b32.xlu0 %v1159, 64
        %v1764 = vpop.permute.xlu0 %1763
        %1765 = vrot.lane.b32.xlu0 %v1160, 64
        %v1766 = vpop.permute.xlu0 %1765
        %1767 = vrot.lane.b32.xlu0 %v1161, 64
        %v1768 = vpop.permute.xlu0 %1767
        %1769 = vrot.lane.b32.xlu0 %v1162, 64
        %v1770 = vpop.permute.xlu0 %1769
        %1771 = vrot.lane.b32.xlu0 %v1163, 64
        %v1772 = vpop.permute.xlu0 %1771
        %1837 = vrot.lane.b32.xlu0 %v1164, 80
        %v1838 = vpop.permute.xlu0 %1837
        %1839 = vrot.lane.b32.xlu0 %v1165, 80
        %v1840 = vpop.permute.xlu0 %1839
        %1841 = vrot.lane.b32.xlu0 %v1166, 80
        %v1842 = vpop.permute.xlu0 %1841
        %1843 = vrot.lane.b32.xlu0 %v1167, 80
        %v1844 = vpop.permute.xlu0 %1843
        %1845 = vrot.lane.b32.xlu0 %v1168, 80
        %v1846 = vpop.permute.xlu0 %1845
        %1847 = vrot.lane.b32.xlu0 %v1169, 80
        %v1848 = vpop.permute.xlu0 %1847
        %1849 = vrot.lane.b32.xlu0 %v1170, 80
        %v1850 = vpop.permute.xlu0 %1849
        %1851 = vrot.lane.b32.xlu0 %v1171, 80
        %v1852 = vpop.permute.xlu0 %1851
        %1853 = vrot.lane.b32.xlu0 %v1172, 80
        %v1854 = vpop.permute.xlu0 %1853
        %1855 = vrot.lane.b32.xlu0 %v1173, 80
        %v1856 = vpop.permute.xlu0 %1855
        %1857 = vrot.lane.b32.xlu0 %v1174, 80
        %v1858 = vpop.permute.xlu0 %1857
        %1859 = vrot.lane.b32.xlu0 %v1175, 80
        %v1860 = vpop.permute.xlu0 %1859
        %1861 = vrot.lane.b32.xlu0 %v1176, 80
        %v1862 = vpop.permute.xlu0 %1861
        %1863 = vrot.lane.b32.xlu0 %v1177, 80
        %v1864 = vpop.permute.xlu0 %1863
        %1865 = vrot.lane.b32.xlu0 %v1178, 80
        %v1866 = vpop.permute.xlu0 %1865
        %1867 = vrot.lane.b32.xlu0 %v1179, 80
        %v1868 = vpop.permute.xlu0 %1867
        %1869 = vrot.lane.b32.xlu0 %v1180, 80
        %v1870 = vpop.permute.xlu0 %1869
        %1871 = vrot.lane.b32.xlu0 %v1181, 80
        %v1872 = vpop.permute.xlu0 %1871
        %1873 = vrot.lane.b32.xlu0 %v1182, 80
        %v1874 = vpop.permute.xlu0 %1873
        %1875 = vrot.lane.b32.xlu0 %v1183, 80
        %v1876 = vpop.permute.xlu0 %1875
        %1877 = vrot.lane.b32.xlu0 %v1184, 80
        %v1878 = vpop.permute.xlu0 %1877
        %1879 = vrot.lane.b32.xlu0 %v1185, 80
        %v1880 = vpop.permute.xlu0 %1879
        %1881 = vrot.lane.b32.xlu0 %v1186, 80
        %v1882 = vpop.permute.xlu0 %1881
        %1883 = vrot.lane.b32.xlu0 %v1187, 80
        %v1884 = vpop.permute.xlu0 %1883
        %1885 = vrot.lane.b32.xlu0 %v1188, 80
        %v1886 = vpop.permute.xlu0 %1885
        %1887 = vrot.lane.b32.xlu0 %v1189, 80
        %v1888 = vpop.permute.xlu0 %1887
        %1889 = vrot.lane.b32.xlu0 %v1190, 80
        %v1890 = vpop.permute.xlu0 %1889
        %1891 = vrot.lane.b32.xlu0 %v1191, 80
        %v1892 = vpop.permute.xlu0 %1891
        %1893 = vrot.lane.b32.xlu0 %v1192, 80
        %v1894 = vpop.permute.xlu0 %1893
        %1895 = vrot.lane.b32.xlu0 %v1193, 80
        %v1896 = vpop.permute.xlu0 %1895
        %1897 = vrot.lane.b32.xlu0 %v1194, 80
        %v1898 = vpop.permute.xlu0 %1897
        %1899 = vrot.lane.b32.xlu0 %v1195, 80
        %v1900 = vpop.permute.xlu0 %1899
        %1965 = vrot.lane.b32.xlu0 %v1197, 96
        %v1966 = vpop.permute.xlu0 %1965
        %1967 = vrot.lane.b32.xlu0 %v1198, 96
        %v1968 = vpop.permute.xlu0 %1967
        %1969 = vrot.lane.b32.xlu0 %v1199, 96
        %v1970 = vpop.permute.xlu0 %1969
        %1971 = vrot.lane.b32.xlu0 %v1200, 96
        %v1972 = vpop.permute.xlu0 %1971
        %1973 = vrot.lane.b32.xlu0 %v1201, 96
        %v1974 = vpop.permute.xlu0 %1973
        %1975 = vrot.lane.b32.xlu0 %v1202, 96
        %v1976 = vpop.permute.xlu0 %1975
        %1977 = vrot.lane.b32.xlu0 %v1203, 96
        %v1978 = vpop.permute.xlu0 %1977
        %1979 = vrot.lane.b32.xlu0 %v1204, 96
        %v1980 = vpop.permute.xlu0 %1979
        %1981 = vrot.lane.b32.xlu0 %v1205, 96
        %v1982 = vpop.permute.xlu0 %1981
        %1983 = vrot.lane.b32.xlu0 %v1206, 96
        %v1984 = vpop.permute.xlu0 %1983
        %1985 = vrot.lane.b32.xlu0 %v1207, 96
        %v1986 = vpop.permute.xlu0 %1985
        %1987 = vrot.lane.b32.xlu0 %v1208, 96
        %v1988 = vpop.permute.xlu0 %1987
        %1989 = vrot.lane.b32.xlu0 %v1209, 96
        %v1990 = vpop.permute.xlu0 %1989
        %1991 = vrot.lane.b32.xlu0 %v1210, 96
        %v1992 = vpop.permute.xlu0 %1991
        %1993 = vrot.lane.b32.xlu0 %v1211, 96
        %v1994 = vpop.permute.xlu0 %1993
        %1995 = vrot.lane.b32.xlu0 %v1212, 96
        %v1996 = vpop.permute.xlu0 %1995
        %1997 = vrot.lane.b32.xlu0 %v1213, 96
        %v1998 = vpop.permute.xlu0 %1997
        %1999 = vrot.lane.b32.xlu0 %v1214, 96
        %v2000 = vpop.permute.xlu0 %1999
        %2001 = vrot.lane.b32.xlu0 %v1215, 96
        %v2002 = vpop.permute.xlu0 %2001
        %2003 = vrot.lane.b32.xlu0 %v1216, 96
        %v2004 = vpop.permute.xlu0 %2003
        %2005 = vrot.lane.b32.xlu0 %v1217, 96
        %v2006 = vpop.permute.xlu0 %2005
        %2007 = vrot.lane.b32.xlu0 %v1218, 96
        %v2008 = vpop.permute.xlu0 %2007
        %2009 = vrot.lane.b32.xlu0 %v1219, 96
        %v2010 = vpop.permute.xlu0 %2009
        %2011 = vrot.lane.b32.xlu0 %v1220, 96
        %v2012 = vpop.permute.xlu0 %2011
        %2013 = vrot.lane.b32.xlu0 %v1221, 96
        %v2014 = vpop.permute.xlu0 %2013
        %2015 = vrot.lane.b32.xlu0 %v1222, 96
        %v2016 = vpop.permute.xlu0 %2015
        %2017 = vrot.lane.b32.xlu0 %v1223, 96
        %v2018 = vpop.permute.xlu0 %2017
        %2019 = vrot.lane.b32.xlu0 %v1224, 96
        %v2020 = vpop.permute.xlu0 %2019
        %2021 = vrot.lane.b32.xlu0 %v1225, 96
        %v2022 = vpop.permute.xlu0 %2021
        %2023 = vrot.lane.b32.xlu0 %v1226, 96
        %v2024 = vpop.permute.xlu0 %2023
        %2025 = vrot.lane.b32.xlu0 %v1227, 96
        %v2026 = vpop.permute.xlu0 %2025
        %2027 = vrot.lane.b32.xlu0 %v1228, 96
        %v2028 = vpop.permute.xlu0 %2027
        %2093 = vrot.lane.b32.xlu0 %v1229, 112
        %v2094 = vpop.permute.xlu0 %2093
        %2095 = vrot.lane.b32.xlu0 %v1230, 112
        %v2096 = vpop.permute.xlu0 %2095
        %2097 = vrot.lane.b32.xlu0 %v1231, 112
        %v2098 = vpop.permute.xlu0 %2097
        %2099 = vrot.lane.b32.xlu0 %v1232, 112
        %v2100 = vpop.permute.xlu0 %2099
        %2101 = vrot.lane.b32.xlu0 %v1233, 112
        %v2102 = vpop.permute.xlu0 %2101
        %2103 = vrot.lane.b32.xlu0 %v1234, 112
        %v2104 = vpop.permute.xlu0 %2103
        %2105 = vrot.lane.b32.xlu0 %v1235, 112
        %v2106 = vpop.permute.xlu0 %2105
        %2107 = vrot.lane.b32.xlu0 %v1236, 112
        %v2108 = vpop.permute.xlu0 %2107
        %2109 = vrot.lane.b32.xlu0 %v1237, 112
        %v2110 = vpop.permute.xlu0 %2109
        %2111 = vrot.lane.b32.xlu0 %v1238, 112
        %v2112 = vpop.permute.xlu0 %2111
        %2113 = vrot.lane.b32.xlu0 %v1239, 112
        %v2114 = vpop.permute.xlu0 %2113
        %2115 = vrot.lane.b32.xlu0 %v1240, 112
        %v2116 = vpop.permute.xlu0 %2115
        %2117 = vrot.lane.b32.xlu0 %v1241, 112
        %v2118 = vpop.permute.xlu0 %2117
        %2119 = vrot.lane.b32.xlu0 %v1242, 112
        %v2120 = vpop.permute.xlu0 %2119
        %2121 = vrot.lane.b32.xlu0 %v1243, 112
        %v2122 = vpop.permute.xlu0 %2121
        %2123 = vrot.lane.b32.xlu0 %v1244, 112
        %v2124 = vpop.permute.xlu0 %2123
        %2125 = vrot.lane.b32.xlu0 %v1245, 112
        %v2126 = vpop.permute.xlu0 %2125
        %2127 = vrot.lane.b32.xlu0 %v1246, 112
        %v2128 = vpop.permute.xlu0 %2127
        %2129 = vrot.lane.b32.xlu0 %v1247, 112
        %v2130 = vpop.permute.xlu0 %2129
        %2131 = vrot.lane.b32.xlu0 %v1248, 112
        %v2132 = vpop.permute.xlu0 %2131
        %2133 = vrot.lane.b32.xlu0 %v1249, 112
        %v2134 = vpop.permute.xlu0 %2133
        %2135 = vrot.lane.b32.xlu0 %v1250, 112
        %v2136 = vpop.permute.xlu0 %2135
        %2137 = vrot.lane.b32.xlu0 %v1251, 112
        %v2138 = vpop.permute.xlu0 %2137
        %2139 = vrot.lane.b32.xlu0 %v1252, 112
        %v2140 = vpop.permute.xlu0 %2139
        %2141 = vrot.lane.b32.xlu0 %v1253, 112
        %v2142 = vpop.permute.xlu0 %2141
        %2143 = vrot.lane.b32.xlu0 %v1254, 112
        %v2144 = vpop.permute.xlu0 %2143
        %2145 = vrot.lane.b32.xlu0 %v1255, 112
        %v2146 = vpop.permute.xlu0 %2145
        %2147 = vrot.lane.b32.xlu0 %v1256, 112
        %v2148 = vpop.permute.xlu0 %2147
        %2149 = vrot.lane.b32.xlu0 %v1257, 112
        %v2150 = vpop.permute.xlu0 %2149
        %2151 = vrot.lane.b32.xlu0 %v1258, 112
        %v2152 = vpop.permute.xlu0 %2151
        %2153 = vrot.lane.b32.xlu0 %v1259, 112
        %v2154 = vpop.permute.xlu0 %2153
        %2155 = vrot.lane.b32.xlu0 %v1260, 112
        %v2156 = vpop.permute.xlu0 %2155
        %v2189 = vsel %vm586, %v1004, %v1326
        %v2190 = vsel %vm586, %v1005, %v1328
        %v2191 = vsel %vm586, %v1006, %v1330
        %v2192 = vsel %vm586, %v1007, %v1332
        %v2193 = vsel %vm586, %v1008, %v1334
        %v2194 = vsel %vm586, %v1009, %v1336
        %v2195 = vsel %vm586, %v1010, %v1338
        %v2196 = vsel %vm586, %v1011, %v1340
        %v2197 = vsel %vm586, %v1012, %v1342
        %v2198 = vsel %vm586, %v1013, %v1344
        %v2199 = vsel %vm586, %v1014, %v1346
        %v2200 = vsel %vm586, %v1015, %v1348
        %v2201 = vsel %vm586, %v1016, %v1350
        %v2202 = vsel %vm586, %v1017, %v1352
        %v2203 = vsel %vm586, %v1018, %v1354
        %v2204 = vsel %vm586, %v1019, %v1356
        %v2205 = vsel %vm586, %v1020, %v1358
        %v2206 = vsel %vm586, %v1021, %v1360
        %v2207 = vsel %vm586, %v1022, %v1362
        %v2208 = vsel %vm586, %v1023, %v1364
        %v2209 = vsel %vm586, %v1024, %v1366
        %v2210 = vsel %vm586, %v1025, %v1368
        %v2211 = vsel %vm586, %v1026, %v1370
        %v2212 = vsel %vm586, %v1027, %v1372
        %v2213 = vsel %vm586, %v1028, %v1374
        %v2214 = vsel %vm586, %v1029, %v1376
        %v2215 = vsel %vm586, %v1030, %v1378
        %v2216 = vsel %vm586, %v1031, %v1380
        %v2217 = vsel %vm586, %v1032, %v1382
        %v2218 = vsel %vm586, %v1033, %v1384
        %v2219 = vsel %vm586, %v1034, %v1386
        %v2220 = vsel %vm586, %v1035, %v1388
        %vm2221 = vcmask 261120
        %v2222 = vsel %vm2221, %v2189, %v1454
        %v2223 = vsel %vm2221, %v2190, %v1456
        %v2224 = vsel %vm2221, %v2191, %v1458
        %v2225 = vsel %vm2221, %v2192, %v1460
        %v2226 = vsel %vm2221, %v2193, %v1462
        %v2227 = vsel %vm2221, %v2194, %v1464
        %v2228 = vsel %vm2221, %v2195, %v1466
        %v2229 = vsel %vm2221, %v2196, %v1468
        %v2230 = vsel %vm2221, %v2197, %v1470
        %v2231 = vsel %vm2221, %v2198, %v1472
        %v2232 = vsel %vm2221, %v2199, %v1474
        %v2233 = vsel %vm2221, %v2200, %v1476
        %v2234 = vsel %vm2221, %v2201, %v1478
        %v2235 = vsel %vm2221, %v2202, %v1480
        %v2236 = vsel %vm2221, %v2203, %v1482
        %v2237 = vsel %vm2221, %v2204, %v1484
        %v2238 = vsel %vm2221, %v2205, %v1486
        %v2239 = vsel %vm2221, %v2206, %v1488
        %v2240 = vsel %vm2221, %v2207, %v1490
        %v2241 = vsel %vm2221, %v2208, %v1492
        %v2242 = vsel %vm2221, %v2209, %v1494
        %v2243 = vsel %vm2221, %v2210, %v1496
        %v2244 = vsel %vm2221, %v2211, %v1498
        %v2245 = vsel %vm2221, %v2212, %v1500
        %v2246 = vsel %vm2221, %v2213, %v1502
        %v2247 = vsel %vm2221, %v2214, %v1504
        %v2248 = vsel %vm2221, %v2215, %v1506
        %v2249 = vsel %vm2221, %v2216, %v1508
        %v2250 = vsel %vm2221, %v2217, %v1510
        %v2251 = vsel %vm2221, %v2218, %v1512
        %v2252 = vsel %vm2221, %v2219, %v1514
        %v2253 = vsel %vm2221, %v2220, %v1516
        %vm2254 = vcmask 392192
        %v2255 = vsel %vm2254, %v2222, %v1582
        %v2256 = vsel %vm2254, %v2223, %v1584
        %v2257 = vsel %vm2254, %v2224, %v1586
        %v2258 = vsel %vm2254, %v2225, %v1588
        %v2259 = vsel %vm2254, %v2226, %v1590
        %v2260 = vsel %vm2254, %v2227, %v1592
        %v2261 = vsel %vm2254, %v2228, %v1594
        %v2262 = vsel %vm2254, %v2229, %v1596
        %v2263 = vsel %vm2254, %v2230, %v1598
        %v2264 = vsel %vm2254, %v2231, %v1600
        %v2265 = vsel %vm2254, %v2232, %v1602
        %v2266 = vsel %vm2254, %v2233, %v1604
        %v2267 = vsel %vm2254, %v2234, %v1606
        %v2268 = vsel %vm2254, %v2235, %v1608
        %v2269 = vsel %vm2254, %v2236, %v1610
        %v2270 = vsel %vm2254, %v2237, %v1612
        %v2271 = vsel %vm2254, %v2238, %v1614
        %v2272 = vsel %vm2254, %v2239, %v1616
        %v2273 = vsel %vm2254, %v2240, %v1618
        %v2274 = vsel %vm2254, %v2241, %v1620
        %v2275 = vsel %vm2254, %v2242, %v1622
        %v2276 = vsel %vm2254, %v2243, %v1624
        %v2277 = vsel %vm2254, %v2244, %v1626
        %v2278 = vsel %vm2254, %v2245, %v1628
        %v2279 = vsel %vm2254, %v2246, %v1630
        %v2280 = vsel %vm2254, %v2247, %v1632
        %v2281 = vsel %vm2254, %v2248, %v1634
        %v2282 = vsel %vm2254, %v2249, %v1636
        %v2283 = vsel %vm2254, %v2250, %v1638
        %v2284 = vsel %vm2254, %v2251, %v1640
        %v2285 = vsel %vm2254, %v2252, %v1642
        %v2286 = vsel %vm2254, %v2253, %v1644
        %vm2287 = vcmask 523264
        %v2288 = vsel %vm2287, %v2255, %v1710
        %v2289 = vsel %vm2287, %v2256, %v1712
        %v2290 = vsel %vm2287, %v2257, %v1714
        %v2291 = vsel %vm2287, %v2258, %v1716
        %v2292 = vsel %vm2287, %v2259, %v1718
        %v2293 = vsel %vm2287, %v2260, %v1720
        %v2294 = vsel %vm2287, %v2261, %v1722
        %v2295 = vsel %vm2287, %v2262, %v1724
        %v2296 = vsel %vm2287, %v2263, %v1726
        %v2297 = vsel %vm2287, %v2264, %v1728
        %v2298 = vsel %vm2287, %v2265, %v1730
        %v2299 = vsel %vm2287, %v2266, %v1732
        %v2300 = vsel %vm2287, %v2267, %v1734
        %v2301 = vsel %vm2287, %v2268, %v1736
        %v2302 = vsel %vm2287, %v2269, %v1738
        %v2303 = vsel %vm2287, %v2270, %v1740
        %v2304 = vsel %vm2287, %v2271, %v1742
        %v2305 = vsel %vm2287, %v2272, %v1744
        %v2306 = vsel %vm2287, %v2273, %v1746
        %v2307 = vsel %vm2287, %v2274, %v1748
        %v2308 = vsel %vm2287, %v2275, %v1750
        %v2309 = vsel %vm2287, %v2276, %v1752
        %v2310 = vsel %vm2287, %v2277, %v1754
        %v2311 = vsel %vm2287, %v2278, %v1756
        %v2312 = vsel %vm2287, %v2279, %v1758
        %v2313 = vsel %vm2287, %v2280, %v1760
        %v2314 = vsel %vm2287, %v2281, %v1762
        %v2315 = vsel %vm2287, %v2282, %v1764
        %v2316 = vsel %vm2287, %v2283, %v1766
        %v2317 = vsel %vm2287, %v2284, %v1768
        %v2318 = vsel %vm2287, %v2285, %v1770
        %v2319 = vsel %vm2287, %v2286, %v1772
        %vm2320 = vcmask 654336
        %v2321 = vsel %vm2320, %v2288, %v1838
        %v2322 = vsel %vm2320, %v2289, %v1840
        %v2323 = vsel %vm2320, %v2290, %v1842
        %v2324 = vsel %vm2320, %v2291, %v1844
        %v2325 = vsel %vm2320, %v2292, %v1846
        %v2326 = vsel %vm2320, %v2293, %v1848
        %v2327 = vsel %vm2320, %v2294, %v1850
        %v2328 = vsel %vm2320, %v2295, %v1852
        %v2329 = vsel %vm2320, %v2296, %v1854
        %v2330 = vsel %vm2320, %v2297, %v1856
        %v2331 = vsel %vm2320, %v2298, %v1858
        %v2332 = vsel %vm2320, %v2299, %v1860
        %v2333 = vsel %vm2320, %v2300, %v1862
        %v2334 = vsel %vm2320, %v2301, %v1864
        %v2335 = vsel %vm2320, %v2302, %v1866
        %v2336 = vsel %vm2320, %v2303, %v1868
        %v2337 = vsel %vm2320, %v2304, %v1870
        %v2338 = vsel %vm2320, %v2305, %v1872
        %v2339 = vsel %vm2320, %v2306, %v1874
        %v2340 = vsel %vm2320, %v2307, %v1876
        %v2341 = vsel %vm2320, %v2308, %v1878
        %v2342 = vsel %vm2320, %v2309, %v1880
        %v2343 = vsel %vm2320, %v2310, %v1882
        %v2344 = vsel %vm2320, %v2311, %v1884
        %v2345 = vsel %vm2320, %v2312, %v1886
        %v2346 = vsel %vm2320, %v2313, %v1888
        %v2347 = vsel %vm2320, %v2314, %v1890
        %v2348 = vsel %vm2320, %v2315, %v1892
        %v2349 = vsel %vm2320, %v2316, %v1894
        %v2350 = vsel %vm2320, %v2317, %v1896
        %v2351 = vsel %vm2320, %v2318, %v1898
        %v2352 = vsel %vm2320, %v2319, %v1900
        %vm2353 = vcmask 785408
        %v2354 = vsel %vm2353, %v2321, %v1966
        %v2355 = vsel %vm2353, %v2322, %v1968
        %v2356 = vsel %vm2353, %v2323, %v1970
        %v2357 = vsel %vm2353, %v2324, %v1972
        %v2358 = vsel %vm2353, %v2325, %v1974
        %v2359 = vsel %vm2353, %v2326, %v1976
        %v2360 = vsel %vm2353, %v2327, %v1978
        %v2361 = vsel %vm2353, %v2328, %v1980
        %v2362 = vsel %vm2353, %v2329, %v1982
        %v2363 = vsel %vm2353, %v2330, %v1984
        %v2364 = vsel %vm2353, %v2331, %v1986
        %v2365 = vsel %vm2353, %v2332, %v1988
        %v2366 = vsel %vm2353, %v2333, %v1990
        %v2367 = vsel %vm2353, %v2334, %v1992
        %v2368 = vsel %vm2353, %v2335, %v1994
        %v2369 = vsel %vm2353, %v2336, %v1996
        %v2370 = vsel %vm2353, %v2337, %v1998
        %v2371 = vsel %vm2353, %v2338, %v2000
        %v2372 = vsel %vm2353, %v2339, %v2002
        %v2373 = vsel %vm2353, %v2340, %v2004
        %v2374 = vsel %vm2353, %v2341, %v2006
        %v2375 = vsel %vm2353, %v2342, %v2008
        %v2376 = vsel %vm2353, %v2343, %v2010
        %v2377 = vsel %vm2353, %v2344, %v2012
        %v2378 = vsel %vm2353, %v2345, %v2014
        %v2379 = vsel %vm2353, %v2346, %v2016
        %v2380 = vsel %vm2353, %v2347, %v2018
        %v2381 = vsel %vm2353, %v2348, %v2020
        %v2382 = vsel %vm2353, %v2349, %v2022
        %v2383 = vsel %vm2353, %v2350, %v2024
        %v2384 = vsel %vm2353, %v2351, %v2026
        %v2385 = vsel %vm2353, %v2352, %v2028
        %vm2386 = vcmask 916480
        %v2387 = vsel %vm2386, %v2354, %v2094
        %v2388 = vsel %vm2386, %v2355, %v2096
        %v2389 = vsel %vm2386, %v2356, %v2098
        %v2390 = vsel %vm2386, %v2357, %v2100
        %v2391 = vsel %vm2386, %v2358, %v2102
        %v2392 = vsel %vm2386, %v2359, %v2104
        %v2393 = vsel %vm2386, %v2360, %v2106
        %v2394 = vsel %vm2386, %v2361, %v2108
        %v2395 = vsel %vm2386, %v2362, %v2110
        %v2396 = vsel %vm2386, %v2363, %v2112
        %v2397 = vsel %vm2386, %v2364, %v2114
        %v2398 = vsel %vm2386, %v2365, %v2116
        %v2399 = vsel %vm2386, %v2366, %v2118
        %v2400 = vsel %vm2386, %v2367, %v2120
        %v2401 = vsel %vm2386, %v2368, %v2122
        %v2402 = vsel %vm2386, %v2369, %v2124
        %v2403 = vsel %vm2386, %v2370, %v2126
        %v2404 = vsel %vm2386, %v2371, %v2128
        %v2405 = vsel %vm2386, %v2372, %v2130
        %v2406 = vsel %vm2386, %v2373, %v2132
        %v2407 = vsel %vm2386, %v2374, %v2134
        %v2408 = vsel %vm2386, %v2375, %v2136
        %v2409 = vsel %vm2386, %v2376, %v2138
        %v2410 = vsel %vm2386, %v2377, %v2140
        %v2411 = vsel %vm2386, %v2378, %v2142
        %v2412 = vsel %vm2386, %v2379, %v2144
        %v2413 = vsel %vm2386, %v2380, %v2146
        %v2414 = vsel %vm2386, %v2381, %v2148
        %v2415 = vsel %vm2386, %v2382, %v2150
        %v2416 = vsel %vm2386, %v2383, %v2152
        %v2417 = vsel %vm2386, %v2384, %v2154
        %v2418 = vsel %vm2386, %v2385, %v2156
        %v2419 = vpack.c.bf16 %v2388, %v2387
        %v2420 = vpack.c.bf16 %v1262, %v1261
        %v2421 = vpack.c.bf16 %v2390, %v2389
        %v2422 = vpack.c.bf16 %v1264, %v1263
        %v2423 = vpack.c.bf16 %v2392, %v2391
        %v2424 = vpack.c.bf16 %v1266, %v1265
        %v2425 = vpack.c.bf16 %v2394, %v2393
        %v2426 = vpack.c.bf16 %v1268, %v1267
        %v2427 = vpack.c.bf16 %v2396, %v2395
        %v2428 = vpack.c.bf16 %v1270, %v1269
        %v2429 = vpack.c.bf16 %v2398, %v2397
        %v2430 = vpack.c.bf16 %v1272, %v1271
        %v2431 = vpack.c.bf16 %v2400, %v2399
        %v2432 = vpack.c.bf16 %v1274, %v1273
        %v2433 = vpack.c.bf16 %v2402, %v2401
        %v2434 = vpack.c.bf16 %v1276, %v1275
        %v2435 = vpack.c.bf16 %v2404, %v2403
        %v2436 = vpack.c.bf16 %v1278, %v1277
        %v2437 = vpack.c.bf16 %v2406, %v2405
        %v2438 = vpack.c.bf16 %v1280, %v1279
        %v2439 = vpack.c.bf16 %v2408, %v2407
        %v2440 = vpack.c.bf16 %v1282, %v1281
        %v2441 = vpack.c.bf16 %v2410, %v2409
        %v2442 = vpack.c.bf16 %v1284, %v1283
        %v2443 = vpack.c.bf16 %v2412, %v2411
        %v2444 = vpack.c.bf16 %v1286, %v1285
        %v2445 = vpack.c.bf16 %v2414, %v2413
        %v2446 = vpack.c.bf16 %v1288, %v1287
        %v2447 = vpack.c.bf16 %v2416, %v2415
        %v2448 = vpack.c.bf16 %v1290, %v1289
        %v2449 = vpack.c.bf16 %v2418, %v2417
        %v2450 = vpack.c.bf16 %v1292, %v1291
        %v2451 = vld [vmem:[%s5] sm:$0xf]
        %v2452 = vld [vmem:[%s5 + $0x4] sm:$0xf]
        %v2453 = vld [vmem:[%s5 + $0x8] sm:$0xf]
        %v2454 = vld [vmem:[%s5 + $0xc] sm:$0xf]
        %v2455 = vld [vmem:[%s5 + $0x10] sm:$0xf]
        %v2456 = vld [vmem:[%s5 + $0x14] sm:$0xf]
        %v2457 = vld [vmem:[%s5 + $0x18] sm:$0xf]
        %v2458 = vld [vmem:[%s5 + $0x1c] sm:$0xf]
        %v2459 = vld [vmem:[%s5 + $0x20] sm:$0xf]
        %v2460 = vld [vmem:[%s5 + $0x24] sm:$0xf]
        %v2461 = vld [vmem:[%s5 + $0x28] sm:$0xf]
        %v2462 = vld [vmem:[%s5 + $0x2c] sm:$0xf]
        %v2463 = vld [vmem:[%s5 + $0x30] sm:$0xf]
        %v2464 = vld [vmem:[%s5 + $0x34] sm:$0xf]
        %v2465 = vld [vmem:[%s5 + $0x38] sm:$0xf]
        %v2466 = vld [vmem:[%s5 + $0x3c] sm:$0xf]
        %v2467 = vld [vmem:[%s5 + $0x40] sm:$0xf]
        %v2468 = vld [vmem:[%s5 + $0x44] sm:$0xf]
        %v2487 = vunpack.c.l.b16 %v2451
        %v2488 = vunpack.c.l.b16 %v2452
        %v2489 = vunpack.c.l.b16 %v2453
        %v2490 = vunpack.c.l.b16 %v2454
        %v2491 = vunpack.c.l.b16 %v2455
        %v2492 = vunpack.c.l.b16 %v2456
        %v2493 = vunpack.c.l.b16 %v2457
        %v2494 = vunpack.c.l.b16 %v2458
        %v2495 = vunpack.c.l.b16 %v2459
        %v2496 = vunpack.c.l.b16 %v2460
        %v2497 = vunpack.c.l.b16 %v2461
        %v2498 = vunpack.c.l.b16 %v2462
        %v2499 = vunpack.c.l.b16 %v2463
        %v2500 = vunpack.c.l.b16 %v2464
        %v2501 = vunpack.c.l.b16 %v2465
        %v2502 = vunpack.c.l.b16 %v2466
        %v2503 = vunpack.c.l.b16 %v2467
        %v2504 = vunpack.c.l.b16 %v2468
        %v2505 = vpack.c.b16 %v2488, %v2487
        %v2506 = vpack.c.b16 %v2490, %v2489
        %v2507 = vpack.c.b16 %v2492, %v2491
        %v2508 = vpack.c.b16 %v2494, %v2493
        %v2509 = vpack.c.b16 %v2496, %v2495
        %v2510 = vpack.c.b16 %v2498, %v2497
        %v2511 = vpack.c.b16 %v2500, %v2499
        %v2512 = vpack.c.b16 %v2502, %v2501
        %v2513 = vpack.c.b16 %v2504, %v2503
        %v2524 = vsel %vm586, %v2420, 0
        %v2527 = vsel %vm586, %v2422, 0
        %v2530 = vsel %vm586, %v2424, 0
        %v2533 = vsel %vm586, %v2426, 0
        %v2536 = vsel %vm586, %v2428, 0
        %v2539 = vsel %vm586, %v2430, 0
        %v2542 = vsel %vm586, %v2432, 0
        %v2545 = vsel %vm586, %v2434, 0
        %v2548 = vsel %vm586, %v2436, 0
        %v2551 = vsel %vm586, %v2438, 0
        %v2554 = vsel %vm586, %v2440, 0
        %v2557 = vsel %vm586, %v2442, 0
        %v2560 = vsel %vm586, %v2444, 0
        %v2563 = vsel %vm586, %v2446, 0
        %v2566 = vsel %vm586, %v2448, 0
        %v2569 = vsel %vm586, %v2450, 0
        %2571 = vmatpush.bf16.msra.mxu0 %v2512
        %2572 = vmatpush.bf16.msra.mxu0 %v2511
        %2573 = vmatpush.bf16.msra.mxu0 %v2510
        %2574 = vmatpush.bf16.msra.mxu0 %v2509
        %2575 = vmatpush.bf16.msra.mxu0 %v2508
        %2576 = vmatpush.bf16.msra.mxu0 %v2507
        %2577 = vmatpush.bf16.msra.mxu0 %v2506
        %2578 = vmatpush.bf16.msra.mxu0 %v2505
        %2579 = vmatmul.bf16.gmra.mxu0 %v2419
        %v2580 = vpop.f32.mrf.mxu0
        %v2581 = vadd.f32 0.0, %v2580
        %v2582 = vpop.f32.mrf.mxu0
        %v2583 = vadd.f32 0.0, %v2582
        %2584 = vmatmul.bf16.gmra.mxu0 %v2421
        %v2585 = vpop.f32.mrf.mxu0
        %v2586 = vadd.f32 0.0, %v2585
        %v2587 = vpop.f32.mrf.mxu0
        %v2588 = vadd.f32 0.0, %v2587
        %2589 = vmatmul.bf16.gmra.mxu0 %v2423
        %v2590 = vpop.f32.mrf.mxu0
        %v2591 = vadd.f32 0.0, %v2590
        %v2592 = vpop.f32.mrf.mxu0
        %v2593 = vadd.f32 0.0, %v2592
        %2594 = vmatmul.bf16.gmra.mxu0 %v2425
        %v2595 = vpop.f32.mrf.mxu0
        %v2596 = vadd.f32 0.0, %v2595
        %v2597 = vpop.f32.mrf.mxu0
        %v2598 = vadd.f32 0.0, %v2597
        %2599 = vmatmul.bf16.gmra.mxu0 %v2427
        %v2600 = vpop.f32.mrf.mxu0
        %v2601 = vadd.f32 0.0, %v2600
        %v2602 = vpop.f32.mrf.mxu0
        %v2603 = vadd.f32 0.0, %v2602
        %2604 = vmatmul.bf16.gmra.mxu0 %v2429
        %v2605 = vpop.f32.mrf.mxu0
        %v2606 = vadd.f32 0.0, %v2605
        %v2607 = vpop.f32.mrf.mxu0
        %v2608 = vadd.f32 0.0, %v2607
        %2609 = vmatmul.bf16.gmra.mxu0 %v2431
        %v2610 = vpop.f32.mrf.mxu0
        %v2611 = vadd.f32 0.0, %v2610
        %v2612 = vpop.f32.mrf.mxu0
        %v2613 = vadd.f32 0.0, %v2612
        %2614 = vmatmul.bf16.gmra.mxu0 %v2433
        %v2615 = vpop.f32.mrf.mxu0
        %v2616 = vadd.f32 0.0, %v2615
        %v2617 = vpop.f32.mrf.mxu0
        %v2618 = vadd.f32 0.0, %v2617
        %2619 = vmatmul.bf16.gmra.mxu0 %v2435
        %v2620 = vpop.f32.mrf.mxu0
        %v2621 = vadd.f32 0.0, %v2620
        %v2622 = vpop.f32.mrf.mxu0
        %v2623 = vadd.f32 0.0, %v2622
        %2624 = vmatmul.bf16.gmra.mxu0 %v2437
        %v2625 = vpop.f32.mrf.mxu0
        %v2626 = vadd.f32 0.0, %v2625
        %v2627 = vpop.f32.mrf.mxu0
        %v2628 = vadd.f32 0.0, %v2627
        %2629 = vmatmul.bf16.gmra.mxu0 %v2439
        %v2630 = vpop.f32.mrf.mxu0
        %v2631 = vadd.f32 0.0, %v2630
        %v2632 = vpop.f32.mrf.mxu0
        %v2633 = vadd.f32 0.0, %v2632
        %2634 = vmatmul.bf16.gmra.mxu0 %v2441
        %v2635 = vpop.f32.mrf.mxu0
        %v2636 = vadd.f32 0.0, %v2635
        %v2637 = vpop.f32.mrf.mxu0
        %v2638 = vadd.f32 0.0, %v2637
        %2639 = vmatmul.bf16.gmra.mxu0 %v2443
        %v2640 = vpop.f32.mrf.mxu0
        %v2641 = vadd.f32 0.0, %v2640
        %v2642 = vpop.f32.mrf.mxu0
        %v2643 = vadd.f32 0.0, %v2642
        %2644 = vmatmul.bf16.gmra.mxu0 %v2445
        %v2645 = vpop.f32.mrf.mxu0
        %v2646 = vadd.f32 0.0, %v2645
        %v2647 = vpop.f32.mrf.mxu0
        %v2648 = vadd.f32 0.0, %v2647
        %2649 = vmatmul.bf16.gmra.mxu0 %v2447
        %v2650 = vpop.f32.mrf.mxu0
        %v2651 = vadd.f32 0.0, %v2650
        %v2652 = vpop.f32.mrf.mxu0
        %v2653 = vadd.f32 0.0, %v2652
        %2654 = vmatmul.bf16.gmra.mxu0 %v2449
        %v2655 = vpop.f32.mrf.mxu0
        %v2656 = vadd.f32 0.0, %v2655
        %v2657 = vpop.f32.mrf.mxu0
        %v2658 = vadd.f32 0.0, %v2657
        %2659 = vdwg.mxu0
        %2660 = vmatpush.bf16.msra.mxu0 0
        %2661 = vmatpush.bf16.msra.mxu0 0
        %2662 = vmatpush.bf16.msra.mxu0 0
        %2663 = vmatpush.bf16.msra.mxu0 0
        %2664 = vmatpush.bf16.msra.mxu0 0
        %2665 = vmatpush.bf16.msra.mxu0 0
        %2666 = vmatpush.bf16.msra.mxu0 0
        %2667 = vmatpush.bf16.msra.mxu0 %v2513
        %2668 = vmatmul.bf16.gmra.mxu0 %v2524
        %v2669 = vpop.f32.mrf.mxu0
        %v2670 = vadd.f32 %v2581, %v2669
        %v2671 = vpop.f32.mrf.mxu0
        %v2672 = vadd.f32 %v2583, %v2671
        %2673 = vmatmul.bf16.gmra.mxu0 %v2527
        %v2674 = vpop.f32.mrf.mxu0
        %v2675 = vadd.f32 %v2586, %v2674
        %v2676 = vpop.f32.mrf.mxu0
        %v2677 = vadd.f32 %v2588, %v2676
        %2678 = vmatmul.bf16.gmra.mxu0 %v2530
        %v2679 = vpop.f32.mrf.mxu0
        %v2680 = vadd.f32 %v2591, %v2679
        %v2681 = vpop.f32.mrf.mxu0
        %v2682 = vadd.f32 %v2593, %v2681
        %2683 = vmatmul.bf16.gmra.mxu0 %v2533
        %v2684 = vpop.f32.mrf.mxu0
        %v2685 = vadd.f32 %v2596, %v2684
        %v2686 = vpop.f32.mrf.mxu0
        %v2687 = vadd.f32 %v2598, %v2686
        %2688 = vmatmul.bf16.gmra.mxu0 %v2536
        %v2689 = vpop.f32.mrf.mxu0
        %v2690 = vadd.f32 %v2601, %v2689
        %v2691 = vpop.f32.mrf.mxu0
        %v2692 = vadd.f32 %v2603, %v2691
        %2693 = vmatmul.bf16.gmra.mxu0 %v2539
        %v2694 = vpop.f32.mrf.mxu0
        %v2695 = vadd.f32 %v2606, %v2694
        %v2696 = vpop.f32.mrf.mxu0
        %v2697 = vadd.f32 %v2608, %v2696
        %2698 = vmatmul.bf16.gmra.mxu0 %v2542
        %v2699 = vpop.f32.mrf.mxu0
        %v2700 = vadd.f32 %v2611, %v2699
        %v2701 = vpop.f32.mrf.mxu0
        %v2702 = vadd.f32 %v2613, %v2701
        %2703 = vmatmul.bf16.gmra.mxu0 %v2545
        %v2704 = vpop.f32.mrf.mxu0
        %v2705 = vadd.f32 %v2616, %v2704
        %v2706 = vpop.f32.mrf.mxu0
        %v2707 = vadd.f32 %v2618, %v2706
        %2708 = vmatmul.bf16.gmra.mxu0 %v2548
        %v2709 = vpop.f32.mrf.mxu0
        %v2710 = vadd.f32 %v2621, %v2709
        %v2711 = vpop.f32.mrf.mxu0
        %v2712 = vadd.f32 %v2623, %v2711
        %2713 = vmatmul.bf16.gmra.mxu0 %v2551
        %v2714 = vpop.f32.mrf.mxu0
        %v2715 = vadd.f32 %v2626, %v2714
        %v2716 = vpop.f32.mrf.mxu0
        %v2717 = vadd.f32 %v2628, %v2716
        %2718 = vmatmul.bf16.gmra.mxu0 %v2554
        %v2719 = vpop.f32.mrf.mxu0
        %v2720 = vadd.f32 %v2631, %v2719
        %v2721 = vpop.f32.mrf.mxu0
        %v2722 = vadd.f32 %v2633, %v2721
        %2723 = vmatmul.bf16.gmra.mxu0 %v2557
        %v2724 = vpop.f32.mrf.mxu0
        %v2725 = vadd.f32 %v2636, %v2724
        %v2726 = vpop.f32.mrf.mxu0
        %v2727 = vadd.f32 %v2638, %v2726
        %2728 = vmatmul.bf16.gmra.mxu0 %v2560
        %v2729 = vpop.f32.mrf.mxu0
        %v2730 = vadd.f32 %v2641, %v2729
        %v2731 = vpop.f32.mrf.mxu0
        %v2732 = vadd.f32 %v2643, %v2731
        %2733 = vmatmul.bf16.gmra.mxu0 %v2563
        %v2734 = vpop.f32.mrf.mxu0
        %v2735 = vadd.f32 %v2646, %v2734
        %v2736 = vpop.f32.mrf.mxu0
        %v2737 = vadd.f32 %v2648, %v2736
        %2738 = vmatmul.bf16.gmra.mxu0 %v2566
        %v2739 = vpop.f32.mrf.mxu0
        %v2740 = vadd.f32 %v2651, %v2739
        %v2741 = vpop.f32.mrf.mxu0
        %v2742 = vadd.f32 %v2653, %v2741
        %2743 = vmatmul.bf16.gmra.mxu0 %v2569
        %v2744 = vpop.f32.mrf.mxu0
        %v2745 = vadd.f32 %v2656, %v2744
        %v2746 = vpop.f32.mrf.mxu0
        %v2747 = vadd.f32 %v2658, %v2746
        %2748 = vdwg.mxu0
        %2781 = vrot.lane.b32.xlu0 %v2670, 8
        %v2782 = vpop.permute.xlu0 %2781
        %2783 = vrot.lane.b32.xlu0 %v2672, 8
        %v2784 = vpop.permute.xlu0 %2783
        %2785 = vrot.lane.b32.xlu0 %v2675, 8
        %v2786 = vpop.permute.xlu0 %2785
        %2787 = vrot.lane.b32.xlu0 %v2677, 8
        %v2788 = vpop.permute.xlu0 %2787
        %2789 = vrot.lane.b32.xlu0 %v2680, 8
        %v2790 = vpop.permute.xlu0 %2789
        %2791 = vrot.lane.b32.xlu0 %v2682, 8
        %v2792 = vpop.permute.xlu0 %2791
        %2793 = vrot.lane.b32.xlu0 %v2685, 8
        %v2794 = vpop.permute.xlu0 %2793
        %2795 = vrot.lane.b32.xlu0 %v2687, 8
        %v2796 = vpop.permute.xlu0 %2795
        %2797 = vrot.lane.b32.xlu0 %v2690, 8
        %v2798 = vpop.permute.xlu0 %2797
        %2799 = vrot.lane.b32.xlu0 %v2692, 8
        %v2800 = vpop.permute.xlu0 %2799
        %2801 = vrot.lane.b32.xlu0 %v2695, 8
        %v2802 = vpop.permute.xlu0 %2801
        %2803 = vrot.lane.b32.xlu0 %v2697, 8
        %v2804 = vpop.permute.xlu0 %2803
        %2805 = vrot.lane.b32.xlu0 %v2700, 8
        %v2806 = vpop.permute.xlu0 %2805
        %2807 = vrot.lane.b32.xlu0 %v2702, 8
        %v2808 = vpop.permute.xlu0 %2807
        %2809 = vrot.lane.b32.xlu0 %v2705, 8
        %v2810 = vpop.permute.xlu0 %2809
        %2811 = vrot.lane.b32.xlu0 %v2707, 8
        %v2812 = vpop.permute.xlu0 %2811
        %2813 = vrot.lane.b32.xlu0 %v2710, 8
        %v2814 = vpop.permute.xlu0 %2813
        %2815 = vrot.lane.b32.xlu0 %v2712, 8
        %v2816 = vpop.permute.xlu0 %2815
        %2817 = vrot.lane.b32.xlu0 %v2715, 8
        %v2818 = vpop.permute.xlu0 %2817
        %2819 = vrot.lane.b32.xlu0 %v2717, 8
        %v2820 = vpop.permute.xlu0 %2819
        %2821 = vrot.lane.b32.xlu0 %v2720, 8
        %v2822 = vpop.permute.xlu0 %2821
        %2823 = vrot.lane.b32.xlu0 %v2722, 8
        %v2824 = vpop.permute.xlu0 %2823
        %2825 = vrot.lane.b32.xlu0 %v2725, 8
        %v2826 = vpop.permute.xlu0 %2825
        %2827 = vrot.lane.b32.xlu0 %v2727, 8
        %v2828 = vpop.permute.xlu0 %2827
        %2829 = vrot.lane.b32.xlu0 %v2730, 8
        %v2830 = vpop.permute.xlu0 %2829
        %2831 = vrot.lane.b32.xlu0 %v2732, 8
        %v2832 = vpop.permute.xlu0 %2831
        %2833 = vrot.lane.b32.xlu0 %v2735, 8
        %v2834 = vpop.permute.xlu0 %2833
        %2835 = vrot.lane.b32.xlu0 %v2737, 8
        %v2836 = vpop.permute.xlu0 %2835
        %2837 = vrot.lane.b32.xlu0 %v2740, 8
        %v2838 = vpop.permute.xlu0 %2837
        %2839 = vrot.lane.b32.xlu0 %v2742, 8
        %v2840 = vpop.permute.xlu0 %2839
        %2841 = vrot.lane.b32.xlu0 %v2745, 8
        %v2842 = vpop.permute.xlu0 %2841
        %2843 = vrot.lane.b32.xlu0 %v2747, 8
        %v2844 = vpop.permute.xlu0 %2843
        %vm2877 = vcmask 130112
        %2878 = vst.msk [vmem:[%s514] sm:$0xff] %vm2877, %v2782
        %2879 = vst.msk [vmem:[%s514 + $0x8] sm:$0xff] %vm2877, %v2784
        %2880 = vst.msk [vmem:[%s514 + $0x10] sm:$0xff] %vm2877, %v2786
        %2881 = vst.msk [vmem:[%s514 + $0x18] sm:$0xff] %vm2877, %v2788
        %2882 = vst.msk [vmem:[%s514 + $0x20] sm:$0xff] %vm2877, %v2790
        %2883 = vst.msk [vmem:[%s514 + $0x28] sm:$0xff] %vm2877, %v2792
        %2884 = vst.msk [vmem:[%s514 + $0x30] sm:$0xff] %vm2877, %v2794
        %2885 = vst.msk [vmem:[%s514 + $0x38] sm:$0xff] %vm2877, %v2796
        %2886 = vst.msk [vmem:[%s514 + $0x40] sm:$0xff] %vm2877, %v2798
        %2887 = vst.msk [vmem:[%s514 + $0x48] sm:$0xff] %vm2877, %v2800
        %2888 = vst.msk [vmem:[%s514 + $0x50] sm:$0xff] %vm2877, %v2802
        %2889 = vst.msk [vmem:[%s514 + $0x58] sm:$0xff] %vm2877, %v2804
        %2890 = vst.msk [vmem:[%s514 + $0x60] sm:$0xff] %vm2877, %v2806
        %2891 = vst.msk [vmem:[%s514 + $0x68] sm:$0xff] %vm2877, %v2808
        %2892 = vst.msk [vmem:[%s514 + $0x70] sm:$0xff] %vm2877, %v2810
        %2893 = vst.msk [vmem:[%s514 + $0x78] sm:$0xff] %vm2877, %v2812
        %2894 = vst.msk [vmem:[%s514 + $0x80] sm:$0xff] %vm2877, %v2814
        %2895 = vst.msk [vmem:[%s514 + $0x88] sm:$0xff] %vm2877, %v2816
        %2896 = vst.msk [vmem:[%s514 + $0x90] sm:$0xff] %vm2877, %v2818
        %2897 = vst.msk [vmem:[%s514 + $0x98] sm:$0xff] %vm2877, %v2820
        %2898 = vst.msk [vmem:[%s514 + $0xa0] sm:$0xff] %vm2877, %v2822
        %2899 = vst.msk [vmem:[%s514 + $0xa8] sm:$0xff] %vm2877, %v2824
        %2900 = vst.msk [vmem:[%s514 + $0xb0] sm:$0xff] %vm2877, %v2826
        %2901 = vst.msk [vmem:[%s514 + $0xb8] sm:$0xff] %vm2877, %v2828
        %2902 = vst.msk [vmem:[%s514 + $0xc0] sm:$0xff] %vm2877, %v2830
        %2903 = vst.msk [vmem:[%s514 + $0xc8] sm:$0xff] %vm2877, %v2832
        %2904 = vst.msk [vmem:[%s514 + $0xd0] sm:$0xff] %vm2877, %v2834
        %2905 = vst.msk [vmem:[%s514 + $0xd8] sm:$0xff] %vm2877, %v2836
        %2906 = vst.msk [vmem:[%s514 + $0xe0] sm:$0xff] %vm2877, %v2838
        %2907 = vst.msk [vmem:[%s514 + $0xe8] sm:$0xff] %vm2877, %v2840
        %2908 = vst.msk [vmem:[%s514 + $0xf0] sm:$0xff] %vm2877, %v2842
        %2909 = vst.msk [vmem:[%s514 + $0xf8] sm:$0xff] %vm2877, %v2844
        %v2910 = vld [vmem:[%s514] sm:$0xff]
        %v2911 = vld [vmem:[%s514 + $0x8] sm:$0xff]
        %v2912 = vld [vmem:[%s514 + $0x10] sm:$0xff]
        %v2913 = vld [vmem:[%s514 + $0x18] sm:$0xff]
        %v2914 = vld [vmem:[%s514 + $0x20] sm:$0xff]
        %v2915 = vld [vmem:[%s514 + $0x28] sm:$0xff]
        %v2916 = vld [vmem:[%s514 + $0x30] sm:$0xff]
        %v2917 = vld [vmem:[%s514 + $0x38] sm:$0xff]
        %v2918 = vld [vmem:[%s514 + $0x40] sm:$0xff]
        %v2919 = vld [vmem:[%s514 + $0x48] sm:$0xff]
        %v2920 = vld [vmem:[%s514 + $0x50] sm:$0xff]
        %v2921 = vld [vmem:[%s514 + $0x58] sm:$0xff]
        %v2922 = vld [vmem:[%s514 + $0x60] sm:$0xff]
        %v2923 = vld [vmem:[%s514 + $0x68] sm:$0xff]
        %v2924 = vld [vmem:[%s514 + $0x70] sm:$0xff]
        %v2925 = vld [vmem:[%s514 + $0x78] sm:$0xff]
        %v2926 = vld [vmem:[%s514 + $0x80] sm:$0xff]
        %v2927 = vld [vmem:[%s514 + $0x88] sm:$0xff]
        %v2928 = vld [vmem:[%s514 + $0x90] sm:$0xff]
        %v2929 = vld [vmem:[%s514 + $0x98] sm:$0xff]
        %v2930 = vld [vmem:[%s514 + $0xa0] sm:$0xff]
        %v2931 = vld [vmem:[%s514 + $0xa8] sm:$0xff]
        %v2932 = vld [vmem:[%s514 + $0xb0] sm:$0xff]
        %v2933 = vld [vmem:[%s514 + $0xb8] sm:$0xff]
        %v2934 = vld [vmem:[%s514 + $0xc0] sm:$0xff]
        %v2935 = vld [vmem:[%s514 + $0xc8] sm:$0xff]
        %v2936 = vld [vmem:[%s514 + $0xd0] sm:$0xff]
        %v2937 = vld [vmem:[%s514 + $0xd8] sm:$0xff]
        %v2938 = vld [vmem:[%s514 + $0xe0] sm:$0xff]
        %v2939 = vld [vmem:[%s514 + $0xe8] sm:$0xff]
        %v2940 = vld [vmem:[%s514 + $0xf0] sm:$0xff]
        %v2941 = vld [vmem:[%s514 + $0xf8] sm:$0xff]
        %v2942 = vld [vmem:[%s6] sm:$0x1]
        %v2944 = vperm.slane %v2942, 0
        %v2946 = vmul.f32 %v2910, %v2944
        %v2947 = vmul.f32 %v2911, %v2944
        %v2948 = vmul.f32 %v2912, %v2944
        %v2949 = vmul.f32 %v2913, %v2944
        %v2950 = vmul.f32 %v2914, %v2944
        %v2951 = vmul.f32 %v2915, %v2944
        %v2952 = vmul.f32 %v2916, %v2944
        %v2953 = vmul.f32 %v2917, %v2944
        %v2954 = vmul.f32 %v2918, %v2944
        %v2955 = vmul.f32 %v2919, %v2944
        %v2956 = vmul.f32 %v2920, %v2944
        %v2957 = vmul.f32 %v2921, %v2944
        %v2958 = vmul.f32 %v2922, %v2944
        %v2959 = vmul.f32 %v2923, %v2944
        %v2960 = vmul.f32 %v2924, %v2944
        %v2961 = vmul.f32 %v2925, %v2944
        %v2962 = vmul.f32 %v2926, %v2944
        %v2963 = vmul.f32 %v2927, %v2944
        %v2964 = vmul.f32 %v2928, %v2944
        %v2965 = vmul.f32 %v2929, %v2944
        %v2966 = vmul.f32 %v2930, %v2944
        %v2967 = vmul.f32 %v2931, %v2944
        %v2968 = vmul.f32 %v2932, %v2944
        %v2969 = vmul.f32 %v2933, %v2944
        %v2970 = vmul.f32 %v2934, %v2944
        %v2971 = vmul.f32 %v2935, %v2944
        %v2972 = vmul.f32 %v2936, %v2944
        %v2973 = vmul.f32 %v2937, %v2944
        %v2974 = vmul.f32 %v2938, %v2944
        %v2975 = vmul.f32 %v2939, %v2944
        %v2976 = vmul.f32 %v2940, %v2944
        %v2977 = vmul.f32 %v2941, %v2944
        %v2978 = vld [vmem:[%s7] sm:$0x1]
        %v2980 = vperm.slane %v2978, 0
        %v2982 = vadd.f32 %v2946, %v2980
        %v2983 = vadd.f32 %v2947, %v2980
        %v2984 = vadd.f32 %v2948, %v2980
        %v2985 = vadd.f32 %v2949, %v2980
        %v2986 = vadd.f32 %v2950, %v2980
        %v2987 = vadd.f32 %v2951, %v2980
        %v2988 = vadd.f32 %v2952, %v2980
        %v2989 = vadd.f32 %v2953, %v2980
        %v2990 = vadd.f32 %v2954, %v2980
        %v2991 = vadd.f32 %v2955, %v2980
        %v2992 = vadd.f32 %v2956, %v2980
        %v2993 = vadd.f32 %v2957, %v2980
        %v2994 = vadd.f32 %v2958, %v2980
        %v2995 = vadd.f32 %v2959, %v2980
        %v2996 = vadd.f32 %v2960, %v2980
        %v2997 = vadd.f32 %v2961, %v2980
        %v2998 = vadd.f32 %v2962, %v2980
        %v2999 = vadd.f32 %v2963, %v2980
        %v3000 = vadd.f32 %v2964, %v2980
        %v3001 = vadd.f32 %v2965, %v2980
        %v3002 = vadd.f32 %v2966, %v2980
        %v3003 = vadd.f32 %v2967, %v2980
        %v3004 = vadd.f32 %v2968, %v2980
        %v3005 = vadd.f32 %v2969, %v2980
        %v3006 = vadd.f32 %v2970, %v2980
        %v3007 = vadd.f32 %v2971, %v2980
        %v3008 = vadd.f32 %v2972, %v2980
        %v3009 = vadd.f32 %v2973, %v2980
        %v3010 = vadd.f32 %v2974, %v2980
        %v3011 = vadd.f32 %v2975, %v2980
        %v3012 = vadd.f32 %v2976, %v2980
        %v3013 = vadd.f32 %v2977, %v2980
        %v3014 = vmax.f32 %v2982, 0.0
        %v3015 = vmax.f32 %v2983, 0.0
        %v3016 = vmax.f32 %v2984, 0.0
        %v3017 = vmax.f32 %v2985, 0.0
        %v3018 = vmax.f32 %v2986, 0.0
        %v3019 = vmax.f32 %v2987, 0.0
        %v3020 = vmax.f32 %v2988, 0.0
        %v3021 = vmax.f32 %v2989, 0.0
        %v3022 = vmax.f32 %v2990, 0.0
        %v3023 = vmax.f32 %v2991, 0.0
        %v3024 = vmax.f32 %v2992, 0.0
        %v3025 = vmax.f32 %v2993, 0.0
        %v3026 = vmax.f32 %v2994, 0.0
        %v3027 = vmax.f32 %v2995, 0.0
        %v3028 = vmax.f32 %v2996, 0.0
        %v3029 = vmax.f32 %v2997, 0.0
        %v3030 = vmax.f32 %v2998, 0.0
        %v3031 = vmax.f32 %v2999, 0.0
        %v3032 = vmax.f32 %v3000, 0.0
        %v3033 = vmax.f32 %v3001, 0.0
        %v3034 = vmax.f32 %v3002, 0.0
        %v3035 = vmax.f32 %v3003, 0.0
        %v3036 = vmax.f32 %v3004, 0.0
        %v3037 = vmax.f32 %v3005, 0.0
        %v3038 = vmax.f32 %v3006, 0.0
        %v3039 = vmax.f32 %v3007, 0.0
        %v3040 = vmax.f32 %v3008, 0.0
        %v3041 = vmax.f32 %v3009, 0.0
        %v3042 = vmax.f32 %v3010, 0.0
        %v3043 = vmax.f32 %v3011, 0.0
        %v3044 = vmax.f32 %v3012, 0.0
        %v3045 = vmax.f32 %v3013, 0.0
        %v3046 = vpack.c.bf16 %v3015, %v3014
        %v3047 = vpack.c.bf16 %v3017, %v3016
        %v3048 = vpack.c.bf16 %v3019, %v3018
        %v3049 = vpack.c.bf16 %v3021, %v3020
        %v3050 = vpack.c.bf16 %v3023, %v3022
        %v3051 = vpack.c.bf16 %v3025, %v3024
        %v3052 = vpack.c.bf16 %v3027, %v3026
        %v3053 = vpack.c.bf16 %v3029, %v3028
        %v3054 = vpack.c.bf16 %v3031, %v3030
        %v3055 = vpack.c.bf16 %v3033, %v3032
        %v3056 = vpack.c.bf16 %v3035, %v3034
        %v3057 = vpack.c.bf16 %v3037, %v3036
        %v3058 = vpack.c.bf16 %v3039, %v3038
        %v3059 = vpack.c.bf16 %v3041, %v3040
        %v3060 = vpack.c.bf16 %v3043, %v3042
        %v3061 = vpack.c.bf16 %v3045, %v3044
        %v3062 = vld [vmem:[%s8] sm:$0xf]
        %v3063 = vld [vmem:[%s8 + $0x4] sm:$0xf]
        %v3064 = vld [vmem:[%s9] sm:$0x1]
        %v3066 = vperm.slane %v3064, 0
        %v3070 = vunpack.c.l.b16 %v3062
        %v3071 = vunpack.c.l.b16 %v3063
        %v3072 = vpack.c.b16 %v3071, %v3070
        %v3075 = vsel %vm586, %v3046, 0
        %v3078 = vsel %vm586, %v3047, 0
        %v3081 = vsel %vm586, %v3048, 0
        %v3084 = vsel %vm586, %v3049, 0
        %v3087 = vsel %vm586, %v3050, 0
        %v3090 = vsel %vm586, %v3051, 0
        %v3093 = vsel %vm586, %v3052, 0
        %v3096 = vsel %vm586, %v3053, 0
        %v3099 = vsel %vm586, %v3054, 0
        %v3102 = vsel %vm586, %v3055, 0
        %v3105 = vsel %vm586, %v3056, 0
        %v3108 = vsel %vm586, %v3057, 0
        %v3111 = vsel %vm586, %v3058, 0
        %v3114 = vsel %vm586, %v3059, 0
        %v3117 = vsel %vm586, %v3060, 0
        %v3120 = vsel %vm586, %v3061, 0
        %3122 = vmatpush.bf16.msra.mxu0 0
        %3123 = vmatpush.bf16.msra.mxu0 0
        %3124 = vmatpush.bf16.msra.mxu0 0
        %3125 = vmatpush.bf16.msra.mxu0 0
        %3126 = vmatpush.bf16.msra.mxu0 0
        %3127 = vmatpush.bf16.msra.mxu0 0
        %3128 = vmatpush.bf16.msra.mxu0 0
        %3129 = vmatpush.bf16.msra.mxu0 %v3072
        %3130 = vmatmul.bf16.gmra.mxu0 %v3075
        %v3131 = vpop.f32.mrf.mxu0
        %v3132 = vadd.f32 %v3066, %v3131
        %v3133 = vpop.f32.mrf.mxu0
        %v3134 = vadd.f32 %v3066, %v3133
        %3135 = vmatmul.bf16.gmra.mxu0 %v3078
        %v3136 = vpop.f32.mrf.mxu0
        %v3137 = vadd.f32 %v3066, %v3136
        %v3138 = vpop.f32.mrf.mxu0
        %v3139 = vadd.f32 %v3066, %v3138
        %3140 = vmatmul.bf16.gmra.mxu0 %v3081
        %v3141 = vpop.f32.mrf.mxu0
        %v3142 = vadd.f32 %v3066, %v3141
        %v3143 = vpop.f32.mrf.mxu0
        %v3144 = vadd.f32 %v3066, %v3143
        %3145 = vmatmul.bf16.gmra.mxu0 %v3084
        %v3146 = vpop.f32.mrf.mxu0
        %v3147 = vadd.f32 %v3066, %v3146
        %v3148 = vpop.f32.mrf.mxu0
        %v3149 = vadd.f32 %v3066, %v3148
        %3150 = vmatmul.bf16.gmra.mxu0 %v3087
        %v3151 = vpop.f32.mrf.mxu0
        %v3152 = vadd.f32 %v3066, %v3151
        %v3153 = vpop.f32.mrf.mxu0
        %v3154 = vadd.f32 %v3066, %v3153
        %3155 = vmatmul.bf16.gmra.mxu0 %v3090
        %v3156 = vpop.f32.mrf.mxu0
        %v3157 = vadd.f32 %v3066, %v3156
        %v3158 = vpop.f32.mrf.mxu0
        %v3159 = vadd.f32 %v3066, %v3158
        %3160 = vmatmul.bf16.gmra.mxu0 %v3093
        %v3161 = vpop.f32.mrf.mxu0
        %v3162 = vadd.f32 %v3066, %v3161
        %v3163 = vpop.f32.mrf.mxu0
        %v3164 = vadd.f32 %v3066, %v3163
        %3165 = vmatmul.bf16.gmra.mxu0 %v3096
        %v3166 = vpop.f32.mrf.mxu0
        %v3167 = vadd.f32 %v3066, %v3166
        %v3168 = vpop.f32.mrf.mxu0
        %v3169 = vadd.f32 %v3066, %v3168
        %3170 = vmatmul.bf16.gmra.mxu0 %v3099
        %v3171 = vpop.f32.mrf.mxu0
        %v3172 = vadd.f32 %v3066, %v3171
        %v3173 = vpop.f32.mrf.mxu0
        %v3174 = vadd.f32 %v3066, %v3173
        %3175 = vmatmul.bf16.gmra.mxu0 %v3102
        %v3176 = vpop.f32.mrf.mxu0
        %v3177 = vadd.f32 %v3066, %v3176
        %v3178 = vpop.f32.mrf.mxu0
        %v3179 = vadd.f32 %v3066, %v3178
        %3180 = vmatmul.bf16.gmra.mxu0 %v3105
        %v3181 = vpop.f32.mrf.mxu0
        %v3182 = vadd.f32 %v3066, %v3181
        %v3183 = vpop.f32.mrf.mxu0
        %v3184 = vadd.f32 %v3066, %v3183
        %3185 = vmatmul.bf16.gmra.mxu0 %v3108
        %v3186 = vpop.f32.mrf.mxu0
        %v3187 = vadd.f32 %v3066, %v3186
        %v3188 = vpop.f32.mrf.mxu0
        %v3189 = vadd.f32 %v3066, %v3188
        %3190 = vmatmul.bf16.gmra.mxu0 %v3111
        %v3191 = vpop.f32.mrf.mxu0
        %v3192 = vadd.f32 %v3066, %v3191
        %v3193 = vpop.f32.mrf.mxu0
        %v3194 = vadd.f32 %v3066, %v3193
        %3195 = vmatmul.bf16.gmra.mxu0 %v3114
        %v3196 = vpop.f32.mrf.mxu0
        %v3197 = vadd.f32 %v3066, %v3196
        %v3198 = vpop.f32.mrf.mxu0
        %v3199 = vadd.f32 %v3066, %v3198
        %3200 = vmatmul.bf16.gmra.mxu0 %v3117
        %v3201 = vpop.f32.mrf.mxu0
        %v3202 = vadd.f32 %v3066, %v3201
        %v3203 = vpop.f32.mrf.mxu0
        %v3204 = vadd.f32 %v3066, %v3203
        %3205 = vmatmul.bf16.gmra.mxu0 %v3120
        %v3206 = vpop.f32.mrf.mxu0
        %v3207 = vadd.f32 %v3066, %v3206
        %v3208 = vpop.f32.mrf.mxu0
        %v3209 = vadd.f32 %v3066, %v3208
        %3210 = vdwg.mxu0
        %v3211 = vmax.f32 %v3132, 0.0
        %v3212 = vmax.f32 %v3134, 0.0
        %v3213 = vmax.f32 %v3137, 0.0
        %v3214 = vmax.f32 %v3139, 0.0
        %v3215 = vmax.f32 %v3142, 0.0
        %v3216 = vmax.f32 %v3144, 0.0
        %v3217 = vmax.f32 %v3147, 0.0
        %v3218 = vmax.f32 %v3149, 0.0
        %v3219 = vmax.f32 %v3152, 0.0
        %v3220 = vmax.f32 %v3154, 0.0
        %v3221 = vmax.f32 %v3157, 0.0
        %v3222 = vmax.f32 %v3159, 0.0
        %v3223 = vmax.f32 %v3162, 0.0
        %v3224 = vmax.f32 %v3164, 0.0
        %v3225 = vmax.f32 %v3167, 0.0
        %v3226 = vmax.f32 %v3169, 0.0
        %v3227 = vmax.f32 %v3172, 0.0
        %v3228 = vmax.f32 %v3174, 0.0
        %v3229 = vmax.f32 %v3177, 0.0
        %v3230 = vmax.f32 %v3179, 0.0
        %v3231 = vmax.f32 %v3182, 0.0
        %v3232 = vmax.f32 %v3184, 0.0
        %v3233 = vmax.f32 %v3187, 0.0
        %v3234 = vmax.f32 %v3189, 0.0
        %v3235 = vmax.f32 %v3192, 0.0
        %v3236 = vmax.f32 %v3194, 0.0
        %v3237 = vmax.f32 %v3197, 0.0
        %v3238 = vmax.f32 %v3199, 0.0
        %v3239 = vmax.f32 %v3202, 0.0
        %v3240 = vmax.f32 %v3204, 0.0
        %v3241 = vmax.f32 %v3207, 0.0
        %v3242 = vmax.f32 %v3209, 0.0
        %3243 = vst.msk [vmem:[%s971 + $0x1] sm:$0xff] %vm586, %v3211
        %3244 = vst.msk [vmem:[%s971 + $0x9] sm:$0xff] %vm586, %v3212
        %3245 = vst.msk [vmem:[%s971 + $0x19] sm:$0xff] %vm586, %v3213
        %3246 = vst.msk [vmem:[%s971 + $0x21] sm:$0xff] %vm586, %v3214
        %3247 = vst.msk [vmem:[%s971 + $0x31] sm:$0xff] %vm586, %v3215
        %3248 = vst.msk [vmem:[%s971 + $0x39] sm:$0xff] %vm586, %v3216
        %3249 = vst.msk [vmem:[%s971 + $0x49] sm:$0xff] %vm586, %v3217
        %3250 = vst.msk [vmem:[%s971 + $0x51] sm:$0xff] %vm586, %v3218
        %3251 = vst.msk [vmem:[%s971 + $0x61] sm:$0xff] %vm586, %v3219
        %3252 = vst.msk [vmem:[%s971 + $0x69] sm:$0xff] %vm586, %v3220
        %3253 = vst.msk [vmem:[%s971 + $0x79] sm:$0xff] %vm586, %v3221
        %3254 = vst.msk [vmem:[%s971 + $0x81] sm:$0xff] %vm586, %v3222
        %3255 = vst.msk [vmem:[%s971 + $0x91] sm:$0xff] %vm586, %v3223
        %3256 = vst.msk [vmem:[%s971 + $0x99] sm:$0xff] %vm586, %v3224
        %3257 = vst.msk [vmem:[%s971 + $0xa9] sm:$0xff] %vm586, %v3225
        %3258 = vst.msk [vmem:[%s971 + $0xb1] sm:$0xff] %vm586, %v3226
        %3259 = vst.msk [vmem:[%s971 + $0xc1] sm:$0xff] %vm586, %v3227
        %3260 = vst.msk [vmem:[%s971 + $0xc9] sm:$0xff] %vm586, %v3228
        %3261 = vst.msk [vmem:[%s971 + $0xd9] sm:$0xff] %vm586, %v3229
        %3262 = vst.msk [vmem:[%s971 + $0xe1] sm:$0xff] %vm586, %v3230
        %3263 = vst.msk [vmem:[%s971 + $0xf1] sm:$0xff] %vm586, %v3231
        %3264 = vst.msk [vmem:[%s971 + $0xf9] sm:$0xff] %vm586, %v3232
        %3265 = vst.msk [vmem:[%s971 + $0x109] sm:$0xff] %vm586, %v3233
        %3266 = vst.msk [vmem:[%s971 + $0x111] sm:$0xff] %vm586, %v3234
        %3267 = vst.msk [vmem:[%s971 + $0x121] sm:$0xff] %vm586, %v3235
        %3268 = vst.msk [vmem:[%s971 + $0x129] sm:$0xff] %vm586, %v3236
        %3269 = vst.msk [vmem:[%s971 + $0x139] sm:$0xff] %vm586, %v3237
        %3270 = vst.msk [vmem:[%s971 + $0x141] sm:$0xff] %vm586, %v3238
        %3271 = vst.msk [vmem:[%s971 + $0x151] sm:$0xff] %vm586, %v3239
        %3272 = vst.msk [vmem:[%s971 + $0x159] sm:$0xff] %vm586, %v3240
        %3273 = vst.msk [vmem:[%s971 + $0x169] sm:$0xff] %vm586, %v3241
        %3274 = vst.msk [vmem:[%s971 + $0x171] sm:$0xff] %vm586, %v3242
        %v3275 = vld [vmem:[#allocation2] sm:$0xff]
        %v3276 = vld [vmem:[#allocation2 + $0x8] sm:$0xff]
        %v3277 = vld [vmem:[#allocation2 + $0x18] sm:$0xff]
        %v3278 = vld [vmem:[#allocation2 + $0x20] sm:$0xff]
        %v3279 = vld [vmem:[#allocation2 + $0x30] sm:$0xff]
        %v3280 = vld [vmem:[#allocation2 + $0x38] sm:$0xff]
        %v3281 = vld [vmem:[#allocation2 + $0x48] sm:$0xff]
        %v3282 = vld [vmem:[#allocation2 + $0x50] sm:$0xff]
        %v3283 = vld [vmem:[#allocation2 + $0x60] sm:$0xff]
        %v3284 = vld [vmem:[#allocation2 + $0x68] sm:$0xff]
        %v3285 = vld [vmem:[#allocation2 + $0x78] sm:$0xff]
        %v3286 = vld [vmem:[#allocation2 + $0x80] sm:$0xff]
        %v3287 = vld [vmem:[#allocation2 + $0x90] sm:$0xff]
        %v3288 = vld [vmem:[#allocation2 + $0x98] sm:$0xff]
        %v3289 = vld [vmem:[#allocation2 + $0xa8] sm:$0xff]
        %v3290 = vld [vmem:[#allocation2 + $0xb0] sm:$0xff]
        %v3291 = vld [vmem:[#allocation2 + $0xc0] sm:$0xff]
        %v3292 = vld [vmem:[#allocation2 + $0xc8] sm:$0xff]
        %v3293 = vld [vmem:[#allocation2 + $0xd8] sm:$0xff]
        %v3294 = vld [vmem:[#allocation2 + $0xe0] sm:$0xff]
        %v3295 = vld [vmem:[#allocation2 + $0xf0] sm:$0xff]
        %v3296 = vld [vmem:[#allocation2 + $0xf8] sm:$0xff]
        %v3297 = vld [vmem:[#allocation2 + $0x108] sm:$0xff]
        %v3298 = vld [vmem:[#allocation2 + $0x110] sm:$0xff]
        %v3299 = vld [vmem:[#allocation2 + $0x120] sm:$0xff]
        %v3300 = vld [vmem:[#allocation2 + $0x128] sm:$0xff]
        %v3301 = vld [vmem:[#allocation2 + $0x138] sm:$0xff]
        %v3302 = vld [vmem:[#allocation2 + $0x140] sm:$0xff]
        %v3303 = vld [vmem:[#allocation2 + $0x150] sm:$0xff]
        %v3304 = vld [vmem:[#allocation2 + $0x158] sm:$0xff]
        %v3305 = vld [vmem:[#allocation2 + $0x168] sm:$0xff]
        %v3306 = vld [vmem:[#allocation2 + $0x170] sm:$0xff]
        %v3307 = vld [vmem:[#allocation2 + $0x1] sm:$0xff]
        %v3308 = vld [vmem:[#allocation2 + $0x9] sm:$0xff]
        %v3309 = vld [vmem:[#allocation2 + $0x19] sm:$0xff]
        %v3310 = vld [vmem:[#allocation2 + $0x21] sm:$0xff]
        %v3311 = vld [vmem:[#allocation2 + $0x31] sm:$0xff]
        %v3312 = vld [vmem:[#allocation2 + $0x39] sm:$0xff]
        %v3313 = vld [vmem:[#allocation2 + $0x49] sm:$0xff]
        %v3314 = vld [vmem:[#allocation2 + $0x51] sm:$0xff]
        %v3315 = vld [vmem:[#allocation2 + $0x61] sm:$0xff]
        %v3316 = vld [vmem:[#allocation2 + $0x69] sm:$0xff]
        %v3317 = vld [vmem:[#allocation2 + $0x79] sm:$0xff]
        %v3318 = vld [vmem:[#allocation2 + $0x81] sm:$0xff]
        %v3319 = vld [vmem:[#allocation2 + $0x91] sm:$0xff]
        %v3320 = vld [vmem:[#allocation2 + $0x99] sm:$0xff]
        %v3321 = vld [vmem:[#allocation2 + $0xa9] sm:$0xff]
        %v3322 = vld [vmem:[#allocation2 + $0xb1] sm:$0xff]
        %v3323 = vld [vmem:[#allocation2 + $0xc1] sm:$0xff]
        %v3324 = vld [vmem:[#allocation2 + $0xc9] sm:$0xff]
        %v3325 = vld [vmem:[#allocation2 + $0xd9] sm:$0xff]
        %v3326 = vld [vmem:[#allocation2 + $0xe1] sm:$0xff]
        %v3327 = vld [vmem:[#allocation2 + $0xf1] sm:$0xff]
        %v3328 = vld [vmem:[#allocation2 + $0xf9] sm:$0xff]
        %v3329 = vld [vmem:[#allocation2 + $0x109] sm:$0xff]
        %v3330 = vld [vmem:[#allocation2 + $0x111] sm:$0xff]
        %v3331 = vld [vmem:[#allocation2 + $0x121] sm:$0xff]
        %v3332 = vld [vmem:[#allocation2 + $0x129] sm:$0xff]
        %v3333 = vld [vmem:[#allocation2 + $0x139] sm:$0xff]
        %v3334 = vld [vmem:[#allocation2 + $0x141] sm:$0xff]
        %v3335 = vld [vmem:[#allocation2 + $0x151] sm:$0xff]
        %v3336 = vld [vmem:[#allocation2 + $0x159] sm:$0xff]
        %v3337 = vld [vmem:[#allocation2 + $0x169] sm:$0xff]
        %v3338 = vld [vmem:[#allocation2 + $0x171] sm:$0xff]
        %v3339 = vld [vmem:[#allocation2 + $0x2] sm:$0xff]
        %v3340 = vld [vmem:[#allocation2 + $0xa] sm:$0xff]
        %v3341 = vld [vmem:[#allocation2 + $0x1a] sm:$0xff]
        %v3342 = vld [vmem:[#allocation2 + $0x22] sm:$0xff]
        %v3343 = vld [vmem:[#allocation2 + $0x32] sm:$0xff]
        %v3344 = vld [vmem:[#allocation2 + $0x3a] sm:$0xff]
        %v3345 = vld [vmem:[#allocation2 + $0x4a] sm:$0xff]
        %v3346 = vld [vmem:[#allocation2 + $0x52] sm:$0xff]
        %v3347 = vld [vmem:[#allocation2 + $0x62] sm:$0xff]
        %v3348 = vld [vmem:[#allocation2 + $0x6a] sm:$0xff]
        %v3349 = vld [vmem:[#allocation2 + $0x7a] sm:$0xff]
        %v3350 = vld [vmem:[#allocation2 + $0x82] sm:$0xff]
        %v3351 = vld [vmem:[#allocation2 + $0x92] sm:$0xff]
        %v3352 = vld [vmem:[#allocation2 + $0x9a] sm:$0xff]
        %v3353 = vld [vmem:[#allocation2 + $0xaa] sm:$0xff]
        %v3354 = vld [vmem:[#allocation2 + $0xb2] sm:$0xff]
        %v3355 = vld [vmem:[#allocation2 + $0xc2] sm:$0xff]
        %v3356 = vld [vmem:[#allocation2 + $0xca] sm:$0xff]
        %v3357 = vld [vmem:[#allocation2 + $0xda] sm:$0xff]
        %v3358 = vld [vmem:[#allocation2 + $0xe2] sm:$0xff]
        %v3359 = vld [vmem:[#allocation2 + $0xf2] sm:$0xff]
        %v3360 = vld [vmem:[#allocation2 + $0xfa] sm:$0xff]
        %v3361 = vld [vmem:[#allocation2 + $0x10a] sm:$0xff]
        %v3362 = vld [vmem:[#allocation2 + $0x112] sm:$0xff]
        %v3363 = vld [vmem:[#allocation2 + $0x122] sm:$0xff]
        %v3364 = vld [vmem:[#allocation2 + $0x12a] sm:$0xff]
        %v3365 = vld [vmem:[#allocation2 + $0x13a] sm:$0xff]
        %v3366 = vld [vmem:[#allocation2 + $0x142] sm:$0xff]
        %v3367 = vld [vmem:[#allocation2 + $0x152] sm:$0xff]
        %v3368 = vld [vmem:[#allocation2 + $0x15a] sm:$0xff]
        %v3369 = vld [vmem:[#allocation2 + $0x16a] sm:$0xff]
        %v3370 = vld [vmem:[#allocation2 + $0x172] sm:$0xff]
        %v3371 = vld [vmem:[%s971] sm:$0xff]
        %v3372 = vld [vmem:[%s971 + $0x8] sm:$0xff]
        %v3373 = vld [vmem:[%s971 + $0x18] sm:$0xff]
        %v3374 = vld [vmem:[%s971 + $0x20] sm:$0xff]
        %v3375 = vld [vmem:[%s971 + $0x30] sm:$0xff]
        %v3376 = vld [vmem:[%s971 + $0x38] sm:$0xff]
        %v3377 = vld [vmem:[%s971 + $0x48] sm:$0xff]
        %v3378 = vld [vmem:[%s971 + $0x50] sm:$0xff]
        %v3379 = vld [vmem:[%s971 + $0x60] sm:$0xff]
        %v3380 = vld [vmem:[%s971 + $0x68] sm:$0xff]
        %v3381 = vld [vmem:[%s971 + $0x78] sm:$0xff]
        %v3382 = vld [vmem:[%s971 + $0x80] sm:$0xff]
        %v3383 = vld [vmem:[%s971 + $0x90] sm:$0xff]
        %v3384 = vld [vmem:[%s971 + $0x98] sm:$0xff]
        %v3385 = vld [vmem:[%s971 + $0xa8] sm:$0xff]
        %v3386 = vld [vmem:[%s971 + $0xb0] sm:$0xff]
        %v3387 = vld [vmem:[%s971 + $0xc0] sm:$0xff]
        %v3388 = vld [vmem:[%s971 + $0xc8] sm:$0xff]
        %v3389 = vld [vmem:[%s971 + $0xd8] sm:$0xff]
        %v3390 = vld [vmem:[%s971 + $0xe0] sm:$0xff]
        %v3391 = vld [vmem:[%s971 + $0xf0] sm:$0xff]
        %v3392 = vld [vmem:[%s971 + $0xf8] sm:$0xff]
        %v3393 = vld [vmem:[%s971 + $0x108] sm:$0xff]
        %v3394 = vld [vmem:[%s971 + $0x110] sm:$0xff]
        %v3395 = vld [vmem:[%s971 + $0x120] sm:$0xff]
        %v3396 = vld [vmem:[%s971 + $0x128] sm:$0xff]
        %v3397 = vld [vmem:[%s971 + $0x138] sm:$0xff]
        %v3398 = vld [vmem:[%s971 + $0x140] sm:$0xff]
        %v3399 = vld [vmem:[%s971 + $0x150] sm:$0xff]
        %v3400 = vld [vmem:[%s971 + $0x158] sm:$0xff]
        %v3401 = vld [vmem:[%s971 + $0x168] sm:$0xff]
        %v3402 = vld [vmem:[%s971 + $0x170] sm:$0xff]
        %v3403 = vld [vmem:[%s971 + $0x1] sm:$0xff]
        %v3404 = vld [vmem:[%s971 + $0x9] sm:$0xff]
        %v3405 = vld [vmem:[%s971 + $0x19] sm:$0xff]
        %v3406 = vld [vmem:[%s971 + $0x21] sm:$0xff]
        %v3407 = vld [vmem:[%s971 + $0x31] sm:$0xff]
        %v3408 = vld [vmem:[%s971 + $0x39] sm:$0xff]
        %v3409 = vld [vmem:[%s971 + $0x49] sm:$0xff]
        %v3410 = vld [vmem:[%s971 + $0x51] sm:$0xff]
        %v3411 = vld [vmem:[%s971 + $0x61] sm:$0xff]
        %v3412 = vld [vmem:[%s971 + $0x69] sm:$0xff]
        %v3413 = vld [vmem:[%s971 + $0x79] sm:$0xff]
        %v3414 = vld [vmem:[%s971 + $0x81] sm:$0xff]
        %v3415 = vld [vmem:[%s971 + $0x91] sm:$0xff]
        %v3416 = vld [vmem:[%s971 + $0x99] sm:$0xff]
        %v3417 = vld [vmem:[%s971 + $0xa9] sm:$0xff]
        %v3418 = vld [vmem:[%s971 + $0xb1] sm:$0xff]
        %v3419 = vld [vmem:[%s971 + $0xc1] sm:$0xff]
        %v3420 = vld [vmem:[%s971 + $0xc9] sm:$0xff]
        %v3421 = vld [vmem:[%s971 + $0xd9] sm:$0xff]
        %v3422 = vld [vmem:[%s971 + $0xe1] sm:$0xff]
        %v3423 = vld [vmem:[%s971 + $0xf1] sm:$0xff]
        %v3424 = vld [vmem:[%s971 + $0xf9] sm:$0xff]
        %v3425 = vld [vmem:[%s971 + $0x109] sm:$0xff]
        %v3426 = vld [vmem:[%s971 + $0x111] sm:$0xff]
        %v3427 = vld [vmem:[%s971 + $0x121] sm:$0xff]
        %v3428 = vld [vmem:[%s971 + $0x129] sm:$0xff]
        %v3429 = vld [vmem:[%s971 + $0x139] sm:$0xff]
        %v3430 = vld [vmem:[%s971 + $0x141] sm:$0xff]
        %v3431 = vld [vmem:[%s971 + $0x151] sm:$0xff]
        %v3432 = vld [vmem:[%s971 + $0x159] sm:$0xff]
        %v3433 = vld [vmem:[%s971 + $0x169] sm:$0xff]
        %v3434 = vld [vmem:[%s971 + $0x171] sm:$0xff]
        %v3435 = vld [vmem:[%s971 + $0x2] sm:$0xff]
        %v3436 = vld [vmem:[%s971 + $0xa] sm:$0xff]
        %v3437 = vld [vmem:[%s971 + $0x1a] sm:$0xff]
        %v3438 = vld [vmem:[%s971 + $0x22] sm:$0xff]
        %v3439 = vld [vmem:[%s971 + $0x32] sm:$0xff]
        %v3440 = vld [vmem:[%s971 + $0x3a] sm:$0xff]
        %v3441 = vld [vmem:[%s971 + $0x4a] sm:$0xff]
        %v3442 = vld [vmem:[%s971 + $0x52] sm:$0xff]
        %v3443 = vld [vmem:[%s971 + $0x62] sm:$0xff]
        %v3444 = vld [vmem:[%s971 + $0x6a] sm:$0xff]
        %v3445 = vld [vmem:[%s971 + $0x7a] sm:$0xff]
        %v3446 = vld [vmem:[%s971 + $0x82] sm:$0xff]
        %v3447 = vld [vmem:[%s971 + $0x92] sm:$0xff]
        %v3448 = vld [vmem:[%s971 + $0x9a] sm:$0xff]
        %v3449 = vld [vmem:[%s971 + $0xaa] sm:$0xff]
        %v3450 = vld [vmem:[%s971 + $0xb2] sm:$0xff]
        %v3451 = vld [vmem:[%s971 + $0xc2] sm:$0xff]
        %v3452 = vld [vmem:[%s971 + $0xca] sm:$0xff]
        %v3453 = vld [vmem:[%s971 + $0xda] sm:$0xff]
        %v3454 = vld [vmem:[%s971 + $0xe2] sm:$0xff]
        %v3455 = vld [vmem:[%s971 + $0xf2] sm:$0xff]
        %v3456 = vld [vmem:[%s971 + $0xfa] sm:$0xff]
        %v3457 = vld [vmem:[%s971 + $0x10a] sm:$0xff]
        %v3458 = vld [vmem:[%s971 + $0x112] sm:$0xff]
        %v3459 = vld [vmem:[%s971 + $0x122] sm:$0xff]
        %v3460 = vld [vmem:[%s971 + $0x12a] sm:$0xff]
        %v3461 = vld [vmem:[%s971 + $0x13a] sm:$0xff]
        %v3462 = vld [vmem:[%s971 + $0x142] sm:$0xff]
        %v3463 = vld [vmem:[%s971 + $0x152] sm:$0xff]
        %v3464 = vld [vmem:[%s971 + $0x15a] sm:$0xff]
        %v3465 = vld [vmem:[%s971 + $0x16a] sm:$0xff]
        %v3466 = vld [vmem:[%s971 + $0x172] sm:$0xff]
        %v3467 = vld [vmem:[%s1196] sm:$0xff]
        %v3468 = vld [vmem:[%s1196 + $0x8] sm:$0xff]
        %v3469 = vld [vmem:[%s1196 + $0x18] sm:$0xff]
        %v3470 = vld [vmem:[%s1196 + $0x20] sm:$0xff]
        %v3471 = vld [vmem:[%s1196 + $0x30] sm:$0xff]
        %v3472 = vld [vmem:[%s1196 + $0x38] sm:$0xff]
        %v3473 = vld [vmem:[%s1196 + $0x48] sm:$0xff]
        %v3474 = vld [vmem:[%s1196 + $0x50] sm:$0xff]
        %v3475 = vld [vmem:[%s1196 + $0x60] sm:$0xff]
        %v3476 = vld [vmem:[%s1196 + $0x68] sm:$0xff]
        %v3477 = vld [vmem:[%s1196 + $0x78] sm:$0xff]
        %v3478 = vld [vmem:[%s1196 + $0x80] sm:$0xff]
        %v3479 = vld [vmem:[%s1196 + $0x90] sm:$0xff]
        %v3480 = vld [vmem:[%s1196 + $0x98] sm:$0xff]
        %v3481 = vld [vmem:[%s1196 + $0xa8] sm:$0xff]
        %v3482 = vld [vmem:[%s1196 + $0xb0] sm:$0xff]
        %v3483 = vld [vmem:[%s1196 + $0xc0] sm:$0xff]
        %v3484 = vld [vmem:[%s1196 + $0xc8] sm:$0xff]
        %v3485 = vld [vmem:[%s1196 + $0xd8] sm:$0xff]
        %v3486 = vld [vmem:[%s1196 + $0xe0] sm:$0xff]
        %v3487 = vld [vmem:[%s1196 + $0xf0] sm:$0xff]
        %v3488 = vld [vmem:[%s1196 + $0xf8] sm:$0xff]
        %v3489 = vld [vmem:[%s1196 + $0x108] sm:$0xff]
        %v3490 = vld [vmem:[%s1196 + $0x110] sm:$0xff]
        %v3491 = vld [vmem:[%s1196 + $0x120] sm:$0xff]
        %v3492 = vld [vmem:[%s1196 + $0x128] sm:$0xff]
        %v3493 = vld [vmem:[%s1196 + $0x138] sm:$0xff]
        %v3494 = vld [vmem:[%s1196 + $0x140] sm:$0xff]
        %v3495 = vld [vmem:[%s1196 + $0x150] sm:$0xff]
        %v3496 = vld [vmem:[%s1196 + $0x158] sm:$0xff]
        %v3497 = vld [vmem:[%s1196 + $0x168] sm:$0xff]
        %v3498 = vld [vmem:[%s1196 + $0x170] sm:$0xff]
        %v3499 = vld [vmem:[%s1196 + $0x1] sm:$0xff]
        %v3500 = vld [vmem:[%s1196 + $0x9] sm:$0xff]
        %v3501 = vld [vmem:[%s1196 + $0x19] sm:$0xff]
        %v3502 = vld [vmem:[%s1196 + $0x21] sm:$0xff]
        %v3503 = vld [vmem:[%s1196 + $0x31] sm:$0xff]
        %v3504 = vld [vmem:[%s1196 + $0x39] sm:$0xff]
        %v3505 = vld [vmem:[%s1196 + $0x49] sm:$0xff]
        %v3506 = vld [vmem:[%s1196 + $0x51] sm:$0xff]
        %v3507 = vld [vmem:[%s1196 + $0x61] sm:$0xff]
        %v3508 = vld [vmem:[%s1196 + $0x69] sm:$0xff]
        %v3509 = vld [vmem:[%s1196 + $0x79] sm:$0xff]
        %v3510 = vld [vmem:[%s1196 + $0x81] sm:$0xff]
        %v3511 = vld [vmem:[%s1196 + $0x91] sm:$0xff]
        %v3512 = vld [vmem:[%s1196 + $0x99] sm:$0xff]
        %v3513 = vld [vmem:[%s1196 + $0xa9] sm:$0xff]
        %v3514 = vld [vmem:[%s1196 + $0xb1] sm:$0xff]
        %v3515 = vld [vmem:[%s1196 + $0xc1] sm:$0xff]
        %v3516 = vld [vmem:[%s1196 + $0xc9] sm:$0xff]
        %v3517 = vld [vmem:[%s1196 + $0xd9] sm:$0xff]
        %v3518 = vld [vmem:[%s1196 + $0xe1] sm:$0xff]
        %v3519 = vld [vmem:[%s1196 + $0xf1] sm:$0xff]
        %v3520 = vld [vmem:[%s1196 + $0xf9] sm:$0xff]
        %v3521 = vld [vmem:[%s1196 + $0x109] sm:$0xff]
        %v3522 = vld [vmem:[%s1196 + $0x111] sm:$0xff]
        %v3523 = vld [vmem:[%s1196 + $0x121] sm:$0xff]
        %v3524 = vld [vmem:[%s1196 + $0x129] sm:$0xff]
        %v3525 = vld [vmem:[%s1196 + $0x139] sm:$0xff]
        %v3526 = vld [vmem:[%s1196 + $0x141] sm:$0xff]
        %v3527 = vld [vmem:[%s1196 + $0x151] sm:$0xff]
        %v3528 = vld [vmem:[%s1196 + $0x159] sm:$0xff]
        %v3529 = vld [vmem:[%s1196 + $0x169] sm:$0xff]
        %v3530 = vld [vmem:[%s1196 + $0x171] sm:$0xff]
        %v3531 = vld [vmem:[%s1196 + $0x2] sm:$0xff]
        %v3532 = vld [vmem:[%s1196 + $0xa] sm:$0xff]
        %v3533 = vld [vmem:[%s1196 + $0x1a] sm:$0xff]
        %v3534 = vld [vmem:[%s1196 + $0x22] sm:$0xff]
        %v3535 = vld [vmem:[%s1196 + $0x32] sm:$0xff]
        %v3536 = vld [vmem:[%s1196 + $0x3a] sm:$0xff]
        %v3537 = vld [vmem:[%s1196 + $0x4a] sm:$0xff]
        %v3538 = vld [vmem:[%s1196 + $0x52] sm:$0xff]
        %v3539 = vld [vmem:[%s1196 + $0x62] sm:$0xff]
        %v3540 = vld [vmem:[%s1196 + $0x6a] sm:$0xff]
        %v3541 = vld [vmem:[%s1196 + $0x7a] sm:$0xff]
        %v3542 = vld [vmem:[%s1196 + $0x82] sm:$0xff]
        %v3543 = vld [vmem:[%s1196 + $0x92] sm:$0xff]
        %v3544 = vld [vmem:[%s1196 + $0x9a] sm:$0xff]
        %v3545 = vld [vmem:[%s1196 + $0xaa] sm:$0xff]
        %v3546 = vld [vmem:[%s1196 + $0xb2] sm:$0xff]
        %v3547 = vld [vmem:[%s1196 + $0xc2] sm:$0xff]
        %v3548 = vld [vmem:[%s1196 + $0xca] sm:$0xff]
        %v3549 = vld [vmem:[%s1196 + $0xda] sm:$0xff]
        %v3550 = vld [vmem:[%s1196 + $0xe2] sm:$0xff]
        %v3551 = vld [vmem:[%s1196 + $0xf2] sm:$0xff]
        %v3552 = vld [vmem:[%s1196 + $0xfa] sm:$0xff]
        %v3553 = vld [vmem:[%s1196 + $0x10a] sm:$0xff]
        %v3554 = vld [vmem:[%s1196 + $0x112] sm:$0xff]
        %v3555 = vld [vmem:[%s1196 + $0x122] sm:$0xff]
        %v3556 = vld [vmem:[%s1196 + $0x12a] sm:$0xff]
        %v3557 = vld [vmem:[%s1196 + $0x13a] sm:$0xff]
        %v3558 = vld [vmem:[%s1196 + $0x142] sm:$0xff]
        %v3559 = vld [vmem:[%s1196 + $0x152] sm:$0xff]
        %v3560 = vld [vmem:[%s1196 + $0x15a] sm:$0xff]
        %v3561 = vld [vmem:[%s1196 + $0x16a] sm:$0xff]
        %v3562 = vld [vmem:[%s1196 + $0x172] sm:$0xff]
        %3595 = vrot.lane.b32.xlu0 %v3307, 16
        %v3596 = vpop.permute.xlu0 %3595
        %3597 = vrot.lane.b32.xlu0 %v3308, 16
        %v3598 = vpop.permute.xlu0 %3597
        %3599 = vrot.lane.b32.xlu0 %v3309, 16
        %v3600 = vpop.permute.xlu0 %3599
        %3601 = vrot.lane.b32.xlu0 %v3310, 16
        %v3602 = vpop.permute.xlu0 %3601
        %3603 = vrot.lane.b32.xlu0 %v3311, 16
        %v3604 = vpop.permute.xlu0 %3603
        %3605 = vrot.lane.b32.xlu0 %v3312, 16
        %v3606 = vpop.permute.xlu0 %3605
        %3607 = vrot.lane.b32.xlu0 %v3313, 16
        %v3608 = vpop.permute.xlu0 %3607
        %3609 = vrot.lane.b32.xlu0 %v3314, 16
        %v3610 = vpop.permute.xlu0 %3609
        %3611 = vrot.lane.b32.xlu0 %v3315, 16
        %v3612 = vpop.permute.xlu0 %3611
        %3613 = vrot.lane.b32.xlu0 %v3316, 16
        %v3614 = vpop.permute.xlu0 %3613
        %3615 = vrot.lane.b32.xlu0 %v3317, 16
        %v3616 = vpop.permute.xlu0 %3615
        %3617 = vrot.lane.b32.xlu0 %v3318, 16
        %v3618 = vpop.permute.xlu0 %3617
        %3619 = vrot.lane.b32.xlu0 %v3319, 16
        %v3620 = vpop.permute.xlu0 %3619
        %3621 = vrot.lane.b32.xlu0 %v3320, 16
        %v3622 = vpop.permute.xlu0 %3621
        %3623 = vrot.lane.b32.xlu0 %v3321, 16
        %v3624 = vpop.permute.xlu0 %3623
        %3625 = vrot.lane.b32.xlu0 %v3322, 16
        %v3626 = vpop.permute.xlu0 %3625
        %3627 = vrot.lane.b32.xlu0 %v3323, 16
        %v3628 = vpop.permute.xlu0 %3627
        %3629 = vrot.lane.b32.xlu0 %v3324, 16
        %v3630 = vpop.permute.xlu0 %3629
        %3631 = vrot.lane.b32.xlu0 %v3325, 16
        %v3632 = vpop.permute.xlu0 %3631
        %3633 = vrot.lane.b32.xlu0 %v3326, 16
        %v3634 = vpop.permute.xlu0 %3633
        %3635 = vrot.lane.b32.xlu0 %v3327, 16
        %v3636 = vpop.permute.xlu0 %3635
        %3637 = vrot.lane.b32.xlu0 %v3328, 16
        %v3638 = vpop.permute.xlu0 %3637
        %3639 = vrot.lane.b32.xlu0 %v3329, 16
        %v3640 = vpop.permute.xlu0 %3639
        %3641 = vrot.lane.b32.xlu0 %v3330, 16
        %v3642 = vpop.permute.xlu0 %3641
        %3643 = vrot.lane.b32.xlu0 %v3331, 16
        %v3644 = vpop.permute.xlu0 %3643
        %3645 = vrot.lane.b32.xlu0 %v3332, 16
        %v3646 = vpop.permute.xlu0 %3645
        %3647 = vrot.lane.b32.xlu0 %v3333, 16
        %v3648 = vpop.permute.xlu0 %3647
        %3649 = vrot.lane.b32.xlu0 %v3334, 16
        %v3650 = vpop.permute.xlu0 %3649
        %3651 = vrot.lane.b32.xlu0 %v3335, 16
        %v3652 = vpop.permute.xlu0 %3651
        %3653 = vrot.lane.b32.xlu0 %v3336, 16
        %v3654 = vpop.permute.xlu0 %3653
        %3655 = vrot.lane.b32.xlu0 %v3337, 16
        %v3656 = vpop.permute.xlu0 %3655
        %3657 = vrot.lane.b32.xlu0 %v3338, 16
        %v3658 = vpop.permute.xlu0 %3657
        %3723 = vrot.lane.b32.xlu0 %v3339, 32
        %v3724 = vpop.permute.xlu0 %3723
        %3725 = vrot.lane.b32.xlu0 %v3340, 32
        %v3726 = vpop.permute.xlu0 %3725
        %3727 = vrot.lane.b32.xlu0 %v3341, 32
        %v3728 = vpop.permute.xlu0 %3727
        %3729 = vrot.lane.b32.xlu0 %v3342, 32
        %v3730 = vpop.permute.xlu0 %3729
        %3731 = vrot.lane.b32.xlu0 %v3343, 32
        %v3732 = vpop.permute.xlu0 %3731
        %3733 = vrot.lane.b32.xlu0 %v3344, 32
        %v3734 = vpop.permute.xlu0 %3733
        %3735 = vrot.lane.b32.xlu0 %v3345, 32
        %v3736 = vpop.permute.xlu0 %3735
        %3737 = vrot.lane.b32.xlu0 %v3346, 32
        %v3738 = vpop.permute.xlu0 %3737
        %3739 = vrot.lane.b32.xlu0 %v3347, 32
        %v3740 = vpop.permute.xlu0 %3739
        %3741 = vrot.lane.b32.xlu0 %v3348, 32
        %v3742 = vpop.permute.xlu0 %3741
        %3743 = vrot.lane.b32.xlu0 %v3349, 32
        %v3744 = vpop.permute.xlu0 %3743
        %3745 = vrot.lane.b32.xlu0 %v3350, 32
        %v3746 = vpop.permute.xlu0 %3745
        %3747 = vrot.lane.b32.xlu0 %v3351, 32
        %v3748 = vpop.permute.xlu0 %3747
        %3749 = vrot.lane.b32.xlu0 %v3352, 32
        %v3750 = vpop.permute.xlu0 %3749
        %3751 = vrot.lane.b32.xlu0 %v3353, 32
        %v3752 = vpop.permute.xlu0 %3751
        %3753 = vrot.lane.b32.xlu0 %v3354, 32
        %v3754 = vpop.permute.xlu0 %3753
        %3755 = vrot.lane.b32.xlu0 %v3355, 32
        %v3756 = vpop.permute.xlu0 %3755
        %3757 = vrot.lane.b32.xlu0 %v3356, 32
        %v3758 = vpop.permute.xlu0 %3757
        %3759 = vrot.lane.b32.xlu0 %v3357, 32
        %v3760 = vpop.permute.xlu0 %3759
        %3761 = vrot.lane.b32.xlu0 %v3358, 32
        %v3762 = vpop.permute.xlu0 %3761
        %3763 = vrot.lane.b32.xlu0 %v3359, 32
        %v3764 = vpop.permute.xlu0 %3763
        %3765 = vrot.lane.b32.xlu0 %v3360, 32
        %v3766 = vpop.permute.xlu0 %3765
        %3767 = vrot.lane.b32.xlu0 %v3361, 32
        %v3768 = vpop.permute.xlu0 %3767
        %3769 = vrot.lane.b32.xlu0 %v3362, 32
        %v3770 = vpop.permute.xlu0 %3769
        %3771 = vrot.lane.b32.xlu0 %v3363, 32
        %v3772 = vpop.permute.xlu0 %3771
        %3773 = vrot.lane.b32.xlu0 %v3364, 32
        %v3774 = vpop.permute.xlu0 %3773
        %3775 = vrot.lane.b32.xlu0 %v3365, 32
        %v3776 = vpop.permute.xlu0 %3775
        %3777 = vrot.lane.b32.xlu0 %v3366, 32
        %v3778 = vpop.permute.xlu0 %3777
        %3779 = vrot.lane.b32.xlu0 %v3367, 32
        %v3780 = vpop.permute.xlu0 %3779
        %3781 = vrot.lane.b32.xlu0 %v3368, 32
        %v3782 = vpop.permute.xlu0 %3781
        %3783 = vrot.lane.b32.xlu0 %v3369, 32
        %v3784 = vpop.permute.xlu0 %3783
        %3785 = vrot.lane.b32.xlu0 %v3370, 32
        %v3786 = vpop.permute.xlu0 %3785
        %3851 = vrot.lane.b32.xlu0 %v3371, 48
        %v3852 = vpop.permute.xlu0 %3851
        %3853 = vrot.lane.b32.xlu0 %v3372, 48
        %v3854 = vpop.permute.xlu0 %3853
        %3855 = vrot.lane.b32.xlu0 %v3373, 48
        %v3856 = vpop.permute.xlu0 %3855
        %3857 = vrot.lane.b32.xlu0 %v3374, 48
        %v3858 = vpop.permute.xlu0 %3857
        %3859 = vrot.lane.b32.xlu0 %v3375, 48
        %v3860 = vpop.permute.xlu0 %3859
        %3861 = vrot.lane.b32.xlu0 %v3376, 48
        %v3862 = vpop.permute.xlu0 %3861
        %3863 = vrot.lane.b32.xlu0 %v3377, 48
        %v3864 = vpop.permute.xlu0 %3863
        %3865 = vrot.lane.b32.xlu0 %v3378, 48
        %v3866 = vpop.permute.xlu0 %3865
        %3867 = vrot.lane.b32.xlu0 %v3379, 48
        %v3868 = vpop.permute.xlu0 %3867
        %3869 = vrot.lane.b32.xlu0 %v3380, 48
        %v3870 = vpop.permute.xlu0 %3869
        %3871 = vrot.lane.b32.xlu0 %v3381, 48
        %v3872 = vpop.permute.xlu0 %3871
        %3873 = vrot.lane.b32.xlu0 %v3382, 48
        %v3874 = vpop.permute.xlu0 %3873
        %3875 = vrot.lane.b32.xlu0 %v3383, 48
        %v3876 = vpop.permute.xlu0 %3875
        %3877 = vrot.lane.b32.xlu0 %v3384, 48
        %v3878 = vpop.permute.xlu0 %3877
        %3879 = vrot.lane.b32.xlu0 %v3385, 48
        %v3880 = vpop.permute.xlu0 %3879
        %3881 = vrot.lane.b32.xlu0 %v3386, 48
        %v3882 = vpop.permute.xlu0 %3881
        %3883 = vrot.lane.b32.xlu0 %v3387, 48
        %v3884 = vpop.permute.xlu0 %3883
        %3885 = vrot.lane.b32.xlu0 %v3388, 48
        %v3886 = vpop.permute.xlu0 %3885
        %3887 = vrot.lane.b32.xlu0 %v3389, 48
        %v3888 = vpop.permute.xlu0 %3887
        %3889 = vrot.lane.b32.xlu0 %v3390, 48
        %v3890 = vpop.permute.xlu0 %3889
        %3891 = vrot.lane.b32.xlu0 %v3391, 48
        %v3892 = vpop.permute.xlu0 %3891
        %3893 = vrot.lane.b32.xlu0 %v3392, 48
        %v3894 = vpop.permute.xlu0 %3893
        %3895 = vrot.lane.b32.xlu0 %v3393, 48
        %v3896 = vpop.permute.xlu0 %3895
        %3897 = vrot.lane.b32.xlu0 %v3394, 48
        %v3898 = vpop.permute.xlu0 %3897
        %3899 = vrot.lane.b32.xlu0 %v3395, 48
        %v3900 = vpop.permute.xlu0 %3899
        %3901 = vrot.lane.b32.xlu0 %v3396, 48
        %v3902 = vpop.permute.xlu0 %3901
        %3903 = vrot.lane.b32.xlu0 %v3397, 48
        %v3904 = vpop.permute.xlu0 %3903
        %3905 = vrot.lane.b32.xlu0 %v3398, 48
        %v3906 = vpop.permute.xlu0 %3905
        %3907 = vrot.lane.b32.xlu0 %v3399, 48
        %v3908 = vpop.permute.xlu0 %3907
        %3909 = vrot.lane.b32.xlu0 %v3400, 48
        %v3910 = vpop.permute.xlu0 %3909
        %3911 = vrot.lane.b32.xlu0 %v3401, 48
        %v3912 = vpop.permute.xlu0 %3911
        %3913 = vrot.lane.b32.xlu0 %v3402, 48
        %v3914 = vpop.permute.xlu0 %3913
        %3979 = vrot.lane.b32.xlu0 %v3403, 64
        %v3980 = vpop.permute.xlu0 %3979
        %3981 = vrot.lane.b32.xlu0 %v3404, 64
        %v3982 = vpop.permute.xlu0 %3981
        %3983 = vrot.lane.b32.xlu0 %v3405, 64
        %v3984 = vpop.permute.xlu0 %3983
        %3985 = vrot.lane.b32.xlu0 %v3406, 64
        %v3986 = vpop.permute.xlu0 %3985
        %3987 = vrot.lane.b32.xlu0 %v3407, 64
        %v3988 = vpop.permute.xlu0 %3987
        %3989 = vrot.lane.b32.xlu0 %v3408, 64
        %v3990 = vpop.permute.xlu0 %3989
        %3991 = vrot.lane.b32.xlu0 %v3409, 64
        %v3992 = vpop.permute.xlu0 %3991
        %3993 = vrot.lane.b32.xlu0 %v3410, 64
        %v3994 = vpop.permute.xlu0 %3993
        %3995 = vrot.lane.b32.xlu0 %v3411, 64
        %v3996 = vpop.permute.xlu0 %3995
        %3997 = vrot.lane.b32.xlu0 %v3412, 64
        %v3998 = vpop.permute.xlu0 %3997
        %3999 = vrot.lane.b32.xlu0 %v3413, 64
        %v4000 = vpop.permute.xlu0 %3999
        %4001 = vrot.lane.b32.xlu0 %v3414, 64
        %v4002 = vpop.permute.xlu0 %4001
        %4003 = vrot.lane.b32.xlu0 %v3415, 64
        %v4004 = vpop.permute.xlu0 %4003
        %4005 = vrot.lane.b32.xlu0 %v3416, 64
        %v4006 = vpop.permute.xlu0 %4005
        %4007 = vrot.lane.b32.xlu0 %v3417, 64
        %v4008 = vpop.permute.xlu0 %4007
        %4009 = vrot.lane.b32.xlu0 %v3418, 64
        %v4010 = vpop.permute.xlu0 %4009
        %4011 = vrot.lane.b32.xlu0 %v3419, 64
        %v4012 = vpop.permute.xlu0 %4011
        %4013 = vrot.lane.b32.xlu0 %v3420, 64
        %v4014 = vpop.permute.xlu0 %4013
        %4015 = vrot.lane.b32.xlu0 %v3421, 64
        %v4016 = vpop.permute.xlu0 %4015
        %4017 = vrot.lane.b32.xlu0 %v3422, 64
        %v4018 = vpop.permute.xlu0 %4017
        %4019 = vrot.lane.b32.xlu0 %v3423, 64
        %v4020 = vpop.permute.xlu0 %4019
        %4021 = vrot.lane.b32.xlu0 %v3424, 64
        %v4022 = vpop.permute.xlu0 %4021
        %4023 = vrot.lane.b32.xlu0 %v3425, 64
        %v4024 = vpop.permute.xlu0 %4023
        %4025 = vrot.lane.b32.xlu0 %v3426, 64
        %v4026 = vpop.permute.xlu0 %4025
        %4027 = vrot.lane.b32.xlu0 %v3427, 64
        %v4028 = vpop.permute.xlu0 %4027
        %4029 = vrot.lane.b32.xlu0 %v3428, 64
        %v4030 = vpop.permute.xlu0 %4029
        %4031 = vrot.lane.b32.xlu0 %v3429, 64
        %v4032 = vpop.permute.xlu0 %4031
        %4033 = vrot.lane.b32.xlu0 %v3430, 64
        %v4034 = vpop.permute.xlu0 %4033
        %4035 = vrot.lane.b32.xlu0 %v3431, 64
        %v4036 = vpop.permute.xlu0 %4035
        %4037 = vrot.lane.b32.xlu0 %v3432, 64
        %v4038 = vpop.permute.xlu0 %4037
        %4039 = vrot.lane.b32.xlu0 %v3433, 64
        %v4040 = vpop.permute.xlu0 %4039
        %4041 = vrot.lane.b32.xlu0 %v3434, 64
        %v4042 = vpop.permute.xlu0 %4041
        %4107 = vrot.lane.b32.xlu0 %v3435, 80
        %v4108 = vpop.permute.xlu0 %4107
        %4109 = vrot.lane.b32.xlu0 %v3436, 80
        %v4110 = vpop.permute.xlu0 %4109
        %4111 = vrot.lane.b32.xlu0 %v3437, 80
        %v4112 = vpop.permute.xlu0 %4111
        %4113 = vrot.lane.b32.xlu0 %v3438, 80
        %v4114 = vpop.permute.xlu0 %4113
        %4115 = vrot.lane.b32.xlu0 %v3439, 80
        %v4116 = vpop.permute.xlu0 %4115
        %4117 = vrot.lane.b32.xlu0 %v3440, 80
        %v4118 = vpop.permute.xlu0 %4117
        %4119 = vrot.lane.b32.xlu0 %v3441, 80
        %v4120 = vpop.permute.xlu0 %4119
        %4121 = vrot.lane.b32.xlu0 %v3442, 80
        %v4122 = vpop.permute.xlu0 %4121
        %4123 = vrot.lane.b32.xlu0 %v3443, 80
        %v4124 = vpop.permute.xlu0 %4123
        %4125 = vrot.lane.b32.xlu0 %v3444, 80
        %v4126 = vpop.permute.xlu0 %4125
        %4127 = vrot.lane.b32.xlu0 %v3445, 80
        %v4128 = vpop.permute.xlu0 %4127
        %4129 = vrot.lane.b32.xlu0 %v3446, 80
        %v4130 = vpop.permute.xlu0 %4129
        %4131 = vrot.lane.b32.xlu0 %v3447, 80
        %v4132 = vpop.permute.xlu0 %4131
        %4133 = vrot.lane.b32.xlu0 %v3448, 80
        %v4134 = vpop.permute.xlu0 %4133
        %4135 = vrot.lane.b32.xlu0 %v3449, 80
        %v4136 = vpop.permute.xlu0 %4135
        %4137 = vrot.lane.b32.xlu0 %v3450, 80
        %v4138 = vpop.permute.xlu0 %4137
        %4139 = vrot.lane.b32.xlu0 %v3451, 80
        %v4140 = vpop.permute.xlu0 %4139
        %4141 = vrot.lane.b32.xlu0 %v3452, 80
        %v4142 = vpop.permute.xlu0 %4141
        %4143 = vrot.lane.b32.xlu0 %v3453, 80
        %v4144 = vpop.permute.xlu0 %4143
        %4145 = vrot.lane.b32.xlu0 %v3454, 80
        %v4146 = vpop.permute.xlu0 %4145
        %4147 = vrot.lane.b32.xlu0 %v3455, 80
        %v4148 = vpop.permute.xlu0 %4147
        %4149 = vrot.lane.b32.xlu0 %v3456, 80
        %v4150 = vpop.permute.xlu0 %4149
        %4151 = vrot.lane.b32.xlu0 %v3457, 80
        %v4152 = vpop.permute.xlu0 %4151
        %4153 = vrot.lane.b32.xlu0 %v3458, 80
        %v4154 = vpop.permute.xlu0 %4153
        %4155 = vrot.lane.b32.xlu0 %v3459, 80
        %v4156 = vpop.permute.xlu0 %4155
        %4157 = vrot.lane.b32.xlu0 %v3460, 80
        %v4158 = vpop.permute.xlu0 %4157
        %4159 = vrot.lane.b32.xlu0 %v3461, 80
        %v4160 = vpop.permute.xlu0 %4159
        %4161 = vrot.lane.b32.xlu0 %v3462, 80
        %v4162 = vpop.permute.xlu0 %4161
        %4163 = vrot.lane.b32.xlu0 %v3463, 80
        %v4164 = vpop.permute.xlu0 %4163
        %4165 = vrot.lane.b32.xlu0 %v3464, 80
        %v4166 = vpop.permute.xlu0 %4165
        %4167 = vrot.lane.b32.xlu0 %v3465, 80
        %v4168 = vpop.permute.xlu0 %4167
        %4169 = vrot.lane.b32.xlu0 %v3466, 80
        %v4170 = vpop.permute.xlu0 %4169
        %4235 = vrot.lane.b32.xlu0 %v3467, 96
        %v4236 = vpop.permute.xlu0 %4235
        %4237 = vrot.lane.b32.xlu0 %v3468, 96
        %v4238 = vpop.permute.xlu0 %4237
        %4239 = vrot.lane.b32.xlu0 %v3469, 96
        %v4240 = vpop.permute.xlu0 %4239
        %4241 = vrot.lane.b32.xlu0 %v3470, 96
        %v4242 = vpop.permute.xlu0 %4241
        %4243 = vrot.lane.b32.xlu0 %v3471, 96
        %v4244 = vpop.permute.xlu0 %4243
        %4245 = vrot.lane.b32.xlu0 %v3472, 96
        %v4246 = vpop.permute.xlu0 %4245
        %4247 = vrot.lane.b32.xlu0 %v3473, 96
        %v4248 = vpop.permute.xlu0 %4247
        %4249 = vrot.lane.b32.xlu0 %v3474, 96
        %v4250 = vpop.permute.xlu0 %4249
        %4251 = vrot.lane.b32.xlu0 %v3475, 96
        %v4252 = vpop.permute.xlu0 %4251
        %4253 = vrot.lane.b32.xlu0 %v3476, 96
        %v4254 = vpop.permute.xlu0 %4253
        %4255 = vrot.lane.b32.xlu0 %v3477, 96
        %v4256 = vpop.permute.xlu0 %4255
        %4257 = vrot.lane.b32.xlu0 %v3478, 96
        %v4258 = vpop.permute.xlu0 %4257
        %4259 = vrot.lane.b32.xlu0 %v3479, 96
        %v4260 = vpop.permute.xlu0 %4259
        %4261 = vrot.lane.b32.xlu0 %v3480, 96
        %v4262 = vpop.permute.xlu0 %4261
        %4263 = vrot.lane.b32.xlu0 %v3481, 96
        %v4264 = vpop.permute.xlu0 %4263
        %4265 = vrot.lane.b32.xlu0 %v3482, 96
        %v4266 = vpop.permute.xlu0 %4265
        %4267 = vrot.lane.b32.xlu0 %v3483, 96
        %v4268 = vpop.permute.xlu0 %4267
        %4269 = vrot.lane.b32.xlu0 %v3484, 96
        %v4270 = vpop.permute.xlu0 %4269
        %4271 = vrot.lane.b32.xlu0 %v3485, 96
        %v4272 = vpop.permute.xlu0 %4271
        %4273 = vrot.lane.b32.xlu0 %v3486, 96
        %v4274 = vpop.permute.xlu0 %4273
        %4275 = vrot.lane.b32.xlu0 %v3487, 96
        %v4276 = vpop.permute.xlu0 %4275
        %4277 = vrot.lane.b32.xlu0 %v3488, 96
        %v4278 = vpop.permute.xlu0 %4277
        %4279 = vrot.lane.b32.xlu0 %v3489, 96
        %v4280 = vpop.permute.xlu0 %4279
        %4281 = vrot.lane.b32.xlu0 %v3490, 96
        %v4282 = vpop.permute.xlu0 %4281
        %4283 = vrot.lane.b32.xlu0 %v3491, 96
        %v4284 = vpop.permute.xlu0 %4283
        %4285 = vrot.lane.b32.xlu0 %v3492, 96
        %v4286 = vpop.permute.xlu0 %4285
        %4287 = vrot.lane.b32.xlu0 %v3493, 96
        %v4288 = vpop.permute.xlu0 %4287
        %4289 = vrot.lane.b32.xlu0 %v3494, 96
        %v4290 = vpop.permute.xlu0 %4289
        %4291 = vrot.lane.b32.xlu0 %v3495, 96
        %v4292 = vpop.permute.xlu0 %4291
        %4293 = vrot.lane.b32.xlu0 %v3496, 96
        %v4294 = vpop.permute.xlu0 %4293
        %4295 = vrot.lane.b32.xlu0 %v3497, 96
        %v4296 = vpop.permute.xlu0 %4295
        %4297 = vrot.lane.b32.xlu0 %v3498, 96
        %v4298 = vpop.permute.xlu0 %4297
        %4363 = vrot.lane.b32.xlu0 %v3499, 112
        %v4364 = vpop.permute.xlu0 %4363
        %4365 = vrot.lane.b32.xlu0 %v3500, 112
        %v4366 = vpop.permute.xlu0 %4365
        %4367 = vrot.lane.b32.xlu0 %v3501, 112
        %v4368 = vpop.permute.xlu0 %4367
        %4369 = vrot.lane.b32.xlu0 %v3502, 112
        %v4370 = vpop.permute.xlu0 %4369
        %4371 = vrot.lane.b32.xlu0 %v3503, 112
        %v4372 = vpop.permute.xlu0 %4371
        %4373 = vrot.lane.b32.xlu0 %v3504, 112
        %v4374 = vpop.permute.xlu0 %4373
        %4375 = vrot.lane.b32.xlu0 %v3505, 112
        %v4376 = vpop.permute.xlu0 %4375
        %4377 = vrot.lane.b32.xlu0 %v3506, 112
        %v4378 = vpop.permute.xlu0 %4377
        %4379 = vrot.lane.b32.xlu0 %v3507, 112
        %v4380 = vpop.permute.xlu0 %4379
        %4381 = vrot.lane.b32.xlu0 %v3508, 112
        %v4382 = vpop.permute.xlu0 %4381
        %4383 = vrot.lane.b32.xlu0 %v3509, 112
        %v4384 = vpop.permute.xlu0 %4383
        %4385 = vrot.lane.b32.xlu0 %v3510, 112
        %v4386 = vpop.permute.xlu0 %4385
        %4387 = vrot.lane.b32.xlu0 %v3511, 112
        %v4388 = vpop.permute.xlu0 %4387
        %4389 = vrot.lane.b32.xlu0 %v3512, 112
        %v4390 = vpop.permute.xlu0 %4389
        %4391 = vrot.lane.b32.xlu0 %v3513, 112
        %v4392 = vpop.permute.xlu0 %4391
        %4393 = vrot.lane.b32.xlu0 %v3514, 112
        %v4394 = vpop.permute.xlu0 %4393
        %4395 = vrot.lane.b32.xlu0 %v3515, 112
        %v4396 = vpop.permute.xlu0 %4395
        %4397 = vrot.lane.b32.xlu0 %v3516, 112
        %v4398 = vpop.permute.xlu0 %4397
        %4399 = vrot.lane.b32.xlu0 %v3517, 112
        %v4400 = vpop.permute.xlu0 %4399
        %4401 = vrot.lane.b32.xlu0 %v3518, 112
        %v4402 = vpop.permute.xlu0 %4401
        %4403 = vrot.lane.b32.xlu0 %v3519, 112
        %v4404 = vpop.permute.xlu0 %4403
        %4405 = vrot.lane.b32.xlu0 %v3520, 112
        %v4406 = vpop.permute.xlu0 %4405
        %4407 = vrot.lane.b32.xlu0 %v3521, 112
        %v4408 = vpop.permute.xlu0 %4407
        %4409 = vrot.lane.b32.xlu0 %v3522, 112
        %v4410 = vpop.permute.xlu0 %4409
        %4411 = vrot.lane.b32.xlu0 %v3523, 112
        %v4412 = vpop.permute.xlu0 %4411
        %4413 = vrot.lane.b32.xlu0 %v3524, 112
        %v4414 = vpop.permute.xlu0 %4413
        %4415 = vrot.lane.b32.xlu0 %v3525, 112
        %v4416 = vpop.permute.xlu0 %4415
        %4417 = vrot.lane.b32.xlu0 %v3526, 112
        %v4418 = vpop.permute.xlu0 %4417
        %4419 = vrot.lane.b32.xlu0 %v3527, 112
        %v4420 = vpop.permute.xlu0 %4419
        %4421 = vrot.lane.b32.xlu0 %v3528, 112
        %v4422 = vpop.permute.xlu0 %4421
        %4423 = vrot.lane.b32.xlu0 %v3529, 112
        %v4424 = vpop.permute.xlu0 %4423
        %4425 = vrot.lane.b32.xlu0 %v3530, 112
        %v4426 = vpop.permute.xlu0 %4425
        %v4459 = vsel %vm586, %v3275, %v3596
        %v4460 = vsel %vm586, %v3276, %v3598
        %v4461 = vsel %vm586, %v3277, %v3600
        %v4462 = vsel %vm586, %v3278, %v3602
        %v4463 = vsel %vm586, %v3279, %v3604
        %v4464 = vsel %vm586, %v3280, %v3606
        %v4465 = vsel %vm586, %v3281, %v3608
        %v4466 = vsel %vm586, %v3282, %v3610
        %v4467 = vsel %vm586, %v3283, %v3612
        %v4468 = vsel %vm586, %v3284, %v3614
        %v4469 = vsel %vm586, %v3285, %v3616
        %v4470 = vsel %vm586, %v3286, %v3618
        %v4471 = vsel %vm586, %v3287, %v3620
        %v4472 = vsel %vm586, %v3288, %v3622
        %v4473 = vsel %vm586, %v3289, %v3624
        %v4474 = vsel %vm586, %v3290, %v3626
        %v4475 = vsel %vm586, %v3291, %v3628
        %v4476 = vsel %vm586, %v3292, %v3630
        %v4477 = vsel %vm586, %v3293, %v3632
        %v4478 = vsel %vm586, %v3294, %v3634
        %v4479 = vsel %vm586, %v3295, %v3636
        %v4480 = vsel %vm586, %v3296, %v3638
        %v4481 = vsel %vm586, %v3297, %v3640
        %v4482 = vsel %vm586, %v3298, %v3642
        %v4483 = vsel %vm586, %v3299, %v3644
        %v4484 = vsel %vm586, %v3300, %v3646
        %v4485 = vsel %vm586, %v3301, %v3648
        %v4486 = vsel %vm586, %v3302, %v3650
        %v4487 = vsel %vm586, %v3303, %v3652
        %v4488 = vsel %vm586, %v3304, %v3654
        %v4489 = vsel %vm586, %v3305, %v3656
        %v4490 = vsel %vm586, %v3306, %v3658
        %v4491 = vsel %vm2221, %v4459, %v3724
        %v4492 = vsel %vm2221, %v4460, %v3726
        %v4493 = vsel %vm2221, %v4461, %v3728
        %v4494 = vsel %vm2221, %v4462, %v3730
        %v4495 = vsel %vm2221, %v4463, %v3732
        %v4496 = vsel %vm2221, %v4464, %v3734
        %v4497 = vsel %vm2221, %v4465, %v3736
        %v4498 = vsel %vm2221, %v4466, %v3738
        %v4499 = vsel %vm2221, %v4467, %v3740
        %v4500 = vsel %vm2221, %v4468, %v3742
        %v4501 = vsel %vm2221, %v4469, %v3744
        %v4502 = vsel %vm2221, %v4470, %v3746
        %v4503 = vsel %vm2221, %v4471, %v3748
        %v4504 = vsel %vm2221, %v4472, %v3750
        %v4505 = vsel %vm2221, %v4473, %v3752
        %v4506 = vsel %vm2221, %v4474, %v3754
        %v4507 = vsel %vm2221, %v4475, %v3756
        %v4508 = vsel %vm2221, %v4476, %v3758
        %v4509 = vsel %vm2221, %v4477, %v3760
        %v4510 = vsel %vm2221, %v4478, %v3762
        %v4511 = vsel %vm2221, %v4479, %v3764
        %v4512 = vsel %vm2221, %v4480, %v3766
        %v4513 = vsel %vm2221, %v4481, %v3768
        %v4514 = vsel %vm2221, %v4482, %v3770
        %v4515 = vsel %vm2221, %v4483, %v3772
        %v4516 = vsel %vm2221, %v4484, %v3774
        %v4517 = vsel %vm2221, %v4485, %v3776
        %v4518 = vsel %vm2221, %v4486, %v3778
        %v4519 = vsel %vm2221, %v4487, %v3780
        %v4520 = vsel %vm2221, %v4488, %v3782
        %v4521 = vsel %vm2221, %v4489, %v3784
        %v4522 = vsel %vm2221, %v4490, %v3786
        %v4523 = vsel %vm2254, %v4491, %v3852
        %v4524 = vsel %vm2254, %v4492, %v3854
        %v4525 = vsel %vm2254, %v4493, %v3856
        %v4526 = vsel %vm2254, %v4494, %v3858
        %v4527 = vsel %vm2254, %v4495, %v3860
        %v4528 = vsel %vm2254, %v4496, %v3862
        %v4529 = vsel %vm2254, %v4497, %v3864
        %v4530 = vsel %vm2254, %v4498, %v3866
        %v4531 = vsel %vm2254, %v4499, %v3868
        %v4532 = vsel %vm2254, %v4500, %v3870
        %v4533 = vsel %vm2254, %v4501, %v3872
        %v4534 = vsel %vm2254, %v4502, %v3874
        %v4535 = vsel %vm2254, %v4503, %v3876
        %v4536 = vsel %vm2254, %v4504, %v3878
        %v4537 = vsel %vm2254, %v4505, %v3880
        %v4538 = vsel %vm2254, %v4506, %v3882
        %v4539 = vsel %vm2254, %v4507, %v3884
        %v4540 = vsel %vm2254, %v4508, %v3886
        %v4541 = vsel %vm2254, %v4509, %v3888
        %v4542 = vsel %vm2254, %v4510, %v3890
        %v4543 = vsel %vm2254, %v4511, %v3892
        %v4544 = vsel %vm2254, %v4512, %v3894
        %v4545 = vsel %vm2254, %v4513, %v3896
        %v4546 = vsel %vm2254, %v4514, %v3898
        %v4547 = vsel %vm2254, %v4515, %v3900
        %v4548 = vsel %vm2254, %v4516, %v3902
        %v4549 = vsel %vm2254, %v4517, %v3904
        %v4550 = vsel %vm2254, %v4518, %v3906
        %v4551 = vsel %vm2254, %v4519, %v3908
        %v4552 = vsel %vm2254, %v4520, %v3910
        %v4553 = vsel %vm2254, %v4521, %v3912
        %v4554 = vsel %vm2254, %v4522, %v3914
        %v4555 = vsel %vm2287, %v4523, %v3980
        %v4556 = vsel %vm2287, %v4524, %v3982
        %v4557 = vsel %vm2287, %v4525, %v3984
        %v4558 = vsel %vm2287, %v4526, %v3986
        %v4559 = vsel %vm2287, %v4527, %v3988
        %v4560 = vsel %vm2287, %v4528, %v3990
        %v4561 = vsel %vm2287, %v4529, %v3992
        %v4562 = vsel %vm2287, %v4530, %v3994
        %v4563 = vsel %vm2287, %v4531, %v3996
        %v4564 = vsel %vm2287, %v4532, %v3998
        %v4565 = vsel %vm2287, %v4533, %v4000
        %v4566 = vsel %vm2287, %v4534, %v4002
        %v4567 = vsel %vm2287, %v4535, %v4004
        %v4568 = vsel %vm2287, %v4536, %v4006
        %v4569 = vsel %vm2287, %v4537, %v4008
        %v4570 = vsel %vm2287, %v4538, %v4010
        %v4571 = vsel %vm2287, %v4539, %v4012
        %v4572 = vsel %vm2287, %v4540, %v4014
        %v4573 = vsel %vm2287, %v4541, %v4016
        %v4574 = vsel %vm2287, %v4542, %v4018
        %v4575 = vsel %vm2287, %v4543, %v4020
        %v4576 = vsel %vm2287, %v4544, %v4022
        %v4577 = vsel %vm2287, %v4545, %v4024
        %v4578 = vsel %vm2287, %v4546, %v4026
        %v4579 = vsel %vm2287, %v4547, %v4028
        %v4580 = vsel %vm2287, %v4548, %v4030
        %v4581 = vsel %vm2287, %v4549, %v4032
        %v4582 = vsel %vm2287, %v4550, %v4034
        %v4583 = vsel %vm2287, %v4551, %v4036
        %v4584 = vsel %vm2287, %v4552, %v4038
        %v4585 = vsel %vm2287, %v4553, %v4040
        %v4586 = vsel %vm2287, %v4554, %v4042
        %v4587 = vsel %vm2320, %v4555, %v4108
        %v4588 = vsel %vm2320, %v4556, %v4110
        %v4589 = vsel %vm2320, %v4557, %v4112
        %v4590 = vsel %vm2320, %v4558, %v4114
        %v4591 = vsel %vm2320, %v4559, %v4116
        %v4592 = vsel %vm2320, %v4560, %v4118
        %v4593 = vsel %vm2320, %v4561, %v4120
        %v4594 = vsel %vm2320, %v4562, %v4122
        %v4595 = vsel %vm2320, %v4563, %v4124
        %v4596 = vsel %vm2320, %v4564, %v4126
        %v4597 = vsel %vm2320, %v4565, %v4128
        %v4598 = vsel %vm2320, %v4566, %v4130
        %v4599 = vsel %vm2320, %v4567, %v4132
        %v4600 = vsel %vm2320, %v4568, %v4134
        %v4601 = vsel %vm2320, %v4569, %v4136
        %v4602 = vsel %vm2320, %v4570, %v4138
        %v4603 = vsel %vm2320, %v4571, %v4140
        %v4604 = vsel %vm2320, %v4572, %v4142
        %v4605 = vsel %vm2320, %v4573, %v4144
        %v4606 = vsel %vm2320, %v4574, %v4146
        %v4607 = vsel %vm2320, %v4575, %v4148
        %v4608 = vsel %vm2320, %v4576, %v4150
        %v4609 = vsel %vm2320, %v4577, %v4152
        %v4610 = vsel %vm2320, %v4578, %v4154
        %v4611 = vsel %vm2320, %v4579, %v4156
        %v4612 = vsel %vm2320, %v4580, %v4158
        %v4613 = vsel %vm2320, %v4581, %v4160
        %v4614 = vsel %vm2320, %v4582, %v4162
        %v4615 = vsel %vm2320, %v4583, %v4164
        %v4616 = vsel %vm2320, %v4584, %v4166
        %v4617 = vsel %vm2320, %v4585, %v4168
        %v4618 = vsel %vm2320, %v4586, %v4170
        %v4619 = vsel %vm2353, %v4587, %v4236
        %v4620 = vsel %vm2353, %v4588, %v4238
        %v4621 = vsel %vm2353, %v4589, %v4240
        %v4622 = vsel %vm2353, %v4590, %v4242
        %v4623 = vsel %vm2353, %v4591, %v4244
        %v4624 = vsel %vm2353, %v4592, %v4246
        %v4625 = vsel %vm2353, %v4593, %v4248
        %v4626 = vsel %vm2353, %v4594, %v4250
        %v4627 = vsel %vm2353, %v4595, %v4252
        %v4628 = vsel %vm2353, %v4596, %v4254
        %v4629 = vsel %vm2353, %v4597, %v4256
        %v4630 = vsel %vm2353, %v4598, %v4258
        %v4631 = vsel %vm2353, %v4599, %v4260
        %v4632 = vsel %vm2353, %v4600, %v4262
        %v4633 = vsel %vm2353, %v4601, %v4264
        %v4634 = vsel %vm2353, %v4602, %v4266
        %v4635 = vsel %vm2353, %v4603, %v4268
        %v4636 = vsel %vm2353, %v4604, %v4270
        %v4637 = vsel %vm2353, %v4605, %v4272
        %v4638 = vsel %vm2353, %v4606, %v4274
        %v4639 = vsel %vm2353, %v4607, %v4276
        %v4640 = vsel %vm2353, %v4608, %v4278
        %v4641 = vsel %vm2353, %v4609, %v4280
        %v4642 = vsel %vm2353, %v4610, %v4282
        %v4643 = vsel %vm2353, %v4611, %v4284
        %v4644 = vsel %vm2353, %v4612, %v4286
        %v4645 = vsel %vm2353, %v4613, %v4288
        %v4646 = vsel %vm2353, %v4614, %v4290
        %v4647 = vsel %vm2353, %v4615, %v4292
        %v4648 = vsel %vm2353, %v4616, %v4294
        %v4649 = vsel %vm2353, %v4617, %v4296
        %v4650 = vsel %vm2353, %v4618, %v4298
        %v4651 = vsel %vm2386, %v4619, %v4364
        %v4652 = vsel %vm2386, %v4620, %v4366
        %v4653 = vsel %vm2386, %v4621, %v4368
        %v4654 = vsel %vm2386, %v4622, %v4370
        %v4655 = vsel %vm2386, %v4623, %v4372
        %v4656 = vsel %vm2386, %v4624, %v4374
        %v4657 = vsel %vm2386, %v4625, %v4376
        %v4658 = vsel %vm2386, %v4626, %v4378
        %v4659 = vsel %vm2386, %v4627, %v4380
        %v4660 = vsel %vm2386, %v4628, %v4382
        %v4661 = vsel %vm2386, %v4629, %v4384
        %v4662 = vsel %vm2386, %v4630, %v4386
        %v4663 = vsel %vm2386, %v4631, %v4388
        %v4664 = vsel %vm2386, %v4632, %v4390
        %v4665 = vsel %vm2386, %v4633, %v4392
        %v4666 = vsel %vm2386, %v4634, %v4394
        %v4667 = vsel %vm2386, %v4635, %v4396
        %v4668 = vsel %vm2386, %v4636, %v4398
        %v4669 = vsel %vm2386, %v4637, %v4400
        %v4670 = vsel %vm2386, %v4638, %v4402
        %v4671 = vsel %vm2386, %v4639, %v4404
        %v4672 = vsel %vm2386, %v4640, %v4406
        %v4673 = vsel %vm2386, %v4641, %v4408
        %v4674 = vsel %vm2386, %v4642, %v4410
        %v4675 = vsel %vm2386, %v4643, %v4412
        %v4676 = vsel %vm2386, %v4644, %v4414
        %v4677 = vsel %vm2386, %v4645, %v4416
        %v4678 = vsel %vm2386, %v4646, %v4418
        %v4679 = vsel %vm2386, %v4647, %v4420
        %v4680 = vsel %vm2386, %v4648, %v4422
        %v4681 = vsel %vm2386, %v4649, %v4424
        %v4682 = vsel %vm2386, %v4650, %v4426
        %v4683 = vpack.c.bf16 %v4652, %v4651
        %v4684 = vpack.c.bf16 %v3532, %v3531
        %v4685 = vpack.c.bf16 %v4654, %v4653
        %v4686 = vpack.c.bf16 %v3534, %v3533
        %v4687 = vpack.c.bf16 %v4656, %v4655
        %v4688 = vpack.c.bf16 %v3536, %v3535
        %v4689 = vpack.c.bf16 %v4658, %v4657
        %v4690 = vpack.c.bf16 %v3538, %v3537
        %v4691 = vpack.c.bf16 %v4660, %v4659
        %v4692 = vpack.c.bf16 %v3540, %v3539
        %v4693 = vpack.c.bf16 %v4662, %v4661
        %v4694 = vpack.c.bf16 %v3542, %v3541
        %v4695 = vpack.c.bf16 %v4664, %v4663
        %v4696 = vpack.c.bf16 %v3544, %v3543
        %v4697 = vpack.c.bf16 %v4666, %v4665
        %v4698 = vpack.c.bf16 %v3546, %v3545
        %v4699 = vpack.c.bf16 %v4668, %v4667
        %v4700 = vpack.c.bf16 %v3548, %v3547
        %v4701 = vpack.c.bf16 %v4670, %v4669
        %v4702 = vpack.c.bf16 %v3550, %v3549
        %v4703 = vpack.c.bf16 %v4672, %v4671
        %v4704 = vpack.c.bf16 %v3552, %v3551
        %v4705 = vpack.c.bf16 %v4674, %v4673
        %v4706 = vpack.c.bf16 %v3554, %v3553
        %v4707 = vpack.c.bf16 %v4676, %v4675
        %v4708 = vpack.c.bf16 %v3556, %v3555
        %v4709 = vpack.c.bf16 %v4678, %v4677
        %v4710 = vpack.c.bf16 %v3558, %v3557
        %v4711 = vpack.c.bf16 %v4680, %v4679
        %v4712 = vpack.c.bf16 %v3560, %v3559
        %v4713 = vpack.c.bf16 %v4682, %v4681
        %v4714 = vpack.c.bf16 %v3562, %v3561
        %v4715 = vld [vmem:[%s10] sm:$0xf]
        %v4716 = vld [vmem:[%s10 + $0x4] sm:$0xf]
        %v4717 = vld [vmem:[%s10 + $0x8] sm:$0xf]
        %v4718 = vld [vmem:[%s10 + $0xc] sm:$0xf]
        %v4719 = vld [vmem:[%s10 + $0x10] sm:$0xf]
        %v4720 = vld [vmem:[%s10 + $0x14] sm:$0xf]
        %v4721 = vld [vmem:[%s10 + $0x18] sm:$0xf]
        %v4722 = vld [vmem:[%s10 + $0x1c] sm:$0xf]
        %v4723 = vld [vmem:[%s10 + $0x20] sm:$0xf]
        %v4724 = vld [vmem:[%s10 + $0x24] sm:$0xf]
        %v4725 = vld [vmem:[%s10 + $0x28] sm:$0xf]
        %v4726 = vld [vmem:[%s10 + $0x2c] sm:$0xf]
        %v4727 = vld [vmem:[%s10 + $0x30] sm:$0xf]
        %v4728 = vld [vmem:[%s10 + $0x34] sm:$0xf]
        %v4729 = vld [vmem:[%s10 + $0x38] sm:$0xf]
        %v4730 = vld [vmem:[%s10 + $0x3c] sm:$0xf]
        %v4731 = vld [vmem:[%s10 + $0x40] sm:$0xf]
        %v4732 = vld [vmem:[%s10 + $0x44] sm:$0xf]
        %v4751 = vunpack.c.l.b16 %v4715
        %v4752 = vunpack.c.l.b16 %v4716
        %v4753 = vunpack.c.l.b16 %v4717
        %v4754 = vunpack.c.l.b16 %v4718
        %v4755 = vunpack.c.l.b16 %v4719
        %v4756 = vunpack.c.l.b16 %v4720
        %v4757 = vunpack.c.l.b16 %v4721
        %v4758 = vunpack.c.l.b16 %v4722
        %v4759 = vunpack.c.l.b16 %v4723
        %v4760 = vunpack.c.l.b16 %v4724
        %v4761 = vunpack.c.l.b16 %v4725
        %v4762 = vunpack.c.l.b16 %v4726
        %v4763 = vunpack.c.l.b16 %v4727
        %v4764 = vunpack.c.l.b16 %v4728
        %v4765 = vunpack.c.l.b16 %v4729
        %v4766 = vunpack.c.l.b16 %v4730
        %v4767 = vunpack.c.l.b16 %v4731
        %v4768 = vunpack.c.l.b16 %v4732
        %v4769 = vpack.c.b16 %v4752, %v4751
        %v4770 = vpack.c.b16 %v4754, %v4753
        %v4771 = vpack.c.b16 %v4756, %v4755
        %v4772 = vpack.c.b16 %v4758, %v4757
        %v4773 = vpack.c.b16 %v4760, %v4759
        %v4774 = vpack.c.b16 %v4762, %v4761
        %v4775 = vpack.c.b16 %v4764, %v4763
        %v4776 = vpack.c.b16 %v4766, %v4765
        %v4777 = vpack.c.b16 %v4768, %v4767
        %v4788 = vsel %vm586, %v4684, 0
        %v4791 = vsel %vm586, %v4686, 0
        %v4794 = vsel %vm586, %v4688, 0
        %v4797 = vsel %vm586, %v4690, 0
        %v4800 = vsel %vm586, %v4692, 0
        %v4803 = vsel %vm586, %v4694, 0
        %v4806 = vsel %vm586, %v4696, 0
        %v4809 = vsel %vm586, %v4698, 0
        %v4812 = vsel %vm586, %v4700, 0
        %v4815 = vsel %vm586, %v4702, 0
        %v4818 = vsel %vm586, %v4704, 0
        %v4821 = vsel %vm586, %v4706, 0
        %v4824 = vsel %vm586, %v4708, 0
        %v4827 = vsel %vm586, %v4710, 0
        %v4830 = vsel %vm586, %v4712, 0
        %v4833 = vsel %vm586, %v4714, 0
        %4835 = vmatpush.bf16.msra.mxu0 %v4776
        %4836 = vmatpush.bf16.msra.mxu0 %v4775
        %4837 = vmatpush.bf16.msra.mxu0 %v4774
        %4838 = vmatpush.bf16.msra.mxu0 %v4773
        %4839 = vmatpush.bf16.msra.mxu0 %v4772
        %4840 = vmatpush.bf16.msra.mxu0 %v4771
        %4841 = vmatpush.bf16.msra.mxu0 %v4770
        %4842 = vmatpush.bf16.msra.mxu0 %v4769
        %4843 = vmatmul.bf16.gmra.mxu0 %v4683
        %v4844 = vpop.f32.mrf.mxu0
        %v4845 = vadd.f32 0.0, %v4844
        %v4846 = vpop.f32.mrf.mxu0
        %v4847 = vadd.f32 0.0, %v4846
        %4848 = vmatmul.bf16.gmra.mxu0 %v4685
        %v4849 = vpop.f32.mrf.mxu0
        %v4850 = vadd.f32 0.0, %v4849
        %v4851 = vpop.f32.mrf.mxu0
        %v4852 = vadd.f32 0.0, %v4851
        %4853 = vmatmul.bf16.gmra.mxu0 %v4687
        %v4854 = vpop.f32.mrf.mxu0
        %v4855 = vadd.f32 0.0, %v4854
        %v4856 = vpop.f32.mrf.mxu0
        %v4857 = vadd.f32 0.0, %v4856
        %4858 = vmatmul.bf16.gmra.mxu0 %v4689
        %v4859 = vpop.f32.mrf.mxu0
        %v4860 = vadd.f32 0.0, %v4859
        %v4861 = vpop.f32.mrf.mxu0
        %v4862 = vadd.f32 0.0, %v4861
        %4863 = vmatmul.bf16.gmra.mxu0 %v4691
        %v4864 = vpop.f32.mrf.mxu0
        %v4865 = vadd.f32 0.0, %v4864
        %v4866 = vpop.f32.mrf.mxu0
        %v4867 = vadd.f32 0.0, %v4866
        %4868 = vmatmul.bf16.gmra.mxu0 %v4693
        %v4869 = vpop.f32.mrf.mxu0
        %v4870 = vadd.f32 0.0, %v4869
        %v4871 = vpop.f32.mrf.mxu0
        %v4872 = vadd.f32 0.0, %v4871
        %4873 = vmatmul.bf16.gmra.mxu0 %v4695
        %v4874 = vpop.f32.mrf.mxu0
        %v4875 = vadd.f32 0.0, %v4874
        %v4876 = vpop.f32.mrf.mxu0
        %v4877 = vadd.f32 0.0, %v4876
        %4878 = vmatmul.bf16.gmra.mxu0 %v4697
        %v4879 = vpop.f32.mrf.mxu0
        %v4880 = vadd.f32 0.0, %v4879
        %v4881 = vpop.f32.mrf.mxu0
        %v4882 = vadd.f32 0.0, %v4881
        %4883 = vmatmul.bf16.gmra.mxu0 %v4699
        %v4884 = vpop.f32.mrf.mxu0
        %v4885 = vadd.f32 0.0, %v4884
        %v4886 = vpop.f32.mrf.mxu0
        %v4887 = vadd.f32 0.0, %v4886
        %4888 = vmatmul.bf16.gmra.mxu0 %v4701
        %v4889 = vpop.f32.mrf.mxu0
        %v4890 = vadd.f32 0.0, %v4889
        %v4891 = vpop.f32.mrf.mxu0
        %v4892 = vadd.f32 0.0, %v4891
        %4893 = vmatmul.bf16.gmra.mxu0 %v4703
        %v4894 = vpop.f32.mrf.mxu0
        %v4895 = vadd.f32 0.0, %v4894
        %v4896 = vpop.f32.mrf.mxu0
        %v4897 = vadd.f32 0.0, %v4896
        %4898 = vmatmul.bf16.gmra.mxu0 %v4705
        %v4899 = vpop.f32.mrf.mxu0
        %v4900 = vadd.f32 0.0, %v4899
        %v4901 = vpop.f32.mrf.mxu0
        %v4902 = vadd.f32 0.0, %v4901
        %4903 = vmatmul.bf16.gmra.mxu0 %v4707
        %v4904 = vpop.f32.mrf.mxu0
        %v4905 = vadd.f32 0.0, %v4904
        %v4906 = vpop.f32.mrf.mxu0
        %v4907 = vadd.f32 0.0, %v4906
        %4908 = vmatmul.bf16.gmra.mxu0 %v4709
        %v4909 = vpop.f32.mrf.mxu0
        %v4910 = vadd.f32 0.0, %v4909
        %v4911 = vpop.f32.mrf.mxu0
        %v4912 = vadd.f32 0.0, %v4911
        %4913 = vmatmul.bf16.gmra.mxu0 %v4711
        %v4914 = vpop.f32.mrf.mxu0
        %v4915 = vadd.f32 0.0, %v4914
        %v4916 = vpop.f32.mrf.mxu0
        %v4917 = vadd.f32 0.0, %v4916
        %4918 = vmatmul.bf16.gmra.mxu0 %v4713
        %v4919 = vpop.f32.mrf.mxu0
        %v4920 = vadd.f32 0.0, %v4919
        %v4921 = vpop.f32.mrf.mxu0
        %v4922 = vadd.f32 0.0, %v4921
        %4923 = vdwg.mxu0
        %4924 = vmatpush.bf16.msra.mxu0 0
        %4925 = vmatpush.bf16.msra.mxu0 0
        %4926 = vmatpush.bf16.msra.mxu0 0
        %4927 = vmatpush.bf16.msra.mxu0 0
        %4928 = vmatpush.bf16.msra.mxu0 0
        %4929 = vmatpush.bf16.msra.mxu0 0
        %4930 = vmatpush.bf16.msra.mxu0 0
        %4931 = vmatpush.bf16.msra.mxu0 %v4777
        %4932 = vmatmul.bf16.gmra.mxu0 %v4788
        %v4933 = vpop.f32.mrf.mxu0
        %v4934 = vadd.f32 %v4845, %v4933
        %v4935 = vpop.f32.mrf.mxu0
        %v4936 = vadd.f32 %v4847, %v4935
        %4937 = vmatmul.bf16.gmra.mxu0 %v4791
        %v4938 = vpop.f32.mrf.mxu0
        %v4939 = vadd.f32 %v4850, %v4938
        %v4940 = vpop.f32.mrf.mxu0
        %v4941 = vadd.f32 %v4852, %v4940
        %4942 = vmatmul.bf16.gmra.mxu0 %v4794
        %v4943 = vpop.f32.mrf.mxu0
        %v4944 = vadd.f32 %v4855, %v4943
        %v4945 = vpop.f32.mrf.mxu0
        %v4946 = vadd.f32 %v4857, %v4945
        %4947 = vmatmul.bf16.gmra.mxu0 %v4797
        %v4948 = vpop.f32.mrf.mxu0
        %v4949 = vadd.f32 %v4860, %v4948
        %v4950 = vpop.f32.mrf.mxu0
        %v4951 = vadd.f32 %v4862, %v4950
        %4952 = vmatmul.bf16.gmra.mxu0 %v4800
        %v4953 = vpop.f32.mrf.mxu0
        %v4954 = vadd.f32 %v4865, %v4953
        %v4955 = vpop.f32.mrf.mxu0
        %v4956 = vadd.f32 %v4867, %v4955
        %4957 = vmatmul.bf16.gmra.mxu0 %v4803
        %v4958 = vpop.f32.mrf.mxu0
        %v4959 = vadd.f32 %v4870, %v4958
        %v4960 = vpop.f32.mrf.mxu0
        %v4961 = vadd.f32 %v4872, %v4960
        %4962 = vmatmul.bf16.gmra.mxu0 %v4806
        %v4963 = vpop.f32.mrf.mxu0
        %v4964 = vadd.f32 %v4875, %v4963
        %v4965 = vpop.f32.mrf.mxu0
        %v4966 = vadd.f32 %v4877, %v4965
        %4967 = vmatmul.bf16.gmra.mxu0 %v4809
        %v4968 = vpop.f32.mrf.mxu0
        %v4969 = vadd.f32 %v4880, %v4968
        %v4970 = vpop.f32.mrf.mxu0
        %v4971 = vadd.f32 %v4882, %v4970
        %4972 = vmatmul.bf16.gmra.mxu0 %v4812
        %v4973 = vpop.f32.mrf.mxu0
        %v4974 = vadd.f32 %v4885, %v4973
        %v4975 = vpop.f32.mrf.mxu0
        %v4976 = vadd.f32 %v4887, %v4975
        %4977 = vmatmul.bf16.gmra.mxu0 %v4815
        %v4978 = vpop.f32.mrf.mxu0
        %v4979 = vadd.f32 %v4890, %v4978
        %v4980 = vpop.f32.mrf.mxu0
        %v4981 = vadd.f32 %v4892, %v4980
        %4982 = vmatmul.bf16.gmra.mxu0 %v4818
        %v4983 = vpop.f32.mrf.mxu0
        %v4984 = vadd.f32 %v4895, %v4983
        %v4985 = vpop.f32.mrf.mxu0
        %v4986 = vadd.f32 %v4897, %v4985
        %4987 = vmatmul.bf16.gmra.mxu0 %v4821
        %v4988 = vpop.f32.mrf.mxu0
        %v4989 = vadd.f32 %v4900, %v4988
        %v4990 = vpop.f32.mrf.mxu0
        %v4991 = vadd.f32 %v4902, %v4990
        %4992 = vmatmul.bf16.gmra.mxu0 %v4824
        %v4993 = vpop.f32.mrf.mxu0
        %v4994 = vadd.f32 %v4905, %v4993
        %v4995 = vpop.f32.mrf.mxu0
        %v4996 = vadd.f32 %v4907, %v4995
        %4997 = vmatmul.bf16.gmra.mxu0 %v4827
        %v4998 = vpop.f32.mrf.mxu0
        %v4999 = vadd.f32 %v4910, %v4998
        %v5000 = vpop.f32.mrf.mxu0
        %v5001 = vadd.f32 %v4912, %v5000
        %5002 = vmatmul.bf16.gmra.mxu0 %v4830
        %v5003 = vpop.f32.mrf.mxu0
        %v5004 = vadd.f32 %v4915, %v5003
        %v5005 = vpop.f32.mrf.mxu0
        %v5006 = vadd.f32 %v4917, %v5005
        %5007 = vmatmul.bf16.gmra.mxu0 %v4833
        %v5008 = vpop.f32.mrf.mxu0
        %v5009 = vadd.f32 %v4920, %v5008
        %v5010 = vpop.f32.mrf.mxu0
        %v5011 = vadd.f32 %v4922, %v5010
        %5012 = vdwg.mxu0
        %5045 = vrot.lane.b32.xlu0 %v4934, 16
        %v5046 = vpop.permute.xlu0 %5045
        %5047 = vrot.lane.b32.xlu0 %v4936, 16
        %v5048 = vpop.permute.xlu0 %5047
        %5049 = vrot.lane.b32.xlu0 %v4939, 16
        %v5050 = vpop.permute.xlu0 %5049
        %5051 = vrot.lane.b32.xlu0 %v4941, 16
        %v5052 = vpop.permute.xlu0 %5051
        %5053 = vrot.lane.b32.xlu0 %v4944, 16
        %v5054 = vpop.permute.xlu0 %5053
        %5055 = vrot.lane.b32.xlu0 %v4946, 16
        %v5056 = vpop.permute.xlu0 %5055
        %5057 = vrot.lane.b32.xlu0 %v4949, 16
        %v5058 = vpop.permute.xlu0 %5057
        %5059 = vrot.lane.b32.xlu0 %v4951, 16
        %v5060 = vpop.permute.xlu0 %5059
        %5061 = vrot.lane.b32.xlu0 %v4954, 16
        %v5062 = vpop.permute.xlu0 %5061
        %5063 = vrot.lane.b32.xlu0 %v4956, 16
        %v5064 = vpop.permute.xlu0 %5063
        %5065 = vrot.lane.b32.xlu0 %v4959, 16
        %v5066 = vpop.permute.xlu0 %5065
        %5067 = vrot.lane.b32.xlu0 %v4961, 16
        %v5068 = vpop.permute.xlu0 %5067
        %5069 = vrot.lane.b32.xlu0 %v4964, 16
        %v5070 = vpop.permute.xlu0 %5069
        %5071 = vrot.lane.b32.xlu0 %v4966, 16
        %v5072 = vpop.permute.xlu0 %5071
        %5073 = vrot.lane.b32.xlu0 %v4969, 16
        %v5074 = vpop.permute.xlu0 %5073
        %5075 = vrot.lane.b32.xlu0 %v4971, 16
        %v5076 = vpop.permute.xlu0 %5075
        %5077 = vrot.lane.b32.xlu0 %v4974, 16
        %v5078 = vpop.permute.xlu0 %5077
        %5079 = vrot.lane.b32.xlu0 %v4976, 16
        %v5080 = vpop.permute.xlu0 %5079
        %5081 = vrot.lane.b32.xlu0 %v4979, 16
        %v5082 = vpop.permute.xlu0 %5081
        %5083 = vrot.lane.b32.xlu0 %v4981, 16
        %v5084 = vpop.permute.xlu0 %5083
        %5085 = vrot.lane.b32.xlu0 %v4984, 16
        %v5086 = vpop.permute.xlu0 %5085
        %5087 = vrot.lane.b32.xlu0 %v4986, 16
        %v5088 = vpop.permute.xlu0 %5087
        %5089 = vrot.lane.b32.xlu0 %v4989, 16
        %v5090 = vpop.permute.xlu0 %5089
        %5091 = vrot.lane.b32.xlu0 %v4991, 16
        %v5092 = vpop.permute.xlu0 %5091
        %5093 = vrot.lane.b32.xlu0 %v4994, 16
        %v5094 = vpop.permute.xlu0 %5093
        %5095 = vrot.lane.b32.xlu0 %v4996, 16
        %v5096 = vpop.permute.xlu0 %5095
        %5097 = vrot.lane.b32.xlu0 %v4999, 16
        %v5098 = vpop.permute.xlu0 %5097
        %5099 = vrot.lane.b32.xlu0 %v5001, 16
        %v5100 = vpop.permute.xlu0 %5099
        %5101 = vrot.lane.b32.xlu0 %v5004, 16
        %v5102 = vpop.permute.xlu0 %5101
        %5103 = vrot.lane.b32.xlu0 %v5006, 16
        %v5104 = vpop.permute.xlu0 %5103
        %5105 = vrot.lane.b32.xlu0 %v5009, 16
        %v5106 = vpop.permute.xlu0 %5105
        %5107 = vrot.lane.b32.xlu0 %v5011, 16
        %v5108 = vpop.permute.xlu0 %5107
        %vm5141 = vcmask 195712
        %5142 = vst.msk [vmem:[%s514] sm:$0xff] %vm5141, %v5046
        %5143 = vst.msk [vmem:[%s514 + $0x8] sm:$0xff] %vm5141, %v5048
        %5144 = vst.msk [vmem:[%s514 + $0x10] sm:$0xff] %vm5141, %v5050
        %5145 = vst.msk [vmem:[%s514 + $0x18] sm:$0xff] %vm5141, %v5052
        %5146 = vst.msk [vmem:[%s514 + $0x20] sm:$0xff] %vm5141, %v5054
        %5147 = vst.msk [vmem:[%s514 + $0x28] sm:$0xff] %vm5141, %v5056
        %5148 = vst.msk [vmem:[%s514 + $0x30] sm:$0xff] %vm5141, %v5058
        %5149 = vst.msk [vmem:[%s514 + $0x38] sm:$0xff] %vm5141, %v5060
        %5150 = vst.msk [vmem:[%s514 + $0x40] sm:$0xff] %vm5141, %v5062
        %5151 = vst.msk [vmem:[%s514 + $0x48] sm:$0xff] %vm5141, %v5064
        %5152 = vst.msk [vmem:[%s514 + $0x50] sm:$0xff] %vm5141, %v5066
        %5153 = vst.msk [vmem:[%s514 + $0x58] sm:$0xff] %vm5141, %v5068
        %5154 = vst.msk [vmem:[%s514 + $0x60] sm:$0xff] %vm5141, %v5070
        %5155 = vst.msk [vmem:[%s514 + $0x68] sm:$0xff] %vm5141, %v5072
        %5156 = vst.msk [vmem:[%s514 + $0x70] sm:$0xff] %vm5141, %v5074
        %5157 = vst.msk [vmem:[%s514 + $0x78] sm:$0xff] %vm5141, %v5076
        %5158 = vst.msk [vmem:[%s514 + $0x80] sm:$0xff] %vm5141, %v5078
        %5159 = vst.msk [vmem:[%s514 + $0x88] sm:$0xff] %vm5141, %v5080
        %5160 = vst.msk [vmem:[%s514 + $0x90] sm:$0xff] %vm5141, %v5082
        %5161 = vst.msk [vmem:[%s514 + $0x98] sm:$0xff] %vm5141, %v5084
        %5162 = vst.msk [vmem:[%s514 + $0xa0] sm:$0xff] %vm5141, %v5086
        %5163 = vst.msk [vmem:[%s514 + $0xa8] sm:$0xff] %vm5141, %v5088
        %5164 = vst.msk [vmem:[%s514 + $0xb0] sm:$0xff] %vm5141, %v5090
        %5165 = vst.msk [vmem:[%s514 + $0xb8] sm:$0xff] %vm5141, %v5092
        %5166 = vst.msk [vmem:[%s514 + $0xc0] sm:$0xff] %vm5141, %v5094
        %5167 = vst.msk [vmem:[%s514 + $0xc8] sm:$0xff] %vm5141, %v5096
        %5168 = vst.msk [vmem:[%s514 + $0xd0] sm:$0xff] %vm5141, %v5098
        %5169 = vst.msk [vmem:[%s514 + $0xd8] sm:$0xff] %vm5141, %v5100
        %5170 = vst.msk [vmem:[%s514 + $0xe0] sm:$0xff] %vm5141, %v5102
        %5171 = vst.msk [vmem:[%s514 + $0xe8] sm:$0xff] %vm5141, %v5104
        %5172 = vst.msk [vmem:[%s514 + $0xf0] sm:$0xff] %vm5141, %v5106
        %5173 = vst.msk [vmem:[%s514 + $0xf8] sm:$0xff] %vm5141, %v5108
        %v5174 = vld [vmem:[%s514] sm:$0xff]
        %v5175 = vld [vmem:[%s514 + $0x8] sm:$0xff]
        %v5176 = vld [vmem:[%s514 + $0x10] sm:$0xff]
        %v5177 = vld [vmem:[%s514 + $0x18] sm:$0xff]
        %v5178 = vld [vmem:[%s514 + $0x20] sm:$0xff]
        %v5179 = vld [vmem:[%s514 + $0x28] sm:$0xff]
        %v5180 = vld [vmem:[%s514 + $0x30] sm:$0xff]
        %v5181 = vld [vmem:[%s514 + $0x38] sm:$0xff]
        %v5182 = vld [vmem:[%s514 + $0x40] sm:$0xff]
        %v5183 = vld [vmem:[%s514 + $0x48] sm:$0xff]
        %v5184 = vld [vmem:[%s514 + $0x50] sm:$0xff]
        %v5185 = vld [vmem:[%s514 + $0x58] sm:$0xff]
        %v5186 = vld [vmem:[%s514 + $0x60] sm:$0xff]
        %v5187 = vld [vmem:[%s514 + $0x68] sm:$0xff]
        %v5188 = vld [vmem:[%s514 + $0x70] sm:$0xff]
        %v5189 = vld [vmem:[%s514 + $0x78] sm:$0xff]
        %v5190 = vld [vmem:[%s514 + $0x80] sm:$0xff]
        %v5191 = vld [vmem:[%s514 + $0x88] sm:$0xff]
        %v5192 = vld [vmem:[%s514 + $0x90] sm:$0xff]
        %v5193 = vld [vmem:[%s514 + $0x98] sm:$0xff]
        %v5194 = vld [vmem:[%s514 + $0xa0] sm:$0xff]
        %v5195 = vld [vmem:[%s514 + $0xa8] sm:$0xff]
        %v5196 = vld [vmem:[%s514 + $0xb0] sm:$0xff]
        %v5197 = vld [vmem:[%s514 + $0xb8] sm:$0xff]
        %v5198 = vld [vmem:[%s514 + $0xc0] sm:$0xff]
        %v5199 = vld [vmem:[%s514 + $0xc8] sm:$0xff]
        %v5200 = vld [vmem:[%s514 + $0xd0] sm:$0xff]
        %v5201 = vld [vmem:[%s514 + $0xd8] sm:$0xff]
        %v5202 = vld [vmem:[%s514 + $0xe0] sm:$0xff]
        %v5203 = vld [vmem:[%s514 + $0xe8] sm:$0xff]
        %v5204 = vld [vmem:[%s514 + $0xf0] sm:$0xff]
        %v5205 = vld [vmem:[%s514 + $0xf8] sm:$0xff]
        %v5206 = vld [vmem:[%s11] sm:$0x1]
        %v5208 = vperm.slane %v5206, 0
        %v5210 = vmul.f32 %v5174, %v5208
        %v5211 = vmul.f32 %v5175, %v5208
        %v5212 = vmul.f32 %v5176, %v5208
        %v5213 = vmul.f32 %v5177, %v5208
        %v5214 = vmul.f32 %v5178, %v5208
        %v5215 = vmul.f32 %v5179, %v5208
        %v5216 = vmul.f32 %v5180, %v5208
        %v5217 = vmul.f32 %v5181, %v5208
        %v5218 = vmul.f32 %v5182, %v5208
        %v5219 = vmul.f32 %v5183, %v5208
        %v5220 = vmul.f32 %v5184, %v5208
        %v5221 = vmul.f32 %v5185, %v5208
        %v5222 = vmul.f32 %v5186, %v5208
        %v5223 = vmul.f32 %v5187, %v5208
        %v5224 = vmul.f32 %v5188, %v5208
        %v5225 = vmul.f32 %v5189, %v5208
        %v5226 = vmul.f32 %v5190, %v5208
        %v5227 = vmul.f32 %v5191, %v5208
        %v5228 = vmul.f32 %v5192, %v5208
        %v5229 = vmul.f32 %v5193, %v5208
        %v5230 = vmul.f32 %v5194, %v5208
        %v5231 = vmul.f32 %v5195, %v5208
        %v5232 = vmul.f32 %v5196, %v5208
        %v5233 = vmul.f32 %v5197, %v5208
        %v5234 = vmul.f32 %v5198, %v5208
        %v5235 = vmul.f32 %v5199, %v5208
        %v5236 = vmul.f32 %v5200, %v5208
        %v5237 = vmul.f32 %v5201, %v5208
        %v5238 = vmul.f32 %v5202, %v5208
        %v5239 = vmul.f32 %v5203, %v5208
        %v5240 = vmul.f32 %v5204, %v5208
        %v5241 = vmul.f32 %v5205, %v5208
        %v5242 = vld [vmem:[%s12] sm:$0x1]
        %v5244 = vperm.slane %v5242, 0
        %v5246 = vadd.f32 %v5210, %v5244
        %v5247 = vadd.f32 %v5211, %v5244
        %v5248 = vadd.f32 %v5212, %v5244
        %v5249 = vadd.f32 %v5213, %v5244
        %v5250 = vadd.f32 %v5214, %v5244
        %v5251 = vadd.f32 %v5215, %v5244
        %v5252 = vadd.f32 %v5216, %v5244
        %v5253 = vadd.f32 %v5217, %v5244
        %v5254 = vadd.f32 %v5218, %v5244
        %v5255 = vadd.f32 %v5219, %v5244
        %v5256 = vadd.f32 %v5220, %v5244
        %v5257 = vadd.f32 %v5221, %v5244
        %v5258 = vadd.f32 %v5222, %v5244
        %v5259 = vadd.f32 %v5223, %v5244
        %v5260 = vadd.f32 %v5224, %v5244
        %v5261 = vadd.f32 %v5225, %v5244
        %v5262 = vadd.f32 %v5226, %v5244
        %v5263 = vadd.f32 %v5227, %v5244
        %v5264 = vadd.f32 %v5228, %v5244
        %v5265 = vadd.f32 %v5229, %v5244
        %v5266 = vadd.f32 %v5230, %v5244
        %v5267 = vadd.f32 %v5231, %v5244
        %v5268 = vadd.f32 %v5232, %v5244
        %v5269 = vadd.f32 %v5233, %v5244
        %v5270 = vadd.f32 %v5234, %v5244
        %v5271 = vadd.f32 %v5235, %v5244
        %v5272 = vadd.f32 %v5236, %v5244
        %v5273 = vadd.f32 %v5237, %v5244
        %v5274 = vadd.f32 %v5238, %v5244
        %v5275 = vadd.f32 %v5239, %v5244
        %v5276 = vadd.f32 %v5240, %v5244
        %v5277 = vadd.f32 %v5241, %v5244
        %v5278 = vmax.f32 %v5246, 0.0
        %v5279 = vmax.f32 %v5247, 0.0
        %v5280 = vmax.f32 %v5248, 0.0
        %v5281 = vmax.f32 %v5249, 0.0
        %v5282 = vmax.f32 %v5250, 0.0
        %v5283 = vmax.f32 %v5251, 0.0
        %v5284 = vmax.f32 %v5252, 0.0
        %v5285 = vmax.f32 %v5253, 0.0
        %v5286 = vmax.f32 %v5254, 0.0
        %v5287 = vmax.f32 %v5255, 0.0
        %v5288 = vmax.f32 %v5256, 0.0
        %v5289 = vmax.f32 %v5257, 0.0
        %v5290 = vmax.f32 %v5258, 0.0
        %v5291 = vmax.f32 %v5259, 0.0
        %v5292 = vmax.f32 %v5260, 0.0
        %v5293 = vmax.f32 %v5261, 0.0
        %v5294 = vmax.f32 %v5262, 0.0
        %v5295 = vmax.f32 %v5263, 0.0
        %v5296 = vmax.f32 %v5264, 0.0
        %v5297 = vmax.f32 %v5265, 0.0
        %v5298 = vmax.f32 %v5266, 0.0
        %v5299 = vmax.f32 %v5267, 0.0
        %v5300 = vmax.f32 %v5268, 0.0
        %v5301 = vmax.f32 %v5269, 0.0
        %v5302 = vmax.f32 %v5270, 0.0
        %v5303 = vmax.f32 %v5271, 0.0
        %v5304 = vmax.f32 %v5272, 0.0
        %v5305 = vmax.f32 %v5273, 0.0
        %v5306 = vmax.f32 %v5274, 0.0
        %v5307 = vmax.f32 %v5275, 0.0
        %v5308 = vmax.f32 %v5276, 0.0
        %v5309 = vmax.f32 %v5277, 0.0
        %v5310 = vpack.c.bf16 %v5279, %v5278
        %v5311 = vpack.c.bf16 %v5281, %v5280
        %v5312 = vpack.c.bf16 %v5283, %v5282
        %v5313 = vpack.c.bf16 %v5285, %v5284
        %v5314 = vpack.c.bf16 %v5287, %v5286
        %v5315 = vpack.c.bf16 %v5289, %v5288
        %v5316 = vpack.c.bf16 %v5291, %v5290
        %v5317 = vpack.c.bf16 %v5293, %v5292
        %v5318 = vpack.c.bf16 %v5295, %v5294
        %v5319 = vpack.c.bf16 %v5297, %v5296
        %v5320 = vpack.c.bf16 %v5299, %v5298
        %v5321 = vpack.c.bf16 %v5301, %v5300
        %v5322 = vpack.c.bf16 %v5303, %v5302
        %v5323 = vpack.c.bf16 %v5305, %v5304
        %v5324 = vpack.c.bf16 %v5307, %v5306
        %v5325 = vpack.c.bf16 %v5309, %v5308
        %v5326 = vld [vmem:[%s13] sm:$0xf]
        %v5327 = vld [vmem:[%s13 + $0x4] sm:$0xf]
        %v5328 = vld [vmem:[%s13 + $0x8] sm:$0xf]
        %v5329 = vld [vmem:[%s14] sm:$0x1]
        %v5331 = vperm.slane %v5329, 0
        %v5336 = vunpack.c.l.b16 %v5326
        %v5337 = vunpack.c.l.b16 %v5327
        %v5338 = vunpack.c.l.b16 %v5328
        %v5339 = vpack.c.b16 %v5337, %v5336
        %v5340 = vpack.c.b16 %v5338, %v5338
        %vm5342 = vcmask 195584
        %v5344 = vsel %vm5342, %v5310, 0
        %v5347 = vsel %vm5342, %v5311, 0
        %v5350 = vsel %vm5342, %v5312, 0
        %v5353 = vsel %vm5342, %v5313, 0
        %v5356 = vsel %vm5342, %v5314, 0
        %v5359 = vsel %vm5342, %v5315, 0
        %v5362 = vsel %vm5342, %v5316, 0
        %v5365 = vsel %vm5342, %v5317, 0
        %v5368 = vsel %vm5342, %v5318, 0
        %v5371 = vsel %vm5342, %v5319, 0
        %v5374 = vsel %vm5342, %v5320, 0
        %v5377 = vsel %vm5342, %v5321, 0
        %v5380 = vsel %vm5342, %v5322, 0
        %v5383 = vsel %vm5342, %v5323, 0
        %v5386 = vsel %vm5342, %v5324, 0
        %v5389 = vsel %vm5342, %v5325, 0
        %v5392 = vsel %vm846, %v5340, 0
        %5394 = vmatpush.bf16.msra.mxu0 0
        %5395 = vmatpush.bf16.msra.mxu0 0
        %5396 = vmatpush.bf16.msra.mxu0 0
        %5397 = vmatpush.bf16.msra.mxu0 0
        %5398 = vmatpush.bf16.msra.mxu0 0
        %5399 = vmatpush.bf16.msra.mxu0 0
        %5400 = vmatpush.bf16.msra.mxu0 %v5392
        %5401 = vmatpush.bf16.msra.mxu0 %v5339
        %5402 = vmatmul.bf16.gmra.mxu0 %v5344
        %v5403 = vpop.f32.mrf.mxu0
        %v5404 = vadd.f32 %v5331, %v5403
        %v5405 = vpop.f32.mrf.mxu0
        %v5406 = vadd.f32 %v5331, %v5405
        %5407 = vmatmul.bf16.gmra.mxu0 %v5347
        %v5408 = vpop.f32.mrf.mxu0
        %v5409 = vadd.f32 %v5331, %v5408
        %v5410 = vpop.f32.mrf.mxu0
        %v5411 = vadd.f32 %v5331, %v5410
        %5412 = vmatmul.bf16.gmra.mxu0 %v5350
        %v5413 = vpop.f32.mrf.mxu0
        %v5414 = vadd.f32 %v5331, %v5413
        %v5415 = vpop.f32.mrf.mxu0
        %v5416 = vadd.f32 %v5331, %v5415
        %5417 = vmatmul.bf16.gmra.mxu0 %v5353
        %v5418 = vpop.f32.mrf.mxu0
        %v5419 = vadd.f32 %v5331, %v5418
        %v5420 = vpop.f32.mrf.mxu0
        %v5421 = vadd.f32 %v5331, %v5420
        %5422 = vmatmul.bf16.gmra.mxu0 %v5356
        %v5423 = vpop.f32.mrf.mxu0
        %v5424 = vadd.f32 %v5331, %v5423
        %v5425 = vpop.f32.mrf.mxu0
        %v5426 = vadd.f32 %v5331, %v5425
        %5427 = vmatmul.bf16.gmra.mxu0 %v5359
        %v5428 = vpop.f32.mrf.mxu0
        %v5429 = vadd.f32 %v5331, %v5428
        %v5430 = vpop.f32.mrf.mxu0
        %v5431 = vadd.f32 %v5331, %v5430
        %5432 = vmatmul.bf16.gmra.mxu0 %v5362
        %v5433 = vpop.f32.mrf.mxu0
        %v5434 = vadd.f32 %v5331, %v5433
        %v5435 = vpop.f32.mrf.mxu0
        %v5436 = vadd.f32 %v5331, %v5435
        %5437 = vmatmul.bf16.gmra.mxu0 %v5365
        %v5438 = vpop.f32.mrf.mxu0
        %v5439 = vadd.f32 %v5331, %v5438
        %v5440 = vpop.f32.mrf.mxu0
        %v5441 = vadd.f32 %v5331, %v5440
        %5442 = vmatmul.bf16.gmra.mxu0 %v5368
        %v5443 = vpop.f32.mrf.mxu0
        %v5444 = vadd.f32 %v5331, %v5443
        %v5445 = vpop.f32.mrf.mxu0
        %v5446 = vadd.f32 %v5331, %v5445
        %5447 = vmatmul.bf16.gmra.mxu0 %v5371
        %v5448 = vpop.f32.mrf.mxu0
        %v5449 = vadd.f32 %v5331, %v5448
        %v5450 = vpop.f32.mrf.mxu0
        %v5451 = vadd.f32 %v5331, %v5450
        %5452 = vmatmul.bf16.gmra.mxu0 %v5374
        %v5453 = vpop.f32.mrf.mxu0
        %v5454 = vadd.f32 %v5331, %v5453
        %v5455 = vpop.f32.mrf.mxu0
        %v5456 = vadd.f32 %v5331, %v5455
        %5457 = vmatmul.bf16.gmra.mxu0 %v5377
        %v5458 = vpop.f32.mrf.mxu0
        %v5459 = vadd.f32 %v5331, %v5458
        %v5460 = vpop.f32.mrf.mxu0
        %v5461 = vadd.f32 %v5331, %v5460
        %5462 = vmatmul.bf16.gmra.mxu0 %v5380
        %v5463 = vpop.f32.mrf.mxu0
        %v5464 = vadd.f32 %v5331, %v5463
        %v5465 = vpop.f32.mrf.mxu0
        %v5466 = vadd.f32 %v5331, %v5465
        %5467 = vmatmul.bf16.gmra.mxu0 %v5383
        %v5468 = vpop.f32.mrf.mxu0
        %v5469 = vadd.f32 %v5331, %v5468
        %v5470 = vpop.f32.mrf.mxu0
        %v5471 = vadd.f32 %v5331, %v5470
        %5472 = vmatmul.bf16.gmra.mxu0 %v5386
        %v5473 = vpop.f32.mrf.mxu0
        %v5474 = vadd.f32 %v5331, %v5473
        %v5475 = vpop.f32.mrf.mxu0
        %v5476 = vadd.f32 %v5331, %v5475
        %5477 = vmatmul.bf16.gmra.mxu0 %v5389
        %v5478 = vpop.f32.mrf.mxu0
        %v5479 = vadd.f32 %v5331, %v5478
        %v5480 = vpop.f32.mrf.mxu0
        %v5481 = vadd.f32 %v5331, %v5480
        %5482 = vdwg.mxu0
        %v5483 = vmax.f32 %v5404, 0.0
        %v5484 = vmax.f32 %v5406, 0.0
        %v5485 = vmax.f32 %v5409, 0.0
        %v5486 = vmax.f32 %v5411, 0.0
        %v5487 = vmax.f32 %v5414, 0.0
        %v5488 = vmax.f32 %v5416, 0.0
        %v5489 = vmax.f32 %v5419, 0.0
        %v5490 = vmax.f32 %v5421, 0.0
        %v5491 = vmax.f32 %v5424, 0.0
        %v5492 = vmax.f32 %v5426, 0.0
        %v5493 = vmax.f32 %v5429, 0.0
        %v5494 = vmax.f32 %v5431, 0.0
        %v5495 = vmax.f32 %v5434, 0.0
        %v5496 = vmax.f32 %v5436, 0.0
        %v5497 = vmax.f32 %v5439, 0.0
        %v5498 = vmax.f32 %v5441, 0.0
        %v5499 = vmax.f32 %v5444, 0.0
        %v5500 = vmax.f32 %v5446, 0.0
        %v5501 = vmax.f32 %v5449, 0.0
        %v5502 = vmax.f32 %v5451, 0.0
        %v5503 = vmax.f32 %v5454, 0.0
        %v5504 = vmax.f32 %v5456, 0.0
        %v5505 = vmax.f32 %v5459, 0.0
        %v5506 = vmax.f32 %v5461, 0.0
        %v5507 = vmax.f32 %v5464, 0.0
        %v5508 = vmax.f32 %v5466, 0.0
        %v5509 = vmax.f32 %v5469, 0.0
        %v5510 = vmax.f32 %v5471, 0.0
        %v5511 = vmax.f32 %v5474, 0.0
        %v5512 = vmax.f32 %v5476, 0.0
        %v5513 = vmax.f32 %v5479, 0.0
        %v5514 = vmax.f32 %v5481, 0.0
        %5515 = vst.msk [vmem:[%s971 + $0x1] sm:$0xff] %vm586, %v5483
        %5516 = vst.msk [vmem:[%s971 + $0x9] sm:$0xff] %vm586, %v5484
        %5517 = vst.msk [vmem:[%s971 + $0x19] sm:$0xff] %vm586, %v5485
        %5518 = vst.msk [vmem:[%s971 + $0x21] sm:$0xff] %vm586, %v5486
        %5519 = vst.msk [vmem:[%s971 + $0x31] sm:$0xff] %vm586, %v5487
        %5520 = vst.msk [vmem:[%s971 + $0x39] sm:$0xff] %vm586, %v5488
        %5521 = vst.msk [vmem:[%s971 + $0x49] sm:$0xff] %vm586, %v5489
        %5522 = vst.msk [vmem:[%s971 + $0x51] sm:$0xff] %vm586, %v5490
        %5523 = vst.msk [vmem:[%s971 + $0x61] sm:$0xff] %vm586, %v5491
        %5524 = vst.msk [vmem:[%s971 + $0x69] sm:$0xff] %vm586, %v5492
        %5525 = vst.msk [vmem:[%s971 + $0x79] sm:$0xff] %vm586, %v5493
        %5526 = vst.msk [vmem:[%s971 + $0x81] sm:$0xff] %vm586, %v5494
        %5527 = vst.msk [vmem:[%s971 + $0x91] sm:$0xff] %vm586, %v5495
        %5528 = vst.msk [vmem:[%s971 + $0x99] sm:$0xff] %vm586, %v5496
        %5529 = vst.msk [vmem:[%s971 + $0xa9] sm:$0xff] %vm586, %v5497
        %5530 = vst.msk [vmem:[%s971 + $0xb1] sm:$0xff] %vm586, %v5498
        %5531 = vst.msk [vmem:[%s971 + $0xc1] sm:$0xff] %vm586, %v5499
        %5532 = vst.msk [vmem:[%s971 + $0xc9] sm:$0xff] %vm586, %v5500
        %5533 = vst.msk [vmem:[%s971 + $0xd9] sm:$0xff] %vm586, %v5501
        %5534 = vst.msk [vmem:[%s971 + $0xe1] sm:$0xff] %vm586, %v5502
        %5535 = vst.msk [vmem:[%s971 + $0xf1] sm:$0xff] %vm586, %v5503
        %5536 = vst.msk [vmem:[%s971 + $0xf9] sm:$0xff] %vm586, %v5504
        %5537 = vst.msk [vmem:[%s971 + $0x109] sm:$0xff] %vm586, %v5505
        %5538 = vst.msk [vmem:[%s971 + $0x111] sm:$0xff] %vm586, %v5506
        %5539 = vst.msk [vmem:[%s971 + $0x121] sm:$0xff] %vm586, %v5507
        %5540 = vst.msk [vmem:[%s971 + $0x129] sm:$0xff] %vm586, %v5508
        %5541 = vst.msk [vmem:[%s971 + $0x139] sm:$0xff] %vm586, %v5509
        %5542 = vst.msk [vmem:[%s971 + $0x141] sm:$0xff] %vm586, %v5510
        %5543 = vst.msk [vmem:[%s971 + $0x151] sm:$0xff] %vm586, %v5511
        %5544 = vst.msk [vmem:[%s971 + $0x159] sm:$0xff] %vm586, %v5512
        %5545 = vst.msk [vmem:[%s971 + $0x169] sm:$0xff] %vm586, %v5513
        %5546 = vst.msk [vmem:[%s971 + $0x171] sm:$0xff] %vm586, %v5514
        %v5547 = vld [vmem:[#allocation2] sm:$0xff]
        %v5548 = vld [vmem:[#allocation2 + $0x8] sm:$0xff]
        %v5549 = vld [vmem:[#allocation2 + $0x18] sm:$0xff]
        %v5550 = vld [vmem:[#allocation2 + $0x20] sm:$0xff]
        %v5551 = vld [vmem:[#allocation2 + $0x30] sm:$0xff]
        %v5552 = vld [vmem:[#allocation2 + $0x38] sm:$0xff]
        %v5553 = vld [vmem:[#allocation2 + $0x48] sm:$0xff]
        %v5554 = vld [vmem:[#allocation2 + $0x50] sm:$0xff]
        %v5555 = vld [vmem:[#allocation2 + $0x60] sm:$0xff]
        %v5556 = vld [vmem:[#allocation2 + $0x68] sm:$0xff]
        %v5557 = vld [vmem:[#allocation2 + $0x78] sm:$0xff]
        %v5558 = vld [vmem:[#allocation2 + $0x80] sm:$0xff]
        %v5559 = vld [vmem:[#allocation2 + $0x90] sm:$0xff]
        %v5560 = vld [vmem:[#allocation2 + $0x98] sm:$0xff]
        %v5561 = vld [vmem:[#allocation2 + $0xa8] sm:$0xff]
        %v5562 = vld [vmem:[#allocation2 + $0xb0] sm:$0xff]
        %v5563 = vld [vmem:[#allocation2 + $0xc0] sm:$0xff]
        %v5564 = vld [vmem:[#allocation2 + $0xc8] sm:$0xff]
        %v5565 = vld [vmem:[#allocation2 + $0xd8] sm:$0xff]
        %v5566 = vld [vmem:[#allocation2 + $0xe0] sm:$0xff]
        %v5567 = vld [vmem:[#allocation2 + $0xf0] sm:$0xff]
        %v5568 = vld [vmem:[#allocation2 + $0xf8] sm:$0xff]
        %v5569 = vld [vmem:[#allocation2 + $0x108] sm:$0xff]
        %v5570 = vld [vmem:[#allocation2 + $0x110] sm:$0xff]
        %v5571 = vld [vmem:[#allocation2 + $0x120] sm:$0xff]
        %v5572 = vld [vmem:[#allocation2 + $0x128] sm:$0xff]
        %v5573 = vld [vmem:[#allocation2 + $0x138] sm:$0xff]
        %v5574 = vld [vmem:[#allocation2 + $0x140] sm:$0xff]
        %v5575 = vld [vmem:[#allocation2 + $0x150] sm:$0xff]
        %v5576 = vld [vmem:[#allocation2 + $0x158] sm:$0xff]
        %v5577 = vld [vmem:[#allocation2 + $0x168] sm:$0xff]
        %v5578 = vld [vmem:[#allocation2 + $0x170] sm:$0xff]
        %v5579 = vld [vmem:[#allocation2 + $0x1] sm:$0xff]
        %v5580 = vld [vmem:[#allocation2 + $0x9] sm:$0xff]
        %v5581 = vld [vmem:[#allocation2 + $0x19] sm:$0xff]
        %v5582 = vld [vmem:[#allocation2 + $0x21] sm:$0xff]
        %v5583 = vld [vmem:[#allocation2 + $0x31] sm:$0xff]
        %v5584 = vld [vmem:[#allocation2 + $0x39] sm:$0xff]
        %v5585 = vld [vmem:[#allocation2 + $0x49] sm:$0xff]
        %v5586 = vld [vmem:[#allocation2 + $0x51] sm:$0xff]
        %v5587 = vld [vmem:[#allocation2 + $0x61] sm:$0xff]
        %v5588 = vld [vmem:[#allocation2 + $0x69] sm:$0xff]
        %v5589 = vld [vmem:[#allocation2 + $0x79] sm:$0xff]
        %v5590 = vld [vmem:[#allocation2 + $0x81] sm:$0xff]
        %v5591 = vld [vmem:[#allocation2 + $0x91] sm:$0xff]
        %v5592 = vld [vmem:[#allocation2 + $0x99] sm:$0xff]
        %v5593 = vld [vmem:[#allocation2 + $0xa9] sm:$0xff]
        %v5594 = vld [vmem:[#allocation2 + $0xb1] sm:$0xff]
        %v5595 = vld [vmem:[#allocation2 + $0xc1] sm:$0xff]
        %v5596 = vld [vmem:[#allocation2 + $0xc9] sm:$0xff]
        %v5597 = vld [vmem:[#allocation2 + $0xd9] sm:$0xff]
        %v5598 = vld [vmem:[#allocation2 + $0xe1] sm:$0xff]
        %v5599 = vld [vmem:[#allocation2 + $0xf1] sm:$0xff]
        %v5600 = vld [vmem:[#allocation2 + $0xf9] sm:$0xff]
        %v5601 = vld [vmem:[#allocation2 + $0x109] sm:$0xff]
        %v5602 = vld [vmem:[#allocation2 + $0x111] sm:$0xff]
        %v5603 = vld [vmem:[#allocation2 + $0x121] sm:$0xff]
        %v5604 = vld [vmem:[#allocation2 + $0x129] sm:$0xff]
        %v5605 = vld [vmem:[#allocation2 + $0x139] sm:$0xff]
        %v5606 = vld [vmem:[#allocation2 + $0x141] sm:$0xff]
        %v5607 = vld [vmem:[#allocation2 + $0x151] sm:$0xff]
        %v5608 = vld [vmem:[#allocation2 + $0x159] sm:$0xff]
        %v5609 = vld [vmem:[#allocation2 + $0x169] sm:$0xff]
        %v5610 = vld [vmem:[#allocation2 + $0x171] sm:$0xff]
        %v5611 = vld [vmem:[#allocation2 + $0x2] sm:$0xff]
        %v5612 = vld [vmem:[#allocation2 + $0xa] sm:$0xff]
        %v5613 = vld [vmem:[#allocation2 + $0x1a] sm:$0xff]
        %v5614 = vld [vmem:[#allocation2 + $0x22] sm:$0xff]
        %v5615 = vld [vmem:[#allocation2 + $0x32] sm:$0xff]
        %v5616 = vld [vmem:[#allocation2 + $0x3a] sm:$0xff]
        %v5617 = vld [vmem:[#allocation2 + $0x4a] sm:$0xff]
        %v5618 = vld [vmem:[#allocation2 + $0x52] sm:$0xff]
        %v5619 = vld [vmem:[#allocation2 + $0x62] sm:$0xff]
        %v5620 = vld [vmem:[#allocation2 + $0x6a] sm:$0xff]
        %v5621 = vld [vmem:[#allocation2 + $0x7a] sm:$0xff]
        %v5622 = vld [vmem:[#allocation2 + $0x82] sm:$0xff]
        %v5623 = vld [vmem:[#allocation2 + $0x92] sm:$0xff]
        %v5624 = vld [vmem:[#allocation2 + $0x9a] sm:$0xff]
        %v5625 = vld [vmem:[#allocation2 + $0xaa] sm:$0xff]
        %v5626 = vld [vmem:[#allocation2 + $0xb2] sm:$0xff]
        %v5627 = vld [vmem:[#allocation2 + $0xc2] sm:$0xff]
        %v5628 = vld [vmem:[#allocation2 + $0xca] sm:$0xff]
        %v5629 = vld [vmem:[#allocation2 + $0xda] sm:$0xff]
        %v5630 = vld [vmem:[#allocation2 + $0xe2] sm:$0xff]
        %v5631 = vld [vmem:[#allocation2 + $0xf2] sm:$0xff]
        %v5632 = vld [vmem:[#allocation2 + $0xfa] sm:$0xff]
        %v5633 = vld [vmem:[#allocation2 + $0x10a] sm:$0xff]
        %v5634 = vld [vmem:[#allocation2 + $0x112] sm:$0xff]
        %v5635 = vld [vmem:[#allocation2 + $0x122] sm:$0xff]
        %v5636 = vld [vmem:[#allocation2 + $0x12a] sm:$0xff]
        %v5637 = vld [vmem:[#allocation2 + $0x13a] sm:$0xff]
        %v5638 = vld [vmem:[#allocation2 + $0x142] sm:$0xff]
        %v5639 = vld [vmem:[#allocation2 + $0x152] sm:$0xff]
        %v5640 = vld [vmem:[#allocation2 + $0x15a] sm:$0xff]
        %v5641 = vld [vmem:[#allocation2 + $0x16a] sm:$0xff]
        %v5642 = vld [vmem:[#allocation2 + $0x172] sm:$0xff]
        %v5643 = vld [vmem:[%s971] sm:$0xff]
        %v5644 = vld [vmem:[%s971 + $0x8] sm:$0xff]
        %v5645 = vld [vmem:[%s971 + $0x18] sm:$0xff]
        %v5646 = vld [vmem:[%s971 + $0x20] sm:$0xff]
        %v5647 = vld [vmem:[%s971 + $0x30] sm:$0xff]
        %v5648 = vld [vmem:[%s971 + $0x38] sm:$0xff]
        %v5649 = vld [vmem:[%s971 + $0x48] sm:$0xff]
        %v5650 = vld [vmem:[%s971 + $0x50] sm:$0xff]
        %v5651 = vld [vmem:[%s971 + $0x60] sm:$0xff]
        %v5652 = vld [vmem:[%s971 + $0x68] sm:$0xff]
        %v5653 = vld [vmem:[%s971 + $0x78] sm:$0xff]
        %v5654 = vld [vmem:[%s971 + $0x80] sm:$0xff]
        %v5655 = vld [vmem:[%s971 + $0x90] sm:$0xff]
        %v5656 = vld [vmem:[%s971 + $0x98] sm:$0xff]
        %v5657 = vld [vmem:[%s971 + $0xa8] sm:$0xff]
        %v5658 = vld [vmem:[%s971 + $0xb0] sm:$0xff]
        %v5659 = vld [vmem:[%s971 + $0xc0] sm:$0xff]
        %v5660 = vld [vmem:[%s971 + $0xc8] sm:$0xff]
        %v5661 = vld [vmem:[%s971 + $0xd8] sm:$0xff]
        %v5662 = vld [vmem:[%s971 + $0xe0] sm:$0xff]
        %v5663 = vld [vmem:[%s971 + $0xf0] sm:$0xff]
        %v5664 = vld [vmem:[%s971 + $0xf8] sm:$0xff]
        %v5665 = vld [vmem:[%s971 + $0x108] sm:$0xff]
        %v5666 = vld [vmem:[%s971 + $0x110] sm:$0xff]
        %v5667 = vld [vmem:[%s971 + $0x120] sm:$0xff]
        %v5668 = vld [vmem:[%s971 + $0x128] sm:$0xff]
        %v5669 = vld [vmem:[%s971 + $0x138] sm:$0xff]
        %v5670 = vld [vmem:[%s971 + $0x140] sm:$0xff]
        %v5671 = vld [vmem:[%s971 + $0x150] sm:$0xff]
        %v5672 = vld [vmem:[%s971 + $0x158] sm:$0xff]
        %v5673 = vld [vmem:[%s971 + $0x168] sm:$0xff]
        %v5674 = vld [vmem:[%s971 + $0x170] sm:$0xff]
        %v5675 = vld [vmem:[%s971 + $0x1] sm:$0xff]
        %v5676 = vld [vmem:[%s971 + $0x9] sm:$0xff]
        %v5677 = vld [vmem:[%s971 + $0x19] sm:$0xff]
        %v5678 = vld [vmem:[%s971 + $0x21] sm:$0xff]
        %v5679 = vld [vmem:[%s971 + $0x31] sm:$0xff]
        %v5680 = vld [vmem:[%s971 + $0x39] sm:$0xff]
        %v5681 = vld [vmem:[%s971 + $0x49] sm:$0xff]
        %v5682 = vld [vmem:[%s971 + $0x51] sm:$0xff]
        %v5683 = vld [vmem:[%s971 + $0x61] sm:$0xff]
        %v5684 = vld [vmem:[%s971 + $0x69] sm:$0xff]
        %v5685 = vld [vmem:[%s971 + $0x79] sm:$0xff]
        %v5686 = vld [vmem:[%s971 + $0x81] sm:$0xff]
        %v5687 = vld [vmem:[%s971 + $0x91] sm:$0xff]
        %v5688 = vld [vmem:[%s971 + $0x99] sm:$0xff]
        %v5689 = vld [vmem:[%s971 + $0xa9] sm:$0xff]
        %v5690 = vld [vmem:[%s971 + $0xb1] sm:$0xff]
        %v5691 = vld [vmem:[%s971 + $0xc1] sm:$0xff]
        %v5692 = vld [vmem:[%s971 + $0xc9] sm:$0xff]
        %v5693 = vld [vmem:[%s971 + $0xd9] sm:$0xff]
        %v5694 = vld [vmem:[%s971 + $0xe1] sm:$0xff]
        %v5695 = vld [vmem:[%s971 + $0xf1] sm:$0xff]
        %v5696 = vld [vmem:[%s971 + $0xf9] sm:$0xff]
        %v5697 = vld [vmem:[%s971 + $0x109] sm:$0xff]
        %v5698 = vld [vmem:[%s971 + $0x111] sm:$0xff]
        %v5699 = vld [vmem:[%s971 + $0x121] sm:$0xff]
        %v5700 = vld [vmem:[%s971 + $0x129] sm:$0xff]
        %v5701 = vld [vmem:[%s971 + $0x139] sm:$0xff]
        %v5702 = vld [vmem:[%s971 + $0x141] sm:$0xff]
        %v5703 = vld [vmem:[%s971 + $0x151] sm:$0xff]
        %v5704 = vld [vmem:[%s971 + $0x159] sm:$0xff]
        %v5705 = vld [vmem:[%s971 + $0x169] sm:$0xff]
        %v5706 = vld [vmem:[%s971 + $0x171] sm:$0xff]
        %v5707 = vld [vmem:[%s971 + $0x2] sm:$0xff]
        %v5708 = vld [vmem:[%s971 + $0xa] sm:$0xff]
        %v5709 = vld [vmem:[%s971 + $0x1a] sm:$0xff]
        %v5710 = vld [vmem:[%s971 + $0x22] sm:$0xff]
        %v5711 = vld [vmem:[%s971 + $0x32] sm:$0xff]
        %v5712 = vld [vmem:[%s971 + $0x3a] sm:$0xff]
        %v5713 = vld [vmem:[%s971 + $0x4a] sm:$0xff]
        %v5714 = vld [vmem:[%s971 + $0x52] sm:$0xff]
        %v5715 = vld [vmem:[%s971 + $0x62] sm:$0xff]
        %v5716 = vld [vmem:[%s971 + $0x6a] sm:$0xff]
        %v5717 = vld [vmem:[%s971 + $0x7a] sm:$0xff]
        %v5718 = vld [vmem:[%s971 + $0x82] sm:$0xff]
        %v5719 = vld [vmem:[%s971 + $0x92] sm:$0xff]
        %v5720 = vld [vmem:[%s971 + $0x9a] sm:$0xff]
        %v5721 = vld [vmem:[%s971 + $0xaa] sm:$0xff]
        %v5722 = vld [vmem:[%s971 + $0xb2] sm:$0xff]
        %v5723 = vld [vmem:[%s971 + $0xc2] sm:$0xff]
        %v5724 = vld [vmem:[%s971 + $0xca] sm:$0xff]
        %v5725 = vld [vmem:[%s971 + $0xda] sm:$0xff]
        %v5726 = vld [vmem:[%s971 + $0xe2] sm:$0xff]
        %v5727 = vld [vmem:[%s971 + $0xf2] sm:$0xff]
        %v5728 = vld [vmem:[%s971 + $0xfa] sm:$0xff]
        %v5729 = vld [vmem:[%s971 + $0x10a] sm:$0xff]
        %v5730 = vld [vmem:[%s971 + $0x112] sm:$0xff]
        %v5731 = vld [vmem:[%s971 + $0x122] sm:$0xff]
        %v5732 = vld [vmem:[%s971 + $0x12a] sm:$0xff]
        %v5733 = vld [vmem:[%s971 + $0x13a] sm:$0xff]
        %v5734 = vld [vmem:[%s971 + $0x142] sm:$0xff]
        %v5735 = vld [vmem:[%s971 + $0x152] sm:$0xff]
        %v5736 = vld [vmem:[%s971 + $0x15a] sm:$0xff]
        %v5737 = vld [vmem:[%s971 + $0x16a] sm:$0xff]
        %v5738 = vld [vmem:[%s971 + $0x172] sm:$0xff]
        %v5739 = vld [vmem:[%s1196] sm:$0xff]
        %v5740 = vld [vmem:[%s1196 + $0x8] sm:$0xff]
        %v5741 = vld [vmem:[%s1196 + $0x18] sm:$0xff]
        %v5742 = vld [vmem:[%s1196 + $0x20] sm:$0xff]
        %v5743 = vld [vmem:[%s1196 + $0x30] sm:$0xff]
        %v5744 = vld [vmem:[%s1196 + $0x38] sm:$0xff]
        %v5745 = vld [vmem:[%s1196 + $0x48] sm:$0xff]
        %v5746 = vld [vmem:[%s1196 + $0x50] sm:$0xff]
        %v5747 = vld [vmem:[%s1196 + $0x60] sm:$0xff]
        %v5748 = vld [vmem:[%s1196 + $0x68] sm:$0xff]
        %v5749 = vld [vmem:[%s1196 + $0x78] sm:$0xff]
        %v5750 = vld [vmem:[%s1196 + $0x80] sm:$0xff]
        %v5751 = vld [vmem:[%s1196 + $0x90] sm:$0xff]
        %v5752 = vld [vmem:[%s1196 + $0x98] sm:$0xff]
        %v5753 = vld [vmem:[%s1196 + $0xa8] sm:$0xff]
        %v5754 = vld [vmem:[%s1196 + $0xb0] sm:$0xff]
        %v5755 = vld [vmem:[%s1196 + $0xc0] sm:$0xff]
        %v5756 = vld [vmem:[%s1196 + $0xc8] sm:$0xff]
        %v5757 = vld [vmem:[%s1196 + $0xd8] sm:$0xff]
        %v5758 = vld [vmem:[%s1196 + $0xe0] sm:$0xff]
        %v5759 = vld [vmem:[%s1196 + $0xf0] sm:$0xff]
        %v5760 = vld [vmem:[%s1196 + $0xf8] sm:$0xff]
        %v5761 = vld [vmem:[%s1196 + $0x108] sm:$0xff]
        %v5762 = vld [vmem:[%s1196 + $0x110] sm:$0xff]
        %v5763 = vld [vmem:[%s1196 + $0x120] sm:$0xff]
        %v5764 = vld [vmem:[%s1196 + $0x128] sm:$0xff]
        %v5765 = vld [vmem:[%s1196 + $0x138] sm:$0xff]
        %v5766 = vld [vmem:[%s1196 + $0x140] sm:$0xff]
        %v5767 = vld [vmem:[%s1196 + $0x150] sm:$0xff]
        %v5768 = vld [vmem:[%s1196 + $0x158] sm:$0xff]
        %v5769 = vld [vmem:[%s1196 + $0x168] sm:$0xff]
        %v5770 = vld [vmem:[%s1196 + $0x170] sm:$0xff]
        %v5771 = vld [vmem:[%s1196 + $0x1] sm:$0xff]
        %v5772 = vld [vmem:[%s1196 + $0x9] sm:$0xff]
        %v5773 = vld [vmem:[%s1196 + $0x19] sm:$0xff]
        %v5774 = vld [vmem:[%s1196 + $0x21] sm:$0xff]
        %v5775 = vld [vmem:[%s1196 + $0x31] sm:$0xff]
        %v5776 = vld [vmem:[%s1196 + $0x39] sm:$0xff]
        %v5777 = vld [vmem:[%s1196 + $0x49] sm:$0xff]
        %v5778 = vld [vmem:[%s1196 + $0x51] sm:$0xff]
        %v5779 = vld [vmem:[%s1196 + $0x61] sm:$0xff]
        %v5780 = vld [vmem:[%s1196 + $0x69] sm:$0xff]
        %v5781 = vld [vmem:[%s1196 + $0x79] sm:$0xff]
        %v5782 = vld [vmem:[%s1196 + $0x81] sm:$0xff]
        %v5783 = vld [vmem:[%s1196 + $0x91] sm:$0xff]
        %v5784 = vld [vmem:[%s1196 + $0x99] sm:$0xff]
        %v5785 = vld [vmem:[%s1196 + $0xa9] sm:$0xff]
        %v5786 = vld [vmem:[%s1196 + $0xb1] sm:$0xff]
        %v5787 = vld [vmem:[%s1196 + $0xc1] sm:$0xff]
        %v5788 = vld [vmem:[%s1196 + $0xc9] sm:$0xff]
        %v5789 = vld [vmem:[%s1196 + $0xd9] sm:$0xff]
        %v5790 = vld [vmem:[%s1196 + $0xe1] sm:$0xff]
        %v5791 = vld [vmem:[%s1196 + $0xf1] sm:$0xff]
        %v5792 = vld [vmem:[%s1196 + $0xf9] sm:$0xff]
        %v5793 = vld [vmem:[%s1196 + $0x109] sm:$0xff]
        %v5794 = vld [vmem:[%s1196 + $0x111] sm:$0xff]
        %v5795 = vld [vmem:[%s1196 + $0x121] sm:$0xff]
        %v5796 = vld [vmem:[%s1196 + $0x129] sm:$0xff]
        %v5797 = vld [vmem:[%s1196 + $0x139] sm:$0xff]
        %v5798 = vld [vmem:[%s1196 + $0x141] sm:$0xff]
        %v5799 = vld [vmem:[%s1196 + $0x151] sm:$0xff]
        %v5800 = vld [vmem:[%s1196 + $0x159] sm:$0xff]
        %v5801 = vld [vmem:[%s1196 + $0x169] sm:$0xff]
        %v5802 = vld [vmem:[%s1196 + $0x171] sm:$0xff]
        %v5803 = vld [vmem:[%s1196 + $0x2] sm:$0xff]
        %v5804 = vld [vmem:[%s1196 + $0xa] sm:$0xff]
        %v5805 = vld [vmem:[%s1196 + $0x1a] sm:$0xff]
        %v5806 = vld [vmem:[%s1196 + $0x22] sm:$0xff]
        %v5807 = vld [vmem:[%s1196 + $0x32] sm:$0xff]
        %v5808 = vld [vmem:[%s1196 + $0x3a] sm:$0xff]
        %v5809 = vld [vmem:[%s1196 + $0x4a] sm:$0xff]
        %v5810 = vld [vmem:[%s1196 + $0x52] sm:$0xff]
        %v5811 = vld [vmem:[%s1196 + $0x62] sm:$0xff]
        %v5812 = vld [vmem:[%s1196 + $0x6a] sm:$0xff]
        %v5813 = vld [vmem:[%s1196 + $0x7a] sm:$0xff]
        %v5814 = vld [vmem:[%s1196 + $0x82] sm:$0xff]
        %v5815 = vld [vmem:[%s1196 + $0x92] sm:$0xff]
        %v5816 = vld [vmem:[%s1196 + $0x9a] sm:$0xff]
        %v5817 = vld [vmem:[%s1196 + $0xaa] sm:$0xff]
        %v5818 = vld [vmem:[%s1196 + $0xb2] sm:$0xff]
        %v5819 = vld [vmem:[%s1196 + $0xc2] sm:$0xff]
        %v5820 = vld [vmem:[%s1196 + $0xca] sm:$0xff]
        %v5821 = vld [vmem:[%s1196 + $0xda] sm:$0xff]
        %v5822 = vld [vmem:[%s1196 + $0xe2] sm:$0xff]
        %v5823 = vld [vmem:[%s1196 + $0xf2] sm:$0xff]
        %v5824 = vld [vmem:[%s1196 + $0xfa] sm:$0xff]
        %v5825 = vld [vmem:[%s1196 + $0x10a] sm:$0xff]
        %v5826 = vld [vmem:[%s1196 + $0x112] sm:$0xff]
        %v5827 = vld [vmem:[%s1196 + $0x122] sm:$0xff]
        %v5828 = vld [vmem:[%s1196 + $0x12a] sm:$0xff]
        %v5829 = vld [vmem:[%s1196 + $0x13a] sm:$0xff]
        %v5830 = vld [vmem:[%s1196 + $0x142] sm:$0xff]
        %v5831 = vld [vmem:[%s1196 + $0x152] sm:$0xff]
        %v5832 = vld [vmem:[%s1196 + $0x15a] sm:$0xff]
        %v5833 = vld [vmem:[%s1196 + $0x16a] sm:$0xff]
        %v5834 = vld [vmem:[%s1196 + $0x172] sm:$0xff]
        %5867 = vrot.lane.b32.xlu0 %v5579, 16
        %v5868 = vpop.permute.xlu0 %5867
        %5869 = vrot.lane.b32.xlu0 %v5580, 16
        %v5870 = vpop.permute.xlu0 %5869
        %5871 = vrot.lane.b32.xlu0 %v5581, 16
        %v5872 = vpop.permute.xlu0 %5871
        %5873 = vrot.lane.b32.xlu0 %v5582, 16
        %v5874 = vpop.permute.xlu0 %5873
        %5875 = vrot.lane.b32.xlu0 %v5583, 16
        %v5876 = vpop.permute.xlu0 %5875
        %5877 = vrot.lane.b32.xlu0 %v5584, 16
        %v5878 = vpop.permute.xlu0 %5877
        %5879 = vrot.lane.b32.xlu0 %v5585, 16
        %v5880 = vpop.permute.xlu0 %5879
        %5881 = vrot.lane.b32.xlu0 %v5586, 16
        %v5882 = vpop.permute.xlu0 %5881
        %5883 = vrot.lane.b32.xlu0 %v5587, 16
        %v5884 = vpop.permute.xlu0 %5883
        %5885 = vrot.lane.b32.xlu0 %v5588, 16
        %v5886 = vpop.permute.xlu0 %5885
        %5887 = vrot.lane.b32.xlu0 %v5589, 16
        %v5888 = vpop.permute.xlu0 %5887
        %5889 = vrot.lane.b32.xlu0 %v5590, 16
        %v5890 = vpop.permute.xlu0 %5889
        %5891 = vrot.lane.b32.xlu0 %v5591, 16
        %v5892 = vpop.permute.xlu0 %5891
        %5893 = vrot.lane.b32.xlu0 %v5592, 16
        %v5894 = vpop.permute.xlu0 %5893
        %5895 = vrot.lane.b32.xlu0 %v5593, 16
        %v5896 = vpop.permute.xlu0 %5895
        %5897 = vrot.lane.b32.xlu0 %v5594, 16
        %v5898 = vpop.permute.xlu0 %5897
        %5899 = vrot.lane.b32.xlu0 %v5595, 16
        %v5900 = vpop.permute.xlu0 %5899
        %5901 = vrot.lane.b32.xlu0 %v5596, 16
        %v5902 = vpop.permute.xlu0 %5901
        %5903 = vrot.lane.b32.xlu0 %v5597, 16
        %v5904 = vpop.permute.xlu0 %5903
        %5905 = vrot.lane.b32.xlu0 %v5598, 16
        %v5906 = vpop.permute.xlu0 %5905
        %5907 = vrot.lane.b32.xlu0 %v5599, 16
        %v5908 = vpop.permute.xlu0 %5907
        %5909 = vrot.lane.b32.xlu0 %v5600, 16
        %v5910 = vpop.permute.xlu0 %5909
        %5911 = vrot.lane.b32.xlu0 %v5601, 16
        %v5912 = vpop.permute.xlu0 %5911
        %5913 = vrot.lane.b32.xlu0 %v5602, 16
        %v5914 = vpop.permute.xlu0 %5913
        %5915 = vrot.lane.b32.xlu0 %v5603, 16
        %v5916 = vpop.permute.xlu0 %5915
        %5917 = vrot.lane.b32.xlu0 %v5604, 16
        %v5918 = vpop.permute.xlu0 %5917
        %5919 = vrot.lane.b32.xlu0 %v5605, 16
        %v5920 = vpop.permute.xlu0 %5919
        %5921 = vrot.lane.b32.xlu0 %v5606, 16
        %v5922 = vpop.permute.xlu0 %5921
        %5923 = vrot.lane.b32.xlu0 %v5607, 16
        %v5924 = vpop.permute.xlu0 %5923
        %5925 = vrot.lane.b32.xlu0 %v5608, 16
        %v5926 = vpop.permute.xlu0 %5925
        %5927 = vrot.lane.b32.xlu0 %v5609, 16
        %v5928 = vpop.permute.xlu0 %5927
        %5929 = vrot.lane.b32.xlu0 %v5610, 16
        %v5930 = vpop.permute.xlu0 %5929
        %5995 = vrot.lane.b32.xlu0 %v5611, 32
        %v5996 = vpop.permute.xlu0 %5995
        %5997 = vrot.lane.b32.xlu0 %v5612, 32
        %v5998 = vpop.permute.xlu0 %5997
        %5999 = vrot.lane.b32.xlu0 %v5613, 32
        %v6000 = vpop.permute.xlu0 %5999
        %6001 = vrot.lane.b32.xlu0 %v5614, 32
        %v6002 = vpop.permute.xlu0 %6001
        %6003 = vrot.lane.b32.xlu0 %v5615, 32
        %v6004 = vpop.permute.xlu0 %6003
        %6005 = vrot.lane.b32.xlu0 %v5616, 32
        %v6006 = vpop.permute.xlu0 %6005
        %6007 = vrot.lane.b32.xlu0 %v5617, 32
        %v6008 = vpop.permute.xlu0 %6007
        %6009 = vrot.lane.b32.xlu0 %v5618, 32
        %v6010 = vpop.permute.xlu0 %6009
        %6011 = vrot.lane.b32.xlu0 %v5619, 32
        %v6012 = vpop.permute.xlu0 %6011
        %6013 = vrot.lane.b32.xlu0 %v5620, 32
        %v6014 = vpop.permute.xlu0 %6013
        %6015 = vrot.lane.b32.xlu0 %v5621, 32
        %v6016 = vpop.permute.xlu0 %6015
        %6017 = vrot.lane.b32.xlu0 %v5622, 32
        %v6018 = vpop.permute.xlu0 %6017
        %6019 = vrot.lane.b32.xlu0 %v5623, 32
        %v6020 = vpop.permute.xlu0 %6019
        %6021 = vrot.lane.b32.xlu0 %v5624, 32
        %v6022 = vpop.permute.xlu0 %6021
        %6023 = vrot.lane.b32.xlu0 %v5625, 32
        %v6024 = vpop.permute.xlu0 %6023
        %6025 = vrot.lane.b32.xlu0 %v5626, 32
        %v6026 = vpop.permute.xlu0 %6025
        %6027 = vrot.lane.b32.xlu0 %v5627, 32
        %v6028 = vpop.permute.xlu0 %6027
        %6029 = vrot.lane.b32.xlu0 %v5628, 32
        %v6030 = vpop.permute.xlu0 %6029
        %6031 = vrot.lane.b32.xlu0 %v5629, 32
        %v6032 = vpop.permute.xlu0 %6031
        %6033 = vrot.lane.b32.xlu0 %v5630, 32
        %v6034 = vpop.permute.xlu0 %6033
        %6035 = vrot.lane.b32.xlu0 %v5631, 32
        %v6036 = vpop.permute.xlu0 %6035
        %6037 = vrot.lane.b32.xlu0 %v5632, 32
        %v6038 = vpop.permute.xlu0 %6037
        %6039 = vrot.lane.b32.xlu0 %v5633, 32
        %v6040 = vpop.permute.xlu0 %6039
        %6041 = vrot.lane.b32.xlu0 %v5634, 32
        %v6042 = vpop.permute.xlu0 %6041
        %6043 = vrot.lane.b32.xlu0 %v5635, 32
        %v6044 = vpop.permute.xlu0 %6043
        %6045 = vrot.lane.b32.xlu0 %v5636, 32
        %v6046 = vpop.permute.xlu0 %6045
        %6047 = vrot.lane.b32.xlu0 %v5637, 32
        %v6048 = vpop.permute.xlu0 %6047
        %6049 = vrot.lane.b32.xlu0 %v5638, 32
        %v6050 = vpop.permute.xlu0 %6049
        %6051 = vrot.lane.b32.xlu0 %v5639, 32
        %v6052 = vpop.permute.xlu0 %6051
        %6053 = vrot.lane.b32.xlu0 %v5640, 32
        %v6054 = vpop.permute.xlu0 %6053
        %6055 = vrot.lane.b32.xlu0 %v5641, 32
        %v6056 = vpop.permute.xlu0 %6055
        %6057 = vrot.lane.b32.xlu0 %v5642, 32
        %v6058 = vpop.permute.xlu0 %6057
        %6123 = vrot.lane.b32.xlu0 %v5643, 48
        %v6124 = vpop.permute.xlu0 %6123
        %6125 = vrot.lane.b32.xlu0 %v5644, 48
        %v6126 = vpop.permute.xlu0 %6125
        %6127 = vrot.lane.b32.xlu0 %v5645, 48
        %v6128 = vpop.permute.xlu0 %6127
        %6129 = vrot.lane.b32.xlu0 %v5646, 48
        %v6130 = vpop.permute.xlu0 %6129
        %6131 = vrot.lane.b32.xlu0 %v5647, 48
        %v6132 = vpop.permute.xlu0 %6131
        %6133 = vrot.lane.b32.xlu0 %v5648, 48
        %v6134 = vpop.permute.xlu0 %6133
        %6135 = vrot.lane.b32.xlu0 %v5649, 48
        %v6136 = vpop.permute.xlu0 %6135
        %6137 = vrot.lane.b32.xlu0 %v5650, 48
        %v6138 = vpop.permute.xlu0 %6137
        %6139 = vrot.lane.b32.xlu0 %v5651, 48
        %v6140 = vpop.permute.xlu0 %6139
        %6141 = vrot.lane.b32.xlu0 %v5652, 48
        %v6142 = vpop.permute.xlu0 %6141
        %6143 = vrot.lane.b32.xlu0 %v5653, 48
        %v6144 = vpop.permute.xlu0 %6143
        %6145 = vrot.lane.b32.xlu0 %v5654, 48
        %v6146 = vpop.permute.xlu0 %6145
        %6147 = vrot.lane.b32.xlu0 %v5655, 48
        %v6148 = vpop.permute.xlu0 %6147
        %6149 = vrot.lane.b32.xlu0 %v5656, 48
        %v6150 = vpop.permute.xlu0 %6149
        %6151 = vrot.lane.b32.xlu0 %v5657, 48
        %v6152 = vpop.permute.xlu0 %6151
        %6153 = vrot.lane.b32.xlu0 %v5658, 48
        %v6154 = vpop.permute.xlu0 %6153
        %6155 = vrot.lane.b32.xlu0 %v5659, 48
        %v6156 = vpop.permute.xlu0 %6155
        %6157 = vrot.lane.b32.xlu0 %v5660, 48
        %v6158 = vpop.permute.xlu0 %6157
        %6159 = vrot.lane.b32.xlu0 %v5661, 48
        %v6160 = vpop.permute.xlu0 %6159
        %6161 = vrot.lane.b32.xlu0 %v5662, 48
        %v6162 = vpop.permute.xlu0 %6161
        %6163 = vrot.lane.b32.xlu0 %v5663, 48
        %v6164 = vpop.permute.xlu0 %6163
        %6165 = vrot.lane.b32.xlu0 %v5664, 48
        %v6166 = vpop.permute.xlu0 %6165
        %6167 = vrot.lane.b32.xlu0 %v5665, 48
        %v6168 = vpop.permute.xlu0 %6167
        %6169 = vrot.lane.b32.xlu0 %v5666, 48
        %v6170 = vpop.permute.xlu0 %6169
        %6171 = vrot.lane.b32.xlu0 %v5667, 48
        %v6172 = vpop.permute.xlu0 %6171
        %6173 = vrot.lane.b32.xlu0 %v5668, 48
        %v6174 = vpop.permute.xlu0 %6173
        %6175 = vrot.lane.b32.xlu0 %v5669, 48
        %v6176 = vpop.permute.xlu0 %6175
        %6177 = vrot.lane.b32.xlu0 %v5670, 48
        %v6178 = vpop.permute.xlu0 %6177
        %6179 = vrot.lane.b32.xlu0 %v5671, 48
        %v6180 = vpop.permute.xlu0 %6179
        %6181 = vrot.lane.b32.xlu0 %v5672, 48
        %v6182 = vpop.permute.xlu0 %6181
        %6183 = vrot.lane.b32.xlu0 %v5673, 48
        %v6184 = vpop.permute.xlu0 %6183
        %6185 = vrot.lane.b32.xlu0 %v5674, 48
        %v6186 = vpop.permute.xlu0 %6185
        %6251 = vrot.lane.b32.xlu0 %v5675, 64
        %v6252 = vpop.permute.xlu0 %6251
        %6253 = vrot.lane.b32.xlu0 %v5676, 64
        %v6254 = vpop.permute.xlu0 %6253
        %6255 = vrot.lane.b32.xlu0 %v5677, 64
        %v6256 = vpop.permute.xlu0 %6255
        %6257 = vrot.lane.b32.xlu0 %v5678, 64
        %v6258 = vpop.permute.xlu0 %6257
        %6259 = vrot.lane.b32.xlu0 %v5679, 64
        %v6260 = vpop.permute.xlu0 %6259
        %6261 = vrot.lane.b32.xlu0 %v5680, 64
        %v6262 = vpop.permute.xlu0 %6261
        %6263 = vrot.lane.b32.xlu0 %v5681, 64
        %v6264 = vpop.permute.xlu0 %6263
        %6265 = vrot.lane.b32.xlu0 %v5682, 64
        %v6266 = vpop.permute.xlu0 %6265
        %6267 = vrot.lane.b32.xlu0 %v5683, 64
        %v6268 = vpop.permute.xlu0 %6267
        %6269 = vrot.lane.b32.xlu0 %v5684, 64
        %v6270 = vpop.permute.xlu0 %6269
        %6271 = vrot.lane.b32.xlu0 %v5685, 64
        %v6272 = vpop.permute.xlu0 %6271
        %6273 = vrot.lane.b32.xlu0 %v5686, 64
        %v6274 = vpop.permute.xlu0 %6273
        %6275 = vrot.lane.b32.xlu0 %v5687, 64
        %v6276 = vpop.permute.xlu0 %6275
        %6277 = vrot.lane.b32.xlu0 %v5688, 64
        %v6278 = vpop.permute.xlu0 %6277
        %6279 = vrot.lane.b32.xlu0 %v5689, 64
        %v6280 = vpop.permute.xlu0 %6279
        %6281 = vrot.lane.b32.xlu0 %v5690, 64
        %v6282 = vpop.permute.xlu0 %6281
        %6283 = vrot.lane.b32.xlu0 %v5691, 64
        %v6284 = vpop.permute.xlu0 %6283
        %6285 = vrot.lane.b32.xlu0 %v5692, 64
        %v6286 = vpop.permute.xlu0 %6285
        %6287 = vrot.lane.b32.xlu0 %v5693, 64
        %v6288 = vpop.permute.xlu0 %6287
        %6289 = vrot.lane.b32.xlu0 %v5694, 64
        %v6290 = vpop.permute.xlu0 %6289
        %6291 = vrot.lane.b32.xlu0 %v5695, 64
        %v6292 = vpop.permute.xlu0 %6291
        %6293 = vrot.lane.b32.xlu0 %v5696, 64
        %v6294 = vpop.permute.xlu0 %6293
        %6295 = vrot.lane.b32.xlu0 %v5697, 64
        %v6296 = vpop.permute.xlu0 %6295
        %6297 = vrot.lane.b32.xlu0 %v5698, 64
        %v6298 = vpop.permute.xlu0 %6297
        %6299 = vrot.lane.b32.xlu0 %v5699, 64
        %v6300 = vpop.permute.xlu0 %6299
        %6301 = vrot.lane.b32.xlu0 %v5700, 64
        %v6302 = vpop.permute.xlu0 %6301
        %6303 = vrot.lane.b32.xlu0 %v5701, 64
        %v6304 = vpop.permute.xlu0 %6303
        %6305 = vrot.lane.b32.xlu0 %v5702, 64
        %v6306 = vpop.permute.xlu0 %6305
        %6307 = vrot.lane.b32.xlu0 %v5703, 64
        %v6308 = vpop.permute.xlu0 %6307
        %6309 = vrot.lane.b32.xlu0 %v5704, 64
        %v6310 = vpop.permute.xlu0 %6309
        %6311 = vrot.lane.b32.xlu0 %v5705, 64
        %v6312 = vpop.permute.xlu0 %6311
        %6313 = vrot.lane.b32.xlu0 %v5706, 64
        %v6314 = vpop.permute.xlu0 %6313
        %6379 = vrot.lane.b32.xlu0 %v5707, 80
        %v6380 = vpop.permute.xlu0 %6379
        %6381 = vrot.lane.b32.xlu0 %v5708, 80
        %v6382 = vpop.permute.xlu0 %6381
        %6383 = vrot.lane.b32.xlu0 %v5709, 80
        %v6384 = vpop.permute.xlu0 %6383
        %6385 = vrot.lane.b32.xlu0 %v5710, 80
        %v6386 = vpop.permute.xlu0 %6385
        %6387 = vrot.lane.b32.xlu0 %v5711, 80
        %v6388 = vpop.permute.xlu0 %6387
        %6389 = vrot.lane.b32.xlu0 %v5712, 80
        %v6390 = vpop.permute.xlu0 %6389
        %6391 = vrot.lane.b32.xlu0 %v5713, 80
        %v6392 = vpop.permute.xlu0 %6391
        %6393 = vrot.lane.b32.xlu0 %v5714, 80
        %v6394 = vpop.permute.xlu0 %6393
        %6395 = vrot.lane.b32.xlu0 %v5715, 80
        %v6396 = vpop.permute.xlu0 %6395
        %6397 = vrot.lane.b32.xlu0 %v5716, 80
        %v6398 = vpop.permute.xlu0 %6397
        %6399 = vrot.lane.b32.xlu0 %v5717, 80
        %v6400 = vpop.permute.xlu0 %6399
        %6401 = vrot.lane.b32.xlu0 %v5718, 80
        %v6402 = vpop.permute.xlu0 %6401
        %6403 = vrot.lane.b32.xlu0 %v5719, 80
        %v6404 = vpop.permute.xlu0 %6403
        %6405 = vrot.lane.b32.xlu0 %v5720, 80
        %v6406 = vpop.permute.xlu0 %6405
        %6407 = vrot.lane.b32.xlu0 %v5721, 80
        %v6408 = vpop.permute.xlu0 %6407
        %6409 = vrot.lane.b32.xlu0 %v5722, 80
        %v6410 = vpop.permute.xlu0 %6409
        %6411 = vrot.lane.b32.xlu0 %v5723, 80
        %v6412 = vpop.permute.xlu0 %6411
        %6413 = vrot.lane.b32.xlu0 %v5724, 80
        %v6414 = vpop.permute.xlu0 %6413
        %6415 = vrot.lane.b32.xlu0 %v5725, 80
        %v6416 = vpop.permute.xlu0 %6415
        %6417 = vrot.lane.b32.xlu0 %v5726, 80
        %v6418 = vpop.permute.xlu0 %6417
        %6419 = vrot.lane.b32.xlu0 %v5727, 80
        %v6420 = vpop.permute.xlu0 %6419
        %6421 = vrot.lane.b32.xlu0 %v5728, 80
        %v6422 = vpop.permute.xlu0 %6421
        %6423 = vrot.lane.b32.xlu0 %v5729, 80
        %v6424 = vpop.permute.xlu0 %6423
        %6425 = vrot.lane.b32.xlu0 %v5730, 80
        %v6426 = vpop.permute.xlu0 %6425
        %6427 = vrot.lane.b32.xlu0 %v5731, 80
        %v6428 = vpop.permute.xlu0 %6427
        %6429 = vrot.lane.b32.xlu0 %v5732, 80
        %v6430 = vpop.permute.xlu0 %6429
        %6431 = vrot.lane.b32.xlu0 %v5733, 80
        %v6432 = vpop.permute.xlu0 %6431
        %6433 = vrot.lane.b32.xlu0 %v5734, 80
        %v6434 = vpop.permute.xlu0 %6433
        %6435 = vrot.lane.b32.xlu0 %v5735, 80
        %v6436 = vpop.permute.xlu0 %6435
        %6437 = vrot.lane.b32.xlu0 %v5736, 80
        %v6438 = vpop.permute.xlu0 %6437
        %6439 = vrot.lane.b32.xlu0 %v5737, 80
        %v6440 = vpop.permute.xlu0 %6439
        %6441 = vrot.lane.b32.xlu0 %v5738, 80
        %v6442 = vpop.permute.xlu0 %6441
        %6507 = vrot.lane.b32.xlu0 %v5739, 96
        %v6508 = vpop.permute.xlu0 %6507
        %6509 = vrot.lane.b32.xlu0 %v5740, 96
        %v6510 = vpop.permute.xlu0 %6509
        %6511 = vrot.lane.b32.xlu0 %v5741, 96
        %v6512 = vpop.permute.xlu0 %6511
        %6513 = vrot.lane.b32.xlu0 %v5742, 96
        %v6514 = vpop.permute.xlu0 %6513
        %6515 = vrot.lane.b32.xlu0 %v5743, 96
        %v6516 = vpop.permute.xlu0 %6515
        %6517 = vrot.lane.b32.xlu0 %v5744, 96
        %v6518 = vpop.permute.xlu0 %6517
        %6519 = vrot.lane.b32.xlu0 %v5745, 96
        %v6520 = vpop.permute.xlu0 %6519
        %6521 = vrot.lane.b32.xlu0 %v5746, 96
        %v6522 = vpop.permute.xlu0 %6521
        %6523 = vrot.lane.b32.xlu0 %v5747, 96
        %v6524 = vpop.permute.xlu0 %6523
        %6525 = vrot.lane.b32.xlu0 %v5748, 96
        %v6526 = vpop.permute.xlu0 %6525
        %6527 = vrot.lane.b32.xlu0 %v5749, 96
        %v6528 = vpop.permute.xlu0 %6527
        %6529 = vrot.lane.b32.xlu0 %v5750, 96
        %v6530 = vpop.permute.xlu0 %6529
        %6531 = vrot.lane.b32.xlu0 %v5751, 96
        %v6532 = vpop.permute.xlu0 %6531
        %6533 = vrot.lane.b32.xlu0 %v5752, 96
        %v6534 = vpop.permute.xlu0 %6533
        %6535 = vrot.lane.b32.xlu0 %v5753, 96
        %v6536 = vpop.permute.xlu0 %6535
        %6537 = vrot.lane.b32.xlu0 %v5754, 96
        %v6538 = vpop.permute.xlu0 %6537
        %6539 = vrot.lane.b32.xlu0 %v5755, 96
        %v6540 = vpop.permute.xlu0 %6539
        %6541 = vrot.lane.b32.xlu0 %v5756, 96
        %v6542 = vpop.permute.xlu0 %6541
        %6543 = vrot.lane.b32.xlu0 %v5757, 96
        %v6544 = vpop.permute.xlu0 %6543
        %6545 = vrot.lane.b32.xlu0 %v5758, 96
        %v6546 = vpop.permute.xlu0 %6545
        %6547 = vrot.lane.b32.xlu0 %v5759, 96
        %v6548 = vpop.permute.xlu0 %6547
        %6549 = vrot.lane.b32.xlu0 %v5760, 96
        %v6550 = vpop.permute.xlu0 %6549
        %6551 = vrot.lane.b32.xlu0 %v5761, 96
        %v6552 = vpop.permute.xlu0 %6551
        %6553 = vrot.lane.b32.xlu0 %v5762, 96
        %v6554 = vpop.permute.xlu0 %6553
        %6555 = vrot.lane.b32.xlu0 %v5763, 96
        %v6556 = vpop.permute.xlu0 %6555
        %6557 = vrot.lane.b32.xlu0 %v5764, 96
        %v6558 = vpop.permute.xlu0 %6557
        %6559 = vrot.lane.b32.xlu0 %v5765, 96
        %v6560 = vpop.permute.xlu0 %6559
        %6561 = vrot.lane.b32.xlu0 %v5766, 96
        %v6562 = vpop.permute.xlu0 %6561
        %6563 = vrot.lane.b32.xlu0 %v5767, 96
        %v6564 = vpop.permute.xlu0 %6563
        %6565 = vrot.lane.b32.xlu0 %v5768, 96
        %v6566 = vpop.permute.xlu0 %6565
        %6567 = vrot.lane.b32.xlu0 %v5769, 96
        %v6568 = vpop.permute.xlu0 %6567
        %6569 = vrot.lane.b32.xlu0 %v5770, 96
        %v6570 = vpop.permute.xlu0 %6569
        %6635 = vrot.lane.b32.xlu0 %v5771, 112
        %v6636 = vpop.permute.xlu0 %6635
        %6637 = vrot.lane.b32.xlu0 %v5772, 112
        %v6638 = vpop.permute.xlu0 %6637
        %6639 = vrot.lane.b32.xlu0 %v5773, 112
        %v6640 = vpop.permute.xlu0 %6639
        %6641 = vrot.lane.b32.xlu0 %v5774, 112
        %v6642 = vpop.permute.xlu0 %6641
        %6643 = vrot.lane.b32.xlu0 %v5775, 112
        %v6644 = vpop.permute.xlu0 %6643
        %6645 = vrot.lane.b32.xlu0 %v5776, 112
        %v6646 = vpop.permute.xlu0 %6645
        %6647 = vrot.lane.b32.xlu0 %v5777, 112
        %v6648 = vpop.permute.xlu0 %6647
        %6649 = vrot.lane.b32.xlu0 %v5778, 112
        %v6650 = vpop.permute.xlu0 %6649
        %6651 = vrot.lane.b32.xlu0 %v5779, 112
        %v6652 = vpop.permute.xlu0 %6651
        %6653 = vrot.lane.b32.xlu0 %v5780, 112
        %v6654 = vpop.permute.xlu0 %6653
        %6655 = vrot.lane.b32.xlu0 %v5781, 112
        %v6656 = vpop.permute.xlu0 %6655
        %6657 = vrot.lane.b32.xlu0 %v5782, 112
        %v6658 = vpop.permute.xlu0 %6657
        %6659 = vrot.lane.b32.xlu0 %v5783, 112
        %v6660 = vpop.permute.xlu0 %6659
        %6661 = vrot.lane.b32.xlu0 %v5784, 112
        %v6662 = vpop.permute.xlu0 %6661
        %6663 = vrot.lane.b32.xlu0 %v5785, 112
        %v6664 = vpop.permute.xlu0 %6663
        %6665 = vrot.lane.b32.xlu0 %v5786, 112
        %v6666 = vpop.permute.xlu0 %6665
        %6667 = vrot.lane.b32.xlu0 %v5787, 112
        %v6668 = vpop.permute.xlu0 %6667
        %6669 = vrot.lane.b32.xlu0 %v5788, 112
        %v6670 = vpop.permute.xlu0 %6669
        %6671 = vrot.lane.b32.xlu0 %v5789, 112
        %v6672 = vpop.permute.xlu0 %6671
        %6673 = vrot.lane.b32.xlu0 %v5790, 112
        %v6674 = vpop.permute.xlu0 %6673
        %6675 = vrot.lane.b32.xlu0 %v5791, 112
        %v6676 = vpop.permute.xlu0 %6675
        %6677 = vrot.lane.b32.xlu0 %v5792, 112
        %v6678 = vpop.permute.xlu0 %6677
        %6679 = vrot.lane.b32.xlu0 %v5793, 112
        %v6680 = vpop.permute.xlu0 %6679
        %6681 = vrot.lane.b32.xlu0 %v5794, 112
        %v6682 = vpop.permute.xlu0 %6681
        %6683 = vrot.lane.b32.xlu0 %v5795, 112
        %v6684 = vpop.permute.xlu0 %6683
        %6685 = vrot.lane.b32.xlu0 %v5796, 112
        %v6686 = vpop.permute.xlu0 %6685
        %6687 = vrot.lane.b32.xlu0 %v5797, 112
        %v6688 = vpop.permute.xlu0 %6687
        %6689 = vrot.lane.b32.xlu0 %v5798, 112
        %v6690 = vpop.permute.xlu0 %6689
        %6691 = vrot.lane.b32.xlu0 %v5799, 112
        %v6692 = vpop.permute.xlu0 %6691
        %6693 = vrot.lane.b32.xlu0 %v5800, 112
        %v6694 = vpop.permute.xlu0 %6693
        %6695 = vrot.lane.b32.xlu0 %v5801, 112
        %v6696 = vpop.permute.xlu0 %6695
        %6697 = vrot.lane.b32.xlu0 %v5802, 112
        %v6698 = vpop.permute.xlu0 %6697
        %v6731 = vsel %vm586, %v5547, %v5868
        %v6732 = vsel %vm586, %v5548, %v5870
        %v6733 = vsel %vm586, %v5549, %v5872
        %v6734 = vsel %vm586, %v5550, %v5874
        %v6735 = vsel %vm586, %v5551, %v5876
        %v6736 = vsel %vm586, %v5552, %v5878
        %v6737 = vsel %vm586, %v5553, %v5880
        %v6738 = vsel %vm586, %v5554, %v5882
        %v6739 = vsel %vm586, %v5555, %v5884
        %v6740 = vsel %vm586, %v5556, %v5886
        %v6741 = vsel %vm586, %v5557, %v5888
        %v6742 = vsel %vm586, %v5558, %v5890
        %v6743 = vsel %vm586, %v5559, %v5892
        %v6744 = vsel %vm586, %v5560, %v5894
        %v6745 = vsel %vm586, %v5561, %v5896
        %v6746 = vsel %vm586, %v5562, %v5898
        %v6747 = vsel %vm586, %v5563, %v5900
        %v6748 = vsel %vm586, %v5564, %v5902
        %v6749 = vsel %vm586, %v5565, %v5904
        %v6750 = vsel %vm586, %v5566, %v5906
        %v6751 = vsel %vm586, %v5567, %v5908
        %v6752 = vsel %vm586, %v5568, %v5910
        %v6753 = vsel %vm586, %v5569, %v5912
        %v6754 = vsel %vm586, %v5570, %v5914
        %v6755 = vsel %vm586, %v5571, %v5916
        %v6756 = vsel %vm586, %v5572, %v5918
        %v6757 = vsel %vm586, %v5573, %v5920
        %v6758 = vsel %vm586, %v5574, %v5922
        %v6759 = vsel %vm586, %v5575, %v5924
        %v6760 = vsel %vm586, %v5576, %v5926
        %v6761 = vsel %vm586, %v5577, %v5928
        %v6762 = vsel %vm586, %v5578, %v5930
        %v6763 = vsel %vm2221, %v6731, %v5996
        %v6764 = vsel %vm2221, %v6732, %v5998
        %v6765 = vsel %vm2221, %v6733, %v6000
        %v6766 = vsel %vm2221, %v6734, %v6002
        %v6767 = vsel %vm2221, %v6735, %v6004
        %v6768 = vsel %vm2221, %v6736, %v6006
        %v6769 = vsel %vm2221, %v6737, %v6008
        %v6770 = vsel %vm2221, %v6738, %v6010
        %v6771 = vsel %vm2221, %v6739, %v6012
        %v6772 = vsel %vm2221, %v6740, %v6014
        %v6773 = vsel %vm2221, %v6741, %v6016
        %v6774 = vsel %vm2221, %v6742, %v6018
        %v6775 = vsel %vm2221, %v6743, %v6020
        %v6776 = vsel %vm2221, %v6744, %v6022
        %v6777 = vsel %vm2221, %v6745, %v6024
        %v6778 = vsel %vm2221, %v6746, %v6026
        %v6779 = vsel %vm2221, %v6747, %v6028
        %v6780 = vsel %vm2221, %v6748, %v6030
        %v6781 = vsel %vm2221, %v6749, %v6032
        %v6782 = vsel %vm2221, %v6750, %v6034
        %v6783 = vsel %vm2221, %v6751, %v6036
        %v6784 = vsel %vm2221, %v6752, %v6038
        %v6785 = vsel %vm2221, %v6753, %v6040
        %v6786 = vsel %vm2221, %v6754, %v6042
        %v6787 = vsel %vm2221, %v6755, %v6044
        %v6788 = vsel %vm2221, %v6756, %v6046
        %v6789 = vsel %vm2221, %v6757, %v6048
        %v6790 = vsel %vm2221, %v6758, %v6050
        %v6791 = vsel %vm2221, %v6759, %v6052
        %v6792 = vsel %vm2221, %v6760, %v6054
        %v6793 = vsel %vm2221, %v6761, %v6056
        %v6794 = vsel %vm2221, %v6762, %v6058
        %v6795 = vsel %vm2254, %v6763, %v6124
        %v6796 = vsel %vm2254, %v6764, %v6126
        %v6797 = vsel %vm2254, %v6765, %v6128
        %v6798 = vsel %vm2254, %v6766, %v6130
        %v6799 = vsel %vm2254, %v6767, %v6132
        %v6800 = vsel %vm2254, %v6768, %v6134
        %v6801 = vsel %vm2254, %v6769, %v6136
        %v6802 = vsel %vm2254, %v6770, %v6138
        %v6803 = vsel %vm2254, %v6771, %v6140
        %v6804 = vsel %vm2254, %v6772, %v6142
        %v6805 = vsel %vm2254, %v6773, %v6144
        %v6806 = vsel %vm2254, %v6774, %v6146
        %v6807 = vsel %vm2254, %v6775, %v6148
        %v6808 = vsel %vm2254, %v6776, %v6150
        %v6809 = vsel %vm2254, %v6777, %v6152
        %v6810 = vsel %vm2254, %v6778, %v6154
        %v6811 = vsel %vm2254, %v6779, %v6156
        %v6812 = vsel %vm2254, %v6780, %v6158
        %v6813 = vsel %vm2254, %v6781, %v6160
        %v6814 = vsel %vm2254, %v6782, %v6162
        %v6815 = vsel %vm2254, %v6783, %v6164
        %v6816 = vsel %vm2254, %v6784, %v6166
        %v6817 = vsel %vm2254, %v6785, %v6168
        %v6818 = vsel %vm2254, %v6786, %v6170
        %v6819 = vsel %vm2254, %v6787, %v6172
        %v6820 = vsel %vm2254, %v6788, %v6174
        %v6821 = vsel %vm2254, %v6789, %v6176
        %v6822 = vsel %vm2254, %v6790, %v6178
        %v6823 = vsel %vm2254, %v6791, %v6180
        %v6824 = vsel %vm2254, %v6792, %v6182
        %v6825 = vsel %vm2254, %v6793, %v6184
        %v6826 = vsel %vm2254, %v6794, %v6186
        %v6827 = vsel %vm2287, %v6795, %v6252
        %v6828 = vsel %vm2287, %v6796, %v6254
        %v6829 = vsel %vm2287, %v6797, %v6256
        %v6830 = vsel %vm2287, %v6798, %v6258
        %v6831 = vsel %vm2287, %v6799, %v6260
        %v6832 = vsel %vm2287, %v6800, %v6262
        %v6833 = vsel %vm2287, %v6801, %v6264
        %v6834 = vsel %vm2287, %v6802, %v6266
        %v6835 = vsel %vm2287, %v6803, %v6268
        %v6836 = vsel %vm2287, %v6804, %v6270
        %v6837 = vsel %vm2287, %v6805, %v6272
        %v6838 = vsel %vm2287, %v6806, %v6274
        %v6839 = vsel %vm2287, %v6807, %v6276
        %v6840 = vsel %vm2287, %v6808, %v6278
        %v6841 = vsel %vm2287, %v6809, %v6280
        %v6842 = vsel %vm2287, %v6810, %v6282
        %v6843 = vsel %vm2287, %v6811, %v6284
        %v6844 = vsel %vm2287, %v6812, %v6286
        %v6845 = vsel %vm2287, %v6813, %v6288
        %v6846 = vsel %vm2287, %v6814, %v6290
        %v6847 = vsel %vm2287, %v6815, %v6292
        %v6848 = vsel %vm2287, %v6816, %v6294
        %v6849 = vsel %vm2287, %v6817, %v6296
        %v6850 = vsel %vm2287, %v6818, %v6298
        %v6851 = vsel %vm2287, %v6819, %v6300
        %v6852 = vsel %vm2287, %v6820, %v6302
        %v6853 = vsel %vm2287, %v6821, %v6304
        %v6854 = vsel %vm2287, %v6822, %v6306
        %v6855 = vsel %vm2287, %v6823, %v6308
        %v6856 = vsel %vm2287, %v6824, %v6310
        %v6857 = vsel %vm2287, %v6825, %v6312
        %v6858 = vsel %vm2287, %v6826, %v6314
        %v6859 = vsel %vm2320, %v6827, %v6380
        %v6860 = vsel %vm2320, %v6828, %v6382
        %v6861 = vsel %vm2320, %v6829, %v6384
        %v6862 = vsel %vm2320, %v6830, %v6386
        %v6863 = vsel %vm2320, %v6831, %v6388
        %v6864 = vsel %vm2320, %v6832, %v6390
        %v6865 = vsel %vm2320, %v6833, %v6392
        %v6866 = vsel %vm2320, %v6834, %v6394
        %v6867 = vsel %vm2320, %v6835, %v6396
        %v6868 = vsel %vm2320, %v6836, %v6398
        %v6869 = vsel %vm2320, %v6837, %v6400
        %v6870 = vsel %vm2320, %v6838, %v6402
        %v6871 = vsel %vm2320, %v6839, %v6404
        %v6872 = vsel %vm2320, %v6840, %v6406
        %v6873 = vsel %vm2320, %v6841, %v6408
        %v6874 = vsel %vm2320, %v6842, %v6410
        %v6875 = vsel %vm2320, %v6843, %v6412
        %v6876 = vsel %vm2320, %v6844, %v6414
        %v6877 = vsel %vm2320, %v6845, %v6416
        %v6878 = vsel %vm2320, %v6846, %v6418
        %v6879 = vsel %vm2320, %v6847, %v6420
        %v6880 = vsel %vm2320, %v6848, %v6422
        %v6881 = vsel %vm2320, %v6849, %v6424
        %v6882 = vsel %vm2320, %v6850, %v6426
        %v6883 = vsel %vm2320, %v6851, %v6428
        %v6884 = vsel %vm2320, %v6852, %v6430
        %v6885 = vsel %vm2320, %v6853, %v6432
        %v6886 = vsel %vm2320, %v6854, %v6434
        %v6887 = vsel %vm2320, %v6855, %v6436
        %v6888 = vsel %vm2320, %v6856, %v6438
        %v6889 = vsel %vm2320, %v6857, %v6440
        %v6890 = vsel %vm2320, %v6858, %v6442
        %v6891 = vsel %vm2353, %v6859, %v6508
        %v6892 = vsel %vm2353, %v6860, %v6510
        %v6893 = vsel %vm2353, %v6861, %v6512
        %v6894 = vsel %vm2353, %v6862, %v6514
        %v6895 = vsel %vm2353, %v6863, %v6516
        %v6896 = vsel %vm2353, %v6864, %v6518
        %v6897 = vsel %vm2353, %v6865, %v6520
        %v6898 = vsel %vm2353, %v6866, %v6522
        %v6899 = vsel %vm2353, %v6867, %v6524
        %v6900 = vsel %vm2353, %v6868, %v6526
        %v6901 = vsel %vm2353, %v6869, %v6528
        %v6902 = vsel %vm2353, %v6870, %v6530
        %v6903 = vsel %vm2353, %v6871, %v6532
        %v6904 = vsel %vm2353, %v6872, %v6534
        %v6905 = vsel %vm2353, %v6873, %v6536
        %v6906 = vsel %vm2353, %v6874, %v6538
        %v6907 = vsel %vm2353, %v6875, %v6540
        %v6908 = vsel %vm2353, %v6876, %v6542
        %v6909 = vsel %vm2353, %v6877, %v6544
        %v6910 = vsel %vm2353, %v6878, %v6546
        %v6911 = vsel %vm2353, %v6879, %v6548
        %v6912 = vsel %vm2353, %v6880, %v6550
        %v6913 = vsel %vm2353, %v6881, %v6552
        %v6914 = vsel %vm2353, %v6882, %v6554
        %v6915 = vsel %vm2353, %v6883, %v6556
        %v6916 = vsel %vm2353, %v6884, %v6558
        %v6917 = vsel %vm2353, %v6885, %v6560
        %v6918 = vsel %vm2353, %v6886, %v6562
        %v6919 = vsel %vm2353, %v6887, %v6564
        %v6920 = vsel %vm2353, %v6888, %v6566
        %v6921 = vsel %vm2353, %v6889, %v6568
        %v6922 = vsel %vm2353, %v6890, %v6570
        %v6923 = vsel %vm2386, %v6891, %v6636
        %v6924 = vsel %vm2386, %v6892, %v6638
        %v6925 = vsel %vm2386, %v6893, %v6640
        %v6926 = vsel %vm2386, %v6894, %v6642
        %v6927 = vsel %vm2386, %v6895, %v6644
        %v6928 = vsel %vm2386, %v6896, %v6646
        %v6929 = vsel %vm2386, %v6897, %v6648
        %v6930 = vsel %vm2386, %v6898, %v6650
        %v6931 = vsel %vm2386, %v6899, %v6652
        %v6932 = vsel %vm2386, %v6900, %v6654
        %v6933 = vsel %vm2386, %v6901, %v6656
        %v6934 = vsel %vm2386, %v6902, %v6658
        %v6935 = vsel %vm2386, %v6903, %v6660
        %v6936 = vsel %vm2386, %v6904, %v6662
        %v6937 = vsel %vm2386, %v6905, %v6664
        %v6938 = vsel %vm2386, %v6906, %v6666
        %v6939 = vsel %vm2386, %v6907, %v6668
        %v6940 = vsel %vm2386, %v6908, %v6670
        %v6941 = vsel %vm2386, %v6909, %v6672
        %v6942 = vsel %vm2386, %v6910, %v6674
        %v6943 = vsel %vm2386, %v6911, %v6676
        %v6944 = vsel %vm2386, %v6912, %v6678
        %v6945 = vsel %vm2386, %v6913, %v6680
        %v6946 = vsel %vm2386, %v6914, %v6682
        %v6947 = vsel %vm2386, %v6915, %v6684
        %v6948 = vsel %vm2386, %v6916, %v6686
        %v6949 = vsel %vm2386, %v6917, %v6688
        %v6950 = vsel %vm2386, %v6918, %v6690
        %v6951 = vsel %vm2386, %v6919, %v6692
        %v6952 = vsel %vm2386, %v6920, %v6694
        %v6953 = vsel %vm2386, %v6921, %v6696
        %v6954 = vsel %vm2386, %v6922, %v6698
        %v6955 = vpack.c.bf16 %v6924, %v6923
        %v6956 = vpack.c.bf16 %v5804, %v5803
        %v6957 = vpack.c.bf16 %v6926, %v6925
        %v6958 = vpack.c.bf16 %v5806, %v5805
        %v6959 = vpack.c.bf16 %v6928, %v6927
        %v6960 = vpack.c.bf16 %v5808, %v5807
        %v6961 = vpack.c.bf16 %v6930, %v6929
        %v6962 = vpack.c.bf16 %v5810, %v5809
        %v6963 = vpack.c.bf16 %v6932, %v6931
        %v6964 = vpack.c.bf16 %v5812, %v5811
        %v6965 = vpack.c.bf16 %v6934, %v6933
        %v6966 = vpack.c.bf16 %v5814, %v5813
        %v6967 = vpack.c.bf16 %v6936, %v6935
        %v6968 = vpack.c.bf16 %v5816, %v5815
        %v6969 = vpack.c.bf16 %v6938, %v6937
        %v6970 = vpack.c.bf16 %v5818, %v5817
        %v6971 = vpack.c.bf16 %v6940, %v6939
        %v6972 = vpack.c.bf16 %v5820, %v5819
        %v6973 = vpack.c.bf16 %v6942, %v6941
        %v6974 = vpack.c.bf16 %v5822, %v5821
        %v6975 = vpack.c.bf16 %v6944, %v6943
        %v6976 = vpack.c.bf16 %v5824, %v5823
        %v6977 = vpack.c.bf16 %v6946, %v6945
        %v6978 = vpack.c.bf16 %v5826, %v5825
        %v6979 = vpack.c.bf16 %v6948, %v6947
        %v6980 = vpack.c.bf16 %v5828, %v5827
        %v6981 = vpack.c.bf16 %v6950, %v6949
        %v6982 = vpack.c.bf16 %v5830, %v5829
        %v6983 = vpack.c.bf16 %v6952, %v6951
        %v6984 = vpack.c.bf16 %v5832, %v5831
        %v6985 = vpack.c.bf16 %v6954, %v6953
        %v6986 = vpack.c.bf16 %v5834, %v5833
        %v6987 = vld [vmem:[%s15] sm:$0xf]
        %v6988 = vld [vmem:[%s15 + $0x4] sm:$0xf]
        %v6989 = vld [vmem:[%s15 + $0x8] sm:$0xf]
        %v6990 = vld [vmem:[%s15 + $0xc] sm:$0xf]
        %v6991 = vld [vmem:[%s15 + $0x10] sm:$0xf]
        %v6992 = vld [vmem:[%s15 + $0x14] sm:$0xf]
        %v6993 = vld [vmem:[%s15 + $0x18] sm:$0xf]
        %v6994 = vld [vmem:[%s15 + $0x1c] sm:$0xf]
        %v6995 = vld [vmem:[%s15 + $0x20] sm:$0xf]
        %v6996 = vld [vmem:[%s15 + $0x24] sm:$0xf]
        %v6997 = vld [vmem:[%s15 + $0x28] sm:$0xf]
        %v6998 = vld [vmem:[%s15 + $0x2c] sm:$0xf]
        %v6999 = vld [vmem:[%s15 + $0x30] sm:$0xf]
        %v7000 = vld [vmem:[%s15 + $0x34] sm:$0xf]
        %v7001 = vld [vmem:[%s15 + $0x38] sm:$0xf]
        %v7002 = vld [vmem:[%s15 + $0x3c] sm:$0xf]
        %v7003 = vld [vmem:[%s15 + $0x40] sm:$0xf]
        %v7004 = vld [vmem:[%s15 + $0x44] sm:$0xf]
        %v7023 = vunpack.c.l.b16 %v6987
        %v7024 = vunpack.c.l.b16 %v6988
        %v7025 = vunpack.c.l.b16 %v6989
        %v7026 = vunpack.c.l.b16 %v6990
        %v7027 = vunpack.c.l.b16 %v6991
        %v7028 = vunpack.c.l.b16 %v6992
        %v7029 = vunpack.c.l.b16 %v6993
        %v7030 = vunpack.c.l.b16 %v6994
        %v7031 = vunpack.c.l.b16 %v6995
        %v7032 = vunpack.c.l.b16 %v6996
        %v7033 = vunpack.c.l.b16 %v6997
        %v7034 = vunpack.c.l.b16 %v6998
        %v7035 = vunpack.c.l.b16 %v6999
        %v7036 = vunpack.c.l.b16 %v7000
        %v7037 = vunpack.c.l.b16 %v7001
        %v7038 = vunpack.c.l.b16 %v7002
        %v7039 = vunpack.c.l.b16 %v7003
        %v7040 = vunpack.c.l.b16 %v7004
        %v7041 = vpack.c.b16 %v7024, %v7023
        %v7042 = vpack.c.b16 %v7026, %v7025
        %v7043 = vpack.c.b16 %v7028, %v7027
        %v7044 = vpack.c.b16 %v7030, %v7029
        %v7045 = vpack.c.b16 %v7032, %v7031
        %v7046 = vpack.c.b16 %v7034, %v7033
        %v7047 = vpack.c.b16 %v7036, %v7035
        %v7048 = vpack.c.b16 %v7038, %v7037
        %v7049 = vpack.c.b16 %v7040, %v7039
        %v7060 = vsel %vm586, %v6956, 0
        %v7063 = vsel %vm586, %v6958, 0
        %v7066 = vsel %vm586, %v6960, 0
        %v7069 = vsel %vm586, %v6962, 0
        %v7072 = vsel %vm586, %v6964, 0
        %v7075 = vsel %vm586, %v6966, 0
        %v7078 = vsel %vm586, %v6968, 0
        %v7081 = vsel %vm586, %v6970, 0
        %v7084 = vsel %vm586, %v6972, 0
        %v7087 = vsel %vm586, %v6974, 0
        %v7090 = vsel %vm586, %v6976, 0
        %v7093 = vsel %vm586, %v6978, 0
        %v7096 = vsel %vm586, %v6980, 0
        %v7099 = vsel %vm586, %v6982, 0
        %v7102 = vsel %vm586, %v6984, 0
        %v7105 = vsel %vm586, %v6986, 0
        %7107 = vmatpush.bf16.msra.mxu0 %v7048
        %7108 = vmatpush.bf16.msra.mxu0 %v7047
        %7109 = vmatpush.bf16.msra.mxu0 %v7046
        %7110 = vmatpush.bf16.msra.mxu0 %v7045
        %7111 = vmatpush.bf16.msra.mxu0 %v7044
        %7112 = vmatpush.bf16.msra.mxu0 %v7043
        %7113 = vmatpush.bf16.msra.mxu0 %v7042
        %7114 = vmatpush.bf16.msra.mxu0 %v7041
        %7115 = vmatmul.bf16.gmra.mxu0 %v6955
        %v7116 = vpop.f32.mrf.mxu0
        %v7117 = vadd.f32 0.0, %v7116
        %v7118 = vpop.f32.mrf.mxu0
        %v7119 = vadd.f32 0.0, %v7118
        %7120 = vmatmul.bf16.gmra.mxu0 %v6957
        %v7121 = vpop.f32.mrf.mxu0
        %v7122 = vadd.f32 0.0, %v7121
        %v7123 = vpop.f32.mrf.mxu0
        %v7124 = vadd.f32 0.0, %v7123
        %7125 = vmatmul.bf16.gmra.mxu0 %v6959
        %v7126 = vpop.f32.mrf.mxu0
        %v7127 = vadd.f32 0.0, %v7126
        %v7128 = vpop.f32.mrf.mxu0
        %v7129 = vadd.f32 0.0, %v7128
        %7130 = vmatmul.bf16.gmra.mxu0 %v6961
        %v7131 = vpop.f32.mrf.mxu0
        %v7132 = vadd.f32 0.0, %v7131
        %v7133 = vpop.f32.mrf.mxu0
        %v7134 = vadd.f32 0.0, %v7133
        %7135 = vmatmul.bf16.gmra.mxu0 %v6963
        %v7136 = vpop.f32.mrf.mxu0
        %v7137 = vadd.f32 0.0, %v7136
        %v7138 = vpop.f32.mrf.mxu0
        %v7139 = vadd.f32 0.0, %v7138
        %7140 = vmatmul.bf16.gmra.mxu0 %v6965
        %v7141 = vpop.f32.mrf.mxu0
        %v7142 = vadd.f32 0.0, %v7141
        %v7143 = vpop.f32.mrf.mxu0
        %v7144 = vadd.f32 0.0, %v7143
        %7145 = vmatmul.bf16.gmra.mxu0 %v6967
        %v7146 = vpop.f32.mrf.mxu0
        %v7147 = vadd.f32 0.0, %v7146
        %v7148 = vpop.f32.mrf.mxu0
        %v7149 = vadd.f32 0.0, %v7148
        %7150 = vmatmul.bf16.gmra.mxu0 %v6969
        %v7151 = vpop.f32.mrf.mxu0
        %v7152 = vadd.f32 0.0, %v7151
        %v7153 = vpop.f32.mrf.mxu0
        %v7154 = vadd.f32 0.0, %v7153
        %7155 = vmatmul.bf16.gmra.mxu0 %v6971
        %v7156 = vpop.f32.mrf.mxu0
        %v7157 = vadd.f32 0.0, %v7156
        %v7158 = vpop.f32.mrf.mxu0
        %v7159 = vadd.f32 0.0, %v7158
        %7160 = vmatmul.bf16.gmra.mxu0 %v6973
        %v7161 = vpop.f32.mrf.mxu0
        %v7162 = vadd.f32 0.0, %v7161
        %v7163 = vpop.f32.mrf.mxu0
        %v7164 = vadd.f32 0.0, %v7163
        %7165 = vmatmul.bf16.gmra.mxu0 %v6975
        %v7166 = vpop.f32.mrf.mxu0
        %v7167 = vadd.f32 0.0, %v7166
        %v7168 = vpop.f32.mrf.mxu0
        %v7169 = vadd.f32 0.0, %v7168
        %7170 = vmatmul.bf16.gmra.mxu0 %v6977
        %v7171 = vpop.f32.mrf.mxu0
        %v7172 = vadd.f32 0.0, %v7171
        %v7173 = vpop.f32.mrf.mxu0
        %v7174 = vadd.f32 0.0, %v7173
        %7175 = vmatmul.bf16.gmra.mxu0 %v6979
        %v7176 = vpop.f32.mrf.mxu0
        %v7177 = vadd.f32 0.0, %v7176
        %v7178 = vpop.f32.mrf.mxu0
        %v7179 = vadd.f32 0.0, %v7178
        %7180 = vmatmul.bf16.gmra.mxu0 %v6981
        %v7181 = vpop.f32.mrf.mxu0
        %v7182 = vadd.f32 0.0, %v7181
        %v7183 = vpop.f32.mrf.mxu0
        %v7184 = vadd.f32 0.0, %v7183
        %7185 = vmatmul.bf16.gmra.mxu0 %v6983
        %v7186 = vpop.f32.mrf.mxu0
        %v7187 = vadd.f32 0.0, %v7186
        %v7188 = vpop.f32.mrf.mxu0
        %v7189 = vadd.f32 0.0, %v7188
        %7190 = vmatmul.bf16.gmra.mxu0 %v6985
        %v7191 = vpop.f32.mrf.mxu0
        %v7192 = vadd.f32 0.0, %v7191
        %v7193 = vpop.f32.mrf.mxu0
        %v7194 = vadd.f32 0.0, %v7193
        %7195 = vdwg.mxu0
        %7196 = vmatpush.bf16.msra.mxu0 0
        %7197 = vmatpush.bf16.msra.mxu0 0
        %7198 = vmatpush.bf16.msra.mxu0 0
        %7199 = vmatpush.bf16.msra.mxu0 0
        %7200 = vmatpush.bf16.msra.mxu0 0
        %7201 = vmatpush.bf16.msra.mxu0 0
        %7202 = vmatpush.bf16.msra.mxu0 0
        %7203 = vmatpush.bf16.msra.mxu0 %v7049
        %7204 = vmatmul.bf16.gmra.mxu0 %v7060
        %v7205 = vpop.f32.mrf.mxu0
        %v7206 = vadd.f32 %v7117, %v7205
        %v7207 = vpop.f32.mrf.mxu0
        %v7208 = vadd.f32 %v7119, %v7207
        %7209 = vmatmul.bf16.gmra.mxu0 %v7063
        %v7210 = vpop.f32.mrf.mxu0
        %v7211 = vadd.f32 %v7122, %v7210
        %v7212 = vpop.f32.mrf.mxu0
        %v7213 = vadd.f32 %v7124, %v7212
        %7214 = vmatmul.bf16.gmra.mxu0 %v7066
        %v7215 = vpop.f32.mrf.mxu0
        %v7216 = vadd.f32 %v7127, %v7215
        %v7217 = vpop.f32.mrf.mxu0
        %v7218 = vadd.f32 %v7129, %v7217
        %7219 = vmatmul.bf16.gmra.mxu0 %v7069
        %v7220 = vpop.f32.mrf.mxu0
        %v7221 = vadd.f32 %v7132, %v7220
        %v7222 = vpop.f32.mrf.mxu0
        %v7223 = vadd.f32 %v7134, %v7222
        %7224 = vmatmul.bf16.gmra.mxu0 %v7072
        %v7225 = vpop.f32.mrf.mxu0
        %v7226 = vadd.f32 %v7137, %v7225
        %v7227 = vpop.f32.mrf.mxu0
        %v7228 = vadd.f32 %v7139, %v7227
        %7229 = vmatmul.bf16.gmra.mxu0 %v7075
        %v7230 = vpop.f32.mrf.mxu0
        %v7231 = vadd.f32 %v7142, %v7230
        %v7232 = vpop.f32.mrf.mxu0
        %v7233 = vadd.f32 %v7144, %v7232
        %7234 = vmatmul.bf16.gmra.mxu0 %v7078
        %v7235 = vpop.f32.mrf.mxu0
        %v7236 = vadd.f32 %v7147, %v7235
        %v7237 = vpop.f32.mrf.mxu0
        %v7238 = vadd.f32 %v7149, %v7237
        %7239 = vmatmul.bf16.gmra.mxu0 %v7081
        %v7240 = vpop.f32.mrf.mxu0
        %v7241 = vadd.f32 %v7152, %v7240
        %v7242 = vpop.f32.mrf.mxu0
        %v7243 = vadd.f32 %v7154, %v7242
        %7244 = vmatmul.bf16.gmra.mxu0 %v7084
        %v7245 = vpop.f32.mrf.mxu0
        %v7246 = vadd.f32 %v7157, %v7245
        %v7247 = vpop.f32.mrf.mxu0
        %v7248 = vadd.f32 %v7159, %v7247
        %7249 = vmatmul.bf16.gmra.mxu0 %v7087
        %v7250 = vpop.f32.mrf.mxu0
        %v7251 = vadd.f32 %v7162, %v7250
        %v7252 = vpop.f32.mrf.mxu0
        %v7253 = vadd.f32 %v7164, %v7252
        %7254 = vmatmul.bf16.gmra.mxu0 %v7090
        %v7255 = vpop.f32.mrf.mxu0
        %v7256 = vadd.f32 %v7167, %v7255
        %v7257 = vpop.f32.mrf.mxu0
        %v7258 = vadd.f32 %v7169, %v7257
        %7259 = vmatmul.bf16.gmra.mxu0 %v7093
        %v7260 = vpop.f32.mrf.mxu0
        %v7261 = vadd.f32 %v7172, %v7260
        %v7262 = vpop.f32.mrf.mxu0
        %v7263 = vadd.f32 %v7174, %v7262
        %7264 = vmatmul.bf16.gmra.mxu0 %v7096
        %v7265 = vpop.f32.mrf.mxu0
        %v7266 = vadd.f32 %v7177, %v7265
        %v7267 = vpop.f32.mrf.mxu0
        %v7268 = vadd.f32 %v7179, %v7267
        %7269 = vmatmul.bf16.gmra.mxu0 %v7099
        %v7270 = vpop.f32.mrf.mxu0
        %v7271 = vadd.f32 %v7182, %v7270
        %v7272 = vpop.f32.mrf.mxu0
        %v7273 = vadd.f32 %v7184, %v7272
        %7274 = vmatmul.bf16.gmra.mxu0 %v7102
        %v7275 = vpop.f32.mrf.mxu0
        %v7276 = vadd.f32 %v7187, %v7275
        %v7277 = vpop.f32.mrf.mxu0
        %v7278 = vadd.f32 %v7189, %v7277
        %7279 = vmatmul.bf16.gmra.mxu0 %v7105
        %v7280 = vpop.f32.mrf.mxu0
        %v7281 = vadd.f32 %v7192, %v7280
        %v7282 = vpop.f32.mrf.mxu0
        %v7283 = vadd.f32 %v7194, %v7282
        %7284 = vdwg.mxu0
        %7317 = vrot.lane.b32.xlu0 %v7206, 24
        %v7318 = vpop.permute.xlu0 %7317
        %7319 = vrot.lane.b32.xlu0 %v7208, 24
        %v7320 = vpop.permute.xlu0 %7319
        %7321 = vrot.lane.b32.xlu0 %v7211, 24
        %v7322 = vpop.permute.xlu0 %7321
        %7323 = vrot.lane.b32.xlu0 %v7213, 24
        %v7324 = vpop.permute.xlu0 %7323
        %7325 = vrot.lane.b32.xlu0 %v7216, 24
        %v7326 = vpop.permute.xlu0 %7325
        %7327 = vrot.lane.b32.xlu0 %v7218, 24
        %v7328 = vpop.permute.xlu0 %7327
        %7329 = vrot.lane.b32.xlu0 %v7221, 24
        %v7330 = vpop.permute.xlu0 %7329
        %7331 = vrot.lane.b32.xlu0 %v7223, 24
        %v7332 = vpop.permute.xlu0 %7331
        %7333 = vrot.lane.b32.xlu0 %v7226, 24
        %v7334 = vpop.permute.xlu0 %7333
        %7335 = vrot.lane.b32.xlu0 %v7228, 24
        %v7336 = vpop.permute.xlu0 %7335
        %7337 = vrot.lane.b32.xlu0 %v7231, 24
        %v7338 = vpop.permute.xlu0 %7337
        %7339 = vrot.lane.b32.xlu0 %v7233, 24
        %v7340 = vpop.permute.xlu0 %7339
        %7341 = vrot.lane.b32.xlu0 %v7236, 24
        %v7342 = vpop.permute.xlu0 %7341
        %7343 = vrot.lane.b32.xlu0 %v7238, 24
        %v7344 = vpop.permute.xlu0 %7343
        %7345 = vrot.lane.b32.xlu0 %v7241, 24
        %v7346 = vpop.permute.xlu0 %7345
        %7347 = vrot.lane.b32.xlu0 %v7243, 24
        %v7348 = vpop.permute.xlu0 %7347
        %7349 = vrot.lane.b32.xlu0 %v7246, 24
        %v7350 = vpop.permute.xlu0 %7349
        %7351 = vrot.lane.b32.xlu0 %v7248, 24
        %v7352 = vpop.permute.xlu0 %7351
        %7353 = vrot.lane.b32.xlu0 %v7251, 24
        %v7354 = vpop.permute.xlu0 %7353
        %7355 = vrot.lane.b32.xlu0 %v7253, 24
        %v7356 = vpop.permute.xlu0 %7355
        %7357 = vrot.lane.b32.xlu0 %v7256, 24
        %v7358 = vpop.permute.xlu0 %7357
        %7359 = vrot.lane.b32.xlu0 %v7258, 24
        %v7360 = vpop.permute.xlu0 %7359
        %7361 = vrot.lane.b32.xlu0 %v7261, 24
        %v7362 = vpop.permute.xlu0 %7361
        %7363 = vrot.lane.b32.xlu0 %v7263, 24
        %v7364 = vpop.permute.xlu0 %7363
        %7365 = vrot.lane.b32.xlu0 %v7266, 24
        %v7366 = vpop.permute.xlu0 %7365
        %7367 = vrot.lane.b32.xlu0 %v7268, 24
        %v7368 = vpop.permute.xlu0 %7367
        %7369 = vrot.lane.b32.xlu0 %v7271, 24
        %v7370 = vpop.permute.xlu0 %7369
        %7371 = vrot.lane.b32.xlu0 %v7273, 24
        %v7372 = vpop.permute.xlu0 %7371
        %7373 = vrot.lane.b32.xlu0 %v7276, 24
        %v7374 = vpop.permute.xlu0 %7373
        %7375 = vrot.lane.b32.xlu0 %v7278, 24
        %v7376 = vpop.permute.xlu0 %7375
        %7377 = vrot.lane.b32.xlu0 %v7281, 24
        %v7378 = vpop.permute.xlu0 %7377
        %7379 = vrot.lane.b32.xlu0 %v7283, 24
        %v7380 = vpop.permute.xlu0 %7379
        %vm7413 = vcmask 261312
        %7414 = vst.msk [vmem:[%s514] sm:$0xff] %vm7413, %v7318
        %7415 = vst.msk [vmem:[%s514 + $0x8] sm:$0xff] %vm7413, %v7320
        %7416 = vst.msk [vmem:[%s514 + $0x10] sm:$0xff] %vm7413, %v7322
        %7417 = vst.msk [vmem:[%s514 + $0x18] sm:$0xff] %vm7413, %v7324
        %7418 = vst.msk [vmem:[%s514 + $0x20] sm:$0xff] %vm7413, %v7326
        %7419 = vst.msk [vmem:[%s514 + $0x28] sm:$0xff] %vm7413, %v7328
        %7420 = vst.msk [vmem:[%s514 + $0x30] sm:$0xff] %vm7413, %v7330
        %7421 = vst.msk [vmem:[%s514 + $0x38] sm:$0xff] %vm7413, %v7332
        %7422 = vst.msk [vmem:[%s514 + $0x40] sm:$0xff] %vm7413, %v7334
        %7423 = vst.msk [vmem:[%s514 + $0x48] sm:$0xff] %vm7413, %v7336
        %7424 = vst.msk [vmem:[%s514 + $0x50] sm:$0xff] %vm7413, %v7338
        %7425 = vst.msk [vmem:[%s514 + $0x58] sm:$0xff] %vm7413, %v7340
        %7426 = vst.msk [vmem:[%s514 + $0x60] sm:$0xff] %vm7413, %v7342
        %7427 = vst.msk [vmem:[%s514 + $0x68] sm:$0xff] %vm7413, %v7344
        %7428 = vst.msk [vmem:[%s514 + $0x70] sm:$0xff] %vm7413, %v7346
        %7429 = vst.msk [vmem:[%s514 + $0x78] sm:$0xff] %vm7413, %v7348
        %7430 = vst.msk [vmem:[%s514 + $0x80] sm:$0xff] %vm7413, %v7350
        %7431 = vst.msk [vmem:[%s514 + $0x88] sm:$0xff] %vm7413, %v7352
        %7432 = vst.msk [vmem:[%s514 + $0x90] sm:$0xff] %vm7413, %v7354
        %7433 = vst.msk [vmem:[%s514 + $0x98] sm:$0xff] %vm7413, %v7356
        %7434 = vst.msk [vmem:[%s514 + $0xa0] sm:$0xff] %vm7413, %v7358
        %7435 = vst.msk [vmem:[%s514 + $0xa8] sm:$0xff] %vm7413, %v7360
        %7436 = vst.msk [vmem:[%s514 + $0xb0] sm:$0xff] %vm7413, %v7362
        %7437 = vst.msk [vmem:[%s514 + $0xb8] sm:$0xff] %vm7413, %v7364
        %7438 = vst.msk [vmem:[%s514 + $0xc0] sm:$0xff] %vm7413, %v7366
        %7439 = vst.msk [vmem:[%s514 + $0xc8] sm:$0xff] %vm7413, %v7368
        %7440 = vst.msk [vmem:[%s514 + $0xd0] sm:$0xff] %vm7413, %v7370
        %7441 = vst.msk [vmem:[%s514 + $0xd8] sm:$0xff] %vm7413, %v7372
        %7442 = vst.msk [vmem:[%s514 + $0xe0] sm:$0xff] %vm7413, %v7374
        %7443 = vst.msk [vmem:[%s514 + $0xe8] sm:$0xff] %vm7413, %v7376
        %7444 = vst.msk [vmem:[%s514 + $0xf0] sm:$0xff] %vm7413, %v7378
        %7445 = vst.msk [vmem:[%s514 + $0xf8] sm:$0xff] %vm7413, %v7380
        %s7446 = sand.u32 %s379, 1
        %s7447 = scalar_lea.sflag [#allocation4], %s7446
        %s7448 = sand.u32 %s379, 1
        %s7449 = smul.addr %s7448, 256
        %s7450 = scalar_lea.vmem [#allocation3], %s7449
        // Predicated region
        $region85: #{dense_block_forward.1} parent=83 // pred_check
          %p7451 = pneg %p389
        $region86: #{dense_block_forward.1} parent=83 // pred_check_branch
          %7453 = sbr.rel (%p7451) target = $region88
        $region87: #{dense_block_forward.1} parent=83 // pred_region
          %7455 = vsyncadd %s7447, 0
          %s7456 = smul.addr %s30, 32
          %s7457 = smul.addr %s7456, 8
          %s7458 = scalar_lea.hbm %s16, %s7457
          %s7459 = sshll.u32 %s7450, 4
          %s7460 = int_to_ptr.vmem [resolvable:$true] %s7459
          %s7461 = sshll.u32 %s7458, 4
          %s7462 = int_to_ptr.hbm [resolvable:$true] %s7461
          %7467 = dma.vmem_to_hbm [thread:$0]  %s7460, 4096, %s7462, %s7447, 128, 128, 8
        $region88: #{dense_block_forward.1} parent=83 // pred_fallthru
          _
      $region84: #{dense_block_forward.1} parent=5 // pred_fallthru
        _
      %p7468 = scmp.le.s32.totalorder 2, %s25
      // Predicated region
      $region89: #{dense_block_forward.1} parent=5 // pred_check
        %p7469 = pneg %p7468
      $region90: #{dense_block_forward.1} parent=5 // pred_check_branch
        %7471 = sbr.rel (%p7469) target = $region92
      $region91: #{dense_block_forward.1} parent=5 // pred_region
        %s7472 = ssub.s32 %s25, 2
        // Predicated region
        $region93: #{dense_block_forward.1} parent=91 // pred_check
          %p7473 = pneg %p395
        $region94: #{dense_block_forward.1} parent=91 // pred_check_branch
          %7475 = sbr.rel (%p7473) target = $region96
        $region95: #{dense_block_forward.1} parent=91 // pred_region
          %s7476 = sand.u32 %s380, 1
          %s7477 = scalar_lea.sflag [#allocation4], %s7476
          %s7478 = sand.u32 %s380, 1
          %s7479 = smul.addr %s7478, 256
          %s7480 = scalar_lea.vmem [#allocation3], %s7479
          %7482 = dma.done %s7477, 4096
        $region96: #{dense_block_forward.1} parent=91 // pred_fallthru
          _
      $region92: #{dense_block_forward.1} parent=5 // pred_fallthru
        _
    $region6: #{dense_block_forward.1} parent=1 // loop_footer
      %s29 = sadd.s32 1, %s25
    $region7: #{dense_block_forward.1} parent=1 // loop_footer_branch
      %24 = sbr.rel target = $region3
    $region8: #{dense_block_forward.1} parent=1 // loop_exit
      _
    %7483 = vsyncpa [#allocation4], 1
    %s7484 = scalar_lea.sflag [#allocation4], 1
    %7485 = vsyncpa %s7484, 1

</llo_original>
